<compile_context>
chip_gen: v7x
topology: tpu7x:2x2x1
jax: 0.10.0
libtpu: 0.0.40
codegen_flags: <defaults>
</compile_context>

<pallas_src>
import functools

import numpy as np

import jax
import jax.numpy as jnp
from jax.experimental import pallas as pl
from jax.experimental.pallas import tpu as pltpu

_NUM_FEAT = 32
_HALO = 4            # four 3x3 conv layers -> 4-row receptive-field halo
_LPAD = 16           # scratch left pad: sublane(16)-aligned interior for bf16
_C_LAST = 108        # 3 * 6 * 6 output channels of the last conv
_C_LAST_PAD = 128    # lane-dense padded Cout of the last conv


def _vmem_limit_bytes():
    """Generation-aware VMEM budget (smaller on v7x, larger on v5e/v6e)."""
    try:
        cap = int(pltpu.get_tpu_info().vmem_capacity_bytes)
    except Exception:
        cap = 64 * 1024 * 1024            # assume the smallest (v7x) if unknown
    return int(min(max(cap * 5 // 8, 32 * 1024 * 1024), 96 * 1024 * 1024))


# ----------------------------------------------------------------------------
# Pallas kernel A: fused 4-layer conv body.
# ----------------------------------------------------------------------------
def _conv_body_kernel(xs_ref, w0, b0, w1, b1, w2, b2, w3, b3, o_ref, act_ref,
                      *, TH, W2, SH, C0):
    """Fused 4-layer conv body for one (batch, row-tile) grid point.

    xs_ref : (1, 1, SH, W2, C0) bf16     halo-expanded input slab (rows outside
                                         the image are already zero)
    w*     : (9*Cin, Cout)      bf16     tap-major packed conv weights
    b*     : (1, Cout)          f32      biases
    o_ref  : (1, TH, W2, 128)   bf16     central TH output rows (Cout padded)
    act_ref: (SH, _LPAD+W2+1, 32) bf16   interlayer activations + conv padding
                                         columns; interior starts at column
                                         _LPAD so the big stores are unmasked.
    """
    # Zero only the two conv-padding columns that the dx taps actually read.
    # Done every step: the scratch is per-core and not zero-initialised, and
    # gating on program_id == 0 would be wrong once the grid is sharded
    # across TensorCores.
    zc = jnp.zeros((SH, 1, _NUM_FEAT), jnp.bfloat16)
    act_ref[:, _LPAD - 1:_LPAD, :] = zc
    act_ref[:, _LPAD + W2:_LPAD + W2 + 1, :] = zc

    # Layer-0 input slab into the (sublane-aligned) scratch interior.
    act_ref[:, _LPAD:_LPAD + W2, 0:C0] = xs_ref[0, 0]

    def conv(layer, cin, w_ref, b_ref, leaky):
        # Progressive halo: layer l only computes the rows later layers need.
        rows = SH - 2 * (layer + 1)
        cols = []
        for dy in range(3):
            for dx in range(3):
                cols.append(
                    act_ref[layer + dy:layer + dy + rows,
                            _LPAD - 1 + dx:_LPAD - 1 + dx + W2,
                            0:cin].reshape(rows * W2, cin))
        # One im2col MXU matmul per layer (K = 9*cin), bf16 in / f32 acc.
        # TODO(synk): compare against a tap-by-tap patch scratch if bundle
        # dumps show the 9 narrow-lane slices saturating the vld/vst slots.
        patches = jnp.concatenate(cols, axis=1)
        y = jnp.dot(patches, w_ref[...], preferred_element_type=jnp.float32)
        y = y + b_ref[...]
        if leaky:
            y = jnp.where(y >= 0.0, y, 0.1 * y)
        return y.reshape(rows, W2, w_ref.shape[1])

    y = conv(0, C0, w0, b0, True)
    act_ref[1:SH - 1, _LPAD:_LPAD + W2, :] = y.astype(jnp.bfloat16)
    y = conv(1, _NUM_FEAT, w1, b1, True)
    act_ref[2:SH - 2, _LPAD:_LPAD + W2, :] = y.astype(jnp.bfloat16)
    y = conv(2, _NUM_FEAT, w2, b2, True)
    act_ref[3:SH - 3, _LPAD:_LPAD + W2, :] = y.astype(jnp.bfloat16)
    y = conv(3, _NUM_FEAT, w3, b3, False)            # (TH, W2, 128) f32
    o_ref[0] = y.astype(o_ref.dtype)


def conv_body(feat_bf16, params, vmem_limit):
    """NHWC bf16 (B, H2, W2, 12) -> bf16 (B, H2p, W2, 128) fused conv body."""
    B, H2, W2, C0 = feat_bf16.shape

    # Row tile: ~3 KiB per W2-element per H2-row of tile footprint (input /
    # output / scratch lane-padding to 128 and bf16 im2col temps included);
    # keep the per-step working set under ~45% of the VMEM limit.
    per_row_bytes = 3072 * max(W2, 1)
    budget = (vmem_limit * 9) // 20
    TH = max(1, min(H2, budget // per_row_bytes))
    if TH >= 8:
        TH -= TH % 4
    NR = -(-H2 // TH)
    H2p = NR * TH                      # pad rows: awkward H2 never forces TH=1
    SH = TH + 2 * _HALO
    # TODO(synk): add a width-tiling path for extreme W2 where even TH=1
    # exceeds the block budget.

    # Halo-expanded row slabs; rows outside the (padded) image are zero.
    fp = jnp.pad(feat_bf16,
                 ((0, 0), (_HALO, H2p - H2 + _HALO), (0, 0), (0, 0)))
    row_idx = (np.arange(NR) * TH)[:, None] + np.arange(SH)[None, :]
    xs = fp[:, row_idx]                # (B, NR, SH, W2, C0)

    wp, bp = [], []
    for i in range(4):
        w = params[f"w{i}"]            # (3, 3, Cin, Cout) HWIO
        cin, cout = w.shape[2], w.shape[3]
        wpk = w.reshape(9 * cin, cout)
        bpk = params[f"b{i}"].reshape(1, cout)
        if i == 3:                     # pad Cout 108 -> 128: lane-dense store
            wpk = jnp.pad(wpk, ((0, 0), (0, _C_LAST_PAD - cout)))
            bpk = jnp.pad(bpk, ((0, 0), (0, _C_LAST_PAD - cout)))
        wp.append(wpk.astype(jnp.bfloat16))
        bp.append(bpk.astype(jnp.float32))

    kernel = functools.partial(_conv_body_kernel, TH=TH, W2=W2, SH=SH, C0=C0)

    in_specs = [pl.BlockSpec((1, 1, SH, W2, C0), lambda b, r: (b, r, 0, 0, 0))]
    for i in range(4):
        in_specs.append(pl.BlockSpec(wp[i].shape, lambda b, r: (0, 0)))
        in_specs.append(pl.BlockSpec(bp[i].shape, lambda b, r: (0, 0)))

    return pl.pallas_call(
        kernel,
        out_shape=jax.ShapeDtypeStruct((B, H2p, W2, _C_LAST_PAD), jnp.bfloat16),
        grid=(B, NR),
        in_specs=in_specs,
        out_specs=pl.BlockSpec((1, TH, W2, _C_LAST_PAD),
                               lambda b, r: (b, r, 0, 0)),
        scratch_shapes=[
            pltpu.VMEM((SH, _LPAD + W2 + 1, _NUM_FEAT), jnp.bfloat16)],
        compiler_params=pltpu.CompilerParams(
            dimension_semantics=("parallel", "parallel"),
            vmem_limit_bytes=vmem_limit),
    )(xs, wp[0], bp[0], wp[1], bp[1], wp[2], bp[2], wp[3], bp[3])


# ----------------------------------------------------------------------------
# Pallas kernel B: banded bilinear residual + add (tile-local matmuls).
# ----------------------------------------------------------------------------
def _residual_kernel(ps_ref, xb_ref, ah_ref, awt_ref, o_ref):
    """out = pixel-shuffled conv output + bilinear(x), one output row tile.

    ps_ref : (1, 3, ORT, OW)   bf16   conv output after PixelShuffle(6)
    xb_ref : (1, 1, 3, BAND, W) f32   banded original-input rows for this tile
    ah_ref : (1, ORT, BAND)    f32    banded height-interpolation matrix
    awt_ref: (W, OW)           f32    width-interpolation matrix (transposed)
    o_ref  : (1, 3, ORT, OW)   f32
    """
    ah = ah_ref[0]
    awt = awt_ref[...]
    for c in range(3):
        # Width interpolation on the banded rows first (fewer rows), then the
        # banded height matmul -- both tile-local.  Default (bf16-pass) MXU
        # precision for the bilinear base is accepted deliberately (~1e-3
        # relative deviation from torch's f32 interpolate).
        xw = jnp.dot(xb_ref[0, 0, c], awt, preferred_element_type=jnp.float32)
        base = jnp.dot(ah, xw, preferred_element_type=jnp.float32)
        o_ref[0, c] = ps_ref[0, c].astype(jnp.float32) + base


def _bilinear_taps(in_size, out_size):
    # torch area_pixel_compute_source_index, align_corners=False (non-cubic).
    scale = in_size / out_size
    dst = np.arange(out_size, dtype=np.float64)
    src = np.maximum(scale * (dst + 0.5) - 0.5, 0.0)
    i0 = np.minimum(np.floor(src).astype(np.int64), in_size - 1)
    i1 = np.minimum(i0 + 1, in_size - 1)
    lam = np.clip(src - i0, 0.0, 1.0)
    return i0, i1, (1.0 - lam).astype(np.float32), lam.astype(np.float32)


def residual_add(x, ps, vmem_limit):
    B, C, H, W = x.shape
    OH, OW = ps.shape[2], ps.shape[3]

    # Output row tile: multiple of 16 (bf16 sublane tile of the ps block) that
    # divides OH; the dense (W, OW) width matrix is budgeted explicitly.
    # TODO(synk): exploit the 2-tap structure of A_w (and add width tiling)
    # for very large W instead of the dense (W, OW) VMEM operand.
    per_row_bytes = 45 * OW + 8 * W
    budget = (vmem_limit * 9) // 20 - 8 * W * OW
    cap = max(16, budget // per_row_bytes) if budget > 0 else 16
    ORT = OH
    if OH > cap:
        for d in range(16, min(OH, cap) + 1, 16):
            if OH % d == 0:
                ORT = d
        # If no 16-aligned divisor exists ORT stays == OH (whole-image tile).
        # TODO(synk): pad OH so awkward heights cannot bust VMEM on v7x.
    NRO = OH // ORT

    # Banded height interpolation: each tile only needs ~ORT/3 + 2 input rows.
    i0, i1, w0, w1 = _bilinear_taps(H, OH)
    starts = i0[np.arange(NRO) * ORT]
    ends = i1[np.arange(NRO) * ORT + ORT - 1]
    BAND = int(min(max(int(np.max(ends - starts + 1)), 1), H))
    band_start = np.clip(starts, 0, H - BAND).astype(np.int64)

    ah = np.zeros((NRO, ORT, BAND), np.float32)
    rr = np.arange(ORT)
    l0 = i0.reshape(NRO, ORT) - band_start[:, None]
    l1 = i1.reshape(NRO, ORT) - band_start[:, None]
    w0t = w0.reshape(NRO, ORT)
    w1t = w1.reshape(NRO, ORT)
    for r in range(NRO):
        ah[r, rr, l0[r]] += w0t[r]
        ah[r, rr, l1[r]] += w1t[r]
    ah = jnp.asarray(ah)

    j0, j1, v0, v1 = _bilinear_taps(W, OW)
    a_w = np.zeros((OW, W), np.float32)
    cc = np.arange(OW)
    a_w[cc, j0] += v0
    a_w[cc, j1] += v1
    a_wt = jnp.asarray(np.ascontiguousarray(a_w.T))

    # Banded x rows, gathered once (input-sized, cheap relative to the output).
    row_idx = band_start[:, None] + np.arange(BAND)[None, :]   # (NRO, BAND)
    xb = jnp.transpose(x[:, :, row_idx, :], (0, 2, 1, 3, 4))   # (B,NRO,3,BAND,W)

    return pl.pallas_call(
        _residual_kernel,
        out_shape=jax.ShapeDtypeStruct((B, C, OH, OW), jnp.float32),
        grid=(B, NRO),
        in_specs=[
            pl.BlockSpec((1, C, ORT, OW), lambda b, r: (b, 0, r, 0)),
            pl.BlockSpec((1, 1, C, BAND, W), lambda b, r: (b, r, 0, 0, 0)),
            pl.BlockSpec((1, ORT, BAND), lambda b, r: (r, 0, 0)),
            pl.BlockSpec((W, OW), lambda b, r: (0, 0)),
        ],
        out_specs=pl.BlockSpec((1, C, ORT, OW), lambda b, r: (b, 0, r, 0)),
        compiler_params=pltpu.CompilerParams(
            dimension_semantics=("parallel", "parallel"),
            vmem_limit_bytes=vmem_limit),
    )(ps, xb, ah, a_wt)


# ----------------------------------------------------------------------------
# Glue: pixel (un)shuffle, parameter init, forward.
# ----------------------------------------------------------------------------
def pixel_unshuffle_nchw(x, r):
    B, C, H, W = x.shape
    x = x.reshape(B, C, H // r, r, W // r, r)
    x = jnp.transpose(x, (0, 1, 3, 5, 2, 4))
    return x.reshape(B, C * r * r, H // r, W // r)


def init_params(key, upscale=3):
    ds = 2
    dims = [(3 * ds * ds, _NUM_FEAT), (_NUM_FEAT, _NUM_FEAT),
            (_NUM_FEAT, _NUM_FEAT), (_NUM_FEAT, 3 * (upscale * ds) ** 2)]
    params = {}
    keys = jax.random.split(key, 2 * len(dims))
    for i, (ci, co) in enumerate(dims):
        params[f"w{i}"] = 0.05 * jax.random.normal(
            keys[2 * i], (3, 3, ci, co), jnp.float32)      # HWIO
        params[f"b{i}"] = 0.01 * jax.random.normal(
            keys[2 * i + 1], (co,), jnp.float32)
    return params


def repnet_forward(x, params, upscale=3):
    # The conv inputs run on the MXU in bf16 (f32 accumulation); expect small
    # (~1e-3 relative) deviation from the PyTorch f32 reference.
    assert upscale == 3, "this kernel implements the default upscale=3 graph"
    B, C, H, W = x.shape
    ds = 2
    r_up = upscale * ds
    H2, W2 = H // ds, W // ds
    OH, OW = upscale * H, upscale * W
    vmem_limit = _vmem_limit_bytes()

    # PixelUnshuffle(2) -> NHWC bf16 (channels on the lane axis for the convs).
    feat = pixel_unshuffle_nchw(x, ds)                   # (B, 12, H2, W2)
    feat = jnp.transpose(feat, (0, 2, 3, 1)).astype(jnp.bfloat16)

    # Fused 4-layer conv body (single Pallas kernel, VMEM-resident, bf16 out).
    feat = conv_body(feat, params, vmem_limit)           # (B, H2p, W2, 128)

    # PixelShuffle(6) as an XLA relayout on the bf16 intermediate (half the
    # bytes of an f32 shuffle).  TODO(synk): fold this (w,j)->lane interleave
    # into the Pallas kernels once Mosaic lowers that relayout reliably; that
    # would remove two more output-sized HBM passes.
    t = feat[:, :H2, :, :_C_LAST].reshape(B, H2, W2, 3, r_up, r_up)
    ps = jnp.transpose(t, (0, 3, 1, 4, 2, 5)).reshape(B, 3, OH, OW)

    # Bilinear residual (F.interpolate, mode='bilinear', align_corners=False)
    # + add, band-tiled over output rows in the second Pallas kernel.
    return residual_add(x, ps, vmem_limit)


if __name__ == "__main__":
    key = jax.random.PRNGKey(0)
    k_x, k_p = jax.random.split(key)
    B, C, H, W = 2, 3, 16, 16
    x = jax.random.normal(k_x, (B, C, H, W), jnp.float32)
    params = init_params(k_p, upscale=3)

    out = jax.jit(functools.partial(repnet_forward, upscale=3))(x, params)
    out = jax.block_until_ready(out)
    assert out.shape == (B, C, 3 * H, 3 * W), out.shape
    assert out.dtype == jnp.float32
    print("KERNEL_OK")
</pallas_src>

<mosaic_0001>
module attributes {stable_mosaic.version = 11 : i64} {
  func.func @_conv_body_kernel(%arg0: i32, %arg1: i32, %arg2: memref<1x1x16x8x12xbf16, #tpu.memory_space<vmem>>, %arg3: memref<108x32xbf16, #tpu.memory_space<vmem>>, %arg4: memref<1x32xf32, #tpu.memory_space<vmem>>, %arg5: memref<288x32xbf16, #tpu.memory_space<vmem>>, %arg6: memref<1x32xf32, #tpu.memory_space<vmem>>, %arg7: memref<288x32xbf16, #tpu.memory_space<vmem>>, %arg8: memref<1x32xf32, #tpu.memory_space<vmem>>, %arg9: memref<288x128xbf16, #tpu.memory_space<vmem>>, %arg10: memref<1x128xf32, #tpu.memory_space<vmem>>, %arg11: memref<1x8x8x128xbf16, #tpu.memory_space<vmem>>, %arg12: memref<16x25x32xbf16, #tpu.memory_space<vmem>>) attributes {dimension_semantics = [#tpu.dimension_semantics<parallel>, #tpu.dimension_semantics<parallel>], iteration_bounds = array<i64: 2, 1>, scalar_prefetch = 0 : i64, scratch_operands = 1 : i64, tpu.core_type = #tpu.core_type<tc>, window_params = [{transform_indices = @transform_0, window_bounds = array<i64: 1, 1, 16, 8, 12>}, {pipeline_mode = #tpu.pipeline_mode<synchronous>, transform_indices = @transform_1, window_bounds = array<i64: 108, 32>}, {pipeline_mode = #tpu.pipeline_mode<synchronous>, transform_indices = @transform_2, window_bounds = array<i64: 1, 32>}, {pipeline_mode = #tpu.pipeline_mode<synchronous>, transform_indices = @transform_3, window_bounds = array<i64: 288, 32>}, {pipeline_mode = #tpu.pipeline_mode<synchronous>, transform_indices = @transform_4, window_bounds = array<i64: 1, 32>}, {pipeline_mode = #tpu.pipeline_mode<synchronous>, transform_indices = @transform_5, window_bounds = array<i64: 288, 32>}, {pipeline_mode = #tpu.pipeline_mode<synchronous>, transform_indices = @transform_6, window_bounds = array<i64: 1, 32>}, {pipeline_mode = #tpu.pipeline_mode<synchronous>, transform_indices = @transform_7, window_bounds = array<i64: 288, 128>}, {pipeline_mode = #tpu.pipeline_mode<synchronous>, transform_indices = @transform_8, window_bounds = array<i64: 1, 128>}, {transform_indices = @transform_9, window_bounds = array<i64: 1, 8, 8, 128>}]} {
    %cst = arith.constant 0.000000e+00 : bf16
    %0 = vector.broadcast %cst : bf16 to vector<16x1x32xbf16>
    %c0 = arith.constant 0 : index
    %c15 = arith.constant 15 : index
    %c0_0 = arith.constant 0 : index
    %1 = vector.load %arg12[%c0, %c15, %c0_0] : memref<16x25x32xbf16, #tpu.memory_space<vmem>>, vector<16x1x32xbf16>
    tpu.vector_store %arg12[%c0, %c15, %c0_0], %0 {strides = array<i32>} : memref<16x25x32xbf16, #tpu.memory_space<vmem>>, vector<16x1x32xbf16>,
    %c0_1 = arith.constant 0 : index
    %c24 = arith.constant 24 : index
    %c0_2 = arith.constant 0 : index
    %2 = vector.load %arg12[%c0_1, %c24, %c0_2] : memref<16x25x32xbf16, #tpu.memory_space<vmem>>, vector<16x1x32xbf16>
    tpu.vector_store %arg12[%c0_1, %c24, %c0_2], %0 {strides = array<i32>} : memref<16x25x32xbf16, #tpu.memory_space<vmem>>, vector<16x1x32xbf16>,
    %c0_3 = arith.constant 0 : index
    %c0_4 = arith.constant 0 : index
    %c0_5 = arith.constant 0 : index
    %c0_6 = arith.constant 0 : index
    %c0_7 = arith.constant 0 : index
    %3 = vector.load %arg2[%c0_3, %c0_4, %c0_5, %c0_6, %c0_7] : memref<1x1x16x8x12xbf16, #tpu.memory_space<vmem>>, vector<1x1x16x8x12xbf16>
    %4 = vector.shape_cast %3 : vector<1x1x16x8x12xbf16> to vector<16x8x12xbf16>
    %c0_8 = arith.constant 0 : index
    %c16 = arith.constant 16 : index
    %c0_9 = arith.constant 0 : index
    %5 = vector.load %arg12[%c0_8, %c16, %c0_9] : memref<16x25x32xbf16, #tpu.memory_space<vmem>>, vector<16x8x12xbf16>
    tpu.vector_store %arg12[%c0_8, %c16, %c0_9], %4 {strides = array<i32>} : memref<16x25x32xbf16, #tpu.memory_space<vmem>>, vector<16x8x12xbf16>,
    %c0_10 = arith.constant 0 : index
    %c15_11 = arith.constant 15 : index
    %c0_12 = arith.constant 0 : index
    %6 = vector.load %arg12[%c0_10, %c15_11, %c0_12] : memref<16x25x32xbf16, #tpu.memory_space<vmem>>, vector<14x8x12xbf16>
    %7 = vector.shape_cast %6 : vector<14x8x12xbf16> to vector<112x12xbf16>
    %c0_13 = arith.constant 0 : index
    %c16_14 = arith.constant 16 : index
    %c0_15 = arith.constant 0 : index
    %8 = vector.load %arg12[%c0_13, %c16_14, %c0_15] : memref<16x25x32xbf16, #tpu.memory_space<vmem>>, vector<14x8x12xbf16>
    %9 = vector.shape_cast %8 : vector<14x8x12xbf16> to vector<112x12xbf16>
    %c0_16 = arith.constant 0 : index
    %c17 = arith.constant 17 : index
    %c0_17 = arith.constant 0 : index
    %10 = vector.load %arg12[%c0_16, %c17, %c0_17] : memref<16x25x32xbf16, #tpu.memory_space<vmem>>, vector<14x8x12xbf16>
    %11 = vector.shape_cast %10 : vector<14x8x12xbf16> to vector<112x12xbf16>
    %c1 = arith.constant 1 : index
    %c15_18 = arith.constant 15 : index
    %c0_19 = arith.constant 0 : index
    %12 = vector.load %arg12[%c1, %c15_18, %c0_19] : memref<16x25x32xbf16, #tpu.memory_space<vmem>>, vector<14x8x12xbf16>
    %13 = vector.shape_cast %12 : vector<14x8x12xbf16> to vector<112x12xbf16>
    %c1_20 = arith.constant 1 : index
    %c16_21 = arith.constant 16 : index
    %c0_22 = arith.constant 0 : index
    %14 = vector.load %arg12[%c1_20, %c16_21, %c0_22] : memref<16x25x32xbf16, #tpu.memory_space<vmem>>, vector<14x8x12xbf16>
    %15 = vector.shape_cast %14 : vector<14x8x12xbf16> to vector<112x12xbf16>
    %c1_23 = arith.constant 1 : index
    %c17_24 = arith.constant 17 : index
    %c0_25 = arith.constant 0 : index
    %16 = vector.load %arg12[%c1_23, %c17_24, %c0_25] : memref<16x25x32xbf16, #tpu.memory_space<vmem>>, vector<14x8x12xbf16>
    %17 = vector.shape_cast %16 : vector<14x8x12xbf16> to vector<112x12xbf16>
    %c2 = arith.constant 2 : index
    %c15_26 = arith.constant 15 : index
    %c0_27 = arith.constant 0 : index
    %18 = vector.load %arg12[%c2, %c15_26, %c0_27] : memref<16x25x32xbf16, #tpu.memory_space<vmem>>, vector<14x8x12xbf16>
    %19 = vector.shape_cast %18 : vector<14x8x12xbf16> to vector<112x12xbf16>
    %c2_28 = arith.constant 2 : index
    %c16_29 = arith.constant 16 : index
    %c0_30 = arith.constant 0 : index
    %20 = vector.load %arg12[%c2_28, %c16_29, %c0_30] : memref<16x25x32xbf16, #tpu.memory_space<vmem>>, vector<14x8x12xbf16>
    %21 = vector.shape_cast %20 : vector<14x8x12xbf16> to vector<112x12xbf16>
    %c2_31 = arith.constant 2 : index
    %c17_32 = arith.constant 17 : index
    %c0_33 = arith.constant 0 : index
    %22 = vector.load %arg12[%c2_31, %c17_32, %c0_33] : memref<16x25x32xbf16, #tpu.memory_space<vmem>>, vector<14x8x12xbf16>
    %23 = vector.shape_cast %22 : vector<14x8x12xbf16> to vector<112x12xbf16>
    %24 = tpu.concatenate %7, %9, %11, %13, %15, %17, %19, %21, %23 in 1 : vector<112x12xbf16>, vector<112x12xbf16>, vector<112x12xbf16>, vector<112x12xbf16>, vector<112x12xbf16>, vector<112x12xbf16>, vector<112x12xbf16>, vector<112x12xbf16>, vector<112x12xbf16> -> vector<112x108xbf16>
    %c0_34 = arith.constant 0 : index
    %c0_35 = arith.constant 0 : index
    %25 = vector.load %arg3[%c0_34, %c0_35] : memref<108x32xbf16, #tpu.memory_space<vmem>>, vector<108x32xbf16>
    %cst_36 = arith.constant dense<0.000000e+00> : vector<112x32xf32>
    %26 = tpu.matmul %24, %25, %cst_36 {dimension_numbers = #tpu.dot_dimension_numbers<[1], [0], [0], [1], [0, 0, 1, 1], [], []>} : vector<112x108xbf16>, vector<108x32xbf16>, vector<112x32xf32> -> vector<112x32xf32>
    %c0_37 = arith.constant 0 : index
    %c0_38 = arith.constant 0 : index
    %27 = vector.load %arg4[%c0_37, %c0_38] : memref<1x32xf32, #tpu.memory_space<vmem>>, vector<1x32xf32>
    %28 = vector.broadcast %27 : vector<1x32xf32> to vector<112x32xf32>
    %29 = arith.addf %26, %28 : vector<112x32xf32>
    %cst_39 = arith.constant 0.000000e+00 : f32
    %30 = vector.broadcast %cst_39 : f32 to vector<112x32xf32>
    %31 = arith.cmpf oge, %29, %30 : vector<112x32xf32>
    %cst_40 = arith.constant 1.000000e-01 : f32
    %32 = vector.broadcast %cst_40 : f32 to vector<112x32xf32>
    %33 = arith.mulf %32, %29 : vector<112x32xf32>
    %34 = arith.select %31, %29, %33 : vector<112x32xi1>, vector<112x32xf32>
    %35 = vector.shape_cast %34 : vector<112x32xf32> to vector<14x8x32xf32>
    %36 = arith.truncf %35 : vector<14x8x32xf32> to vector<14x8x32xbf16>
    %c1_41 = arith.constant 1 : index
    %c16_42 = arith.constant 16 : index
    %c0_43 = arith.constant 0 : index
    %37 = vector.load %arg12[%c1_41, %c16_42, %c0_43] : memref<16x25x32xbf16, #tpu.memory_space<vmem>>, vector<14x8x32xbf16>
    tpu.vector_store %arg12[%c1_41, %c16_42, %c0_43], %36 {strides = array<i32>} : memref<16x25x32xbf16, #tpu.memory_space<vmem>>, vector<14x8x32xbf16>,
    %c1_44 = arith.constant 1 : index
    %c15_45 = arith.constant 15 : index
    %c0_46 = arith.constant 0 : index
    %38 = vector.load %arg12[%c1_44, %c15_45, %c0_46] : memref<16x25x32xbf16, #tpu.memory_space<vmem>>, vector<12x8x32xbf16>
    %39 = vector.shape_cast %38 : vector<12x8x32xbf16> to vector<96x32xbf16>
    %c1_47 = arith.constant 1 : index
    %c16_48 = arith.constant 16 : index
    %c0_49 = arith.constant 0 : index
    %40 = vector.load %arg12[%c1_47, %c16_48, %c0_49] : memref<16x25x32xbf16, #tpu.memory_space<vmem>>, vector<12x8x32xbf16>
    %41 = vector.shape_cast %40 : vector<12x8x32xbf16> to vector<96x32xbf16>
    %c1_50 = arith.constant 1 : index
    %c17_51 = arith.constant 17 : index
    %c0_52 = arith.constant 0 : index
    %42 = vector.load %arg12[%c1_50, %c17_51, %c0_52] : memref<16x25x32xbf16, #tpu.memory_space<vmem>>, vector<12x8x32xbf16>
    %43 = vector.shape_cast %42 : vector<12x8x32xbf16> to vector<96x32xbf16>
    %c2_53 = arith.constant 2 : index
    %c15_54 = arith.constant 15 : index
    %c0_55 = arith.constant 0 : index
    %44 = vector.load %arg12[%c2_53, %c15_54, %c0_55] : memref<16x25x32xbf16, #tpu.memory_space<vmem>>, vector<12x8x32xbf16>
    %45 = vector.shape_cast %44 : vector<12x8x32xbf16> to vector<96x32xbf16>
    %c2_56 = arith.constant 2 : index
    %c16_57 = arith.constant 16 : index
    %c0_58 = arith.constant 0 : index
    %46 = vector.load %arg12[%c2_56, %c16_57, %c0_58] : memref<16x25x32xbf16, #tpu.memory_space<vmem>>, vector<12x8x32xbf16>
    %47 = vector.shape_cast %46 : vector<12x8x32xbf16> to vector<96x32xbf16>
    %c2_59 = arith.constant 2 : index
    %c17_60 = arith.constant 17 : index
    %c0_61 = arith.constant 0 : index
    %48 = vector.load %arg12[%c2_59, %c17_60, %c0_61] : memref<16x25x32xbf16, #tpu.memory_space<vmem>>, vector<12x8x32xbf16>
    %49 = vector.shape_cast %48 : vector<12x8x32xbf16> to vector<96x32xbf16>
    %c3 = arith.constant 3 : index
    %c15_62 = arith.constant 15 : index
    %c0_63 = arith.constant 0 : index
    %50 = vector.load %arg12[%c3, %c15_62, %c0_63] : memref<16x25x32xbf16, #tpu.memory_space<vmem>>, vector<12x8x32xbf16>
    %51 = vector.shape_cast %50 : vector<12x8x32xbf16> to vector<96x32xbf16>
    %c3_64 = arith.constant 3 : index
    %c16_65 = arith.constant 16 : index
    %c0_66 = arith.constant 0 : index
    %52 = vector.load %arg12[%c3_64, %c16_65, %c0_66] : memref<16x25x32xbf16, #tpu.memory_space<vmem>>, vector<12x8x32xbf16>
    %53 = vector.shape_cast %52 : vector<12x8x32xbf16> to vector<96x32xbf16>
    %c3_67 = arith.constant 3 : index
    %c17_68 = arith.constant 17 : index
    %c0_69 = arith.constant 0 : index
    %54 = vector.load %arg12[%c3_67, %c17_68, %c0_69] : memref<16x25x32xbf16, #tpu.memory_space<vmem>>, vector<12x8x32xbf16>
    %55 = vector.shape_cast %54 : vector<12x8x32xbf16> to vector<96x32xbf16>
    %56 = tpu.concatenate %39, %41, %43, %45, %47, %49, %51, %53, %55 in 1 : vector<96x32xbf16>, vector<96x32xbf16>, vector<96x32xbf16>, vector<96x32xbf16>, vector<96x32xbf16>, vector<96x32xbf16>, vector<96x32xbf16>, vector<96x32xbf16>, vector<96x32xbf16> -> vector<96x288xbf16>
    %c0_70 = arith.constant 0 : index
    %c0_71 = arith.constant 0 : index
    %57 = vector.load %arg5[%c0_70, %c0_71] : memref<288x32xbf16, #tpu.memory_space<vmem>>, vector<288x32xbf16>
    %cst_72 = arith.constant dense<0.000000e+00> : vector<96x32xf32>
    %58 = tpu.matmul %56, %57, %cst_72 {dimension_numbers = #tpu.dot_dimension_numbers<[1], [0], [0], [1], [0, 0, 1, 1], [], []>} : vector<96x288xbf16>, vector<288x32xbf16>, vector<96x32xf32> -> vector<96x32xf32>
    %c0_73 = arith.constant 0 : index
    %c0_74 = arith.constant 0 : index
    %59 = vector.load %arg6[%c0_73, %c0_74] : memref<1x32xf32, #tpu.memory_space<vmem>>, vector<1x32xf32>
    %60 = vector.broadcast %59 : vector<1x32xf32> to vector<96x32xf32>
    %61 = arith.addf %58, %60 : vector<96x32xf32>
    %cst_75 = arith.constant 0.000000e+00 : f32
    %62 = vector.broadcast %cst_75 : f32 to vector<96x32xf32>
    %63 = arith.cmpf oge, %61, %62 : vector<96x32xf32>
    %cst_76 = arith.constant 1.000000e-01 : f32
    %64 = vector.broadcast %cst_76 : f32 to vector<96x32xf32>
    %65 = arith.mulf %64, %61 : vector<96x32xf32>
    %66 = arith.select %63, %61, %65 : vector<96x32xi1>, vector<96x32xf32>
    %67 = vector.shape_cast %66 : vector<96x32xf32> to vector<12x8x32xf32>
    %68 = arith.truncf %67 : vector<12x8x32xf32> to vector<12x8x32xbf16>
    %c2_77 = arith.constant 2 : index
    %c16_78 = arith.constant 16 : index
    %c0_79 = arith.constant 0 : index
    %69 = vector.load %arg12[%c2_77, %c16_78, %c0_79] : memref<16x25x32xbf16, #tpu.memory_space<vmem>>, vector<12x8x32xbf16>
    tpu.vector_store %arg12[%c2_77, %c16_78, %c0_79], %68 {strides = array<i32>} : memref<16x25x32xbf16, #tpu.memory_space<vmem>>, vector<12x8x32xbf16>,
    %c2_80 = arith.constant 2 : index
    %c15_81 = arith.constant 15 : index
    %c0_82 = arith.constant 0 : index
    %70 = vector.load %arg12[%c2_80, %c15_81, %c0_82] : memref<16x25x32xbf16, #tpu.memory_space<vmem>>, vector<10x8x32xbf16>
    %71 = vector.shape_cast %70 : vector<10x8x32xbf16> to vector<80x32xbf16>
    %c2_83 = arith.constant 2 : index
    %c16_84 = arith.constant 16 : index
    %c0_85 = arith.constant 0 : index
    %72 = vector.load %arg12[%c2_83, %c16_84, %c0_85] : memref<16x25x32xbf16, #tpu.memory_space<vmem>>, vector<10x8x32xbf16>
    %73 = vector.shape_cast %72 : vector<10x8x32xbf16> to vector<80x32xbf16>
    %c2_86 = arith.constant 2 : index
    %c17_87 = arith.constant 17 : index
    %c0_88 = arith.constant 0 : index
    %74 = vector.load %arg12[%c2_86, %c17_87, %c0_88] : memref<16x25x32xbf16, #tpu.memory_space<vmem>>, vector<10x8x32xbf16>
    %75 = vector.shape_cast %74 : vector<10x8x32xbf16> to vector<80x32xbf16>
    %c3_89 = arith.constant 3 : index
    %c15_90 = arith.constant 15 : index
    %c0_91 = arith.constant 0 : index
    %76 = vector.load %arg12[%c3_89, %c15_90, %c0_91] : memref<16x25x32xbf16, #tpu.memory_space<vmem>>, vector<10x8x32xbf16>
    %77 = vector.shape_cast %76 : vector<10x8x32xbf16> to vector<80x32xbf16>
    %c3_92 = arith.constant 3 : index
    %c16_93 = arith.constant 16 : index
    %c0_94 = arith.constant 0 : index
    %78 = vector.load %arg12[%c3_92, %c16_93, %c0_94] : memref<16x25x32xbf16, #tpu.memory_space<vmem>>, vector<10x8x32xbf16>
    %79 = vector.shape_cast %78 : vector<10x8x32xbf16> to vector<80x32xbf16>
    %c3_95 = arith.constant 3 : index
    %c17_96 = arith.constant 17 : index
    %c0_97 = arith.constant 0 : index
    %80 = vector.load %arg12[%c3_95, %c17_96, %c0_97] : memref<16x25x32xbf16, #tpu.memory_space<vmem>>, vector<10x8x32xbf16>
    %81 = vector.shape_cast %80 : vector<10x8x32xbf16> to vector<80x32xbf16>
    %c4 = arith.constant 4 : index
    %c15_98 = arith.constant 15 : index
    %c0_99 = arith.constant 0 : index
    %82 = vector.load %arg12[%c4, %c15_98, %c0_99] : memref<16x25x32xbf16, #tpu.memory_space<vmem>>, vector<10x8x32xbf16>
    %83 = vector.shape_cast %82 : vector<10x8x32xbf16> to vector<80x32xbf16>
    %c4_100 = arith.constant 4 : index
    %c16_101 = arith.constant 16 : index
    %c0_102 = arith.constant 0 : index
    %84 = vector.load %arg12[%c4_100, %c16_101, %c0_102] : memref<16x25x32xbf16, #tpu.memory_space<vmem>>, vector<10x8x32xbf16>
    %85 = vector.shape_cast %84 : vector<10x8x32xbf16> to vector<80x32xbf16>
    %c4_103 = arith.constant 4 : index
    %c17_104 = arith.constant 17 : index
    %c0_105 = arith.constant 0 : index
    %86 = vector.load %arg12[%c4_103, %c17_104, %c0_105] : memref<16x25x32xbf16, #tpu.memory_space<vmem>>, vector<10x8x32xbf16>
    %87 = vector.shape_cast %86 : vector<10x8x32xbf16> to vector<80x32xbf16>
    %88 = tpu.concatenate %71, %73, %75, %77, %79, %81, %83, %85, %87 in 1 : vector<80x32xbf16>, vector<80x32xbf16>, vector<80x32xbf16>, vector<80x32xbf16>, vector<80x32xbf16>, vector<80x32xbf16>, vector<80x32xbf16>, vector<80x32xbf16>, vector<80x32xbf16> -> vector<80x288xbf16>
    %c0_106 = arith.constant 0 : index
    %c0_107 = arith.constant 0 : index
    %89 = vector.load %arg7[%c0_106, %c0_107] : memref<288x32xbf16, #tpu.memory_space<vmem>>, vector<288x32xbf16>
    %cst_108 = arith.constant dense<0.000000e+00> : vector<80x32xf32>
    %90 = tpu.matmul %88, %89, %cst_108 {dimension_numbers = #tpu.dot_dimension_numbers<[1], [0], [0], [1], [0, 0, 1, 1], [], []>} : vector<80x288xbf16>, vector<288x32xbf16>, vector<80x32xf32> -> vector<80x32xf32>
    %c0_109 = arith.constant 0 : index
    %c0_110 = arith.constant 0 : index
    %91 = vector.load %arg8[%c0_109, %c0_110] : memref<1x32xf32, #tpu.memory_space<vmem>>, vector<1x32xf32>
    %92 = vector.broadcast %91 : vector<1x32xf32> to vector<80x32xf32>
    %93 = arith.addf %90, %92 : vector<80x32xf32>
    %cst_111 = arith.constant 0.000000e+00 : f32
    %94 = vector.broadcast %cst_111 : f32 to vector<80x32xf32>
    %95 = arith.cmpf oge, %93, %94 : vector<80x32xf32>
    %cst_112 = arith.constant 1.000000e-01 : f32
    %96 = vector.broadcast %cst_112 : f32 to vector<80x32xf32>
    %97 = arith.mulf %96, %93 : vector<80x32xf32>
    %98 = arith.select %95, %93, %97 : vector<80x32xi1>, vector<80x32xf32>
    %99 = vector.shape_cast %98 : vector<80x32xf32> to vector<10x8x32xf32>
    %100 = arith.truncf %99 : vector<10x8x32xf32> to vector<10x8x32xbf16>
    %c3_113 = arith.constant 3 : index
    %c16_114 = arith.constant 16 : index
    %c0_115 = arith.constant 0 : index
    %101 = vector.load %arg12[%c3_113, %c16_114, %c0_115] : memref<16x25x32xbf16, #tpu.memory_space<vmem>>, vector<10x8x32xbf16>
    tpu.vector_store %arg12[%c3_113, %c16_114, %c0_115], %100 {strides = array<i32>} : memref<16x25x32xbf16, #tpu.memory_space<vmem>>, vector<10x8x32xbf16>,
    %c3_116 = arith.constant 3 : index
    %c15_117 = arith.constant 15 : index
    %c0_118 = arith.constant 0 : index
    %102 = vector.load %arg12[%c3_116, %c15_117, %c0_118] : memref<16x25x32xbf16, #tpu.memory_space<vmem>>, vector<8x8x32xbf16>
    %103 = vector.shape_cast %102 : vector<8x8x32xbf16> to vector<64x32xbf16>
    %c3_119 = arith.constant 3 : index
    %c16_120 = arith.constant 16 : index
    %c0_121 = arith.constant 0 : index
    %104 = vector.load %arg12[%c3_119, %c16_120, %c0_121] : memref<16x25x32xbf16, #tpu.memory_space<vmem>>, vector<8x8x32xbf16>
    %105 = vector.shape_cast %104 : vector<8x8x32xbf16> to vector<64x32xbf16>
    %c3_122 = arith.constant 3 : index
    %c17_123 = arith.constant 17 : index
    %c0_124 = arith.constant 0 : index
    %106 = vector.load %arg12[%c3_122, %c17_123, %c0_124] : memref<16x25x32xbf16, #tpu.memory_space<vmem>>, vector<8x8x32xbf16>
    %107 = vector.shape_cast %106 : vector<8x8x32xbf16> to vector<64x32xbf16>
    %c4_125 = arith.constant 4 : index
    %c15_126 = arith.constant 15 : index
    %c0_127 = arith.constant 0 : index
    %108 = vector.load %arg12[%c4_125, %c15_126, %c0_127] : memref<16x25x32xbf16, #tpu.memory_space<vmem>>, vector<8x8x32xbf16>
    %109 = vector.shape_cast %108 : vector<8x8x32xbf16> to vector<64x32xbf16>
    %c4_128 = arith.constant 4 : index
    %c16_129 = arith.constant 16 : index
    %c0_130 = arith.constant 0 : index
    %110 = vector.load %arg12[%c4_128, %c16_129, %c0_130] : memref<16x25x32xbf16, #tpu.memory_space<vmem>>, vector<8x8x32xbf16>
    %111 = vector.shape_cast %110 : vector<8x8x32xbf16> to vector<64x32xbf16>
    %c4_131 = arith.constant 4 : index
    %c17_132 = arith.constant 17 : index
    %c0_133 = arith.constant 0 : index
    %112 = vector.load %arg12[%c4_131, %c17_132, %c0_133] : memref<16x25x32xbf16, #tpu.memory_space<vmem>>, vector<8x8x32xbf16>
    %113 = vector.shape_cast %112 : vector<8x8x32xbf16> to vector<64x32xbf16>
    %c5 = arith.constant 5 : index
    %c15_134 = arith.constant 15 : index
    %c0_135 = arith.constant 0 : index
    %114 = vector.load %arg12[%c5, %c15_134, %c0_135] : memref<16x25x32xbf16, #tpu.memory_space<vmem>>, vector<8x8x32xbf16>
    %115 = vector.shape_cast %114 : vector<8x8x32xbf16> to vector<64x32xbf16>
    %c5_136 = arith.constant 5 : index
    %c16_137 = arith.constant 16 : index
    %c0_138 = arith.constant 0 : index
    %116 = vector.load %arg12[%c5_136, %c16_137, %c0_138] : memref<16x25x32xbf16, #tpu.memory_space<vmem>>, vector<8x8x32xbf16>
    %117 = vector.shape_cast %116 : vector<8x8x32xbf16> to vector<64x32xbf16>
    %c5_139 = arith.constant 5 : index
    %c17_140 = arith.constant 17 : index
    %c0_141 = arith.constant 0 : index
    %118 = vector.load %arg12[%c5_139, %c17_140, %c0_141] : memref<16x25x32xbf16, #tpu.memory_space<vmem>>, vector<8x8x32xbf16>
    %119 = vector.shape_cast %118 : vector<8x8x32xbf16> to vector<64x32xbf16>
    %120 = tpu.concatenate %103, %105, %107, %109, %111, %113, %115, %117, %119 in 1 : vector<64x32xbf16>, vector<64x32xbf16>, vector<64x32xbf16>, vector<64x32xbf16>, vector<64x32xbf16>, vector<64x32xbf16>, vector<64x32xbf16>, vector<64x32xbf16>, vector<64x32xbf16> -> vector<64x288xbf16>
    %c0_142 = arith.constant 0 : index
    %c0_143 = arith.constant 0 : index
    %121 = vector.load %arg9[%c0_142, %c0_143] : memref<288x128xbf16, #tpu.memory_space<vmem>>, vector<288x128xbf16>
    %cst_144 = arith.constant dense<0.000000e+00> : vector<64x128xf32>
    %122 = tpu.matmul %120, %121, %cst_144 {dimension_numbers = #tpu.dot_dimension_numbers<[1], [0], [0], [1], [0, 0, 1, 1], [], []>} : vector<64x288xbf16>, vector<288x128xbf16>, vector<64x128xf32> -> vector<64x128xf32>
    %c0_145 = arith.constant 0 : index
    %c0_146 = arith.constant 0 : index
    %123 = vector.load %arg10[%c0_145, %c0_146] : memref<1x128xf32, #tpu.memory_space<vmem>>, vector<1x128xf32>
    %124 = vector.broadcast %123 : vector<1x128xf32> to vector<64x128xf32>
    %125 = arith.addf %122, %124 : vector<64x128xf32>
    %126 = vector.shape_cast %125 : vector<64x128xf32> to vector<8x8x128xf32>
    %127 = arith.truncf %126 : vector<8x8x128xf32> to vector<8x8x128xbf16>
    %c0_147 = arith.constant 0 : index
    %c0_148 = arith.constant 0 : index
    %c0_149 = arith.constant 0 : index
    %c0_150 = arith.constant 0 : index
    %128 = vector.load %arg11[%c0_147, %c0_148, %c0_149, %c0_150] : memref<1x8x8x128xbf16, #tpu.memory_space<vmem>>, vector<1x8x8x128xbf16>
    %129 = vector.shape_cast %128 : vector<1x8x8x128xbf16> to vector<8x8x128xbf16>
    %130 = vector.shape_cast %127 : vector<8x8x128xbf16> to vector<1x8x8x128xbf16>
    tpu.vector_store %arg11[%c0_147, %c0_148, %c0_149, %c0_150], %130 {strides = array<i32>} : memref<1x8x8x128xbf16, #tpu.memory_space<vmem>>, vector<1x8x8x128xbf16>,
    return
  }
  func.func @transform_0(%arg0: i32, %arg1: i32) -> (i32, i32, i32, i32, i32) {
    %c0_i32 = arith.constant 0 : i32
    %c0_i32_0 = arith.constant 0 : i32
    %c0_i32_1 = arith.constant 0 : i32
    %c0_i32_2 = arith.constant 0 : i32
    return %arg0, %arg1, %c0_i32, %c0_i32_0, %c0_i32_1 : i32, i32, i32, i32, i32
  }
  func.func @transform_1(%arg0: i32, %arg1: i32) -> (i32, i32) {
    %c0_i32 = arith.constant 0 : i32
    %c0_i32_0 = arith.constant 0 : i32
    %c0_i32_1 = arith.constant 0 : i32
    return %c0_i32, %c0_i32_0 : i32, i32
  }
  func.func @transform_2(%arg0: i32, %arg1: i32) -> (i32, i32) {
    %c0_i32 = arith.constant 0 : i32
    %c0_i32_0 = arith.constant 0 : i32
    %c0_i32_1 = arith.constant 0 : i32
    return %c0_i32, %c0_i32_0 : i32, i32
  }
  func.func @transform_3(%arg0: i32, %arg1: i32) -> (i32, i32) {
    %c0_i32 = arith.constant 0 : i32
    %c0_i32_0 = arith.constant 0 : i32
    %c0_i32_1 = arith.constant 0 : i32
    return %c0_i32, %c0_i32_0 : i32, i32
  }
  func.func @transform_4(%arg0: i32, %arg1: i32) -> (i32, i32) {
    %c0_i32 = arith.constant 0 : i32
    %c0_i32_0 = arith.constant 0 : i32
    %c0_i32_1 = arith.constant 0 : i32
    return %c0_i32, %c0_i32_0 : i32, i32
  }
  func.func @transform_5(%arg0: i32, %arg1: i32) -> (i32, i32) {
    %c0_i32 = arith.constant 0 : i32
    %c0_i32_0 = arith.constant 0 : i32
    %c0_i32_1 = arith.constant 0 : i32
    return %c0_i32, %c0_i32_0 : i32, i32
  }
  func.func @transform_6(%arg0: i32, %arg1: i32) -> (i32, i32) {
    %c0_i32 = arith.constant 0 : i32
    %c0_i32_0 = arith.constant 0 : i32
    %c0_i32_1 = arith.constant 0 : i32
    return %c0_i32, %c0_i32_0 : i32, i32
  }
  func.func @transform_7(%arg0: i32, %arg1: i32) -> (i32, i32) {
    %c0_i32 = arith.constant 0 : i32
    %c0_i32_0 = arith.constant 0 : i32
    %c0_i32_1 = arith.constant 0 : i32
    return %c0_i32, %c0_i32_0 : i32, i32
  }
  func.func @transform_8(%arg0: i32, %arg1: i32) -> (i32, i32) {
    %c0_i32 = arith.constant 0 : i32
    %c0_i32_0 = arith.constant 0 : i32
    %c0_i32_1 = arith.constant 0 : i32
    return %c0_i32, %c0_i32_0 : i32, i32
  }
  func.func @transform_9(%arg0: i32, %arg1: i32) -> (i32, i32, i32, i32) {
    %c0_i32 = arith.constant 0 : i32
    %c0_i32_0 = arith.constant 0 : i32
    %c0_i32_1 = arith.constant 0 : i32
    return %arg0, %arg1, %c0_i32, %c0_i32_0 : i32, i32, i32, i32
  }
}

module attributes {stable_mosaic.version = 11 : i64} {
  func.func @_residual_kernel(%arg0: i32, %arg1: i32, %arg2: memref<1x3x48x48xbf16, #tpu.memory_space<vmem>>, %arg3: memref<1x1x3x16x16xf32, #tpu.memory_space<vmem>>, %arg4: memref<1x48x16xf32, #tpu.memory_space<vmem>>, %arg5: memref<16x48xf32, #tpu.memory_space<vmem>>, %arg6: memref<1x3x48x48xf32, #tpu.memory_space<vmem>>) attributes {dimension_semantics = [#tpu.dimension_semantics<parallel>, #tpu.dimension_semantics<parallel>], iteration_bounds = array<i64: 2, 1>, scalar_prefetch = 0 : i64, scratch_operands = 0 : i64, tpu.core_type = #tpu.core_type<tc>, window_params = [{transform_indices = @transform_0, window_bounds = array<i64: 1, 3, 48, 48>}, {transform_indices = @transform_1, window_bounds = array<i64: 1, 1, 3, 16, 16>}, {transform_indices = @transform_2, window_bounds = array<i64: 1, 48, 16>}, {pipeline_mode = #tpu.pipeline_mode<synchronous>, transform_indices = @transform_3, window_bounds = array<i64: 16, 48>}, {transform_indices = @transform_4, window_bounds = array<i64: 1, 3, 48, 48>}]} {
    %c0 = arith.constant 0 : index
    %c0_0 = arith.constant 0 : index
    %c0_1 = arith.constant 0 : index
    %0 = vector.load %arg4[%c0, %c0_0, %c0_1] : memref<1x48x16xf32, #tpu.memory_space<vmem>>, vector<1x48x16xf32>
    %1 = vector.shape_cast %0 : vector<1x48x16xf32> to vector<48x16xf32>
    %c0_2 = arith.constant 0 : index
    %c0_3 = arith.constant 0 : index
    %2 = vector.load %arg5[%c0_2, %c0_3] : memref<16x48xf32, #tpu.memory_space<vmem>>, vector<16x48xf32>
    %c0_4 = arith.constant 0 : index
    %c0_5 = arith.constant 0 : index
    %c0_6 = arith.constant 0 : index
    %c0_7 = arith.constant 0 : index
    %c0_8 = arith.constant 0 : index
    %3 = vector.load %arg3[%c0_4, %c0_5, %c0_6, %c0_7, %c0_8] : memref<1x1x3x16x16xf32, #tpu.memory_space<vmem>>, vector<1x1x1x16x16xf32>
    %4 = vector.shape_cast %3 : vector<1x1x1x16x16xf32> to vector<16x16xf32>
    %cst = arith.constant dense<0.000000e+00> : vector<16x48xf32>
    %5 = tpu.matmul %4, %2, %cst {dimension_numbers = #tpu.dot_dimension_numbers<[1], [0], [0], [1], [0, 0, 1, 1], [], []>} : vector<16x16xf32>, vector<16x48xf32>, vector<16x48xf32> -> vector<16x48xf32>
    %cst_9 = arith.constant dense<0.000000e+00> : vector<48x48xf32>
    %6 = tpu.matmul %1, %5, %cst_9 {dimension_numbers = #tpu.dot_dimension_numbers<[1], [0], [0], [1], [0, 0, 1, 1], [], []>} : vector<48x16xf32>, vector<16x48xf32>, vector<48x48xf32> -> vector<48x48xf32>
    %c0_10 = arith.constant 0 : index
    %c0_11 = arith.constant 0 : index
    %c0_12 = arith.constant 0 : index
    %c0_13 = arith.constant 0 : index
    %7 = vector.load %arg2[%c0_10, %c0_11, %c0_12, %c0_13] : memref<1x3x48x48xbf16, #tpu.memory_space<vmem>>, vector<1x1x48x48xbf16>
    %8 = vector.shape_cast %7 : vector<1x1x48x48xbf16> to vector<48x48xbf16>
    %9 = arith.extf %8 : vector<48x48xbf16> to vector<48x48xf32>
    %10 = arith.addf %9, %6 : vector<48x48xf32>
    %c0_14 = arith.constant 0 : index
    %c0_15 = arith.constant 0 : index
    %c0_16 = arith.constant 0 : index
    %c0_17 = arith.constant 0 : index
    %11 = vector.load %arg6[%c0_14, %c0_15, %c0_16, %c0_17] : memref<1x3x48x48xf32, #tpu.memory_space<vmem>>, vector<1x1x48x48xf32>
    %12 = vector.shape_cast %11 : vector<1x1x48x48xf32> to vector<48x48xf32>
    %13 = vector.shape_cast %10 : vector<48x48xf32> to vector<1x1x48x48xf32>
    tpu.vector_store %arg6[%c0_14, %c0_15, %c0_16, %c0_17], %13 {strides = array<i32>} : memref<1x3x48x48xf32, #tpu.memory_space<vmem>>, vector<1x1x48x48xf32>,
    %c0_18 = arith.constant 0 : index
    %c0_19 = arith.constant 0 : index
    %c1 = arith.constant 1 : index
    %c0_20 = arith.constant 0 : index
    %c0_21 = arith.constant 0 : index
    %14 = vector.load %arg3[%c0_18, %c0_19, %c1, %c0_20, %c0_21] : memref<1x1x3x16x16xf32, #tpu.memory_space<vmem>>, vector<1x1x1x16x16xf32>
    %15 = vector.shape_cast %14 : vector<1x1x1x16x16xf32> to vector<16x16xf32>
    %cst_22 = arith.constant dense<0.000000e+00> : vector<16x48xf32>
    %16 = tpu.matmul %15, %2, %cst_22 {dimension_numbers = #tpu.dot_dimension_numbers<[1], [0], [0], [1], [0, 0, 1, 1], [], []>} : vector<16x16xf32>, vector<16x48xf32>, vector<16x48xf32> -> vector<16x48xf32>
    %cst_23 = arith.constant dense<0.000000e+00> : vector<48x48xf32>
    %17 = tpu.matmul %1, %16, %cst_23 {dimension_numbers = #tpu.dot_dimension_numbers<[1], [0], [0], [1], [0, 0, 1, 1], [], []>} : vector<48x16xf32>, vector<16x48xf32>, vector<48x48xf32> -> vector<48x48xf32>
    %c0_24 = arith.constant 0 : index
    %c1_25 = arith.constant 1 : index
    %c0_26 = arith.constant 0 : index
    %c0_27 = arith.constant 0 : index
    %18 = vector.load %arg2[%c0_24, %c1_25, %c0_26, %c0_27] : memref<1x3x48x48xbf16, #tpu.memory_space<vmem>>, vector<1x1x48x48xbf16>
    %19 = vector.shape_cast %18 : vector<1x1x48x48xbf16> to vector<48x48xbf16>
    %20 = arith.extf %19 : vector<48x48xbf16> to vector<48x48xf32>
    %21 = arith.addf %20, %17 : vector<48x48xf32>
    %c0_28 = arith.constant 0 : index
    %c1_29 = arith.constant 1 : index
    %c0_30 = arith.constant 0 : index
    %c0_31 = arith.constant 0 : index
    %22 = vector.load %arg6[%c0_28, %c1_29, %c0_30, %c0_31] : memref<1x3x48x48xf32, #tpu.memory_space<vmem>>, vector<1x1x48x48xf32>
    %23 = vector.shape_cast %22 : vector<1x1x48x48xf32> to vector<48x48xf32>
    %24 = vector.shape_cast %21 : vector<48x48xf32> to vector<1x1x48x48xf32>
    tpu.vector_store %arg6[%c0_28, %c1_29, %c0_30, %c0_31], %24 {strides = array<i32>} : memref<1x3x48x48xf32, #tpu.memory_space<vmem>>, vector<1x1x48x48xf32>,
    %c0_32 = arith.constant 0 : index
    %c0_33 = arith.constant 0 : index
    %c2 = arith.constant 2 : index
    %c0_34 = arith.constant 0 : index
    %c0_35 = arith.constant 0 : index
    %25 = vector.load %arg3[%c0_32, %c0_33, %c2, %c0_34, %c0_35] : memref<1x1x3x16x16xf32, #tpu.memory_space<vmem>>, vector<1x1x1x16x16xf32>
    %26 = vector.shape_cast %25 : vector<1x1x1x16x16xf32> to vector<16x16xf32>
    %cst_36 = arith.constant dense<0.000000e+00> : vector<16x48xf32>
    %27 = tpu.matmul %26, %2, %cst_36 {dimension_numbers = #tpu.dot_dimension_numbers<[1], [0], [0], [1], [0, 0, 1, 1], [], []>} : vector<16x16xf32>, vector<16x48xf32>, vector<16x48xf32> -> vector<16x48xf32>
    %cst_37 = arith.constant dense<0.000000e+00> : vector<48x48xf32>
    %28 = tpu.matmul %1, %27, %cst_37 {dimension_numbers = #tpu.dot_dimension_numbers<[1], [0], [0], [1], [0, 0, 1, 1], [], []>} : vector<48x16xf32>, vector<16x48xf32>, vector<48x48xf32> -> vector<48x48xf32>
    %c0_38 = arith.constant 0 : index
    %c2_39 = arith.constant 2 : index
    %c0_40 = arith.constant 0 : index
    %c0_41 = arith.constant 0 : index
    %29 = vector.load %arg2[%c0_38, %c2_39, %c0_40, %c0_41] : memref<1x3x48x48xbf16, #tpu.memory_space<vmem>>, vector<1x1x48x48xbf16>
    %30 = vector.shape_cast %29 : vector<1x1x48x48xbf16> to vector<48x48xbf16>
    %31 = arith.extf %30 : vector<48x48xbf16> to vector<48x48xf32>
    %32 = arith.addf %31, %28 : vector<48x48xf32>
    %c0_42 = arith.constant 0 : index
    %c2_43 = arith.constant 2 : index
    %c0_44 = arith.constant 0 : index
    %c0_45 = arith.constant 0 : index
    %33 = vector.load %arg6[%c0_42, %c2_43, %c0_44, %c0_45] : memref<1x3x48x48xf32, #tpu.memory_space<vmem>>, vector<1x1x48x48xf32>
    %34 = vector.shape_cast %33 : vector<1x1x48x48xf32> to vector<48x48xf32>
    %35 = vector.shape_cast %32 : vector<48x48xf32> to vector<1x1x48x48xf32>
    tpu.vector_store %arg6[%c0_42, %c2_43, %c0_44, %c0_45], %35 {strides = array<i32>} : memref<1x3x48x48xf32, #tpu.memory_space<vmem>>, vector<1x1x48x48xf32>,
    return
  }
  func.func @transform_0(%arg0: i32, %arg1: i32) -> (i32, i32, i32, i32) {
    %c0_i32 = arith.constant 0 : i32
    %c0_i32_0 = arith.constant 0 : i32
    %c0_i32_1 = arith.constant 0 : i32
    return %arg0, %c0_i32, %arg1, %c0_i32_0 : i32, i32, i32, i32
  }
  func.func @transform_1(%arg0: i32, %arg1: i32) -> (i32, i32, i32, i32, i32) {
    %c0_i32 = arith.constant 0 : i32
    %c0_i32_0 = arith.constant 0 : i32
    %c0_i32_1 = arith.constant 0 : i32
    %c0_i32_2 = arith.constant 0 : i32
    return %arg0, %arg1, %c0_i32, %c0_i32_0, %c0_i32_1 : i32, i32, i32, i32, i32
  }
  func.func @transform_2(%arg0: i32, %arg1: i32) -> (i32, i32, i32) {
    %c0_i32 = arith.constant 0 : i32
    %c0_i32_0 = arith.constant 0 : i32
    %c0_i32_1 = arith.constant 0 : i32
    return %arg1, %c0_i32, %c0_i32_0 : i32, i32, i32
  }
  func.func @transform_3(%arg0: i32, %arg1: i32) -> (i32, i32) {
    %c0_i32 = arith.constant 0 : i32
    %c0_i32_0 = arith.constant 0 : i32
    %c0_i32_1 = arith.constant 0 : i32
    return %c0_i32, %c0_i32_0 : i32, i32
  }
  func.func @transform_4(%arg0: i32, %arg1: i32) -> (i32, i32, i32, i32) {
    %c0_i32 = arith.constant 0 : i32
    %c0_i32_0 = arith.constant 0 : i32
    %c0_i32_1 = arith.constant 0 : i32
    return %arg0, %c0_i32, %arg1, %c0_i32_0 : i32, i32, i32, i32
  }
}

</mosaic_0001>

<llo_original>
// kernel: repnet_forward.3
$region0: #{repnet_forward.3}
  #allocation0 [shape = 'u32[]', space=smem, size = 0x4, offset = 0x4, fixed_abs, tag = 'smem constant byte address 0x4 - core index']
  #allocation1 [shape = 'u32[144,128]{1,0:T(1,128)}', space=vmem, size = 0x12000, scoped, tag = 'internal scratch']
  %s0 = inlined_call_operand.vmem [shape: bf16[2,3,48,48], index: 0, kind: input, shape index: {}]
  %s1 = inlined_call_operand.vmem [shape: f32[2,1,3,16,16], index: 1, kind: input, shape index: {}]
  %s2 = inlined_call_operand.vmem [shape: f32[1,48,16], index: 2, kind: input, shape index: {}]
  %s3 = inlined_call_operand.vmem [shape: f32[16,48], index: 3, kind: input, shape index: {}]
  %s4 = inlined_call_operand.hbm [shape: f32[2,3,48,48], index: 4, kind: output, shape index: {}]
  %s5 = sld [smem:[#allocation0]]
  $region49: #{repnet_forward.3} parent=0
    _
  %s7 = ssub.s32 1, %s5
  %s8 = scalar_select 0, %s7, %s5
  $region1: #{repnet_forward.3} parent=0
    #allocation2 [shape = 'u8[147456]{0}', space=vmem, size = 0x24000, scoped, tag = 'output window, operand 0']
    #allocation3 [shape = 's32[2]{0}', space=sflag, size = 0x8, scoped, tag = 'scoped memory for repnet_forward.3']
    %9 = vsyncpa [#allocation3], 0
    %s10 = scalar_lea.sflag [#allocation3], 1
    %11 = vsyncpa %s10, 0
    loop: start=0, step=1, limit=4
    $region2: #{repnet_forward.3} parent=1 // loop_pre_header
      _
    $region3: #{repnet_forward.3} parent=1 // loop_header
      %s13 = sphi 0, %s17
      %p14 = scmp.ge.s32.totalorder %s13, 4
      %s20 = sphi 0, %s32
      %s21 = sphi 0, %s28
      %s22 = sphi 0, %s20
      %s23 = sphi 0, %s21
      %s24 = sphi 0, %s22
      %s25 = sphi 0, %s23
      %s37 = sphi 0, %s39
      %s40 = sphi 0, %s37
      %s41 = sphi 0, %s40
      %s57 = sphi 0, %s41
      %s65 = sphi 0, %s67
      %s68 = sphi 0, %s65
      %s69 = sphi 0, %s68
      %s85 = sphi 0, %s69
      %s91 = sphi 0, %s93
      %s94 = sphi 0, %s91
      %s95 = sphi 0, %s94
      %s111 = sphi 0, %s95
      %s115 = sphi 0, %s115
      %s117 = sphi 0, %s115
      %s118 = sphi 0, %s117
      %s132 = sphi 0, %s118
      %s140 = sphi 0, %s142
      %s143 = sphi 0, %s140
      %s144 = sphi 0, %s143
      %s160 = sphi 0, %s144
    $region4: #{repnet_forward.3} parent=1 // loop_header_branch
      %16 = sbr.rel (%p14) target = $region8
    $region5: #{repnet_forward.3} parent=1 // loop_body
      %s18 = ssub.s32 %s13, 1
      %s19 = ssub.s32 %s13, 2
      %s26 = sadd.s32 1, %s21
      %p27 = scmp.ge.s32.totalorder %s26, 1
      %s28 = scalar_select %p27, 0, %s26
      %s29 = sadd.s32 1, %s20
      %s30 = scalar_select %p27, %s29, %s20
      %p31 = scmp.ge.s32.totalorder %s30, 2
      %s32 = scalar_select %p31, 0, %s30
      %s33 = ssub.s32 %s20, %s32
      %s34 = ssub.s32 %s21, %s28
      %s35 = sor.u32 %s33, %s34
      %p36 = scmp.eq.s32.totalorder %s35, 0
      %s38 = sadd.s32 %s37, 1
      %s39 = scalar_select %p36, %s37, %s38
      %p42 = pneg %p36
      %p43 = scmp.eq.s32.totalorder %s13, 1
      %p44 = por %p42, %p43
      %p45 = scmp.ne.s32.totalorder %s37, %s40
      %p46 = scmp.eq.s32.totalorder %s13, 0
      %p47 = por %p45, %p46
      %p48 = scmp.ne.s32.totalorder %s37, %s40
      %p49 = scmp.eq.s32.totalorder %s18, 1
      %p50 = por %p48, %p49
      %p51 = scmp.ne.s32.totalorder %s40, %s41
      %p52 = scmp.eq.s32.totalorder %s18, 0
      %p53 = por %p51, %p52
      %p54 = scmp.ne.s32.totalorder %s40, %s41
      %p55 = scmp.eq.s32.totalorder %s19, 1
      %p56 = por %p54, %p55
      %p58 = scmp.ne.s32.totalorder %s41, %s57
      %p59 = scmp.eq.s32.totalorder %s19, 0
      %p60 = por %p58, %p59
      %s61 = ssub.s32 %s20, %s32
      %s62 = ssub.s32 %s21, %s28
      %s63 = sor.u32 %s61, %s62
      %p64 = scmp.eq.s32.totalorder %s63, 0
      %s66 = sadd.s32 %s65, 1
      %s67 = scalar_select %p64, %s65, %s66
      %p70 = pneg %p64
      %p71 = scmp.eq.s32.totalorder %s13, 1
      %p72 = por %p70, %p71
      %p73 = scmp.ne.s32.totalorder %s65, %s68
      %p74 = scmp.eq.s32.totalorder %s13, 0
      %p75 = por %p73, %p74
      %p76 = scmp.ne.s32.totalorder %s65, %s68
      %p77 = scmp.eq.s32.totalorder %s18, 1
      %p78 = por %p76, %p77
      %p79 = scmp.ne.s32.totalorder %s68, %s69
      %p80 = scmp.eq.s32.totalorder %s18, 0
      %p81 = por %p79, %p80
      %p82 = scmp.ne.s32.totalorder %s68, %s69
      %p83 = scmp.eq.s32.totalorder %s19, 1
      %p84 = por %p82, %p83
      %p86 = scmp.ne.s32.totalorder %s69, %s85
      %p87 = scmp.eq.s32.totalorder %s19, 0
      %p88 = por %p86, %p87
      %s89 = ssub.s32 %s21, %s28
      %p90 = scmp.eq.s32.totalorder %s89, 0
      %s92 = sadd.s32 %s91, 1
      %s93 = scalar_select %p90, %s91, %s92
      %p96 = pneg %p90
      %p97 = scmp.eq.s32.totalorder %s13, 1
      %p98 = por %p96, %p97
      %p99 = scmp.ne.s32.totalorder %s91, %s94
      %p100 = scmp.eq.s32.totalorder %s13, 0
      %p101 = por %p99, %p100
      %p102 = scmp.ne.s32.totalorder %s91, %s94
      %p103 = scmp.eq.s32.totalorder %s18, 1
      %p104 = por %p102, %p103
      %p105 = scmp.ne.s32.totalorder %s94, %s95
      %p106 = scmp.eq.s32.totalorder %s18, 0
      %p107 = por %p105, %p106
      %p108 = scmp.ne.s32.totalorder %s94, %s95
      %p109 = scmp.eq.s32.totalorder %s19, 1
      %p110 = por %p108, %p109
      %p112 = scmp.ne.s32.totalorder %s95, %s111
      %p113 = scmp.eq.s32.totalorder %s19, 0
      %p114 = por %p112, %p113
      %s116 = sadd.s32 %s115, 1
      %p119 = scmp.eq.s32.totalorder %s13, 1
      %p120 = scmp.ne.s32.totalorder %s115, %s117
      %p121 = scmp.eq.s32.totalorder %s13, 0
      %p122 = por %p120, %p121
      %p123 = scmp.ne.s32.totalorder %s115, %s117
      %p124 = scmp.eq.s32.totalorder %s18, 1
      %p125 = por %p123, %p124
      %p126 = scmp.ne.s32.totalorder %s117, %s118
      %p127 = scmp.eq.s32.totalorder %s18, 0
      %p128 = por %p126, %p127
      %p129 = scmp.ne.s32.totalorder %s117, %s118
      %p130 = scmp.eq.s32.totalorder %s19, 1
      %p131 = por %p129, %p130
      %p133 = scmp.ne.s32.totalorder %s118, %s132
      %p134 = scmp.eq.s32.totalorder %s19, 0
      %p135 = por %p133, %p134
      %s136 = ssub.s32 %s20, %s32
      %s137 = ssub.s32 %s21, %s28
      %s138 = sor.u32 %s136, %s137
      %p139 = scmp.eq.s32.totalorder %s138, 0
      %s141 = sadd.s32 %s140, 1
      %s142 = scalar_select %p139, %s140, %s141
      %p145 = pneg %p139
      %p146 = scmp.eq.s32.totalorder %s13, 1
      %p147 = por %p145, %p146
      %p148 = scmp.ne.s32.totalorder %s140, %s143
      %p149 = scmp.eq.s32.totalorder %s13, 0
      %p150 = por %p148, %p149
      %p151 = scmp.ne.s32.totalorder %s140, %s143
      %p152 = scmp.eq.s32.totalorder %s18, 1
      %p153 = por %p151, %p152
      %p154 = scmp.ne.s32.totalorder %s143, %s144
      %p155 = scmp.eq.s32.totalorder %s18, 0
      %p156 = por %p154, %p155
      %p157 = scmp.ne.s32.totalorder %s143, %s144
      %p158 = scmp.eq.s32.totalorder %s19, 1
      %p159 = por %p157, %p158
      %p161 = scmp.ne.s32.totalorder %s144, %s160
      %p162 = scmp.eq.s32.totalorder %s19, 0
      %p163 = por %p161, %p162
      %p164 = scmp.le.s32.totalorder 1, %s13
      %p165 = scmp.lt.s32.totalorder %s13, 3
      %p166 = pnand %p164, %p165
      %p167 = pneg %p166
      // Predicated region
      $region9: #{repnet_forward.3} parent=5 // pred_check
        _
      $region10: #{repnet_forward.3} parent=5 // pred_check_branch
        %169 = sbr.rel (%p166) target = $region12
      $region11: #{repnet_forward.3} parent=5 // pred_region
        %s170 = ssub.s32 %s13, 1
        // Predicated region
        $region13: #{repnet_forward.3} parent=11 // pred_check
          %p171 = pneg %p107
        $region14: #{repnet_forward.3} parent=11 // pred_check_branch
          %173 = sbr.rel (%p171) target = $region16
        $region15: #{repnet_forward.3} parent=11 // pred_region
          %p174 = scmp.lt.s32.totalorder %s23, 0
          %s175 = scalar_select %p174, %s23, 0
          %s176 = smul.addr %s175, 6
          %s177 = smul.addr %s176, 8
          %s178 = scalar_lea.vmem %s2, %s177
        $region16: #{repnet_forward.3} parent=11 // pred_fallthru
          _
        // Predicated region
        $region17: #{repnet_forward.3} parent=11 // pred_check
          %p179 = pneg %p128
        $region18: #{repnet_forward.3} parent=11 // pred_check_branch
          %181 = sbr.rel (%p179) target = $region20
        $region19: #{repnet_forward.3} parent=11 // pred_region
          _
        $region20: #{repnet_forward.3} parent=11 // pred_fallthru
          _
      $region12: #{repnet_forward.3} parent=5 // pred_fallthru
        _
      %p182 = scmp.lt.s32.totalorder %s13, 2
      // Predicated region
      $region21: #{repnet_forward.3} parent=5 // pred_check
        %p183 = pneg %p182
      $region22: #{repnet_forward.3} parent=5 // pred_check_branch
        %185 = sbr.rel (%p183) target = $region24
      $region23: #{repnet_forward.3} parent=5 // pred_region
        // Predicated region
        $region25: #{repnet_forward.3} parent=23 // pred_check
          %p186 = pneg %p47
        $region26: #{repnet_forward.3} parent=23 // pred_check_branch
          %188 = sbr.rel (%p186) target = $region28
        $region27: #{repnet_forward.3} parent=23 // pred_region
          %s189 = smul.u32 6, %s21
          %p190 = scmp.lt.s32.totalorder %s20, 1
          %s191 = scalar_select %p190, %s20, 1
          %p192 = scmp.lt.s32.totalorder %s189, 5
          %s193 = scalar_select %p192, %s189, 5
          %s194 = smul.addr %s191, 18
          %s195 = sadd.s32 %s193, %s194
          %s196 = smul.addr %s195, 4
          %s197 = scalar_lea.vmem %s0, %s196
          %s198 = smul.u32 6, %s21
        $region28: #{repnet_forward.3} parent=23 // pred_fallthru
          _
        // Predicated region
        $region29: #{repnet_forward.3} parent=23 // pred_check
          %p199 = pneg %p75
        $region30: #{repnet_forward.3} parent=23 // pred_check_branch
          %201 = sbr.rel (%p199) target = $region32
        $region31: #{repnet_forward.3} parent=23 // pred_region
          %p202 = scmp.lt.s32.totalorder %s20, 1
          %s203 = scalar_select %p202, %s20, 1
          %p204 = scmp.lt.s32.totalorder %s21, 0
          %s205 = scalar_select %p204, %s21, 0
          %s206 = smul.addr %s205, 6
          %s207 = smul.addr %s203, 6
          %s208 = sadd.s32 %s206, %s207
          %s209 = smul.addr %s208, 8
          %s210 = scalar_lea.vmem %s1, %s209
        $region32: #{repnet_forward.3} parent=23 // pred_fallthru
          _
      $region24: #{repnet_forward.3} parent=5 // pred_fallthru
        _
      %p211 = scmp.le.s32.totalorder 1, %s13
      %p212 = scmp.lt.s32.totalorder %s13, 3
      %p213 = pnand %p211, %p212
      %p214 = pneg %p213
      // Predicated region
      $region33: #{repnet_forward.3} parent=5 // pred_check
        _
      $region34: #{repnet_forward.3} parent=5 // pred_check_branch
        %216 = sbr.rel (%p213) target = $region36
      $region35: #{repnet_forward.3} parent=5 // pred_region
        %s217 = ssub.s32 %s13, 1
        %s218 = smul.u32 6, %s23
        %p219 = scmp.lt.s32.totalorder %s22, 1
        %s220 = scalar_select %p219, %s22, 1
        %p221 = scmp.lt.s32.totalorder %s218, 5
        %s222 = scalar_select %p221, %s218, 5
        %s223 = smul.addr %s220, 18
        %s224 = sadd.s32 %s222, %s223
        %s225 = smul.addr %s224, 4
        %s226 = scalar_lea.vmem %s0, %s225
        %p227 = pneg %p53
        %p228 = pneg %p50
        %p229 = scmp.lt.s32.totalorder %s22, 1
        %s230 = scalar_select %p229, %s22, 1
        %p231 = scmp.lt.s32.totalorder %s23, 0
        %s232 = scalar_select %p231, %s23, 0
        %s233 = smul.addr %s232, 6
        %s234 = smul.addr %s230, 6
        %s235 = sadd.s32 %s233, %s234
        %s236 = smul.addr %s235, 8
        %s237 = scalar_lea.vmem %s1, %s236
        %p238 = pneg %p81
        %p239 = pneg %p78
        %p240 = scmp.lt.s32.totalorder %s23, 0
        %s241 = scalar_select %p240, %s23, 0
        %s242 = smul.addr %s241, 6
        %s243 = smul.addr %s242, 8
        %s244 = scalar_lea.vmem %s2, %s243
        %p245 = pneg %p107
        %p246 = pneg %p104
        %p247 = pneg %p128
        %p248 = pneg %p125
        %p249 = pneg %p156
        %p250 = pneg %p153
        %s251 = sand.u32 %s143, 1
        %s252 = scalar_lea.sflag [#allocation3], %s251
        %s253 = sand.u32 %s143, 1
        %s254 = smul.addr %s253, 144
        %s255 = scalar_lea.vmem [#allocation2], %s254
        %s256 = smul.u32 6, %s23
        %p257 = scmp.lt.s32.totalorder %s22, 1
        %s258 = scalar_select %p257, %s22, 1
        %p259 = scmp.lt.s32.totalorder %s256, 5
        %s260 = scalar_select %p259, %s256, 5
        %s261 = smul.addr %s258, 18
        %s262 = sadd.s32 %s260, %s261
        %s263 = smul.addr %s262, 4
        %s264 = scalar_lea.vmem %s0, %s263
        %s265 = smul.u32 6, %s23
        %p266 = scmp.lt.s32.totalorder %s22, 1
        %s267 = scalar_select %p266, %s22, 1
        %p268 = scmp.lt.s32.totalorder %s23, 0
        %s269 = scalar_select %p268, %s23, 0
        %s270 = smul.addr %s269, 6
        %s271 = smul.addr %s267, 6
        %s272 = sadd.s32 %s270, %s271
        %s273 = smul.addr %s272, 8
        %s274 = scalar_lea.vmem %s1, %s273
        %p275 = scmp.lt.s32.totalorder %s23, 0
        %s276 = scalar_select %p275, %s23, 0
        %s277 = smul.addr %s276, 6
        %s278 = smul.addr %s277, 8
        %s279 = scalar_lea.vmem %s2, %s278
        %s280 = smul.u32 6, %s23
        %v281 = vld [vmem:[%s279] sm:$0xff]
        %v282 = vld [vmem:[%s279 + $0x8] sm:$0xff]
        %v283 = vld [vmem:[%s279 + $0x10] sm:$0xff]
        %v284 = vld [vmem:[%s279 + $0x18] sm:$0xff]
        %v285 = vld [vmem:[%s279 + $0x20] sm:$0xff]
        %v286 = vld [vmem:[%s279 + $0x28] sm:$0xff]
        %v287 = vld [vmem:[%s3] sm:$0xff]
        %v288 = vld [vmem:[%s3 + $0x8] sm:$0xff]
        %v289 = vld [vmem:[%s274] sm:$0xff]
        %v290 = vld [vmem:[%s274 + $0x8] sm:$0xff]
        %vm291 = vcmask 130048
        %v293 = vsel %vm291, %v289, 0
        %v296 = vsel %vm291, %v290, 0
        %298 = vmatprep.subr.mxu0 0.0
        %299 = vmatpush1.msra.mxu0 %v287
        %300 = vmatprep.subr.mxu0 0.0
        %301 = vmatpush1.msra.mxu0 %v288
        %302 = vmatprep.subr.mxu0 0.0
        %303 = vmatpush1.msra.mxu0 0.0
        %304 = vmatprep.subr.mxu0 0.0
        %305 = vmatpush1.msra.mxu0 0.0
        %306 = vmatprep.subr.mxu0 0.0
        %307 = vmatpush1.msra.mxu0 0.0
        %308 = vmatprep.subr.mxu0 0.0
        %309 = vmatpush1.msra.mxu0 0.0
        %310 = vmatprep.subr.mxu0 0.0
        %311 = vmatpush1.msra.mxu0 0.0
        %312 = vmatprep.subr.mxu0 0.0
        %313 = vmatpush1.msra.mxu0 0.0
        %314 = vmatprep.subr.mxu0 0.0
        %315 = vmatpush1.msra.mxu0 0.0
        %316 = vmatprep.subr.mxu0 0.0
        %317 = vmatpush1.msra.mxu0 0.0
        %318 = vmatprep.subr.mxu0 0.0
        %319 = vmatpush1.msra.mxu0 0.0
        %320 = vmatprep.subr.mxu0 0.0
        %321 = vmatpush1.msra.mxu0 0.0
        %322 = vmatprep.subr.mxu0 0.0
        %323 = vmatpush1.msra.mxu0 0.0
        %324 = vmatprep.subr.mxu0 0.0
        %325 = vmatpush1.msra.mxu0 0.0
        %326 = vmatprep.subr.mxu0 0.0
        %327 = vmatpush1.msra.mxu0 0.0
        %328 = vmatprep.subr.mxu0 0.0
        %329 = vmatpush1.msra.mxu0 0.0
        %330 = vmatprep.subr.mxu0 0.0
        %331 = vmatpush1.msra.mxu0 0.0
        %332 = vmatprep.subr.mxu0 0.0
        %333 = vmatpush1.msra.mxu0 0.0
        %334 = vmatprep.subr.mxu0 0.0
        %335 = vmatpush1.msra.mxu0 0.0
        %336 = vmatprep.subr.mxu0 0.0
        %337 = vmatpush1.msra.mxu0 0.0
        %338 = vmatprep.subr.mxu0 0.0
        %339 = vmatpush1.msra.mxu0 0.0
        %340 = vmatprep.subr.mxu0 0.0
        %341 = vmatpush1.msra.mxu0 0.0
        %342 = vmatprep.subr.mxu0 0.0
        %343 = vmatpush1.msra.mxu0 0.0
        %344 = vmatprep.subr.mxu0 0.0
        %345 = vmatpush1.msra.mxu0 0.0
        %346 = vmatprep.subr.mxu0 0.0
        %347 = vmatpush1.msra.mxu0 0.0
        %348 = vmatprep.subr.mxu0 0.0
        %349 = vmatpush1.msra.mxu0 0.0
        %350 = vmatprep.subr.mxu0 0.0
        %351 = vmatpush1.msra.mxu0 0.0
        %352 = vmatprep.subr.mxu0 0.0
        %353 = vmatpush1.msra.mxu0 0.0
        %354 = vmatprep.subr.mxu0 0.0
        %355 = vmatpush1.msra.mxu0 0.0
        %356 = vmatprep.subr.mxu0 0.0
        %357 = vmatpush1.msra.mxu0 0.0
        %358 = vmatprep.subr.mxu0 0.0
        %359 = vmatpush1.msra.mxu0 0.0
        %360 = vmatprep.subr.mxu0 0.0
        %361 = vmatpush1.msra.mxu0 0.0
        %362 = vmatprep.mubr.f32.mxu0 0.0
        %363 = vmatmul.mubr.f32.gmra.mrb[0].mxu0 %v293
        %v364 = vpop.f32.mrb[0].mxu0
        %v365 = vadd.f32 0.0, %v364
        %v366 = vpop.f32.mrb[0].mxu0
        %367 = vmatprep.mubr.f32.mxu0 0.0
        %368 = vmatmul.mubr.f32.gmra.mrb[0].mxu0 %v296
        %v369 = vpop.f32.mrb[0].mxu0
        %v370 = vadd.f32 0.0, %v369
        %v371 = vpop.f32.mrb[0].mxu0
        %372 = vdwg.mxu0
        %v374 = vsel %vm291, %v281, 0
        %v377 = vsel %vm291, %v282, 0
        %v380 = vsel %vm291, %v283, 0
        %v383 = vsel %vm291, %v284, 0
        %v386 = vsel %vm291, %v285, 0
        %v389 = vsel %vm291, %v286, 0
        %391 = vmatprep.subr.mxu0 0.0
        %392 = vmatpush1.msra.mxu0 %v365
        %393 = vmatprep.subr.mxu0 0.0
        %394 = vmatpush1.msra.mxu0 %v370
        %395 = vmatprep.subr.mxu0 0.0
        %396 = vmatpush1.msra.mxu0 0.0
        %397 = vmatprep.subr.mxu0 0.0
        %398 = vmatpush1.msra.mxu0 0.0
        %399 = vmatprep.subr.mxu0 0.0
        %400 = vmatpush1.msra.mxu0 0.0
        %401 = vmatprep.subr.mxu0 0.0
        %402 = vmatpush1.msra.mxu0 0.0
        %403 = vmatprep.subr.mxu0 0.0
        %404 = vmatpush1.msra.mxu0 0.0
        %405 = vmatprep.subr.mxu0 0.0
        %406 = vmatpush1.msra.mxu0 0.0
        %407 = vmatprep.subr.mxu0 0.0
        %408 = vmatpush1.msra.mxu0 0.0
        %409 = vmatprep.subr.mxu0 0.0
        %410 = vmatpush1.msra.mxu0 0.0
        %411 = vmatprep.subr.mxu0 0.0
        %412 = vmatpush1.msra.mxu0 0.0
        %413 = vmatprep.subr.mxu0 0.0
        %414 = vmatpush1.msra.mxu0 0.0
        %415 = vmatprep.subr.mxu0 0.0
        %416 = vmatpush1.msra.mxu0 0.0
        %417 = vmatprep.subr.mxu0 0.0
        %418 = vmatpush1.msra.mxu0 0.0
        %419 = vmatprep.subr.mxu0 0.0
        %420 = vmatpush1.msra.mxu0 0.0
        %421 = vmatprep.subr.mxu0 0.0
        %422 = vmatpush1.msra.mxu0 0.0
        %423 = vmatprep.subr.mxu0 0.0
        %424 = vmatpush1.msra.mxu0 0.0
        %425 = vmatprep.subr.mxu0 0.0
        %426 = vmatpush1.msra.mxu0 0.0
        %427 = vmatprep.subr.mxu0 0.0
        %428 = vmatpush1.msra.mxu0 0.0
        %429 = vmatprep.subr.mxu0 0.0
        %430 = vmatpush1.msra.mxu0 0.0
        %431 = vmatprep.subr.mxu0 0.0
        %432 = vmatpush1.msra.mxu0 0.0
        %433 = vmatprep.subr.mxu0 0.0
        %434 = vmatpush1.msra.mxu0 0.0
        %435 = vmatprep.subr.mxu0 0.0
        %436 = vmatpush1.msra.mxu0 0.0
        %437 = vmatprep.subr.mxu0 0.0
        %438 = vmatpush1.msra.mxu0 0.0
        %439 = vmatprep.subr.mxu0 0.0
        %440 = vmatpush1.msra.mxu0 0.0
        %441 = vmatprep.subr.mxu0 0.0
        %442 = vmatpush1.msra.mxu0 0.0
        %443 = vmatprep.subr.mxu0 0.0
        %444 = vmatpush1.msra.mxu0 0.0
        %445 = vmatprep.subr.mxu0 0.0
        %446 = vmatpush1.msra.mxu0 0.0
        %447 = vmatprep.subr.mxu0 0.0
        %448 = vmatpush1.msra.mxu0 0.0
        %449 = vmatprep.subr.mxu0 0.0
        %450 = vmatpush1.msra.mxu0 0.0
        %451 = vmatprep.subr.mxu0 0.0
        %452 = vmatpush1.msra.mxu0 0.0
        %453 = vmatprep.subr.mxu0 0.0
        %454 = vmatpush1.msra.mxu0 0.0
        %455 = vmatprep.mubr.f32.mxu0 0.0
        %456 = vmatmul.mubr.f32.gmra.mrb[0].mxu0 %v374
        %v457 = vpop.f32.mrb[0].mxu0
        %v458 = vadd.f32 0.0, %v457
        %v459 = vpop.f32.mrb[0].mxu0
        %460 = vmatprep.mubr.f32.mxu0 0.0
        %461 = vmatmul.mubr.f32.gmra.mrb[0].mxu0 %v377
        %v462 = vpop.f32.mrb[0].mxu0
        %v463 = vadd.f32 0.0, %v462
        %v464 = vpop.f32.mrb[0].mxu0
        %465 = vmatprep.mubr.f32.mxu0 0.0
        %466 = vmatmul.mubr.f32.gmra.mrb[0].mxu0 %v380
        %v467 = vpop.f32.mrb[0].mxu0
        %v468 = vadd.f32 0.0, %v467
        %v469 = vpop.f32.mrb[0].mxu0
        %470 = vmatprep.mubr.f32.mxu0 0.0
        %471 = vmatmul.mubr.f32.gmra.mrb[0].mxu0 %v383
        %v472 = vpop.f32.mrb[0].mxu0
        %v473 = vadd.f32 0.0, %v472
        %v474 = vpop.f32.mrb[0].mxu0
        %475 = vmatprep.mubr.f32.mxu0 0.0
        %476 = vmatmul.mubr.f32.gmra.mrb[0].mxu0 %v386
        %v477 = vpop.f32.mrb[0].mxu0
        %v478 = vadd.f32 0.0, %v477
        %v479 = vpop.f32.mrb[0].mxu0
        %480 = vmatprep.mubr.f32.mxu0 0.0
        %481 = vmatmul.mubr.f32.gmra.mrb[0].mxu0 %v389
        %v482 = vpop.f32.mrb[0].mxu0
        %v483 = vadd.f32 0.0, %v482
        %v484 = vpop.f32.mrb[0].mxu0
        %485 = vdwg.mxu0
        %v486 = vld [vmem:[%s264] sm:$0xf]
        %v487 = vld [vmem:[%s264 + $0x4] sm:$0xf]
        %v488 = vld [vmem:[%s264 + $0x8] sm:$0xf]
        %v489 = vld [vmem:[%s264 + $0xc] sm:$0xf]
        %v490 = vld [vmem:[%s264 + $0x10] sm:$0xf]
        %v491 = vld [vmem:[%s264 + $0x14] sm:$0xf]
        %v492 = vunpack.c.l.bf16 %v486
        %v493 = vunpack.c.l.bf16 %v487
        %v494 = vunpack.c.l.bf16 %v488
        %v495 = vunpack.c.l.bf16 %v489
        %v496 = vunpack.c.l.bf16 %v490
        %v497 = vunpack.c.l.bf16 %v491
        %v498 = vadd.f32 %v492, %v458
        %v499 = vadd.f32 %v493, %v463
        %v500 = vadd.f32 %v494, %v468
        %v501 = vadd.f32 %v495, %v473
        %v502 = vadd.f32 %v496, %v478
        %v503 = vadd.f32 %v497, %v483
        %vm504 = vcmask 392192
        %505 = vst.msk [vmem:[%s255] sm:$0xff] %vm504, %v498
        %506 = vst.msk [vmem:[%s255 + $0x8] sm:$0xff] %vm504, %v499
        %507 = vst.msk [vmem:[%s255 + $0x10] sm:$0xff] %vm504, %v500
        %508 = vst.msk [vmem:[%s255 + $0x18] sm:$0xff] %vm504, %v501
        %509 = vst.msk [vmem:[%s255 + $0x20] sm:$0xff] %vm504, %v502
        %510 = vst.msk [vmem:[%s255 + $0x28] sm:$0xff] %vm504, %v503
        %s511 = scalar_lea.vmem %s274, 16
        %v512 = vld [vmem:[%s511] sm:$0xff]
        %v513 = vld [vmem:[%s511 + $0x8] sm:$0xff]
        %v515 = vsel %vm291, %v512, 0
        %v518 = vsel %vm291, %v513, 0
        %520 = vmatprep.subr.mxu0 0.0
        %521 = vmatpush1.msra.mxu0 %v287
        %522 = vmatprep.subr.mxu0 0.0
        %523 = vmatpush1.msra.mxu0 %v288
        %524 = vmatprep.subr.mxu0 0.0
        %525 = vmatpush1.msra.mxu0 0.0
        %526 = vmatprep.subr.mxu0 0.0
        %527 = vmatpush1.msra.mxu0 0.0
        %528 = vmatprep.subr.mxu0 0.0
        %529 = vmatpush1.msra.mxu0 0.0
        %530 = vmatprep.subr.mxu0 0.0
        %531 = vmatpush1.msra.mxu0 0.0
        %532 = vmatprep.subr.mxu0 0.0
        %533 = vmatpush1.msra.mxu0 0.0
        %534 = vmatprep.subr.mxu0 0.0
        %535 = vmatpush1.msra.mxu0 0.0
        %536 = vmatprep.subr.mxu0 0.0
        %537 = vmatpush1.msra.mxu0 0.0
        %538 = vmatprep.subr.mxu0 0.0
        %539 = vmatpush1.msra.mxu0 0.0
        %540 = vmatprep.subr.mxu0 0.0
        %541 = vmatpush1.msra.mxu0 0.0
        %542 = vmatprep.subr.mxu0 0.0
        %543 = vmatpush1.msra.mxu0 0.0
        %544 = vmatprep.subr.mxu0 0.0
        %545 = vmatpush1.msra.mxu0 0.0
        %546 = vmatprep.subr.mxu0 0.0
        %547 = vmatpush1.msra.mxu0 0.0
        %548 = vmatprep.subr.mxu0 0.0
        %549 = vmatpush1.msra.mxu0 0.0
        %550 = vmatprep.subr.mxu0 0.0
        %551 = vmatpush1.msra.mxu0 0.0
        %552 = vmatprep.subr.mxu0 0.0
        %553 = vmatpush1.msra.mxu0 0.0
        %554 = vmatprep.subr.mxu0 0.0
        %555 = vmatpush1.msra.mxu0 0.0
        %556 = vmatprep.subr.mxu0 0.0
        %557 = vmatpush1.msra.mxu0 0.0
        %558 = vmatprep.subr.mxu0 0.0
        %559 = vmatpush1.msra.mxu0 0.0
        %560 = vmatprep.subr.mxu0 0.0
        %561 = vmatpush1.msra.mxu0 0.0
        %562 = vmatprep.subr.mxu0 0.0
        %563 = vmatpush1.msra.mxu0 0.0
        %564 = vmatprep.subr.mxu0 0.0
        %565 = vmatpush1.msra.mxu0 0.0
        %566 = vmatprep.subr.mxu0 0.0
        %567 = vmatpush1.msra.mxu0 0.0
        %568 = vmatprep.subr.mxu0 0.0
        %569 = vmatpush1.msra.mxu0 0.0
        %570 = vmatprep.subr.mxu0 0.0
        %571 = vmatpush1.msra.mxu0 0.0
        %572 = vmatprep.subr.mxu0 0.0
        %573 = vmatpush1.msra.mxu0 0.0
        %574 = vmatprep.subr.mxu0 0.0
        %575 = vmatpush1.msra.mxu0 0.0
        %576 = vmatprep.subr.mxu0 0.0
        %577 = vmatpush1.msra.mxu0 0.0
        %578 = vmatprep.subr.mxu0 0.0
        %579 = vmatpush1.msra.mxu0 0.0
        %580 = vmatprep.subr.mxu0 0.0
        %581 = vmatpush1.msra.mxu0 0.0
        %582 = vmatprep.subr.mxu0 0.0
        %583 = vmatpush1.msra.mxu0 0.0
        %584 = vmatprep.mubr.f32.mxu0 0.0
        %585 = vmatmul.mubr.f32.gmra.mrb[0].mxu0 %v515
        %v586 = vpop.f32.mrb[0].mxu0
        %v587 = vadd.f32 0.0, %v586
        %v588 = vpop.f32.mrb[0].mxu0
        %589 = vmatprep.mubr.f32.mxu0 0.0
        %590 = vmatmul.mubr.f32.gmra.mrb[0].mxu0 %v518
        %v591 = vpop.f32.mrb[0].mxu0
        %v592 = vadd.f32 0.0, %v591
        %v593 = vpop.f32.mrb[0].mxu0
        %594 = vdwg.mxu0
        %595 = vmatprep.subr.mxu0 0.0
        %596 = vmatpush1.msra.mxu0 %v587
        %597 = vmatprep.subr.mxu0 0.0
        %598 = vmatpush1.msra.mxu0 %v592
        %599 = vmatprep.subr.mxu0 0.0
        %600 = vmatpush1.msra.mxu0 0.0
        %601 = vmatprep.subr.mxu0 0.0
        %602 = vmatpush1.msra.mxu0 0.0
        %603 = vmatprep.subr.mxu0 0.0
        %604 = vmatpush1.msra.mxu0 0.0
        %605 = vmatprep.subr.mxu0 0.0
        %606 = vmatpush1.msra.mxu0 0.0
        %607 = vmatprep.subr.mxu0 0.0
        %608 = vmatpush1.msra.mxu0 0.0
        %609 = vmatprep.subr.mxu0 0.0
        %610 = vmatpush1.msra.mxu0 0.0
        %611 = vmatprep.subr.mxu0 0.0
        %612 = vmatpush1.msra.mxu0 0.0
        %613 = vmatprep.subr.mxu0 0.0
        %614 = vmatpush1.msra.mxu0 0.0
        %615 = vmatprep.subr.mxu0 0.0
        %616 = vmatpush1.msra.mxu0 0.0
        %617 = vmatprep.subr.mxu0 0.0
        %618 = vmatpush1.msra.mxu0 0.0
        %619 = vmatprep.subr.mxu0 0.0
        %620 = vmatpush1.msra.mxu0 0.0
        %621 = vmatprep.subr.mxu0 0.0
        %622 = vmatpush1.msra.mxu0 0.0
        %623 = vmatprep.subr.mxu0 0.0
        %624 = vmatpush1.msra.mxu0 0.0
        %625 = vmatprep.subr.mxu0 0.0
        %626 = vmatpush1.msra.mxu0 0.0
        %627 = vmatprep.subr.mxu0 0.0
        %628 = vmatpush1.msra.mxu0 0.0
        %629 = vmatprep.subr.mxu0 0.0
        %630 = vmatpush1.msra.mxu0 0.0
        %631 = vmatprep.subr.mxu0 0.0
        %632 = vmatpush1.msra.mxu0 0.0
        %633 = vmatprep.subr.mxu0 0.0
        %634 = vmatpush1.msra.mxu0 0.0
        %635 = vmatprep.subr.mxu0 0.0
        %636 = vmatpush1.msra.mxu0 0.0
        %637 = vmatprep.subr.mxu0 0.0
        %638 = vmatpush1.msra.mxu0 0.0
        %639 = vmatprep.subr.mxu0 0.0
        %640 = vmatpush1.msra.mxu0 0.0
        %641 = vmatprep.subr.mxu0 0.0
        %642 = vmatpush1.msra.mxu0 0.0
        %643 = vmatprep.subr.mxu0 0.0
        %644 = vmatpush1.msra.mxu0 0.0
        %645 = vmatprep.subr.mxu0 0.0
        %646 = vmatpush1.msra.mxu0 0.0
        %647 = vmatprep.subr.mxu0 0.0
        %648 = vmatpush1.msra.mxu0 0.0
        %649 = vmatprep.subr.mxu0 0.0
        %650 = vmatpush1.msra.mxu0 0.0
        %651 = vmatprep.subr.mxu0 0.0
        %652 = vmatpush1.msra.mxu0 0.0
        %653 = vmatprep.subr.mxu0 0.0
        %654 = vmatpush1.msra.mxu0 0.0
        %655 = vmatprep.subr.mxu0 0.0
        %656 = vmatpush1.msra.mxu0 0.0
        %657 = vmatprep.subr.mxu0 0.0
        %658 = vmatpush1.msra.mxu0 0.0
        %659 = vmatprep.mubr.f32.mxu0 0.0
        %660 = vmatmul.mubr.f32.gmra.mrb[0].mxu0 %v374
        %v661 = vpop.f32.mrb[0].mxu0
        %v662 = vadd.f32 0.0, %v661
        %v663 = vpop.f32.mrb[0].mxu0
        %664 = vmatprep.mubr.f32.mxu0 0.0
        %665 = vmatmul.mubr.f32.gmra.mrb[0].mxu0 %v377
        %v666 = vpop.f32.mrb[0].mxu0
        %v667 = vadd.f32 0.0, %v666
        %v668 = vpop.f32.mrb[0].mxu0
        %669 = vmatprep.mubr.f32.mxu0 0.0
        %670 = vmatmul.mubr.f32.gmra.mrb[0].mxu0 %v380
        %v671 = vpop.f32.mrb[0].mxu0
        %v672 = vadd.f32 0.0, %v671
        %v673 = vpop.f32.mrb[0].mxu0
        %674 = vmatprep.mubr.f32.mxu0 0.0
        %675 = vmatmul.mubr.f32.gmra.mrb[0].mxu0 %v383
        %v676 = vpop.f32.mrb[0].mxu0
        %v677 = vadd.f32 0.0, %v676
        %v678 = vpop.f32.mrb[0].mxu0
        %679 = vmatprep.mubr.f32.mxu0 0.0
        %680 = vmatmul.mubr.f32.gmra.mrb[0].mxu0 %v386
        %v681 = vpop.f32.mrb[0].mxu0
        %v682 = vadd.f32 0.0, %v681
        %v683 = vpop.f32.mrb[0].mxu0
        %684 = vmatprep.mubr.f32.mxu0 0.0
        %685 = vmatmul.mubr.f32.gmra.mrb[0].mxu0 %v389
        %v686 = vpop.f32.mrb[0].mxu0
        %v687 = vadd.f32 0.0, %v686
        %v688 = vpop.f32.mrb[0].mxu0
        %689 = vdwg.mxu0
        %s690 = scalar_lea.vmem %s264, 24
        %v691 = vld [vmem:[%s690] sm:$0xf]
        %v692 = vld [vmem:[%s690 + $0x4] sm:$0xf]
        %v693 = vld [vmem:[%s690 + $0x8] sm:$0xf]
        %v694 = vld [vmem:[%s690 + $0xc] sm:$0xf]
        %v695 = vld [vmem:[%s690 + $0x10] sm:$0xf]
        %v696 = vld [vmem:[%s690 + $0x14] sm:$0xf]
        %v697 = vunpack.c.l.bf16 %v691
        %v698 = vunpack.c.l.bf16 %v692
        %v699 = vunpack.c.l.bf16 %v693
        %v700 = vunpack.c.l.bf16 %v694
        %v701 = vunpack.c.l.bf16 %v695
        %v702 = vunpack.c.l.bf16 %v696
        %v703 = vadd.f32 %v697, %v662
        %v704 = vadd.f32 %v698, %v667
        %v705 = vadd.f32 %v699, %v672
        %v706 = vadd.f32 %v700, %v677
        %v707 = vadd.f32 %v701, %v682
        %v708 = vadd.f32 %v702, %v687
        %s709 = scalar_lea.vmem %s255, 48 [#allocation2]
        %710 = vst.msk [vmem:[%s709] sm:$0xff] %vm504, %v703
        %711 = vst.msk [vmem:[%s709 + $0x8] sm:$0xff] %vm504, %v704
        %712 = vst.msk [vmem:[%s709 + $0x10] sm:$0xff] %vm504, %v705
        %713 = vst.msk [vmem:[%s709 + $0x18] sm:$0xff] %vm504, %v706
        %714 = vst.msk [vmem:[%s709 + $0x20] sm:$0xff] %vm504, %v707
        %715 = vst.msk [vmem:[%s709 + $0x28] sm:$0xff] %vm504, %v708
        %s716 = scalar_lea.vmem %s274, 32
        %v717 = vld [vmem:[%s716] sm:$0xff]
        %v718 = vld [vmem:[%s716 + $0x8] sm:$0xff]
        %v720 = vsel %vm291, %v717, 0
        %v723 = vsel %vm291, %v718, 0
        %725 = vmatprep.subr.mxu0 0.0
        %726 = vmatpush1.msra.mxu0 %v287
        %727 = vmatprep.subr.mxu0 0.0
        %728 = vmatpush1.msra.mxu0 %v288
        %729 = vmatprep.subr.mxu0 0.0
        %730 = vmatpush1.msra.mxu0 0.0
        %731 = vmatprep.subr.mxu0 0.0
        %732 = vmatpush1.msra.mxu0 0.0
        %733 = vmatprep.subr.mxu0 0.0
        %734 = vmatpush1.msra.mxu0 0.0
        %735 = vmatprep.subr.mxu0 0.0
        %736 = vmatpush1.msra.mxu0 0.0
        %737 = vmatprep.subr.mxu0 0.0
        %738 = vmatpush1.msra.mxu0 0.0
        %739 = vmatprep.subr.mxu0 0.0
        %740 = vmatpush1.msra.mxu0 0.0
        %741 = vmatprep.subr.mxu0 0.0
        %742 = vmatpush1.msra.mxu0 0.0
        %743 = vmatprep.subr.mxu0 0.0
        %744 = vmatpush1.msra.mxu0 0.0
        %745 = vmatprep.subr.mxu0 0.0
        %746 = vmatpush1.msra.mxu0 0.0
        %747 = vmatprep.subr.mxu0 0.0
        %748 = vmatpush1.msra.mxu0 0.0
        %749 = vmatprep.subr.mxu0 0.0
        %750 = vmatpush1.msra.mxu0 0.0
        %751 = vmatprep.subr.mxu0 0.0
        %752 = vmatpush1.msra.mxu0 0.0
        %753 = vmatprep.subr.mxu0 0.0
        %754 = vmatpush1.msra.mxu0 0.0
        %755 = vmatprep.subr.mxu0 0.0
        %756 = vmatpush1.msra.mxu0 0.0
        %757 = vmatprep.subr.mxu0 0.0
        %758 = vmatpush1.msra.mxu0 0.0
        %759 = vmatprep.subr.mxu0 0.0
        %760 = vmatpush1.msra.mxu0 0.0
        %761 = vmatprep.subr.mxu0 0.0
        %762 = vmatpush1.msra.mxu0 0.0
        %763 = vmatprep.subr.mxu0 0.0
        %764 = vmatpush1.msra.mxu0 0.0
        %765 = vmatprep.subr.mxu0 0.0
        %766 = vmatpush1.msra.mxu0 0.0
        %767 = vmatprep.subr.mxu0 0.0
        %768 = vmatpush1.msra.mxu0 0.0
        %769 = vmatprep.subr.mxu0 0.0
        %770 = vmatpush1.msra.mxu0 0.0
        %771 = vmatprep.subr.mxu0 0.0
        %772 = vmatpush1.msra.mxu0 0.0
        %773 = vmatprep.subr.mxu0 0.0
        %774 = vmatpush1.msra.mxu0 0.0
        %775 = vmatprep.subr.mxu0 0.0
        %776 = vmatpush1.msra.mxu0 0.0
        %777 = vmatprep.subr.mxu0 0.0
        %778 = vmatpush1.msra.mxu0 0.0
        %779 = vmatprep.subr.mxu0 0.0
        %780 = vmatpush1.msra.mxu0 0.0
        %781 = vmatprep.subr.mxu0 0.0
        %782 = vmatpush1.msra.mxu0 0.0
        %783 = vmatprep.subr.mxu0 0.0
        %784 = vmatpush1.msra.mxu0 0.0
        %785 = vmatprep.subr.mxu0 0.0
        %786 = vmatpush1.msra.mxu0 0.0
        %787 = vmatprep.subr.mxu0 0.0
        %788 = vmatpush1.msra.mxu0 0.0
        %789 = vmatprep.mubr.f32.mxu0 0.0
        %790 = vmatmul.mubr.f32.gmra.mrb[0].mxu0 %v720
        %v791 = vpop.f32.mrb[0].mxu0
        %v792 = vadd.f32 0.0, %v791
        %v793 = vpop.f32.mrb[0].mxu0
        %794 = vmatprep.mubr.f32.mxu0 0.0
        %795 = vmatmul.mubr.f32.gmra.mrb[0].mxu0 %v723
        %v796 = vpop.f32.mrb[0].mxu0
        %v797 = vadd.f32 0.0, %v796
        %v798 = vpop.f32.mrb[0].mxu0
        %799 = vdwg.mxu0
        %800 = vmatprep.subr.mxu0 0.0
        %801 = vmatpush1.msra.mxu0 %v792
        %802 = vmatprep.subr.mxu0 0.0
        %803 = vmatpush1.msra.mxu0 %v797
        %804 = vmatprep.subr.mxu0 0.0
        %805 = vmatpush1.msra.mxu0 0.0
        %806 = vmatprep.subr.mxu0 0.0
        %807 = vmatpush1.msra.mxu0 0.0
        %808 = vmatprep.subr.mxu0 0.0
        %809 = vmatpush1.msra.mxu0 0.0
        %810 = vmatprep.subr.mxu0 0.0
        %811 = vmatpush1.msra.mxu0 0.0
        %812 = vmatprep.subr.mxu0 0.0
        %813 = vmatpush1.msra.mxu0 0.0
        %814 = vmatprep.subr.mxu0 0.0
        %815 = vmatpush1.msra.mxu0 0.0
        %816 = vmatprep.subr.mxu0 0.0
        %817 = vmatpush1.msra.mxu0 0.0
        %818 = vmatprep.subr.mxu0 0.0
        %819 = vmatpush1.msra.mxu0 0.0
        %820 = vmatprep.subr.mxu0 0.0
        %821 = vmatpush1.msra.mxu0 0.0
        %822 = vmatprep.subr.mxu0 0.0
        %823 = vmatpush1.msra.mxu0 0.0
        %824 = vmatprep.subr.mxu0 0.0
        %825 = vmatpush1.msra.mxu0 0.0
        %826 = vmatprep.subr.mxu0 0.0
        %827 = vmatpush1.msra.mxu0 0.0
        %828 = vmatprep.subr.mxu0 0.0
        %829 = vmatpush1.msra.mxu0 0.0
        %830 = vmatprep.subr.mxu0 0.0
        %831 = vmatpush1.msra.mxu0 0.0
        %832 = vmatprep.subr.mxu0 0.0
        %833 = vmatpush1.msra.mxu0 0.0
        %834 = vmatprep.subr.mxu0 0.0
        %835 = vmatpush1.msra.mxu0 0.0
        %836 = vmatprep.subr.mxu0 0.0
        %837 = vmatpush1.msra.mxu0 0.0
        %838 = vmatprep.subr.mxu0 0.0
        %839 = vmatpush1.msra.mxu0 0.0
        %840 = vmatprep.subr.mxu0 0.0
        %841 = vmatpush1.msra.mxu0 0.0
        %842 = vmatprep.subr.mxu0 0.0
        %843 = vmatpush1.msra.mxu0 0.0
        %844 = vmatprep.subr.mxu0 0.0
        %845 = vmatpush1.msra.mxu0 0.0
        %846 = vmatprep.subr.mxu0 0.0
        %847 = vmatpush1.msra.mxu0 0.0
        %848 = vmatprep.subr.mxu0 0.0
        %849 = vmatpush1.msra.mxu0 0.0
        %850 = vmatprep.subr.mxu0 0.0
        %851 = vmatpush1.msra.mxu0 0.0
        %852 = vmatprep.subr.mxu0 0.0
        %853 = vmatpush1.msra.mxu0 0.0
        %854 = vmatprep.subr.mxu0 0.0
        %855 = vmatpush1.msra.mxu0 0.0
        %856 = vmatprep.subr.mxu0 0.0
        %857 = vmatpush1.msra.mxu0 0.0
        %858 = vmatprep.subr.mxu0 0.0
        %859 = vmatpush1.msra.mxu0 0.0
        %860 = vmatprep.subr.mxu0 0.0
        %861 = vmatpush1.msra.mxu0 0.0
        %862 = vmatprep.subr.mxu0 0.0
        %863 = vmatpush1.msra.mxu0 0.0
        %864 = vmatprep.mubr.f32.mxu0 0.0
        %865 = vmatmul.mubr.f32.gmra.mrb[0].mxu0 %v374
        %v866 = vpop.f32.mrb[0].mxu0
        %v867 = vadd.f32 0.0, %v866
        %v868 = vpop.f32.mrb[0].mxu0
        %869 = vmatprep.mubr.f32.mxu0 0.0
        %870 = vmatmul.mubr.f32.gmra.mrb[0].mxu0 %v377
        %v871 = vpop.f32.mrb[0].mxu0
        %v872 = vadd.f32 0.0, %v871
        %v873 = vpop.f32.mrb[0].mxu0
        %874 = vmatprep.mubr.f32.mxu0 0.0
        %875 = vmatmul.mubr.f32.gmra.mrb[0].mxu0 %v380
        %v876 = vpop.f32.mrb[0].mxu0
        %v877 = vadd.f32 0.0, %v876
        %v878 = vpop.f32.mrb[0].mxu0
        %879 = vmatprep.mubr.f32.mxu0 0.0
        %880 = vmatmul.mubr.f32.gmra.mrb[0].mxu0 %v383
        %v881 = vpop.f32.mrb[0].mxu0
        %v882 = vadd.f32 0.0, %v881
        %v883 = vpop.f32.mrb[0].mxu0
        %884 = vmatprep.mubr.f32.mxu0 0.0
        %885 = vmatmul.mubr.f32.gmra.mrb[0].mxu0 %v386
        %v886 = vpop.f32.mrb[0].mxu0
        %v887 = vadd.f32 0.0, %v886
        %v888 = vpop.f32.mrb[0].mxu0
        %889 = vmatprep.mubr.f32.mxu0 0.0
        %890 = vmatmul.mubr.f32.gmra.mrb[0].mxu0 %v389
        %v891 = vpop.f32.mrb[0].mxu0
        %v892 = vadd.f32 0.0, %v891
        %v893 = vpop.f32.mrb[0].mxu0
        %894 = vdwg.mxu0
        %s895 = scalar_lea.vmem %s264, 48
        %v896 = vld [vmem:[%s895] sm:$0xf]
        %v897 = vld [vmem:[%s895 + $0x4] sm:$0xf]
        %v898 = vld [vmem:[%s895 + $0x8] sm:$0xf]
        %v899 = vld [vmem:[%s895 + $0xc] sm:$0xf]
        %v900 = vld [vmem:[%s895 + $0x10] sm:$0xf]
        %v901 = vld [vmem:[%s895 + $0x14] sm:$0xf]
        %v902 = vunpack.c.l.bf16 %v896
        %v903 = vunpack.c.l.bf16 %v897
        %v904 = vunpack.c.l.bf16 %v898
        %v905 = vunpack.c.l.bf16 %v899
        %v906 = vunpack.c.l.bf16 %v900
        %v907 = vunpack.c.l.bf16 %v901
        %v908 = vadd.f32 %v902, %v867
        %v909 = vadd.f32 %v903, %v872
        %v910 = vadd.f32 %v904, %v877
        %v911 = vadd.f32 %v905, %v882
        %v912 = vadd.f32 %v906, %v887
        %v913 = vadd.f32 %v907, %v892
        %s914 = scalar_lea.vmem %s255, 96 [#allocation2]
        %915 = vst.msk [vmem:[%s914] sm:$0xff] %vm504, %v908
        %916 = vst.msk [vmem:[%s914 + $0x8] sm:$0xff] %vm504, %v909
        %917 = vst.msk [vmem:[%s914 + $0x10] sm:$0xff] %vm504, %v910
        %918 = vst.msk [vmem:[%s914 + $0x18] sm:$0xff] %vm504, %v911
        %919 = vst.msk [vmem:[%s914 + $0x20] sm:$0xff] %vm504, %v912
        %920 = vst.msk [vmem:[%s914 + $0x28] sm:$0xff] %vm504, %v913
        %s921 = sand.u32 %s143, 1
        %s922 = scalar_lea.sflag [#allocation3], %s921
        %s923 = sand.u32 %s143, 1
        %s924 = smul.addr %s923, 144
        %s925 = scalar_lea.vmem [#allocation2], %s924
        // Predicated region
        $region37: #{repnet_forward.3} parent=35 // pred_check
          %p926 = pneg %p153
        $region38: #{repnet_forward.3} parent=35 // pred_check_branch
          %928 = sbr.rel (%p926) target = $region40
        $region39: #{repnet_forward.3} parent=35 // pred_region
          %s929 = smul.u32 6, %s23
          %s931 = ssub.s32 2304, 2304
          %932 = vsyncadd %s922, %s931
          %s933 = smul.addr %s22, 18
          %s934 = sadd.s32 %s929, %s933
          %s935 = smul.addr %s934, 128
          %s936 = scalar_lea.hbm %s4, %s935
          %s937 = sshll.u32 %s925, 4
          %s938 = int_to_ptr.vmem [resolvable:$true] %s937
          %943 = dma.vmem_to_hbm [thread:$0]  %s938, 2304, %s936, %s922, 128, 128, 8
        $region40: #{repnet_forward.3} parent=35 // pred_fallthru
          _
      $region36: #{repnet_forward.3} parent=5 // pred_fallthru
        _
      %p944 = scmp.le.s32.totalorder 2, %s13
      // Predicated region
      $region41: #{repnet_forward.3} parent=5 // pred_check
        %p945 = pneg %p944
      $region42: #{repnet_forward.3} parent=5 // pred_check_branch
        %947 = sbr.rel (%p945) target = $region44
      $region43: #{repnet_forward.3} parent=5 // pred_region
        %s948 = ssub.s32 %s13, 2
        // Predicated region
        $region45: #{repnet_forward.3} parent=43 // pred_check
          %p949 = pneg %p159
        $region46: #{repnet_forward.3} parent=43 // pred_check_branch
          %951 = sbr.rel (%p949) target = $region48
        $region47: #{repnet_forward.3} parent=43 // pred_region
          %s952 = sand.u32 %s144, 1
          %s953 = scalar_lea.sflag [#allocation3], %s952
          %s954 = sand.u32 %s144, 1
          %s955 = smul.addr %s954, 144
          %s956 = scalar_lea.vmem [#allocation2], %s955
          %957 = dma.done %s953, 2304
        $region48: #{repnet_forward.3} parent=43 // pred_fallthru
          _
      $region44: #{repnet_forward.3} parent=5 // pred_fallthru
        _
    $region6: #{repnet_forward.3} parent=1 // loop_footer
      %s17 = sadd.s32 1, %s13
    $region7: #{repnet_forward.3} parent=1 // loop_footer_branch
      %12 = sbr.rel target = $region3
    $region8: #{repnet_forward.3} parent=1 // loop_exit
      _
    %958 = vsyncpa [#allocation3], 1
    %s959 = scalar_lea.sflag [#allocation3], 1
    %960 = vsyncpa %s959, 1

// kernel: repnet_forward.2
$region0: #{repnet_forward.2}
  #allocation0 [shape = 'u32[]', space=smem, size = 0x4, offset = 0x4, fixed_abs, tag = 'smem constant byte address 0x4 - core index']
  #allocation1 [shape = 'u32[144,128]{1,0:T(1,128)}', space=vmem, size = 0x12000, scoped, tag = 'internal scratch']
  #allocation2 [shape = 'bf16[16,25,32]{2,1,0:T(8,128)(2,1)}', space=vmem, size = 0x20000, scoped, tag = 'scratch operand']
  %s0 = inlined_call_operand.vmem [shape: bf16[2,1,16,8,12], index: 0, kind: input, shape index: {}]
  %s1 = inlined_call_operand.vmem [shape: bf16[108,32], index: 1, kind: input, shape index: {}]
  %s2 = inlined_call_operand.vmem [shape: f32[1,32], index: 2, kind: input, shape index: {}]
  %s3 = inlined_call_operand.vmem [shape: bf16[288,32], index: 3, kind: input, shape index: {}]
  %s4 = inlined_call_operand.vmem [shape: f32[1,32], index: 4, kind: input, shape index: {}]
  %s5 = inlined_call_operand.vmem [shape: bf16[288,32], index: 5, kind: input, shape index: {}]
  %s6 = inlined_call_operand.vmem [shape: f32[1,32], index: 6, kind: input, shape index: {}]
  %s7 = inlined_call_operand.vmem [shape: bf16[288,128], index: 7, kind: input, shape index: {}]
  %s8 = inlined_call_operand.vmem [shape: f32[1,128], index: 8, kind: input, shape index: {}]
  %s9 = inlined_call_operand.vmem [shape: bf16[2,8,8,128], index: 9, kind: output, shape index: {}]
  %s10 = sld [smem:[#allocation0]]
  $region69: #{repnet_forward.2} parent=0
    _
  %s12 = ssub.s32 1, %s10
  %s13 = scalar_select 0, %s12, %s10
  loop: start=0, step=1, limit=4
  $region2: #{repnet_forward.2} parent=0 // loop_pre_header
    _
  $region3: #{repnet_forward.2} parent=0 // loop_header
    %s15 = sphi 0, %s19
    %p16 = scmp.ge.s32.totalorder %s15, 4
    %s22 = sphi 0, %s34
    %s23 = sphi 0, %s30
    %s24 = sphi 0, %s22
    %s25 = sphi 0, %s23
    %s26 = sphi 0, %s24
    %s27 = sphi 0, %s25
    %s39 = sphi 0, %s41
    %s42 = sphi 0, %s39
    %s43 = sphi 0, %s42
    %s59 = sphi 0, %s43
    %s63 = sphi 0, %s63
    %s65 = sphi 0, %s63
    %s66 = sphi 0, %s65
    %s80 = sphi 0, %s66
    %s84 = sphi 0, %s84
    %s86 = sphi 0, %s84
    %s87 = sphi 0, %s86
    %s101 = sphi 0, %s87
    %s105 = sphi 0, %s105
    %s107 = sphi 0, %s105
    %s108 = sphi 0, %s107
    %s122 = sphi 0, %s108
    %s126 = sphi 0, %s126
    %s128 = sphi 0, %s126
    %s129 = sphi 0, %s128
    %s143 = sphi 0, %s129
    %s147 = sphi 0, %s147
    %s149 = sphi 0, %s147
    %s150 = sphi 0, %s149
    %s164 = sphi 0, %s150
    %s168 = sphi 0, %s168
    %s170 = sphi 0, %s168
    %s171 = sphi 0, %s170
    %s185 = sphi 0, %s171
    %s189 = sphi 0, %s189
    %s191 = sphi 0, %s189
    %s192 = sphi 0, %s191
    %s206 = sphi 0, %s192
    %s210 = sphi 0, %s210
    %s212 = sphi 0, %s210
    %s213 = sphi 0, %s212
    %s227 = sphi 0, %s213
    %s235 = sphi 0, %s237
    %s238 = sphi 0, %s235
    %s239 = sphi 0, %s238
    %s255 = sphi 0, %s239
  $region4: #{repnet_forward.2} parent=0 // loop_header_branch
    %18 = sbr.rel (%p16) target = $region8
  $region5: #{repnet_forward.2} parent=0 // loop_body
    %s20 = ssub.s32 %s15, 1
    %s21 = ssub.s32 %s15, 2
    %s28 = sadd.s32 1, %s23
    %p29 = scmp.ge.s32.totalorder %s28, 1
    %s30 = scalar_select %p29, 0, %s28
    %s31 = sadd.s32 1, %s22
    %s32 = scalar_select %p29, %s31, %s22
    %p33 = scmp.ge.s32.totalorder %s32, 2
    %s34 = scalar_select %p33, 0, %s32
    %s35 = ssub.s32 %s22, %s34
    %s36 = ssub.s32 %s23, %s30
    %s37 = sor.u32 %s35, %s36
    %p38 = scmp.eq.s32.totalorder %s37, 0
    %s40 = sadd.s32 %s39, 1
    %s41 = scalar_select %p38, %s39, %s40
    %p44 = pneg %p38
    %p45 = scmp.eq.s32.totalorder %s15, 1
    %p46 = por %p44, %p45
    %p47 = scmp.ne.s32.totalorder %s39, %s42
    %p48 = scmp.eq.s32.totalorder %s15, 0
    %p49 = por %p47, %p48
    %p50 = scmp.ne.s32.totalorder %s39, %s42
    %p51 = scmp.eq.s32.totalorder %s20, 1
    %p52 = por %p50, %p51
    %p53 = scmp.ne.s32.totalorder %s42, %s43
    %p54 = scmp.eq.s32.totalorder %s20, 0
    %p55 = por %p53, %p54
    %p56 = scmp.ne.s32.totalorder %s42, %s43
    %p57 = scmp.eq.s32.totalorder %s21, 1
    %p58 = por %p56, %p57
    %p60 = scmp.ne.s32.totalorder %s43, %s59
    %p61 = scmp.eq.s32.totalorder %s21, 0
    %p62 = por %p60, %p61
    %s64 = sadd.s32 %s63, 1
    %p67 = scmp.eq.s32.totalorder %s15, 1
    %p68 = scmp.ne.s32.totalorder %s63, %s65
    %p69 = scmp.eq.s32.totalorder %s15, 0
    %p70 = por %p68, %p69
    %p71 = scmp.ne.s32.totalorder %s63, %s65
    %p72 = scmp.eq.s32.totalorder %s20, 1
    %p73 = por %p71, %p72
    %p74 = scmp.ne.s32.totalorder %s65, %s66
    %p75 = scmp.eq.s32.totalorder %s20, 0
    %p76 = por %p74, %p75
    %p77 = scmp.ne.s32.totalorder %s65, %s66
    %p78 = scmp.eq.s32.totalorder %s21, 1
    %p79 = por %p77, %p78
    %p81 = scmp.ne.s32.totalorder %s66, %s80
    %p82 = scmp.eq.s32.totalorder %s21, 0
    %p83 = por %p81, %p82
    %s85 = sadd.s32 %s84, 1
    %p88 = scmp.eq.s32.totalorder %s15, 1
    %p89 = scmp.ne.s32.totalorder %s84, %s86
    %p90 = scmp.eq.s32.totalorder %s15, 0
    %p91 = por %p89, %p90
    %p92 = scmp.ne.s32.totalorder %s84, %s86
    %p93 = scmp.eq.s32.totalorder %s20, 1
    %p94 = por %p92, %p93
    %p95 = scmp.ne.s32.totalorder %s86, %s87
    %p96 = scmp.eq.s32.totalorder %s20, 0
    %p97 = por %p95, %p96
    %p98 = scmp.ne.s32.totalorder %s86, %s87
    %p99 = scmp.eq.s32.totalorder %s21, 1
    %p100 = por %p98, %p99
    %p102 = scmp.ne.s32.totalorder %s87, %s101
    %p103 = scmp.eq.s32.totalorder %s21, 0
    %p104 = por %p102, %p103
    %s106 = sadd.s32 %s105, 1
    %p109 = scmp.eq.s32.totalorder %s15, 1
    %p110 = scmp.ne.s32.totalorder %s105, %s107
    %p111 = scmp.eq.s32.totalorder %s15, 0
    %p112 = por %p110, %p111
    %p113 = scmp.ne.s32.totalorder %s105, %s107
    %p114 = scmp.eq.s32.totalorder %s20, 1
    %p115 = por %p113, %p114
    %p116 = scmp.ne.s32.totalorder %s107, %s108
    %p117 = scmp.eq.s32.totalorder %s20, 0
    %p118 = por %p116, %p117
    %p119 = scmp.ne.s32.totalorder %s107, %s108
    %p120 = scmp.eq.s32.totalorder %s21, 1
    %p121 = por %p119, %p120
    %p123 = scmp.ne.s32.totalorder %s108, %s122
    %p124 = scmp.eq.s32.totalorder %s21, 0
    %p125 = por %p123, %p124
    %s127 = sadd.s32 %s126, 1
    %p130 = scmp.eq.s32.totalorder %s15, 1
    %p131 = scmp.ne.s32.totalorder %s126, %s128
    %p132 = scmp.eq.s32.totalorder %s15, 0
    %p133 = por %p131, %p132
    %p134 = scmp.ne.s32.totalorder %s126, %s128
    %p135 = scmp.eq.s32.totalorder %s20, 1
    %p136 = por %p134, %p135
    %p137 = scmp.ne.s32.totalorder %s128, %s129
    %p138 = scmp.eq.s32.totalorder %s20, 0
    %p139 = por %p137, %p138
    %p140 = scmp.ne.s32.totalorder %s128, %s129
    %p141 = scmp.eq.s32.totalorder %s21, 1
    %p142 = por %p140, %p141
    %p144 = scmp.ne.s32.totalorder %s129, %s143
    %p145 = scmp.eq.s32.totalorder %s21, 0
    %p146 = por %p144, %p145
    %s148 = sadd.s32 %s147, 1
    %p151 = scmp.eq.s32.totalorder %s15, 1
    %p152 = scmp.ne.s32.totalorder %s147, %s149
    %p153 = scmp.eq.s32.totalorder %s15, 0
    %p154 = por %p152, %p153
    %p155 = scmp.ne.s32.totalorder %s147, %s149
    %p156 = scmp.eq.s32.totalorder %s20, 1
    %p157 = por %p155, %p156
    %p158 = scmp.ne.s32.totalorder %s149, %s150
    %p159 = scmp.eq.s32.totalorder %s20, 0
    %p160 = por %p158, %p159
    %p161 = scmp.ne.s32.totalorder %s149, %s150
    %p162 = scmp.eq.s32.totalorder %s21, 1
    %p163 = por %p161, %p162
    %p165 = scmp.ne.s32.totalorder %s150, %s164
    %p166 = scmp.eq.s32.totalorder %s21, 0
    %p167 = por %p165, %p166
    %s169 = sadd.s32 %s168, 1
    %p172 = scmp.eq.s32.totalorder %s15, 1
    %p173 = scmp.ne.s32.totalorder %s168, %s170
    %p174 = scmp.eq.s32.totalorder %s15, 0
    %p175 = por %p173, %p174
    %p176 = scmp.ne.s32.totalorder %s168, %s170
    %p177 = scmp.eq.s32.totalorder %s20, 1
    %p178 = por %p176, %p177
    %p179 = scmp.ne.s32.totalorder %s170, %s171
    %p180 = scmp.eq.s32.totalorder %s20, 0
    %p181 = por %p179, %p180
    %p182 = scmp.ne.s32.totalorder %s170, %s171
    %p183 = scmp.eq.s32.totalorder %s21, 1
    %p184 = por %p182, %p183
    %p186 = scmp.ne.s32.totalorder %s171, %s185
    %p187 = scmp.eq.s32.totalorder %s21, 0
    %p188 = por %p186, %p187
    %s190 = sadd.s32 %s189, 1
    %p193 = scmp.eq.s32.totalorder %s15, 1
    %p194 = scmp.ne.s32.totalorder %s189, %s191
    %p195 = scmp.eq.s32.totalorder %s15, 0
    %p196 = por %p194, %p195
    %p197 = scmp.ne.s32.totalorder %s189, %s191
    %p198 = scmp.eq.s32.totalorder %s20, 1
    %p199 = por %p197, %p198
    %p200 = scmp.ne.s32.totalorder %s191, %s192
    %p201 = scmp.eq.s32.totalorder %s20, 0
    %p202 = por %p200, %p201
    %p203 = scmp.ne.s32.totalorder %s191, %s192
    %p204 = scmp.eq.s32.totalorder %s21, 1
    %p205 = por %p203, %p204
    %p207 = scmp.ne.s32.totalorder %s192, %s206
    %p208 = scmp.eq.s32.totalorder %s21, 0
    %p209 = por %p207, %p208
    %s211 = sadd.s32 %s210, 1
    %p214 = scmp.eq.s32.totalorder %s15, 1
    %p215 = scmp.ne.s32.totalorder %s210, %s212
    %p216 = scmp.eq.s32.totalorder %s15, 0
    %p217 = por %p215, %p216
    %p218 = scmp.ne.s32.totalorder %s210, %s212
    %p219 = scmp.eq.s32.totalorder %s20, 1
    %p220 = por %p218, %p219
    %p221 = scmp.ne.s32.totalorder %s212, %s213
    %p222 = scmp.eq.s32.totalorder %s20, 0
    %p223 = por %p221, %p222
    %p224 = scmp.ne.s32.totalorder %s212, %s213
    %p225 = scmp.eq.s32.totalorder %s21, 1
    %p226 = por %p224, %p225
    %p228 = scmp.ne.s32.totalorder %s213, %s227
    %p229 = scmp.eq.s32.totalorder %s21, 0
    %p230 = por %p228, %p229
    %s231 = ssub.s32 %s22, %s34
    %s232 = ssub.s32 %s23, %s30
    %s233 = sor.u32 %s231, %s232
    %p234 = scmp.eq.s32.totalorder %s233, 0
    %s236 = sadd.s32 %s235, 1
    %s237 = scalar_select %p234, %s235, %s236
    %p240 = pneg %p234
    %p241 = scmp.eq.s32.totalorder %s15, 1
    %p242 = por %p240, %p241
    %p243 = scmp.ne.s32.totalorder %s235, %s238
    %p244 = scmp.eq.s32.totalorder %s15, 0
    %p245 = por %p243, %p244
    %p246 = scmp.ne.s32.totalorder %s235, %s238
    %p247 = scmp.eq.s32.totalorder %s20, 1
    %p248 = por %p246, %p247
    %p249 = scmp.ne.s32.totalorder %s238, %s239
    %p250 = scmp.eq.s32.totalorder %s20, 0
    %p251 = por %p249, %p250
    %p252 = scmp.ne.s32.totalorder %s238, %s239
    %p253 = scmp.eq.s32.totalorder %s21, 1
    %p254 = por %p252, %p253
    %p256 = scmp.ne.s32.totalorder %s239, %s255
    %p257 = scmp.eq.s32.totalorder %s21, 0
    %p258 = por %p256, %p257
    %p259 = scmp.le.s32.totalorder 1, %s15
    %p260 = scmp.lt.s32.totalorder %s15, 3
    %p261 = pnand %p259, %p260
    %p262 = pneg %p261
    // Predicated region
    $region9: #{repnet_forward.2} parent=5 // pred_check
      _
    $region10: #{repnet_forward.2} parent=5 // pred_check_branch
      %264 = sbr.rel (%p261) target = $region12
    $region11: #{repnet_forward.2} parent=5 // pred_region
      %s265 = ssub.s32 %s15, 1
      // Predicated region
      $region13: #{repnet_forward.2} parent=11 // pred_check
        %p266 = pneg %p76
      $region14: #{repnet_forward.2} parent=11 // pred_check_branch
        %268 = sbr.rel (%p266) target = $region16
      $region15: #{repnet_forward.2} parent=11 // pred_region
        _
      $region16: #{repnet_forward.2} parent=11 // pred_fallthru
        _
      // Predicated region
      $region17: #{repnet_forward.2} parent=11 // pred_check
        %p269 = pneg %p97
      $region18: #{repnet_forward.2} parent=11 // pred_check_branch
        %271 = sbr.rel (%p269) target = $region20
      $region19: #{repnet_forward.2} parent=11 // pred_region
        _
      $region20: #{repnet_forward.2} parent=11 // pred_fallthru
        _
      // Predicated region
      $region21: #{repnet_forward.2} parent=11 // pred_check
        %p272 = pneg %p118
      $region22: #{repnet_forward.2} parent=11 // pred_check_branch
        %274 = sbr.rel (%p272) target = $region24
      $region23: #{repnet_forward.2} parent=11 // pred_region
        _
      $region24: #{repnet_forward.2} parent=11 // pred_fallthru
        _
      // Predicated region
      $region25: #{repnet_forward.2} parent=11 // pred_check
        %p275 = pneg %p139
      $region26: #{repnet_forward.2} parent=11 // pred_check_branch
        %277 = sbr.rel (%p275) target = $region28
      $region27: #{repnet_forward.2} parent=11 // pred_region
        _
      $region28: #{repnet_forward.2} parent=11 // pred_fallthru
        _
      // Predicated region
      $region29: #{repnet_forward.2} parent=11 // pred_check
        %p278 = pneg %p160
      $region30: #{repnet_forward.2} parent=11 // pred_check_branch
        %280 = sbr.rel (%p278) target = $region32
      $region31: #{repnet_forward.2} parent=11 // pred_region
        _
      $region32: #{repnet_forward.2} parent=11 // pred_fallthru
        _
      // Predicated region
      $region33: #{repnet_forward.2} parent=11 // pred_check
        %p281 = pneg %p181
      $region34: #{repnet_forward.2} parent=11 // pred_check_branch
        %283 = sbr.rel (%p281) target = $region36
      $region35: #{repnet_forward.2} parent=11 // pred_region
        _
      $region36: #{repnet_forward.2} parent=11 // pred_fallthru
        _
      // Predicated region
      $region37: #{repnet_forward.2} parent=11 // pred_check
        %p284 = pneg %p202
      $region38: #{repnet_forward.2} parent=11 // pred_check_branch
        %286 = sbr.rel (%p284) target = $region40
      $region39: #{repnet_forward.2} parent=11 // pred_region
        _
      $region40: #{repnet_forward.2} parent=11 // pred_fallthru
        _
      // Predicated region
      $region41: #{repnet_forward.2} parent=11 // pred_check
        %p287 = pneg %p223
      $region42: #{repnet_forward.2} parent=11 // pred_check_branch
        %289 = sbr.rel (%p287) target = $region44
      $region43: #{repnet_forward.2} parent=11 // pred_region
        _
      $region44: #{repnet_forward.2} parent=11 // pred_fallthru
        _
    $region12: #{repnet_forward.2} parent=5 // pred_fallthru
      _
    %p290 = scmp.lt.s32.totalorder %s15, 2
    // Predicated region
    $region45: #{repnet_forward.2} parent=5 // pred_check
      %p291 = pneg %p290
    $region46: #{repnet_forward.2} parent=5 // pred_check_branch
      %293 = sbr.rel (%p291) target = $region48
    $region47: #{repnet_forward.2} parent=5 // pred_region
      // Predicated region
      $region49: #{repnet_forward.2} parent=47 // pred_check
        %p294 = pneg %p49
      $region50: #{repnet_forward.2} parent=47 // pred_check_branch
        %296 = sbr.rel (%p294) target = $region52
      $region51: #{repnet_forward.2} parent=47 // pred_region
        %p297 = scmp.lt.s32.totalorder %s22, 1
        %s298 = scalar_select %p297, %s22, 1
        %p299 = scmp.lt.s32.totalorder %s23, 0
        %s300 = scalar_select %p299, %s23, 0
        %s301 = smul.addr %s300, 16
        %s302 = smul.addr %s298, 16
        %s303 = sadd.s32 %s301, %s302
        %s304 = smul.addr %s303, 4
        %s305 = scalar_lea.vmem %s0, %s304
      $region52: #{repnet_forward.2} parent=47 // pred_fallthru
        _
    $region48: #{repnet_forward.2} parent=5 // pred_fallthru
      _
    %p306 = scmp.le.s32.totalorder 1, %s15
    %p307 = scmp.lt.s32.totalorder %s15, 3
    %p308 = pnand %p306, %p307
    %p309 = pneg %p308
    // Predicated region
    $region53: #{repnet_forward.2} parent=5 // pred_check
      _
    $region54: #{repnet_forward.2} parent=5 // pred_check_branch
      %311 = sbr.rel (%p308) target = $region56
    $region55: #{repnet_forward.2} parent=5 // pred_region
      %s312 = ssub.s32 %s15, 1
      %p313 = scmp.lt.s32.totalorder %s24, 1
      %s314 = scalar_select %p313, %s24, 1
      %p315 = scmp.lt.s32.totalorder %s25, 0
      %s316 = scalar_select %p315, %s25, 0
      %s317 = smul.addr %s316, 16
      %s318 = smul.addr %s314, 16
      %s319 = sadd.s32 %s317, %s318
      %s320 = smul.addr %s319, 4
      %s321 = scalar_lea.vmem %s0, %s320
      %p322 = pneg %p55
      %p323 = pneg %p52
      %p324 = pneg %p76
      %p325 = pneg %p73
      %p326 = pneg %p97
      %p327 = pneg %p94
      %p328 = pneg %p118
      %p329 = pneg %p115
      %p330 = pneg %p139
      %p331 = pneg %p136
      %p332 = pneg %p160
      %p333 = pneg %p157
      %p334 = pneg %p181
      %p335 = pneg %p178
      %p336 = pneg %p202
      %p337 = pneg %p199
      %p338 = pneg %p223
      %p339 = pneg %p220
      %p340 = pneg %p251
      %p341 = pneg %p248
      %s342 = smul.u32 8, %s25
      %p343 = scmp.lt.s32.totalorder %s24, 1
      %s344 = scalar_select %p343, %s24, 1
      %p345 = scmp.lt.s32.totalorder %s342, 7
      %s346 = scalar_select %p345, %s342, 7
      %s347 = smul.addr %s344, 8
      %s348 = sadd.s32 %s346, %s347
      %s349 = smul.addr %s348, 4
      %s350 = scalar_lea.vmem %s9, %s349
      %p351 = scmp.lt.s32.totalorder %s24, 1
      %s352 = scalar_select %p351, %s24, 1
      %p353 = scmp.lt.s32.totalorder %s25, 0
      %s354 = scalar_select %p353, %s25, 0
      %s355 = smul.addr %s354, 16
      %s356 = smul.addr %s352, 16
      %s357 = sadd.s32 %s355, %s356
      %s358 = smul.addr %s357, 4
      %s359 = scalar_lea.vmem %s0, %s358
      %s360 = smul.u32 8, %s25
      %p361 = scmp.lt.s32.totalorder %s24, 1
      %s362 = scalar_select %p361, %s24, 1
      %p363 = scmp.lt.s32.totalorder %s360, 7
      %s364 = scalar_select %p363, %s360, 7
      %s365 = smul.addr %s362, 8
      %s366 = sadd.s32 %s364, %s365
      %s367 = smul.addr %s366, 4
      %s368 = scalar_lea.vmem %s9, %s367
      %s369 = smul.u32 8, %s25
      %vm371 = vcmask 257027
      %vm372 = vsmask.f32 7950
      %vm373 = vmand %vm371, %vm372
      %v374 = vld [vmem:[#allocation2 + $0x4] sm:$0x8]
      %v375 = vsel %vm373, 0, %v374
      %376 = vst [vmem:[#allocation2 + $0x4] sm:$0x8] %v375
      %v377 = vld [vmem:[#allocation2 + $0x14] sm:$0x8]
      %v378 = vsel %vm373, 0, %v377
      %379 = vst [vmem:[#allocation2 + $0x14] sm:$0x8] %v378
      %v380 = vld [vmem:[#allocation2 + $0x24] sm:$0x8]
      %v381 = vsel %vm373, 0, %v380
      %382 = vst [vmem:[#allocation2 + $0x24] sm:$0x8] %v381
      %v383 = vld [vmem:[#allocation2 + $0x34] sm:$0x8]
      %v384 = vsel %vm373, 0, %v383
      %385 = vst [vmem:[#allocation2 + $0x34] sm:$0x8] %v384
      %v386 = vld [vmem:[#allocation2 + $0x44] sm:$0x8]
      %v387 = vsel %vm373, 0, %v386
      %388 = vst [vmem:[#allocation2 + $0x44] sm:$0x8] %v387
      %v389 = vld [vmem:[#allocation2 + $0x54] sm:$0x8]
      %v390 = vsel %vm373, 0, %v389
      %391 = vst [vmem:[#allocation2 + $0x54] sm:$0x8] %v390
      %v392 = vld [vmem:[#allocation2 + $0x64] sm:$0x8]
      %v393 = vsel %vm373, 0, %v392
      %394 = vst [vmem:[#allocation2 + $0x64] sm:$0x8] %v393
      %v395 = vld [vmem:[#allocation2 + $0x74] sm:$0x8]
      %v396 = vsel %vm373, 0, %v395
      %397 = vst [vmem:[#allocation2 + $0x74] sm:$0x8] %v396
      %v398 = vld [vmem:[#allocation2 + $0x84] sm:$0x8]
      %v399 = vsel %vm373, 0, %v398
      %400 = vst [vmem:[#allocation2 + $0x84] sm:$0x8] %v399
      %v401 = vld [vmem:[#allocation2 + $0x94] sm:$0x8]
      %v402 = vsel %vm373, 0, %v401
      %403 = vst [vmem:[#allocation2 + $0x94] sm:$0x8] %v402
      %v404 = vld [vmem:[#allocation2 + $0xa4] sm:$0x8]
      %v405 = vsel %vm373, 0, %v404
      %406 = vst [vmem:[#allocation2 + $0xa4] sm:$0x8] %v405
      %v407 = vld [vmem:[#allocation2 + $0xb4] sm:$0x8]
      %v408 = vsel %vm373, 0, %v407
      %409 = vst [vmem:[#allocation2 + $0xb4] sm:$0x8] %v408
      %v410 = vld [vmem:[#allocation2 + $0xc4] sm:$0x8]
      %v411 = vsel %vm373, 0, %v410
      %412 = vst [vmem:[#allocation2 + $0xc4] sm:$0x8] %v411
      %v413 = vld [vmem:[#allocation2 + $0xd4] sm:$0x8]
      %v414 = vsel %vm373, 0, %v413
      %415 = vst [vmem:[#allocation2 + $0xd4] sm:$0x8] %v414
      %v416 = vld [vmem:[#allocation2 + $0xe4] sm:$0x8]
      %v417 = vsel %vm373, 0, %v416
      %418 = vst [vmem:[#allocation2 + $0xe4] sm:$0x8] %v417
      %v419 = vld [vmem:[#allocation2 + $0xf4] sm:$0x8]
      %v420 = vsel %vm373, 0, %v419
      %421 = vst [vmem:[#allocation2 + $0xf4] sm:$0x8] %v420
      %vm422 = vcmask 253952
      %vm423 = vsmask.f32 256
      %vm424 = vmand %vm422, %vm423
      %v425 = vld [vmem:[#allocation2 + $0xc] sm:$0x1]
      %v426 = vsel %vm424, 0, %v425
      %427 = vst [vmem:[#allocation2 + $0xc] sm:$0x1] %v426
      %v428 = vld [vmem:[#allocation2 + $0x1c] sm:$0x1]
      %v429 = vsel %vm424, 0, %v428
      %430 = vst [vmem:[#allocation2 + $0x1c] sm:$0x1] %v429
      %v431 = vld [vmem:[#allocation2 + $0x2c] sm:$0x1]
      %v432 = vsel %vm424, 0, %v431
      %433 = vst [vmem:[#allocation2 + $0x2c] sm:$0x1] %v432
      %v434 = vld [vmem:[#allocation2 + $0x3c] sm:$0x1]
      %v435 = vsel %vm424, 0, %v434
      %436 = vst [vmem:[#allocation2 + $0x3c] sm:$0x1] %v435
      %v437 = vld [vmem:[#allocation2 + $0x4c] sm:$0x1]
      %v438 = vsel %vm424, 0, %v437
      %439 = vst [vmem:[#allocation2 + $0x4c] sm:$0x1] %v438
      %v440 = vld [vmem:[#allocation2 + $0x5c] sm:$0x1]
      %v441 = vsel %vm424, 0, %v440
      %442 = vst [vmem:[#allocation2 + $0x5c] sm:$0x1] %v441
      %v443 = vld [vmem:[#allocation2 + $0x6c] sm:$0x1]
      %v444 = vsel %vm424, 0, %v443
      %445 = vst [vmem:[#allocation2 + $0x6c] sm:$0x1] %v444
      %v446 = vld [vmem:[#allocation2 + $0x7c] sm:$0x1]
      %v447 = vsel %vm424, 0, %v446
      %448 = vst [vmem:[#allocation2 + $0x7c] sm:$0x1] %v447
      %v449 = vld [vmem:[#allocation2 + $0x8c] sm:$0x1]
      %v450 = vsel %vm424, 0, %v449
      %451 = vst [vmem:[#allocation2 + $0x8c] sm:$0x1] %v450
      %v452 = vld [vmem:[#allocation2 + $0x9c] sm:$0x1]
      %v453 = vsel %vm424, 0, %v452
      %454 = vst [vmem:[#allocation2 + $0x9c] sm:$0x1] %v453
      %v455 = vld [vmem:[#allocation2 + $0xac] sm:$0x1]
      %v456 = vsel %vm424, 0, %v455
      %457 = vst [vmem:[#allocation2 + $0xac] sm:$0x1] %v456
      %v458 = vld [vmem:[#allocation2 + $0xbc] sm:$0x1]
      %v459 = vsel %vm424, 0, %v458
      %460 = vst [vmem:[#allocation2 + $0xbc] sm:$0x1] %v459
      %v461 = vld [vmem:[#allocation2 + $0xcc] sm:$0x1]
      %v462 = vsel %vm424, 0, %v461
      %463 = vst [vmem:[#allocation2 + $0xcc] sm:$0x1] %v462
      %v464 = vld [vmem:[#allocation2 + $0xdc] sm:$0x1]
      %v465 = vsel %vm424, 0, %v464
      %466 = vst [vmem:[#allocation2 + $0xdc] sm:$0x1] %v465
      %v467 = vld [vmem:[#allocation2 + $0xec] sm:$0x1]
      %v468 = vsel %vm424, 0, %v467
      %469 = vst [vmem:[#allocation2 + $0xec] sm:$0x1] %v468
      %v470 = vld [vmem:[#allocation2 + $0xfc] sm:$0x1]
      %v471 = vsel %vm424, 0, %v470
      %472 = vst [vmem:[#allocation2 + $0xfc] sm:$0x1] %v471
      %v473 = vld [vmem:[%s359] sm:$0xf]
      %v474 = vld [vmem:[%s359 + $0x4] sm:$0xf]
      %v475 = vld [vmem:[%s359 + $0x8] sm:$0xf]
      %v476 = vld [vmem:[%s359 + $0xc] sm:$0xf]
      %v477 = vld [vmem:[%s359 + $0x10] sm:$0xf]
      %v478 = vld [vmem:[%s359 + $0x14] sm:$0xf]
      %v479 = vld [vmem:[%s359 + $0x18] sm:$0xf]
      %v480 = vld [vmem:[%s359 + $0x1c] sm:$0xf]
      %v481 = vld [vmem:[%s359 + $0x20] sm:$0xf]
      %v482 = vld [vmem:[%s359 + $0x24] sm:$0xf]
      %v483 = vld [vmem:[%s359 + $0x28] sm:$0xf]
      %v484 = vld [vmem:[%s359 + $0x2c] sm:$0xf]
      %v485 = vld [vmem:[%s359 + $0x30] sm:$0xf]
      %v486 = vld [vmem:[%s359 + $0x34] sm:$0xf]
      %v487 = vld [vmem:[%s359 + $0x38] sm:$0xf]
      %v488 = vld [vmem:[%s359 + $0x3c] sm:$0xf]
      %vm489 = vcmask 93184
      %490 = vst.msk [vmem:[#allocation2 + $0x8] sm:$0xf] %vm489, %v473
      %491 = vst.msk [vmem:[#allocation2 + $0x18] sm:$0xf] %vm489, %v474
      %492 = vst.msk [vmem:[#allocation2 + $0x28] sm:$0xf] %vm489, %v475
      %493 = vst.msk [vmem:[#allocation2 + $0x38] sm:$0xf] %vm489, %v476
      %494 = vst.msk [vmem:[#allocation2 + $0x48] sm:$0xf] %vm489, %v477
      %495 = vst.msk [vmem:[#allocation2 + $0x58] sm:$0xf] %vm489, %v478
      %496 = vst.msk [vmem:[#allocation2 + $0x68] sm:$0xf] %vm489, %v479
      %497 = vst.msk [vmem:[#allocation2 + $0x78] sm:$0xf] %vm489, %v480
      %498 = vst.msk [vmem:[#allocation2 + $0x88] sm:$0xf] %vm489, %v481
      %499 = vst.msk [vmem:[#allocation2 + $0x98] sm:$0xf] %vm489, %v482
      %500 = vst.msk [vmem:[#allocation2 + $0xa8] sm:$0xf] %vm489, %v483
      %501 = vst.msk [vmem:[#allocation2 + $0xb8] sm:$0xf] %vm489, %v484
      %502 = vst.msk [vmem:[#allocation2 + $0xc8] sm:$0xf] %vm489, %v485
      %503 = vst.msk [vmem:[#allocation2 + $0xd8] sm:$0xf] %vm489, %v486
      %504 = vst.msk [vmem:[#allocation2 + $0xe8] sm:$0xf] %vm489, %v487
      %505 = vst.msk [vmem:[#allocation2 + $0xf8] sm:$0xf] %vm489, %v488
      %v506 = vld [vmem:[#allocation2 + $0x4] sm:$0x8]
      %v507 = vld [vmem:[#allocation2 + $0x8] sm:$0xf]
      %v508 = vld [vmem:[#allocation2 + $0x14] sm:$0x8]
      %v509 = vld [vmem:[#allocation2 + $0x18] sm:$0xf]
      %v510 = vld [vmem:[#allocation2 + $0x24] sm:$0x8]
      %v511 = vld [vmem:[#allocation2 + $0x28] sm:$0xf]
      %v512 = vld [vmem:[#allocation2 + $0x34] sm:$0x8]
      %v513 = vld [vmem:[#allocation2 + $0x38] sm:$0xf]
      %v514 = vld [vmem:[#allocation2 + $0x44] sm:$0x8]
      %v515 = vld [vmem:[#allocation2 + $0x48] sm:$0xf]
      %v516 = vld [vmem:[#allocation2 + $0x54] sm:$0x8]
      %v517 = vld [vmem:[#allocation2 + $0x58] sm:$0xf]
      %v518 = vld [vmem:[#allocation2 + $0x64] sm:$0x8]
      %v519 = vld [vmem:[#allocation2 + $0x68] sm:$0xf]
      %v520 = vld [vmem:[#allocation2 + $0x74] sm:$0x8]
      %v521 = vld [vmem:[#allocation2 + $0x78] sm:$0xf]
      %v522 = vld [vmem:[#allocation2 + $0x84] sm:$0x8]
      %v523 = vld [vmem:[#allocation2 + $0x88] sm:$0xf]
      %v524 = vld [vmem:[#allocation2 + $0x94] sm:$0x8]
      %v525 = vld [vmem:[#allocation2 + $0x98] sm:$0xf]
      %v526 = vld [vmem:[#allocation2 + $0xa4] sm:$0x8]
      %v527 = vld [vmem:[#allocation2 + $0xa8] sm:$0xf]
      %v528 = vld [vmem:[#allocation2 + $0xb4] sm:$0x8]
      %v529 = vld [vmem:[#allocation2 + $0xb8] sm:$0xf]
      %v530 = vld [vmem:[#allocation2 + $0xc4] sm:$0x8]
      %v531 = vld [vmem:[#allocation2 + $0xc8] sm:$0xf]
      %v532 = vld [vmem:[#allocation2 + $0xd4] sm:$0x8]
      %v533 = vld [vmem:[#allocation2 + $0xd8] sm:$0xf]
      %vm534 = vsmask.f32 4368
      %vm535 = vmor %vm423, %vm534
      %v537 = vshrl.u32 %v506, 16
      %v539 = vrot.slane %v537, 7
      %v540 = vrot.slane %v539, 4
      %v542 = vshrl.u32 %v507, 16
      %v544 = vrot.slane %v542, 7
      %v545 = vshll.u32 %v507, 16
      %v547 = vor.u32 %v544, %v545
      %v548 = vsel %vm535, %v540, %v547
      %v550 = vshrl.u32 %v508, 16
      %v552 = vrot.slane %v550, 7
      %v553 = vrot.slane %v552, 4
      %v555 = vshrl.u32 %v509, 16
      %v557 = vrot.slane %v555, 7
      %v558 = vshll.u32 %v509, 16
      %v560 = vor.u32 %v557, %v558
      %v561 = vsel %vm535, %v553, %v560
      %v563 = vshrl.u32 %v510, 16
      %v565 = vrot.slane %v563, 7
      %v566 = vrot.slane %v565, 4
      %v568 = vshrl.u32 %v511, 16
      %v570 = vrot.slane %v568, 7
      %v571 = vshll.u32 %v511, 16
      %v573 = vor.u32 %v570, %v571
      %v574 = vsel %vm535, %v566, %v573
      %v576 = vshrl.u32 %v512, 16
      %v578 = vrot.slane %v576, 7
      %v579 = vrot.slane %v578, 4
      %v581 = vshrl.u32 %v513, 16
      %v583 = vrot.slane %v581, 7
      %v584 = vshll.u32 %v513, 16
      %v586 = vor.u32 %v583, %v584
      %v587 = vsel %vm535, %v579, %v586
      %v589 = vshrl.u32 %v514, 16
      %v591 = vrot.slane %v589, 7
      %v592 = vrot.slane %v591, 4
      %v594 = vshrl.u32 %v515, 16
      %v596 = vrot.slane %v594, 7
      %v597 = vshll.u32 %v515, 16
      %v599 = vor.u32 %v596, %v597
      %v600 = vsel %vm535, %v592, %v599
      %v602 = vshrl.u32 %v516, 16
      %v604 = vrot.slane %v602, 7
      %v605 = vrot.slane %v604, 4
      %v607 = vshrl.u32 %v517, 16
      %v609 = vrot.slane %v607, 7
      %v610 = vshll.u32 %v517, 16
      %v612 = vor.u32 %v609, %v610
      %v613 = vsel %vm535, %v605, %v612
      %v615 = vshrl.u32 %v518, 16
      %v617 = vrot.slane %v615, 7
      %v618 = vrot.slane %v617, 4
      %v620 = vshrl.u32 %v519, 16
      %v622 = vrot.slane %v620, 7
      %v623 = vshll.u32 %v519, 16
      %v625 = vor.u32 %v622, %v623
      %v626 = vsel %vm535, %v618, %v625
      %v628 = vshrl.u32 %v520, 16
      %v630 = vrot.slane %v628, 7
      %v631 = vrot.slane %v630, 4
      %v633 = vshrl.u32 %v521, 16
      %v635 = vrot.slane %v633, 7
      %v636 = vshll.u32 %v521, 16
      %v638 = vor.u32 %v635, %v636
      %v639 = vsel %vm535, %v631, %v638
      %v641 = vshrl.u32 %v522, 16
      %v643 = vrot.slane %v641, 7
      %v644 = vrot.slane %v643, 4
      %v646 = vshrl.u32 %v523, 16
      %v648 = vrot.slane %v646, 7
      %v649 = vshll.u32 %v523, 16
      %v651 = vor.u32 %v648, %v649
      %v652 = vsel %vm535, %v644, %v651
      %v654 = vshrl.u32 %v524, 16
      %v656 = vrot.slane %v654, 7
      %v657 = vrot.slane %v656, 4
      %v659 = vshrl.u32 %v525, 16
      %v661 = vrot.slane %v659, 7
      %v662 = vshll.u32 %v525, 16
      %v664 = vor.u32 %v661, %v662
      %v665 = vsel %vm535, %v657, %v664
      %v667 = vshrl.u32 %v526, 16
      %v669 = vrot.slane %v667, 7
      %v670 = vrot.slane %v669, 4
      %v672 = vshrl.u32 %v527, 16
      %v674 = vrot.slane %v672, 7
      %v675 = vshll.u32 %v527, 16
      %v677 = vor.u32 %v674, %v675
      %v678 = vsel %vm535, %v670, %v677
      %v680 = vshrl.u32 %v528, 16
      %v682 = vrot.slane %v680, 7
      %v683 = vrot.slane %v682, 4
      %v685 = vshrl.u32 %v529, 16
      %v687 = vrot.slane %v685, 7
      %v688 = vshll.u32 %v529, 16
      %v690 = vor.u32 %v687, %v688
      %v691 = vsel %vm535, %v683, %v690
      %v693 = vshrl.u32 %v530, 16
      %v695 = vrot.slane %v693, 7
      %v696 = vrot.slane %v695, 4
      %v698 = vshrl.u32 %v531, 16
      %v700 = vrot.slane %v698, 7
      %v701 = vshll.u32 %v531, 16
      %v703 = vor.u32 %v700, %v701
      %v704 = vsel %vm535, %v696, %v703
      %v706 = vshrl.u32 %v532, 16
      %v708 = vrot.slane %v706, 7
      %v709 = vrot.slane %v708, 4
      %v711 = vshrl.u32 %v533, 16
      %v713 = vrot.slane %v711, 7
      %v714 = vshll.u32 %v533, 16
      %v716 = vor.u32 %v713, %v714
      %v717 = vsel %vm535, %v709, %v716
      %v718 = vld [vmem:[#allocation2 + $0xc] sm:$0x1]
      %v719 = vld [vmem:[#allocation2 + $0x1c] sm:$0x1]
      %v720 = vld [vmem:[#allocation2 + $0x2c] sm:$0x1]
      %v721 = vld [vmem:[#allocation2 + $0x3c] sm:$0x1]
      %v722 = vld [vmem:[#allocation2 + $0x4c] sm:$0x1]
      %v723 = vld [vmem:[#allocation2 + $0x5c] sm:$0x1]
      %v724 = vld [vmem:[#allocation2 + $0x6c] sm:$0x1]
      %v725 = vld [vmem:[#allocation2 + $0x7c] sm:$0x1]
      %v726 = vld [vmem:[#allocation2 + $0x8c] sm:$0x1]
      %v727 = vld [vmem:[#allocation2 + $0x9c] sm:$0x1]
      %v728 = vld [vmem:[#allocation2 + $0xac] sm:$0x1]
      %v729 = vld [vmem:[#allocation2 + $0xbc] sm:$0x1]
      %v730 = vld [vmem:[#allocation2 + $0xcc] sm:$0x1]
      %v731 = vld [vmem:[#allocation2 + $0xdc] sm:$0x1]
      %vm732 = vsmask.f32 3328
      %vm733 = vsmask.f32 7440
      %vm734 = vmor %vm732, %vm733
      %v735 = vrot.slane %v542, 4
      %v736 = vrot.slane %v545, 5
      %v737 = vor.u32 %v735, %v736
      %v738 = vrot.slane %v737, 4
      %v740 = vshll.u32 %v718, 16
      %v742 = vrot.slane %v740, 5
      %v743 = vsel %vm734, %v738, %v742
      %v744 = vrot.slane %v555, 4
      %v745 = vrot.slane %v558, 5
      %v746 = vor.u32 %v744, %v745
      %v747 = vrot.slane %v746, 4
      %v749 = vshll.u32 %v719, 16
      %v751 = vrot.slane %v749, 5
      %v752 = vsel %vm734, %v747, %v751
      %v753 = vrot.slane %v568, 4
      %v754 = vrot.slane %v571, 5
      %v755 = vor.u32 %v753, %v754
      %v756 = vrot.slane %v755, 4
      %v758 = vshll.u32 %v720, 16
      %v760 = vrot.slane %v758, 5
      %v761 = vsel %vm734, %v756, %v760
      %v762 = vrot.slane %v581, 4
      %v763 = vrot.slane %v584, 5
      %v764 = vor.u32 %v762, %v763
      %v765 = vrot.slane %v764, 4
      %v767 = vshll.u32 %v721, 16
      %v769 = vrot.slane %v767, 5
      %v770 = vsel %vm734, %v765, %v769
      %v771 = vrot.slane %v594, 4
      %v772 = vrot.slane %v597, 5
      %v773 = vor.u32 %v771, %v772
      %v774 = vrot.slane %v773, 4
      %v776 = vshll.u32 %v722, 16
      %v778 = vrot.slane %v776, 5
      %v779 = vsel %vm734, %v774, %v778
      %v780 = vrot.slane %v607, 4
      %v781 = vrot.slane %v610, 5
      %v782 = vor.u32 %v780, %v781
      %v783 = vrot.slane %v782, 4
      %v785 = vshll.u32 %v723, 16
      %v787 = vrot.slane %v785, 5
      %v788 = vsel %vm734, %v783, %v787
      %v789 = vrot.slane %v620, 4
      %v790 = vrot.slane %v623, 5
      %v791 = vor.u32 %v789, %v790
      %v792 = vrot.slane %v791, 4
      %v794 = vshll.u32 %v724, 16
      %v796 = vrot.slane %v794, 5
      %v797 = vsel %vm734, %v792, %v796
      %v798 = vrot.slane %v633, 4
      %v799 = vrot.slane %v636, 5
      %v800 = vor.u32 %v798, %v799
      %v801 = vrot.slane %v800, 4
      %v803 = vshll.u32 %v725, 16
      %v805 = vrot.slane %v803, 5
      %v806 = vsel %vm734, %v801, %v805
      %v807 = vrot.slane %v646, 4
      %v808 = vrot.slane %v649, 5
      %v809 = vor.u32 %v807, %v808
      %v810 = vrot.slane %v809, 4
      %v812 = vshll.u32 %v726, 16
      %v814 = vrot.slane %v812, 5
      %v815 = vsel %vm734, %v810, %v814
      %v816 = vrot.slane %v659, 4
      %v817 = vrot.slane %v662, 5
      %v818 = vor.u32 %v816, %v817
      %v819 = vrot.slane %v818, 4
      %v821 = vshll.u32 %v727, 16
      %v823 = vrot.slane %v821, 5
      %v824 = vsel %vm734, %v819, %v823
      %v825 = vrot.slane %v672, 4
      %v826 = vrot.slane %v675, 5
      %v827 = vor.u32 %v825, %v826
      %v828 = vrot.slane %v827, 4
      %v830 = vshll.u32 %v728, 16
      %v832 = vrot.slane %v830, 5
      %v833 = vsel %vm734, %v828, %v832
      %v834 = vrot.slane %v685, 4
      %v835 = vrot.slane %v688, 5
      %v836 = vor.u32 %v834, %v835
      %v837 = vrot.slane %v836, 4
      %v839 = vshll.u32 %v729, 16
      %v841 = vrot.slane %v839, 5
      %v842 = vsel %vm734, %v837, %v841
      %v843 = vrot.slane %v698, 4
      %v844 = vrot.slane %v701, 5
      %v845 = vor.u32 %v843, %v844
      %v846 = vrot.slane %v845, 4
      %v848 = vshll.u32 %v730, 16
      %v850 = vrot.slane %v848, 5
      %v851 = vsel %vm734, %v846, %v850
      %v852 = vrot.slane %v711, 4
      %v853 = vrot.slane %v714, 5
      %v854 = vor.u32 %v852, %v853
      %v855 = vrot.slane %v854, 4
      %v857 = vshll.u32 %v731, 16
      %v859 = vrot.slane %v857, 5
      %v860 = vsel %vm734, %v855, %v859
      %s861 = scalar_lea.vmem [#allocation2], 16
      %v862 = vld [vmem:[%s861 + $0x4] sm:$0x8]
      %v863 = vld [vmem:[%s861 + $0x8] sm:$0xf]
      %v864 = vld [vmem:[%s861 + $0x14] sm:$0x8]
      %v865 = vld [vmem:[%s861 + $0x18] sm:$0xf]
      %v866 = vld [vmem:[%s861 + $0x24] sm:$0x8]
      %v867 = vld [vmem:[%s861 + $0x28] sm:$0xf]
      %v868 = vld [vmem:[%s861 + $0x34] sm:$0x8]
      %v869 = vld [vmem:[%s861 + $0x38] sm:$0xf]
      %v870 = vld [vmem:[%s861 + $0x44] sm:$0x8]
      %v871 = vld [vmem:[%s861 + $0x48] sm:$0xf]
      %v872 = vld [vmem:[%s861 + $0x54] sm:$0x8]
      %v873 = vld [vmem:[%s861 + $0x58] sm:$0xf]
      %v874 = vld [vmem:[%s861 + $0x64] sm:$0x8]
      %v875 = vld [vmem:[%s861 + $0x68] sm:$0xf]
      %v876 = vld [vmem:[%s861 + $0x74] sm:$0x8]
      %v877 = vld [vmem:[%s861 + $0x78] sm:$0xf]
      %v878 = vld [vmem:[%s861 + $0x84] sm:$0x8]
      %v879 = vld [vmem:[%s861 + $0x88] sm:$0xf]
      %v880 = vld [vmem:[%s861 + $0x94] sm:$0x8]
      %v881 = vld [vmem:[%s861 + $0x98] sm:$0xf]
      %v882 = vld [vmem:[%s861 + $0xa4] sm:$0x8]
      %v883 = vld [vmem:[%s861 + $0xa8] sm:$0xf]
      %v884 = vld [vmem:[%s861 + $0xb4] sm:$0x8]
      %v885 = vld [vmem:[%s861 + $0xb8] sm:$0xf]
      %v886 = vld [vmem:[%s861 + $0xc4] sm:$0x8]
      %v887 = vld [vmem:[%s861 + $0xc8] sm:$0xf]
      %v888 = vld [vmem:[%s861 + $0xd4] sm:$0x8]
      %v889 = vld [vmem:[%s861 + $0xd8] sm:$0xf]
      %v891 = vshrl.u32 %v862, 16
      %v893 = vrot.slane %v891, 7
      %v894 = vrot.slane %v893, 4
      %v896 = vshrl.u32 %v863, 16
      %v898 = vrot.slane %v896, 7
      %v899 = vshll.u32 %v863, 16
      %v901 = vor.u32 %v898, %v899
      %v902 = vsel %vm535, %v894, %v901
      %v904 = vshrl.u32 %v864, 16
      %v906 = vrot.slane %v904, 7
      %v907 = vrot.slane %v906, 4
      %v909 = vshrl.u32 %v865, 16
      %v911 = vrot.slane %v909, 7
      %v912 = vshll.u32 %v865, 16
      %v914 = vor.u32 %v911, %v912
      %v915 = vsel %vm535, %v907, %v914
      %v917 = vshrl.u32 %v866, 16
      %v919 = vrot.slane %v917, 7
      %v920 = vrot.slane %v919, 4
      %v922 = vshrl.u32 %v867, 16
      %v924 = vrot.slane %v922, 7
      %v925 = vshll.u32 %v867, 16
      %v927 = vor.u32 %v924, %v925
      %v928 = vsel %vm535, %v920, %v927
      %v930 = vshrl.u32 %v868, 16
      %v932 = vrot.slane %v930, 7
      %v933 = vrot.slane %v932, 4
      %v935 = vshrl.u32 %v869, 16
      %v937 = vrot.slane %v935, 7
      %v938 = vshll.u32 %v869, 16
      %v940 = vor.u32 %v937, %v938
      %v941 = vsel %vm535, %v933, %v940
      %v943 = vshrl.u32 %v870, 16
      %v945 = vrot.slane %v943, 7
      %v946 = vrot.slane %v945, 4
      %v948 = vshrl.u32 %v871, 16
      %v950 = vrot.slane %v948, 7
      %v951 = vshll.u32 %v871, 16
      %v953 = vor.u32 %v950, %v951
      %v954 = vsel %vm535, %v946, %v953
      %v956 = vshrl.u32 %v872, 16
      %v958 = vrot.slane %v956, 7
      %v959 = vrot.slane %v958, 4
      %v961 = vshrl.u32 %v873, 16
      %v963 = vrot.slane %v961, 7
      %v964 = vshll.u32 %v873, 16
      %v966 = vor.u32 %v963, %v964
      %v967 = vsel %vm535, %v959, %v966
      %v969 = vshrl.u32 %v874, 16
      %v971 = vrot.slane %v969, 7
      %v972 = vrot.slane %v971, 4
      %v974 = vshrl.u32 %v875, 16
      %v976 = vrot.slane %v974, 7
      %v977 = vshll.u32 %v875, 16
      %v979 = vor.u32 %v976, %v977
      %v980 = vsel %vm535, %v972, %v979
      %v982 = vshrl.u32 %v876, 16
      %v984 = vrot.slane %v982, 7
      %v985 = vrot.slane %v984, 4
      %v987 = vshrl.u32 %v877, 16
      %v989 = vrot.slane %v987, 7
      %v990 = vshll.u32 %v877, 16
      %v992 = vor.u32 %v989, %v990
      %v993 = vsel %vm535, %v985, %v992
      %v995 = vshrl.u32 %v878, 16
      %v997 = vrot.slane %v995, 7
      %v998 = vrot.slane %v997, 4
      %v1000 = vshrl.u32 %v879, 16
      %v1002 = vrot.slane %v1000, 7
      %v1003 = vshll.u32 %v879, 16
      %v1005 = vor.u32 %v1002, %v1003
      %v1006 = vsel %vm535, %v998, %v1005
      %v1008 = vshrl.u32 %v880, 16
      %v1010 = vrot.slane %v1008, 7
      %v1011 = vrot.slane %v1010, 4
      %v1013 = vshrl.u32 %v881, 16
      %v1015 = vrot.slane %v1013, 7
      %v1016 = vshll.u32 %v881, 16
      %v1018 = vor.u32 %v1015, %v1016
      %v1019 = vsel %vm535, %v1011, %v1018
      %v1021 = vshrl.u32 %v882, 16
      %v1023 = vrot.slane %v1021, 7
      %v1024 = vrot.slane %v1023, 4
      %v1026 = vshrl.u32 %v883, 16
      %v1028 = vrot.slane %v1026, 7
      %v1029 = vshll.u32 %v883, 16
      %v1031 = vor.u32 %v1028, %v1029
      %v1032 = vsel %vm535, %v1024, %v1031
      %v1034 = vshrl.u32 %v884, 16
      %v1036 = vrot.slane %v1034, 7
      %v1037 = vrot.slane %v1036, 4
      %v1039 = vshrl.u32 %v885, 16
      %v1041 = vrot.slane %v1039, 7
      %v1042 = vshll.u32 %v885, 16
      %v1044 = vor.u32 %v1041, %v1042
      %v1045 = vsel %vm535, %v1037, %v1044
      %v1047 = vshrl.u32 %v886, 16
      %v1049 = vrot.slane %v1047, 7
      %v1050 = vrot.slane %v1049, 4
      %v1052 = vshrl.u32 %v887, 16
      %v1054 = vrot.slane %v1052, 7
      %v1055 = vshll.u32 %v887, 16
      %v1057 = vor.u32 %v1054, %v1055
      %v1058 = vsel %vm535, %v1050, %v1057
      %v1060 = vshrl.u32 %v888, 16
      %v1062 = vrot.slane %v1060, 7
      %v1063 = vrot.slane %v1062, 4
      %v1065 = vshrl.u32 %v889, 16
      %v1067 = vrot.slane %v1065, 7
      %v1068 = vshll.u32 %v889, 16
      %v1070 = vor.u32 %v1067, %v1068
      %v1071 = vsel %vm535, %v1063, %v1070
      %v1072 = vld [vmem:[%s861 + $0xc] sm:$0x1]
      %v1073 = vld [vmem:[%s861 + $0x1c] sm:$0x1]
      %v1074 = vld [vmem:[%s861 + $0x2c] sm:$0x1]
      %v1075 = vld [vmem:[%s861 + $0x3c] sm:$0x1]
      %v1076 = vld [vmem:[%s861 + $0x4c] sm:$0x1]
      %v1077 = vld [vmem:[%s861 + $0x5c] sm:$0x1]
      %v1078 = vld [vmem:[%s861 + $0x6c] sm:$0x1]
      %v1079 = vld [vmem:[%s861 + $0x7c] sm:$0x1]
      %v1080 = vld [vmem:[%s861 + $0x8c] sm:$0x1]
      %v1081 = vld [vmem:[%s861 + $0x9c] sm:$0x1]
      %v1082 = vld [vmem:[%s861 + $0xac] sm:$0x1]
      %v1083 = vld [vmem:[%s861 + $0xbc] sm:$0x1]
      %v1084 = vld [vmem:[%s861 + $0xcc] sm:$0x1]
      %v1085 = vld [vmem:[%s861 + $0xdc] sm:$0x1]
      %v1086 = vrot.slane %v896, 4
      %v1087 = vrot.slane %v899, 5
      %v1088 = vor.u32 %v1086, %v1087
      %v1089 = vrot.slane %v1088, 4
      %v1091 = vshll.u32 %v1072, 16
      %v1093 = vrot.slane %v1091, 5
      %v1094 = vsel %vm734, %v1089, %v1093
      %v1095 = vrot.slane %v909, 4
      %v1096 = vrot.slane %v912, 5
      %v1097 = vor.u32 %v1095, %v1096
      %v1098 = vrot.slane %v1097, 4
      %v1100 = vshll.u32 %v1073, 16
      %v1102 = vrot.slane %v1100, 5
      %v1103 = vsel %vm734, %v1098, %v1102
      %v1104 = vrot.slane %v922, 4
      %v1105 = vrot.slane %v925, 5
      %v1106 = vor.u32 %v1104, %v1105
      %v1107 = vrot.slane %v1106, 4
      %v1109 = vshll.u32 %v1074, 16
      %v1111 = vrot.slane %v1109, 5
      %v1112 = vsel %vm734, %v1107, %v1111
      %v1113 = vrot.slane %v935, 4
      %v1114 = vrot.slane %v938, 5
      %v1115 = vor.u32 %v1113, %v1114
      %v1116 = vrot.slane %v1115, 4
      %v1118 = vshll.u32 %v1075, 16
      %v1120 = vrot.slane %v1118, 5
      %v1121 = vsel %vm734, %v1116, %v1120
      %v1122 = vrot.slane %v948, 4
      %v1123 = vrot.slane %v951, 5
      %v1124 = vor.u32 %v1122, %v1123
      %v1125 = vrot.slane %v1124, 4
      %v1127 = vshll.u32 %v1076, 16
      %v1129 = vrot.slane %v1127, 5
      %v1130 = vsel %vm734, %v1125, %v1129
      %v1131 = vrot.slane %v961, 4
      %v1132 = vrot.slane %v964, 5
      %v1133 = vor.u32 %v1131, %v1132
      %v1134 = vrot.slane %v1133, 4
      %v1136 = vshll.u32 %v1077, 16
      %v1138 = vrot.slane %v1136, 5
      %v1139 = vsel %vm734, %v1134, %v1138
      %v1140 = vrot.slane %v974, 4
      %v1141 = vrot.slane %v977, 5
      %v1142 = vor.u32 %v1140, %v1141
      %v1143 = vrot.slane %v1142, 4
      %v1145 = vshll.u32 %v1078, 16
      %v1147 = vrot.slane %v1145, 5
      %v1148 = vsel %vm734, %v1143, %v1147
      %v1149 = vrot.slane %v987, 4
      %v1150 = vrot.slane %v990, 5
      %v1151 = vor.u32 %v1149, %v1150
      %v1152 = vrot.slane %v1151, 4
      %v1154 = vshll.u32 %v1079, 16
      %v1156 = vrot.slane %v1154, 5
      %v1157 = vsel %vm734, %v1152, %v1156
      %v1158 = vrot.slane %v1000, 4
      %v1159 = vrot.slane %v1003, 5
      %v1160 = vor.u32 %v1158, %v1159
      %v1161 = vrot.slane %v1160, 4
      %v1163 = vshll.u32 %v1080, 16
      %v1165 = vrot.slane %v1163, 5
      %v1166 = vsel %vm734, %v1161, %v1165
      %v1167 = vrot.slane %v1013, 4
      %v1168 = vrot.slane %v1016, 5
      %v1169 = vor.u32 %v1167, %v1168
      %v1170 = vrot.slane %v1169, 4
      %v1172 = vshll.u32 %v1081, 16
      %v1174 = vrot.slane %v1172, 5
      %v1175 = vsel %vm734, %v1170, %v1174
      %v1176 = vrot.slane %v1026, 4
      %v1177 = vrot.slane %v1029, 5
      %v1178 = vor.u32 %v1176, %v1177
      %v1179 = vrot.slane %v1178, 4
      %v1181 = vshll.u32 %v1082, 16
      %v1183 = vrot.slane %v1181, 5
      %v1184 = vsel %vm734, %v1179, %v1183
      %v1185 = vrot.slane %v1039, 4
      %v1186 = vrot.slane %v1042, 5
      %v1187 = vor.u32 %v1185, %v1186
      %v1188 = vrot.slane %v1187, 4
      %v1190 = vshll.u32 %v1083, 16
      %v1192 = vrot.slane %v1190, 5
      %v1193 = vsel %vm734, %v1188, %v1192
      %v1194 = vrot.slane %v1052, 4
      %v1195 = vrot.slane %v1055, 5
      %v1196 = vor.u32 %v1194, %v1195
      %v1197 = vrot.slane %v1196, 4
      %v1199 = vshll.u32 %v1084, 16
      %v1201 = vrot.slane %v1199, 5
      %v1202 = vsel %vm734, %v1197, %v1201
      %v1203 = vrot.slane %v1065, 4
      %v1204 = vrot.slane %v1068, 5
      %v1205 = vor.u32 %v1203, %v1204
      %v1206 = vrot.slane %v1205, 4
      %v1208 = vshll.u32 %v1085, 16
      %v1210 = vrot.slane %v1208, 5
      %v1211 = vsel %vm734, %v1206, %v1210
      %s1212 = scalar_lea.vmem [#allocation2], 32
      %v1213 = vld [vmem:[%s1212 + $0x4] sm:$0x8]
      %v1214 = vld [vmem:[%s1212 + $0x8] sm:$0xf]
      %v1215 = vld [vmem:[%s1212 + $0x14] sm:$0x8]
      %v1216 = vld [vmem:[%s1212 + $0x18] sm:$0xf]
      %v1217 = vld [vmem:[%s1212 + $0x24] sm:$0x8]
      %v1218 = vld [vmem:[%s1212 + $0x28] sm:$0xf]
      %v1219 = vld [vmem:[%s1212 + $0x34] sm:$0x8]
      %v1220 = vld [vmem:[%s1212 + $0x38] sm:$0xf]
      %v1221 = vld [vmem:[%s1212 + $0x44] sm:$0x8]
      %v1222 = vld [vmem:[%s1212 + $0x48] sm:$0xf]
      %v1223 = vld [vmem:[%s1212 + $0x54] sm:$0x8]
      %v1224 = vld [vmem:[%s1212 + $0x58] sm:$0xf]
      %v1225 = vld [vmem:[%s1212 + $0x64] sm:$0x8]
      %v1226 = vld [vmem:[%s1212 + $0x68] sm:$0xf]
      %v1227 = vld [vmem:[%s1212 + $0x74] sm:$0x8]
      %v1228 = vld [vmem:[%s1212 + $0x78] sm:$0xf]
      %v1229 = vld [vmem:[%s1212 + $0x84] sm:$0x8]
      %v1230 = vld [vmem:[%s1212 + $0x88] sm:$0xf]
      %v1231 = vld [vmem:[%s1212 + $0x94] sm:$0x8]
      %v1232 = vld [vmem:[%s1212 + $0x98] sm:$0xf]
      %v1233 = vld [vmem:[%s1212 + $0xa4] sm:$0x8]
      %v1234 = vld [vmem:[%s1212 + $0xa8] sm:$0xf]
      %v1235 = vld [vmem:[%s1212 + $0xb4] sm:$0x8]
      %v1236 = vld [vmem:[%s1212 + $0xb8] sm:$0xf]
      %v1237 = vld [vmem:[%s1212 + $0xc4] sm:$0x8]
      %v1238 = vld [vmem:[%s1212 + $0xc8] sm:$0xf]
      %v1239 = vld [vmem:[%s1212 + $0xd4] sm:$0x8]
      %v1240 = vld [vmem:[%s1212 + $0xd8] sm:$0xf]
      %v1242 = vshrl.u32 %v1213, 16
      %v1244 = vrot.slane %v1242, 7
      %v1245 = vrot.slane %v1244, 4
      %v1247 = vshrl.u32 %v1214, 16
      %v1249 = vrot.slane %v1247, 7
      %v1250 = vshll.u32 %v1214, 16
      %v1252 = vor.u32 %v1249, %v1250
      %v1253 = vsel %vm535, %v1245, %v1252
      %v1255 = vshrl.u32 %v1215, 16
      %v1257 = vrot.slane %v1255, 7
      %v1258 = vrot.slane %v1257, 4
      %v1260 = vshrl.u32 %v1216, 16
      %v1262 = vrot.slane %v1260, 7
      %v1263 = vshll.u32 %v1216, 16
      %v1265 = vor.u32 %v1262, %v1263
      %v1266 = vsel %vm535, %v1258, %v1265
      %v1268 = vshrl.u32 %v1217, 16
      %v1270 = vrot.slane %v1268, 7
      %v1271 = vrot.slane %v1270, 4
      %v1273 = vshrl.u32 %v1218, 16
      %v1275 = vrot.slane %v1273, 7
      %v1276 = vshll.u32 %v1218, 16
      %v1278 = vor.u32 %v1275, %v1276
      %v1279 = vsel %vm535, %v1271, %v1278
      %v1281 = vshrl.u32 %v1219, 16
      %v1283 = vrot.slane %v1281, 7
      %v1284 = vrot.slane %v1283, 4
      %v1286 = vshrl.u32 %v1220, 16
      %v1288 = vrot.slane %v1286, 7
      %v1289 = vshll.u32 %v1220, 16
      %v1291 = vor.u32 %v1288, %v1289
      %v1292 = vsel %vm535, %v1284, %v1291
      %v1294 = vshrl.u32 %v1221, 16
      %v1296 = vrot.slane %v1294, 7
      %v1297 = vrot.slane %v1296, 4
      %v1299 = vshrl.u32 %v1222, 16
      %v1301 = vrot.slane %v1299, 7
      %v1302 = vshll.u32 %v1222, 16
      %v1304 = vor.u32 %v1301, %v1302
      %v1305 = vsel %vm535, %v1297, %v1304
      %v1307 = vshrl.u32 %v1223, 16
      %v1309 = vrot.slane %v1307, 7
      %v1310 = vrot.slane %v1309, 4
      %v1312 = vshrl.u32 %v1224, 16
      %v1314 = vrot.slane %v1312, 7
      %v1315 = vshll.u32 %v1224, 16
      %v1317 = vor.u32 %v1314, %v1315
      %v1318 = vsel %vm535, %v1310, %v1317
      %v1320 = vshrl.u32 %v1225, 16
      %v1322 = vrot.slane %v1320, 7
      %v1323 = vrot.slane %v1322, 4
      %v1325 = vshrl.u32 %v1226, 16
      %v1327 = vrot.slane %v1325, 7
      %v1328 = vshll.u32 %v1226, 16
      %v1330 = vor.u32 %v1327, %v1328
      %v1331 = vsel %vm535, %v1323, %v1330
      %v1333 = vshrl.u32 %v1227, 16
      %v1335 = vrot.slane %v1333, 7
      %v1336 = vrot.slane %v1335, 4
      %v1338 = vshrl.u32 %v1228, 16
      %v1340 = vrot.slane %v1338, 7
      %v1341 = vshll.u32 %v1228, 16
      %v1343 = vor.u32 %v1340, %v1341
      %v1344 = vsel %vm535, %v1336, %v1343
      %v1346 = vshrl.u32 %v1229, 16
      %v1348 = vrot.slane %v1346, 7
      %v1349 = vrot.slane %v1348, 4
      %v1351 = vshrl.u32 %v1230, 16
      %v1353 = vrot.slane %v1351, 7
      %v1354 = vshll.u32 %v1230, 16
      %v1356 = vor.u32 %v1353, %v1354
      %v1357 = vsel %vm535, %v1349, %v1356
      %v1359 = vshrl.u32 %v1231, 16
      %v1361 = vrot.slane %v1359, 7
      %v1362 = vrot.slane %v1361, 4
      %v1364 = vshrl.u32 %v1232, 16
      %v1366 = vrot.slane %v1364, 7
      %v1367 = vshll.u32 %v1232, 16
      %v1369 = vor.u32 %v1366, %v1367
      %v1370 = vsel %vm535, %v1362, %v1369
      %v1372 = vshrl.u32 %v1233, 16
      %v1374 = vrot.slane %v1372, 7
      %v1375 = vrot.slane %v1374, 4
      %v1377 = vshrl.u32 %v1234, 16
      %v1379 = vrot.slane %v1377, 7
      %v1380 = vshll.u32 %v1234, 16
      %v1382 = vor.u32 %v1379, %v1380
      %v1383 = vsel %vm535, %v1375, %v1382
      %v1385 = vshrl.u32 %v1235, 16
      %v1387 = vrot.slane %v1385, 7
      %v1388 = vrot.slane %v1387, 4
      %v1390 = vshrl.u32 %v1236, 16
      %v1392 = vrot.slane %v1390, 7
      %v1393 = vshll.u32 %v1236, 16
      %v1395 = vor.u32 %v1392, %v1393
      %v1396 = vsel %vm535, %v1388, %v1395
      %v1398 = vshrl.u32 %v1237, 16
      %v1400 = vrot.slane %v1398, 7
      %v1401 = vrot.slane %v1400, 4
      %v1403 = vshrl.u32 %v1238, 16
      %v1405 = vrot.slane %v1403, 7
      %v1406 = vshll.u32 %v1238, 16
      %v1408 = vor.u32 %v1405, %v1406
      %v1409 = vsel %vm535, %v1401, %v1408
      %v1411 = vshrl.u32 %v1239, 16
      %v1413 = vrot.slane %v1411, 7
      %v1414 = vrot.slane %v1413, 4
      %v1416 = vshrl.u32 %v1240, 16
      %v1418 = vrot.slane %v1416, 7
      %v1419 = vshll.u32 %v1240, 16
      %v1421 = vor.u32 %v1418, %v1419
      %v1422 = vsel %vm535, %v1414, %v1421
      %v1423 = vld [vmem:[%s1212 + $0xc] sm:$0x1]
      %v1424 = vld [vmem:[%s1212 + $0x1c] sm:$0x1]
      %v1425 = vld [vmem:[%s1212 + $0x2c] sm:$0x1]
      %v1426 = vld [vmem:[%s1212 + $0x3c] sm:$0x1]
      %v1427 = vld [vmem:[%s1212 + $0x4c] sm:$0x1]
      %v1428 = vld [vmem:[%s1212 + $0x5c] sm:$0x1]
      %v1429 = vld [vmem:[%s1212 + $0x6c] sm:$0x1]
      %v1430 = vld [vmem:[%s1212 + $0x7c] sm:$0x1]
      %v1431 = vld [vmem:[%s1212 + $0x8c] sm:$0x1]
      %v1432 = vld [vmem:[%s1212 + $0x9c] sm:$0x1]
      %v1433 = vld [vmem:[%s1212 + $0xac] sm:$0x1]
      %v1434 = vld [vmem:[%s1212 + $0xbc] sm:$0x1]
      %v1435 = vld [vmem:[%s1212 + $0xcc] sm:$0x1]
      %v1436 = vld [vmem:[%s1212 + $0xdc] sm:$0x1]
      %v1437 = vrot.slane %v1247, 4
      %v1438 = vrot.slane %v1250, 5
      %v1439 = vor.u32 %v1437, %v1438
      %v1440 = vrot.slane %v1439, 4
      %v1442 = vshll.u32 %v1423, 16
      %v1444 = vrot.slane %v1442, 5
      %v1445 = vsel %vm734, %v1440, %v1444
      %v1446 = vrot.slane %v1260, 4
      %v1447 = vrot.slane %v1263, 5
      %v1448 = vor.u32 %v1446, %v1447
      %v1449 = vrot.slane %v1448, 4
      %v1451 = vshll.u32 %v1424, 16
      %v1453 = vrot.slane %v1451, 5
      %v1454 = vsel %vm734, %v1449, %v1453
      %v1455 = vrot.slane %v1273, 4
      %v1456 = vrot.slane %v1276, 5
      %v1457 = vor.u32 %v1455, %v1456
      %v1458 = vrot.slane %v1457, 4
      %v1460 = vshll.u32 %v1425, 16
      %v1462 = vrot.slane %v1460, 5
      %v1463 = vsel %vm734, %v1458, %v1462
      %v1464 = vrot.slane %v1286, 4
      %v1465 = vrot.slane %v1289, 5
      %v1466 = vor.u32 %v1464, %v1465
      %v1467 = vrot.slane %v1466, 4
      %v1469 = vshll.u32 %v1426, 16
      %v1471 = vrot.slane %v1469, 5
      %v1472 = vsel %vm734, %v1467, %v1471
      %v1473 = vrot.slane %v1299, 4
      %v1474 = vrot.slane %v1302, 5
      %v1475 = vor.u32 %v1473, %v1474
      %v1476 = vrot.slane %v1475, 4
      %v1478 = vshll.u32 %v1427, 16
      %v1480 = vrot.slane %v1478, 5
      %v1481 = vsel %vm734, %v1476, %v1480
      %v1482 = vrot.slane %v1312, 4
      %v1483 = vrot.slane %v1315, 5
      %v1484 = vor.u32 %v1482, %v1483
      %v1485 = vrot.slane %v1484, 4
      %v1487 = vshll.u32 %v1428, 16
      %v1489 = vrot.slane %v1487, 5
      %v1490 = vsel %vm734, %v1485, %v1489
      %v1491 = vrot.slane %v1325, 4
      %v1492 = vrot.slane %v1328, 5
      %v1493 = vor.u32 %v1491, %v1492
      %v1494 = vrot.slane %v1493, 4
      %v1496 = vshll.u32 %v1429, 16
      %v1498 = vrot.slane %v1496, 5
      %v1499 = vsel %vm734, %v1494, %v1498
      %v1500 = vrot.slane %v1338, 4
      %v1501 = vrot.slane %v1341, 5
      %v1502 = vor.u32 %v1500, %v1501
      %v1503 = vrot.slane %v1502, 4
      %v1505 = vshll.u32 %v1430, 16
      %v1507 = vrot.slane %v1505, 5
      %v1508 = vsel %vm734, %v1503, %v1507
      %v1509 = vrot.slane %v1351, 4
      %v1510 = vrot.slane %v1354, 5
      %v1511 = vor.u32 %v1509, %v1510
      %v1512 = vrot.slane %v1511, 4
      %v1514 = vshll.u32 %v1431, 16
      %v1516 = vrot.slane %v1514, 5
      %v1517 = vsel %vm734, %v1512, %v1516
      %v1518 = vrot.slane %v1364, 4
      %v1519 = vrot.slane %v1367, 5
      %v1520 = vor.u32 %v1518, %v1519
      %v1521 = vrot.slane %v1520, 4
      %v1523 = vshll.u32 %v1432, 16
      %v1525 = vrot.slane %v1523, 5
      %v1526 = vsel %vm734, %v1521, %v1525
      %v1527 = vrot.slane %v1377, 4
      %v1528 = vrot.slane %v1380, 5
      %v1529 = vor.u32 %v1527, %v1528
      %v1530 = vrot.slane %v1529, 4
      %v1532 = vshll.u32 %v1433, 16
      %v1534 = vrot.slane %v1532, 5
      %v1535 = vsel %vm734, %v1530, %v1534
      %v1536 = vrot.slane %v1390, 4
      %v1537 = vrot.slane %v1393, 5
      %v1538 = vor.u32 %v1536, %v1537
      %v1539 = vrot.slane %v1538, 4
      %v1541 = vshll.u32 %v1434, 16
      %v1543 = vrot.slane %v1541, 5
      %v1544 = vsel %vm734, %v1539, %v1543
      %v1545 = vrot.slane %v1403, 4
      %v1546 = vrot.slane %v1406, 5
      %v1547 = vor.u32 %v1545, %v1546
      %v1548 = vrot.slane %v1547, 4
      %v1550 = vshll.u32 %v1435, 16
      %v1552 = vrot.slane %v1550, 5
      %v1553 = vsel %vm734, %v1548, %v1552
      %v1554 = vrot.slane %v1416, 4
      %v1555 = vrot.slane %v1419, 5
      %v1556 = vor.u32 %v1554, %v1555
      %v1557 = vrot.slane %v1556, 4
      %v1559 = vshll.u32 %v1436, 16
      %v1561 = vrot.slane %v1559, 5
      %v1562 = vsel %vm734, %v1557, %v1561
      %v1563 = vunpack.c.l.b16 %v548
      %v1564 = vunpack.c.l.b16 %v561
      %v1565 = vunpack.c.l.b16 %v574
      %v1566 = vunpack.c.l.b16 %v587
      %v1567 = vunpack.c.l.b16 %v600
      %v1568 = vunpack.c.l.b16 %v613
      %v1569 = vunpack.c.l.b16 %v626
      %v1570 = vunpack.c.l.b16 %v639
      %v1571 = vunpack.c.l.b16 %v652
      %v1572 = vunpack.c.l.b16 %v665
      %v1573 = vunpack.c.l.b16 %v678
      %v1574 = vunpack.c.l.b16 %v691
      %v1575 = vunpack.c.l.b16 %v704
      %v1576 = vunpack.c.l.b16 %v717
      %v1577 = vpack.c.b16 %v1564, %v1563
      %v1578 = vpack.c.b16 %v1566, %v1565
      %v1579 = vpack.c.b16 %v1568, %v1567
      %v1580 = vpack.c.b16 %v1570, %v1569
      %v1581 = vpack.c.b16 %v1572, %v1571
      %v1582 = vpack.c.b16 %v1574, %v1573
      %v1583 = vpack.c.b16 %v1576, %v1575
      %v1598 = vunpack.c.l.b16 %v507
      %v1599 = vunpack.c.l.b16 %v509
      %v1600 = vunpack.c.l.b16 %v511
      %v1601 = vunpack.c.l.b16 %v513
      %v1602 = vunpack.c.l.b16 %v515
      %v1603 = vunpack.c.l.b16 %v517
      %v1604 = vunpack.c.l.b16 %v519
      %v1605 = vunpack.c.l.b16 %v521
      %v1606 = vunpack.c.l.b16 %v523
      %v1607 = vunpack.c.l.b16 %v525
      %v1608 = vunpack.c.l.b16 %v527
      %v1609 = vunpack.c.l.b16 %v529
      %v1610 = vunpack.c.l.b16 %v531
      %v1611 = vunpack.c.l.b16 %v533
      %v1612 = vpack.c.b16 %v1599, %v1598
      %v1613 = vpack.c.b16 %v1601, %v1600
      %v1614 = vpack.c.b16 %v1603, %v1602
      %v1615 = vpack.c.b16 %v1605, %v1604
      %v1616 = vpack.c.b16 %v1607, %v1606
      %v1617 = vpack.c.b16 %v1609, %v1608
      %v1618 = vpack.c.b16 %v1611, %v1610
      %1619 = vrot.lane.b32.xlu0 %v1612, 12
      %v1620 = vpop.permute.xlu0 %1619
      %1621 = vrot.lane.b32.xlu0 %v1613, 12
      %v1622 = vpop.permute.xlu0 %1621
      %1623 = vrot.lane.b32.xlu0 %v1614, 12
      %v1624 = vpop.permute.xlu0 %1623
      %1625 = vrot.lane.b32.xlu0 %v1615, 12
      %v1626 = vpop.permute.xlu0 %1625
      %1627 = vrot.lane.b32.xlu0 %v1616, 12
      %v1628 = vpop.permute.xlu0 %1627
      %1629 = vrot.lane.b32.xlu0 %v1617, 12
      %v1630 = vpop.permute.xlu0 %1629
      %1631 = vrot.lane.b32.xlu0 %v1618, 12
      %v1632 = vpop.permute.xlu0 %1631
      %v1633 = vunpack.c.l.b16 %v743
      %v1634 = vunpack.c.l.b16 %v752
      %v1635 = vunpack.c.l.b16 %v761
      %v1636 = vunpack.c.l.b16 %v770
      %v1637 = vunpack.c.l.b16 %v779
      %v1638 = vunpack.c.l.b16 %v788
      %v1639 = vunpack.c.l.b16 %v797
      %v1640 = vunpack.c.l.b16 %v806
      %v1641 = vunpack.c.l.b16 %v815
      %v1642 = vunpack.c.l.b16 %v824
      %v1643 = vunpack.c.l.b16 %v833
      %v1644 = vunpack.c.l.b16 %v842
      %v1645 = vunpack.c.l.b16 %v851
      %v1646 = vunpack.c.l.b16 %v860
      %v1647 = vpack.c.b16 %v1634, %v1633
      %v1648 = vpack.c.b16 %v1636, %v1635
      %v1649 = vpack.c.b16 %v1638, %v1637
      %v1650 = vpack.c.b16 %v1640, %v1639
      %v1651 = vpack.c.b16 %v1642, %v1641
      %v1652 = vpack.c.b16 %v1644, %v1643
      %v1653 = vpack.c.b16 %v1646, %v1645
      %1654 = vrot.lane.b32.xlu0 %v1647, 24
      %v1655 = vpop.permute.xlu0 %1654
      %1656 = vrot.lane.b32.xlu0 %v1648, 24
      %v1657 = vpop.permute.xlu0 %1656
      %1658 = vrot.lane.b32.xlu0 %v1649, 24
      %v1659 = vpop.permute.xlu0 %1658
      %1660 = vrot.lane.b32.xlu0 %v1650, 24
      %v1661 = vpop.permute.xlu0 %1660
      %1662 = vrot.lane.b32.xlu0 %v1651, 24
      %v1663 = vpop.permute.xlu0 %1662
      %1664 = vrot.lane.b32.xlu0 %v1652, 24
      %v1665 = vpop.permute.xlu0 %1664
      %1666 = vrot.lane.b32.xlu0 %v1653, 24
      %v1667 = vpop.permute.xlu0 %1666
      %v1668 = vunpack.c.l.b16 %v902
      %v1669 = vunpack.c.l.b16 %v915
      %v1670 = vunpack.c.l.b16 %v928
      %v1671 = vunpack.c.l.b16 %v941
      %v1672 = vunpack.c.l.b16 %v954
      %v1673 = vunpack.c.l.b16 %v967
      %v1674 = vunpack.c.l.b16 %v980
      %v1675 = vunpack.c.l.b16 %v993
      %v1676 = vunpack.c.l.b16 %v1006
      %v1677 = vunpack.c.l.b16 %v1019
      %v1678 = vunpack.c.l.b16 %v1032
      %v1679 = vunpack.c.l.b16 %v1045
      %v1680 = vunpack.c.l.b16 %v1058
      %v1681 = vunpack.c.l.b16 %v1071
      %v1682 = vpack.c.b16 %v1669, %v1668
      %v1683 = vpack.c.b16 %v1671, %v1670
      %v1684 = vpack.c.b16 %v1673, %v1672
      %v1685 = vpack.c.b16 %v1675, %v1674
      %v1686 = vpack.c.b16 %v1677, %v1676
      %v1687 = vpack.c.b16 %v1679, %v1678
      %v1688 = vpack.c.b16 %v1681, %v1680
      %1689 = vrot.lane.b32.xlu0 %v1682, 36
      %v1690 = vpop.permute.xlu0 %1689
      %1691 = vrot.lane.b32.xlu0 %v1683, 36
      %v1692 = vpop.permute.xlu0 %1691
      %1693 = vrot.lane.b32.xlu0 %v1684, 36
      %v1694 = vpop.permute.xlu0 %1693
      %1695 = vrot.lane.b32.xlu0 %v1685, 36
      %v1696 = vpop.permute.xlu0 %1695
      %1697 = vrot.lane.b32.xlu0 %v1686, 36
      %v1698 = vpop.permute.xlu0 %1697
      %1699 = vrot.lane.b32.xlu0 %v1687, 36
      %v1700 = vpop.permute.xlu0 %1699
      %1701 = vrot.lane.b32.xlu0 %v1688, 36
      %v1702 = vpop.permute.xlu0 %1701
      %v1717 = vunpack.c.l.b16 %v863
      %v1718 = vunpack.c.l.b16 %v865
      %v1719 = vunpack.c.l.b16 %v867
      %v1720 = vunpack.c.l.b16 %v869
      %v1721 = vunpack.c.l.b16 %v871
      %v1722 = vunpack.c.l.b16 %v873
      %v1723 = vunpack.c.l.b16 %v875
      %v1724 = vunpack.c.l.b16 %v877
      %v1725 = vunpack.c.l.b16 %v879
      %v1726 = vunpack.c.l.b16 %v881
      %v1727 = vunpack.c.l.b16 %v883
      %v1728 = vunpack.c.l.b16 %v885
      %v1729 = vunpack.c.l.b16 %v887
      %v1730 = vunpack.c.l.b16 %v889
      %v1731 = vpack.c.b16 %v1718, %v1717
      %v1732 = vpack.c.b16 %v1720, %v1719
      %v1733 = vpack.c.b16 %v1722, %v1721
      %v1734 = vpack.c.b16 %v1724, %v1723
      %v1735 = vpack.c.b16 %v1726, %v1725
      %v1736 = vpack.c.b16 %v1728, %v1727
      %v1737 = vpack.c.b16 %v1730, %v1729
      %1738 = vrot.lane.b32.xlu0 %v1731, 48
      %v1739 = vpop.permute.xlu0 %1738
      %1740 = vrot.lane.b32.xlu0 %v1732, 48
      %v1741 = vpop.permute.xlu0 %1740
      %1742 = vrot.lane.b32.xlu0 %v1733, 48
      %v1743 = vpop.permute.xlu0 %1742
      %1744 = vrot.lane.b32.xlu0 %v1734, 48
      %v1745 = vpop.permute.xlu0 %1744
      %1746 = vrot.lane.b32.xlu0 %v1735, 48
      %v1747 = vpop.permute.xlu0 %1746
      %1748 = vrot.lane.b32.xlu0 %v1736, 48
      %v1749 = vpop.permute.xlu0 %1748
      %1750 = vrot.lane.b32.xlu0 %v1737, 48
      %v1751 = vpop.permute.xlu0 %1750
      %v1752 = vunpack.c.l.b16 %v1094
      %v1753 = vunpack.c.l.b16 %v1103
      %v1754 = vunpack.c.l.b16 %v1112
      %v1755 = vunpack.c.l.b16 %v1121
      %v1756 = vunpack.c.l.b16 %v1130
      %v1757 = vunpack.c.l.b16 %v1139
      %v1758 = vunpack.c.l.b16 %v1148
      %v1759 = vunpack.c.l.b16 %v1157
      %v1760 = vunpack.c.l.b16 %v1166
      %v1761 = vunpack.c.l.b16 %v1175
      %v1762 = vunpack.c.l.b16 %v1184
      %v1763 = vunpack.c.l.b16 %v1193
      %v1764 = vunpack.c.l.b16 %v1202
      %v1765 = vunpack.c.l.b16 %v1211
      %v1766 = vpack.c.b16 %v1753, %v1752
      %v1767 = vpack.c.b16 %v1755, %v1754
      %v1768 = vpack.c.b16 %v1757, %v1756
      %v1769 = vpack.c.b16 %v1759, %v1758
      %v1770 = vpack.c.b16 %v1761, %v1760
      %v1771 = vpack.c.b16 %v1763, %v1762
      %v1772 = vpack.c.b16 %v1765, %v1764
      %1773 = vrot.lane.b32.xlu0 %v1766, 60
      %v1774 = vpop.permute.xlu0 %1773
      %1775 = vrot.lane.b32.xlu0 %v1767, 60
      %v1776 = vpop.permute.xlu0 %1775
      %1777 = vrot.lane.b32.xlu0 %v1768, 60
      %v1778 = vpop.permute.xlu0 %1777
      %1779 = vrot.lane.b32.xlu0 %v1769, 60
      %v1780 = vpop.permute.xlu0 %1779
      %1781 = vrot.lane.b32.xlu0 %v1770, 60
      %v1782 = vpop.permute.xlu0 %1781
      %1783 = vrot.lane.b32.xlu0 %v1771, 60
      %v1784 = vpop.permute.xlu0 %1783
      %1785 = vrot.lane.b32.xlu0 %v1772, 60
      %v1786 = vpop.permute.xlu0 %1785
      %v1787 = vunpack.c.l.b16 %v1253
      %v1788 = vunpack.c.l.b16 %v1266
      %v1789 = vunpack.c.l.b16 %v1279
      %v1790 = vunpack.c.l.b16 %v1292
      %v1791 = vunpack.c.l.b16 %v1305
      %v1792 = vunpack.c.l.b16 %v1318
      %v1793 = vunpack.c.l.b16 %v1331
      %v1794 = vunpack.c.l.b16 %v1344
      %v1795 = vunpack.c.l.b16 %v1357
      %v1796 = vunpack.c.l.b16 %v1370
      %v1797 = vunpack.c.l.b16 %v1383
      %v1798 = vunpack.c.l.b16 %v1396
      %v1799 = vunpack.c.l.b16 %v1409
      %v1800 = vunpack.c.l.b16 %v1422
      %v1801 = vpack.c.b16 %v1788, %v1787
      %v1802 = vpack.c.b16 %v1790, %v1789
      %v1803 = vpack.c.b16 %v1792, %v1791
      %v1804 = vpack.c.b16 %v1794, %v1793
      %v1805 = vpack.c.b16 %v1796, %v1795
      %v1806 = vpack.c.b16 %v1798, %v1797
      %v1807 = vpack.c.b16 %v1800, %v1799
      %1808 = vrot.lane.b32.xlu0 %v1801, 72
      %v1809 = vpop.permute.xlu0 %1808
      %1810 = vrot.lane.b32.xlu0 %v1802, 72
      %v1811 = vpop.permute.xlu0 %1810
      %1812 = vrot.lane.b32.xlu0 %v1803, 72
      %v1813 = vpop.permute.xlu0 %1812
      %1814 = vrot.lane.b32.xlu0 %v1804, 72
      %v1815 = vpop.permute.xlu0 %1814
      %1816 = vrot.lane.b32.xlu0 %v1805, 72
      %v1817 = vpop.permute.xlu0 %1816
      %1818 = vrot.lane.b32.xlu0 %v1806, 72
      %v1819 = vpop.permute.xlu0 %1818
      %1820 = vrot.lane.b32.xlu0 %v1807, 72
      %v1821 = vpop.permute.xlu0 %1820
      %v1836 = vunpack.c.l.b16 %v1214
      %v1837 = vunpack.c.l.b16 %v1216
      %v1838 = vunpack.c.l.b16 %v1218
      %v1839 = vunpack.c.l.b16 %v1220
      %v1840 = vunpack.c.l.b16 %v1222
      %v1841 = vunpack.c.l.b16 %v1224
      %v1842 = vunpack.c.l.b16 %v1226
      %v1843 = vunpack.c.l.b16 %v1228
      %v1844 = vunpack.c.l.b16 %v1230
      %v1845 = vunpack.c.l.b16 %v1232
      %v1846 = vunpack.c.l.b16 %v1234
      %v1847 = vunpack.c.l.b16 %v1236
      %v1848 = vunpack.c.l.b16 %v1238
      %v1849 = vunpack.c.l.b16 %v1240
      %v1850 = vpack.c.b16 %v1837, %v1836
      %v1851 = vpack.c.b16 %v1839, %v1838
      %v1852 = vpack.c.b16 %v1841, %v1840
      %v1853 = vpack.c.b16 %v1843, %v1842
      %v1854 = vpack.c.b16 %v1845, %v1844
      %v1855 = vpack.c.b16 %v1847, %v1846
      %v1856 = vpack.c.b16 %v1849, %v1848
      %1857 = vrot.lane.b32.xlu0 %v1850, 84
      %v1858 = vpop.permute.xlu0 %1857
      %1859 = vrot.lane.b32.xlu0 %v1851, 84
      %v1860 = vpop.permute.xlu0 %1859
      %1861 = vrot.lane.b32.xlu0 %v1852, 84
      %v1862 = vpop.permute.xlu0 %1861
      %1863 = vrot.lane.b32.xlu0 %v1853, 84
      %v1864 = vpop.permute.xlu0 %1863
      %1865 = vrot.lane.b32.xlu0 %v1854, 84
      %v1866 = vpop.permute.xlu0 %1865
      %1867 = vrot.lane.b32.xlu0 %v1855, 84
      %v1868 = vpop.permute.xlu0 %1867
      %1869 = vrot.lane.b32.xlu0 %v1856, 84
      %v1870 = vpop.permute.xlu0 %1869
      %v1871 = vunpack.c.l.b16 %v1445
      %v1872 = vunpack.c.l.b16 %v1454
      %v1873 = vunpack.c.l.b16 %v1463
      %v1874 = vunpack.c.l.b16 %v1472
      %v1875 = vunpack.c.l.b16 %v1481
      %v1876 = vunpack.c.l.b16 %v1490
      %v1877 = vunpack.c.l.b16 %v1499
      %v1878 = vunpack.c.l.b16 %v1508
      %v1879 = vunpack.c.l.b16 %v1517
      %v1880 = vunpack.c.l.b16 %v1526
      %v1881 = vunpack.c.l.b16 %v1535
      %v1882 = vunpack.c.l.b16 %v1544
      %v1883 = vunpack.c.l.b16 %v1553
      %v1884 = vunpack.c.l.b16 %v1562
      %v1885 = vpack.c.b16 %v1872, %v1871
      %v1886 = vpack.c.b16 %v1874, %v1873
      %v1887 = vpack.c.b16 %v1876, %v1875
      %v1888 = vpack.c.b16 %v1878, %v1877
      %v1889 = vpack.c.b16 %v1880, %v1879
      %v1890 = vpack.c.b16 %v1882, %v1881
      %v1891 = vpack.c.b16 %v1884, %v1883
      %1892 = vrot.lane.b32.xlu0 %v1885, 96
      %v1893 = vpop.permute.xlu0 %1892
      %1894 = vrot.lane.b32.xlu0 %v1886, 96
      %v1895 = vpop.permute.xlu0 %1894
      %1896 = vrot.lane.b32.xlu0 %v1887, 96
      %v1897 = vpop.permute.xlu0 %1896
      %1898 = vrot.lane.b32.xlu0 %v1888, 96
      %v1899 = vpop.permute.xlu0 %1898
      %1900 = vrot.lane.b32.xlu0 %v1889, 96
      %v1901 = vpop.permute.xlu0 %1900
      %1902 = vrot.lane.b32.xlu0 %v1890, 96
      %v1903 = vpop.permute.xlu0 %1902
      %1904 = vrot.lane.b32.xlu0 %v1891, 96
      %v1905 = vpop.permute.xlu0 %1904
      %vm1906 = vcmask 97280
      %v1909 = vsel %vm1906, %v1577, %v1620
      %v1912 = vsel %vm1906, %v1578, %v1622
      %v1915 = vsel %vm1906, %v1579, %v1624
      %v1918 = vsel %vm1906, %v1580, %v1626
      %v1921 = vsel %vm1906, %v1581, %v1628
      %v1924 = vsel %vm1906, %v1582, %v1630
      %v1927 = vsel %vm1906, %v1583, %v1632
      %vm1928 = vcmask 195584
      %v1930 = vsel %vm1928, %v1909, %v1655
      %v1932 = vsel %vm1928, %v1912, %v1657
      %v1934 = vsel %vm1928, %v1915, %v1659
      %v1936 = vsel %vm1928, %v1918, %v1661
      %v1938 = vsel %vm1928, %v1921, %v1663
      %v1940 = vsel %vm1928, %v1924, %v1665
      %v1942 = vsel %vm1928, %v1927, %v1667
      %vm1943 = vcmask 293888
      %v1945 = vsel %vm1943, %v1930, %v1690
      %v1947 = vsel %vm1943, %v1932, %v1692
      %v1949 = vsel %vm1943, %v1934, %v1694
      %v1951 = vsel %vm1943, %v1936, %v1696
      %v1953 = vsel %vm1943, %v1938, %v1698
      %v1955 = vsel %vm1943, %v1940, %v1700
      %v1957 = vsel %vm1943, %v1942, %v1702
      %vm1958 = vcmask 392192
      %v1960 = vsel %vm1958, %v1945, %v1739
      %v1962 = vsel %vm1958, %v1947, %v1741
      %v1964 = vsel %vm1958, %v1949, %v1743
      %v1966 = vsel %vm1958, %v1951, %v1745
      %v1968 = vsel %vm1958, %v1953, %v1747
      %v1970 = vsel %vm1958, %v1955, %v1749
      %v1972 = vsel %vm1958, %v1957, %v1751
      %vm1973 = vcmask 490496
      %v1975 = vsel %vm1973, %v1960, %v1774
      %v1977 = vsel %vm1973, %v1962, %v1776
      %v1979 = vsel %vm1973, %v1964, %v1778
      %v1981 = vsel %vm1973, %v1966, %v1780
      %v1983 = vsel %vm1973, %v1968, %v1782
      %v1985 = vsel %vm1973, %v1970, %v1784
      %v1987 = vsel %vm1973, %v1972, %v1786
      %vm1988 = vcmask 588800
      %v1990 = vsel %vm1988, %v1975, %v1809
      %v1992 = vsel %vm1988, %v1977, %v1811
      %v1994 = vsel %vm1988, %v1979, %v1813
      %v1996 = vsel %vm1988, %v1981, %v1815
      %v1998 = vsel %vm1988, %v1983, %v1817
      %v2000 = vsel %vm1988, %v1985, %v1819
      %v2002 = vsel %vm1988, %v1987, %v1821
      %vm2003 = vcmask 687104
      %v2005 = vsel %vm2003, %v1990, %v1858
      %v2007 = vsel %vm2003, %v1992, %v1860
      %v2009 = vsel %vm2003, %v1994, %v1862
      %v2011 = vsel %vm2003, %v1996, %v1864
      %v2013 = vsel %vm2003, %v1998, %v1866
      %v2015 = vsel %vm2003, %v2000, %v1868
      %v2017 = vsel %vm2003, %v2002, %v1870
      %vm2018 = vcmask 785408
      %v2020 = vsel %vm2018, %v2005, %v1893
      %v2022 = vsel %vm2018, %v2007, %v1895
      %v2024 = vsel %vm2018, %v2009, %v1897
      %v2026 = vsel %vm2018, %v2011, %v1899
      %v2028 = vsel %vm2018, %v2013, %v1901
      %v2030 = vsel %vm2018, %v2015, %v1903
      %v2032 = vsel %vm2018, %v2017, %v1905
      %v2033 = vld [vmem:[%s1] sm:$0xf]
      %v2034 = vld [vmem:[%s1 + $0x4] sm:$0xf]
      %v2035 = vld [vmem:[%s1 + $0x8] sm:$0xf]
      %v2036 = vld [vmem:[%s1 + $0xc] sm:$0xf]
      %v2037 = vld [vmem:[%s1 + $0x10] sm:$0xf]
      %v2038 = vld [vmem:[%s1 + $0x14] sm:$0xf]
      %v2039 = vld [vmem:[%s1 + $0x18] sm:$0xf]
      %v2040 = vld [vmem:[%s1 + $0x1c] sm:$0xf]
      %v2041 = vld [vmem:[%s1 + $0x20] sm:$0xf]
      %v2042 = vld [vmem:[%s1 + $0x24] sm:$0xf]
      %v2043 = vld [vmem:[%s1 + $0x28] sm:$0xf]
      %v2044 = vld [vmem:[%s1 + $0x2c] sm:$0xf]
      %v2045 = vld [vmem:[%s1 + $0x30] sm:$0xf]
      %v2046 = vld [vmem:[%s1 + $0x34] sm:$0x3]
      %v2047 = vld [vmem:[%s2] sm:$0x1]
      %v2049 = vlaneseq
      %v2050 = vshrl.u32 %v2049, 7
      %v2051 = vsub.s32 0, %v2050
      %v2052 = vrot.slane %v2047, %v2051
      %v2068 = vunpack.c.l.b16 %v2033
      %v2069 = vunpack.c.l.b16 %v2034
      %v2070 = vunpack.c.l.b16 %v2035
      %v2071 = vunpack.c.l.b16 %v2036
      %v2072 = vunpack.c.l.b16 %v2037
      %v2073 = vunpack.c.l.b16 %v2038
      %v2074 = vunpack.c.l.b16 %v2039
      %v2075 = vunpack.c.l.b16 %v2040
      %v2076 = vunpack.c.l.b16 %v2041
      %v2077 = vunpack.c.l.b16 %v2042
      %v2078 = vunpack.c.l.b16 %v2043
      %v2079 = vunpack.c.l.b16 %v2044
      %v2080 = vunpack.c.l.b16 %v2045
      %v2081 = vunpack.c.l.b16 %v2046
      %v2082 = vpack.c.b16 %v2069, %v2068
      %v2083 = vpack.c.b16 %v2071, %v2070
      %v2084 = vpack.c.b16 %v2073, %v2072
      %v2085 = vpack.c.b16 %v2075, %v2074
      %v2086 = vpack.c.b16 %v2077, %v2076
      %v2087 = vpack.c.b16 %v2079, %v2078
      %v2088 = vpack.c.b16 %v2081, %v2080
      %vm2095 = vcmask 883712
      %v2096 = vsel %vm2095, %v2020, 0
      %v2098 = vsel %vm2095, %v2022, 0
      %v2100 = vsel %vm2095, %v2024, 0
      %v2102 = vsel %vm2095, %v2026, 0
      %v2104 = vsel %vm2095, %v2028, 0
      %v2106 = vsel %vm2095, %v2030, 0
      %v2108 = vsel %vm2095, %v2032, 0
      %vm2110 = vcmask 1045504
      %v2112 = vsel %vm2110, %v2088, 0
      %2114 = vmatprep.subr.bf16.mxu0 0
      %2115 = vmatpush1.bf16.msra.mxu0 %v2082
      %2116 = vmatprep.subr.bf16.mxu0 0
      %2117 = vmatpush1.bf16.msra.mxu0 %v2083
      %2118 = vmatprep.subr.bf16.mxu0 0
      %2119 = vmatpush1.bf16.msra.mxu0 %v2084
      %2120 = vmatprep.subr.bf16.mxu0 0
      %2121 = vmatpush1.bf16.msra.mxu0 %v2085
      %2122 = vmatprep.subr.bf16.mxu0 0
      %2123 = vmatpush1.bf16.msra.mxu0 %v2086
      %2124 = vmatprep.subr.bf16.mxu0 0
      %2125 = vmatpush1.bf16.msra.mxu0 %v2087
      %2126 = vmatprep.subr.bf16.mxu0 0
      %2127 = vmatpush1.bf16.msra.mxu0 %v2112
      %2128 = vmatprep.subr.bf16.mxu0 0
      %2129 = vmatpush1.bf16.msra.mxu0 0
      %2130 = vmatprep.subr.bf16.mxu0 0
      %2131 = vmatpush1.bf16.msra.mxu0 0
      %2132 = vmatprep.subr.bf16.mxu0 0
      %2133 = vmatpush1.bf16.msra.mxu0 0
      %2134 = vmatprep.subr.bf16.mxu0 0
      %2135 = vmatpush1.bf16.msra.mxu0 0
      %2136 = vmatprep.subr.bf16.mxu0 0
      %2137 = vmatpush1.bf16.msra.mxu0 0
      %2138 = vmatprep.subr.bf16.mxu0 0
      %2139 = vmatpush1.bf16.msra.mxu0 0
      %2140 = vmatprep.subr.bf16.mxu0 0
      %2141 = vmatpush1.bf16.msra.mxu0 0
      %2142 = vmatprep.subr.bf16.mxu0 0
      %2143 = vmatpush1.bf16.msra.mxu0 0
      %2144 = vmatprep.subr.bf16.mxu0 0
      %2145 = vmatpush1.bf16.msra.mxu0 0
      %2146 = vmatprep.mubr.bf16.mxu0 0
      %2147 = vmatmul.mubr.bf16.gmra.mrb[0].mxu0 %v2096
      %v2148 = vpop.f32.mrb[0].mxu0
      %v2149 = vadd.f32 %v2052, %v2148
      %v2150 = vpop.f32.mrb[0].mxu0
      %v2151 = vpop.f32.mrb[0].mxu0
      %v2152 = vadd.f32 %v2052, %v2151
      %v2153 = vpop.f32.mrb[0].mxu0
      %2154 = vmatprep.mubr.bf16.mxu0 0
      %2155 = vmatmul.mubr.bf16.gmra.mrb[0].mxu0 %v2098
      %v2156 = vpop.f32.mrb[0].mxu0
      %v2157 = vadd.f32 %v2052, %v2156
      %v2158 = vpop.f32.mrb[0].mxu0
      %v2159 = vpop.f32.mrb[0].mxu0
      %v2160 = vadd.f32 %v2052, %v2159
      %v2161 = vpop.f32.mrb[0].mxu0
      %2162 = vmatprep.mubr.bf16.mxu0 0
      %2163 = vmatmul.mubr.bf16.gmra.mrb[0].mxu0 %v2100
      %v2164 = vpop.f32.mrb[0].mxu0
      %v2165 = vadd.f32 %v2052, %v2164
      %v2166 = vpop.f32.mrb[0].mxu0
      %v2167 = vpop.f32.mrb[0].mxu0
      %v2168 = vadd.f32 %v2052, %v2167
      %v2169 = vpop.f32.mrb[0].mxu0
      %2170 = vmatprep.mubr.bf16.mxu0 0
      %2171 = vmatmul.mubr.bf16.gmra.mrb[0].mxu0 %v2102
      %v2172 = vpop.f32.mrb[0].mxu0
      %v2173 = vadd.f32 %v2052, %v2172
      %v2174 = vpop.f32.mrb[0].mxu0
      %v2175 = vpop.f32.mrb[0].mxu0
      %v2176 = vadd.f32 %v2052, %v2175
      %v2177 = vpop.f32.mrb[0].mxu0
      %2178 = vmatprep.mubr.bf16.mxu0 0
      %2179 = vmatmul.mubr.bf16.gmra.mrb[0].mxu0 %v2104
      %v2180 = vpop.f32.mrb[0].mxu0
      %v2181 = vadd.f32 %v2052, %v2180
      %v2182 = vpop.f32.mrb[0].mxu0
      %v2183 = vpop.f32.mrb[0].mxu0
      %v2184 = vadd.f32 %v2052, %v2183
      %v2185 = vpop.f32.mrb[0].mxu0
      %2186 = vmatprep.mubr.bf16.mxu0 0
      %2187 = vmatmul.mubr.bf16.gmra.mrb[0].mxu0 %v2106
      %v2188 = vpop.f32.mrb[0].mxu0
      %v2189 = vadd.f32 %v2052, %v2188
      %v2190 = vpop.f32.mrb[0].mxu0
      %v2191 = vpop.f32.mrb[0].mxu0
      %v2192 = vadd.f32 %v2052, %v2191
      %v2193 = vpop.f32.mrb[0].mxu0
      %2194 = vmatprep.mubr.bf16.mxu0 0
      %2195 = vmatmul.mubr.bf16.gmra.mrb[0].mxu0 %v2108
      %v2196 = vpop.f32.mrb[0].mxu0
      %v2197 = vadd.f32 %v2052, %v2196
      %v2198 = vpop.f32.mrb[0].mxu0
      %v2199 = vpop.f32.mrb[0].mxu0
      %v2200 = vadd.f32 %v2052, %v2199
      %v2201 = vpop.f32.mrb[0].mxu0
      %2202 = vdwg.mxu0
      %vm2203 = vcmp.ge.f32.partialorder %v2149, 0.0
      %vm2204 = vcmp.ge.f32.partialorder %v2152, 0.0
      %vm2205 = vcmp.ge.f32.partialorder %v2157, 0.0
      %vm2206 = vcmp.ge.f32.partialorder %v2160, 0.0
      %vm2207 = vcmp.ge.f32.partialorder %v2165, 0.0
      %vm2208 = vcmp.ge.f32.partialorder %v2168, 0.0
      %vm2209 = vcmp.ge.f32.partialorder %v2173, 0.0
      %vm2210 = vcmp.ge.f32.partialorder %v2176, 0.0
      %vm2211 = vcmp.ge.f32.partialorder %v2181, 0.0
      %vm2212 = vcmp.ge.f32.partialorder %v2184, 0.0
      %vm2213 = vcmp.ge.f32.partialorder %v2189, 0.0
      %vm2214 = vcmp.ge.f32.partialorder %v2192, 0.0
      %vm2215 = vcmp.ge.f32.partialorder %v2197, 0.0
      %vm2216 = vcmp.ge.f32.partialorder %v2200, 0.0
      %v2217 = vmul.f32 %v2149, 0.1
      %v2218 = vmul.f32 %v2152, 0.1
      %v2219 = vmul.f32 %v2157, 0.1
      %v2220 = vmul.f32 %v2160, 0.1
      %v2221 = vmul.f32 %v2165, 0.1
      %v2222 = vmul.f32 %v2168, 0.1
      %v2223 = vmul.f32 %v2173, 0.1
      %v2224 = vmul.f32 %v2176, 0.1
      %v2225 = vmul.f32 %v2181, 0.1
      %v2226 = vmul.f32 %v2184, 0.1
      %v2227 = vmul.f32 %v2189, 0.1
      %v2228 = vmul.f32 %v2192, 0.1
      %v2229 = vmul.f32 %v2197, 0.1
      %v2230 = vmul.f32 %v2200, 0.1
      %v2231 = vsel %vm2203, %v2149, %v2217
      %v2232 = vsel %vm2204, %v2152, %v2218
      %v2233 = vsel %vm2205, %v2157, %v2219
      %v2234 = vsel %vm2206, %v2160, %v2220
      %v2235 = vsel %vm2207, %v2165, %v2221
      %v2236 = vsel %vm2208, %v2168, %v2222
      %v2237 = vsel %vm2209, %v2173, %v2223
      %v2238 = vsel %vm2210, %v2176, %v2224
      %v2239 = vsel %vm2211, %v2181, %v2225
      %v2240 = vsel %vm2212, %v2184, %v2226
      %v2241 = vsel %vm2213, %v2189, %v2227
      %v2242 = vsel %vm2214, %v2192, %v2228
      %v2243 = vsel %vm2215, %v2197, %v2229
      %v2244 = vsel %vm2216, %v2200, %v2230
      %v2245 = vpack.c.bf16 %v2231, %v2231
      %v2246 = vpack.c.bf16 %v2232, %v2232
      %v2247 = vpack.c.bf16 %v2233, %v2233
      %v2248 = vpack.c.bf16 %v2234, %v2234
      %v2249 = vpack.c.bf16 %v2235, %v2235
      %v2250 = vpack.c.bf16 %v2236, %v2236
      %v2251 = vpack.c.bf16 %v2237, %v2237
      %v2252 = vpack.c.bf16 %v2238, %v2238
      %v2253 = vpack.c.bf16 %v2239, %v2239
      %v2254 = vpack.c.bf16 %v2240, %v2240
      %v2255 = vpack.c.bf16 %v2241, %v2241
      %v2256 = vpack.c.bf16 %v2242, %v2242
      %v2257 = vpack.c.bf16 %v2243, %v2243
      %v2258 = vpack.c.bf16 %v2244, %v2244
      %vm2259 = vcmask 257024
      %2260 = vst.msk [vmem:[%s861 + $0x8] sm:$0xf] %vm2259, %v2245
      %2261 = vst.msk [vmem:[%s861 + $0x18] sm:$0xf] %vm2259, %v2246
      %2262 = vst.msk [vmem:[%s861 + $0x28] sm:$0xf] %vm2259, %v2247
      %2263 = vst.msk [vmem:[%s861 + $0x38] sm:$0xf] %vm2259, %v2248
      %2264 = vst.msk [vmem:[%s861 + $0x48] sm:$0xf] %vm2259, %v2249
      %2265 = vst.msk [vmem:[%s861 + $0x58] sm:$0xf] %vm2259, %v2250
      %2266 = vst.msk [vmem:[%s861 + $0x68] sm:$0xf] %vm2259, %v2251
      %2267 = vst.msk [vmem:[%s861 + $0x78] sm:$0xf] %vm2259, %v2252
      %2268 = vst.msk [vmem:[%s861 + $0x88] sm:$0xf] %vm2259, %v2253
      %2269 = vst.msk [vmem:[%s861 + $0x98] sm:$0xf] %vm2259, %v2254
      %2270 = vst.msk [vmem:[%s861 + $0xa8] sm:$0xf] %vm2259, %v2255
      %2271 = vst.msk [vmem:[%s861 + $0xb8] sm:$0xf] %vm2259, %v2256
      %2272 = vst.msk [vmem:[%s861 + $0xc8] sm:$0xf] %vm2259, %v2257
      %2273 = vst.msk [vmem:[%s861 + $0xd8] sm:$0xf] %vm2259, %v2258
      %v2274 = vld [vmem:[%s861 + $0x4] sm:$0x8]
      %v2275 = vld [vmem:[%s861 + $0x8] sm:$0xf]
      %v2276 = vld [vmem:[%s861 + $0x14] sm:$0x8]
      %v2277 = vld [vmem:[%s861 + $0x18] sm:$0xf]
      %v2278 = vld [vmem:[%s861 + $0x24] sm:$0x8]
      %v2279 = vld [vmem:[%s861 + $0x28] sm:$0xf]
      %v2280 = vld [vmem:[%s861 + $0x34] sm:$0x8]
      %v2281 = vld [vmem:[%s861 + $0x38] sm:$0xf]
      %v2282 = vld [vmem:[%s861 + $0x44] sm:$0x8]
      %v2283 = vld [vmem:[%s861 + $0x48] sm:$0xf]
      %v2284 = vld [vmem:[%s861 + $0x54] sm:$0x8]
      %v2285 = vld [vmem:[%s861 + $0x58] sm:$0xf]
      %v2286 = vld [vmem:[%s861 + $0x64] sm:$0x8]
      %v2287 = vld [vmem:[%s861 + $0x68] sm:$0xf]
      %v2288 = vld [vmem:[%s861 + $0x74] sm:$0x8]
      %v2289 = vld [vmem:[%s861 + $0x78] sm:$0xf]
      %v2290 = vld [vmem:[%s861 + $0x84] sm:$0x8]
      %v2291 = vld [vmem:[%s861 + $0x88] sm:$0xf]
      %v2292 = vld [vmem:[%s861 + $0x94] sm:$0x8]
      %v2293 = vld [vmem:[%s861 + $0x98] sm:$0xf]
      %v2294 = vld [vmem:[%s861 + $0xa4] sm:$0x8]
      %v2295 = vld [vmem:[%s861 + $0xa8] sm:$0xf]
      %v2296 = vld [vmem:[%s861 + $0xb4] sm:$0x8]
      %v2297 = vld [vmem:[%s861 + $0xb8] sm:$0xf]
      %v2299 = vshrl.u32 %v2274, 16
      %v2301 = vrot.slane %v2299, 7
      %v2302 = vrot.slane %v2301, 4
      %v2304 = vshrl.u32 %v2275, 16
      %v2306 = vrot.slane %v2304, 7
      %v2307 = vshll.u32 %v2275, 16
      %v2309 = vor.u32 %v2306, %v2307
      %v2310 = vsel %vm535, %v2302, %v2309
      %v2312 = vshrl.u32 %v2276, 16
      %v2314 = vrot.slane %v2312, 7
      %v2315 = vrot.slane %v2314, 4
      %v2317 = vshrl.u32 %v2277, 16
      %v2319 = vrot.slane %v2317, 7
      %v2320 = vshll.u32 %v2277, 16
      %v2322 = vor.u32 %v2319, %v2320
      %v2323 = vsel %vm535, %v2315, %v2322
      %v2325 = vshrl.u32 %v2278, 16
      %v2327 = vrot.slane %v2325, 7
      %v2328 = vrot.slane %v2327, 4
      %v2330 = vshrl.u32 %v2279, 16
      %v2332 = vrot.slane %v2330, 7
      %v2333 = vshll.u32 %v2279, 16
      %v2335 = vor.u32 %v2332, %v2333
      %v2336 = vsel %vm535, %v2328, %v2335
      %v2338 = vshrl.u32 %v2280, 16
      %v2340 = vrot.slane %v2338, 7
      %v2341 = vrot.slane %v2340, 4
      %v2343 = vshrl.u32 %v2281, 16
      %v2345 = vrot.slane %v2343, 7
      %v2346 = vshll.u32 %v2281, 16
      %v2348 = vor.u32 %v2345, %v2346
      %v2349 = vsel %vm535, %v2341, %v2348
      %v2351 = vshrl.u32 %v2282, 16
      %v2353 = vrot.slane %v2351, 7
      %v2354 = vrot.slane %v2353, 4
      %v2356 = vshrl.u32 %v2283, 16
      %v2358 = vrot.slane %v2356, 7
      %v2359 = vshll.u32 %v2283, 16
      %v2361 = vor.u32 %v2358, %v2359
      %v2362 = vsel %vm535, %v2354, %v2361
      %v2364 = vshrl.u32 %v2284, 16
      %v2366 = vrot.slane %v2364, 7
      %v2367 = vrot.slane %v2366, 4
      %v2369 = vshrl.u32 %v2285, 16
      %v2371 = vrot.slane %v2369, 7
      %v2372 = vshll.u32 %v2285, 16
      %v2374 = vor.u32 %v2371, %v2372
      %v2375 = vsel %vm535, %v2367, %v2374
      %v2377 = vshrl.u32 %v2286, 16
      %v2379 = vrot.slane %v2377, 7
      %v2380 = vrot.slane %v2379, 4
      %v2382 = vshrl.u32 %v2287, 16
      %v2384 = vrot.slane %v2382, 7
      %v2385 = vshll.u32 %v2287, 16
      %v2387 = vor.u32 %v2384, %v2385
      %v2388 = vsel %vm535, %v2380, %v2387
      %v2390 = vshrl.u32 %v2288, 16
      %v2392 = vrot.slane %v2390, 7
      %v2393 = vrot.slane %v2392, 4
      %v2395 = vshrl.u32 %v2289, 16
      %v2397 = vrot.slane %v2395, 7
      %v2398 = vshll.u32 %v2289, 16
      %v2400 = vor.u32 %v2397, %v2398
      %v2401 = vsel %vm535, %v2393, %v2400
      %v2403 = vshrl.u32 %v2290, 16
      %v2405 = vrot.slane %v2403, 7
      %v2406 = vrot.slane %v2405, 4
      %v2408 = vshrl.u32 %v2291, 16
      %v2410 = vrot.slane %v2408, 7
      %v2411 = vshll.u32 %v2291, 16
      %v2413 = vor.u32 %v2410, %v2411
      %v2414 = vsel %vm535, %v2406, %v2413
      %v2416 = vshrl.u32 %v2292, 16
      %v2418 = vrot.slane %v2416, 7
      %v2419 = vrot.slane %v2418, 4
      %v2421 = vshrl.u32 %v2293, 16
      %v2423 = vrot.slane %v2421, 7
      %v2424 = vshll.u32 %v2293, 16
      %v2426 = vor.u32 %v2423, %v2424
      %v2427 = vsel %vm535, %v2419, %v2426
      %v2429 = vshrl.u32 %v2294, 16
      %v2431 = vrot.slane %v2429, 7
      %v2432 = vrot.slane %v2431, 4
      %v2434 = vshrl.u32 %v2295, 16
      %v2436 = vrot.slane %v2434, 7
      %v2437 = vshll.u32 %v2295, 16
      %v2439 = vor.u32 %v2436, %v2437
      %v2440 = vsel %vm535, %v2432, %v2439
      %v2442 = vshrl.u32 %v2296, 16
      %v2444 = vrot.slane %v2442, 7
      %v2445 = vrot.slane %v2444, 4
      %v2447 = vshrl.u32 %v2297, 16
      %v2449 = vrot.slane %v2447, 7
      %v2450 = vshll.u32 %v2297, 16
      %v2452 = vor.u32 %v2449, %v2450
      %v2453 = vsel %vm535, %v2445, %v2452
      %v2454 = vld [vmem:[%s861 + $0xc] sm:$0x1]
      %v2455 = vld [vmem:[%s861 + $0x1c] sm:$0x1]
      %v2456 = vld [vmem:[%s861 + $0x2c] sm:$0x1]
      %v2457 = vld [vmem:[%s861 + $0x3c] sm:$0x1]
      %v2458 = vld [vmem:[%s861 + $0x4c] sm:$0x1]
      %v2459 = vld [vmem:[%s861 + $0x5c] sm:$0x1]
      %v2460 = vld [vmem:[%s861 + $0x6c] sm:$0x1]
      %v2461 = vld [vmem:[%s861 + $0x7c] sm:$0x1]
      %v2462 = vld [vmem:[%s861 + $0x8c] sm:$0x1]
      %v2463 = vld [vmem:[%s861 + $0x9c] sm:$0x1]
      %v2464 = vld [vmem:[%s861 + $0xac] sm:$0x1]
      %v2465 = vld [vmem:[%s861 + $0xbc] sm:$0x1]
      %v2466 = vrot.slane %v2304, 4
      %v2467 = vrot.slane %v2307, 5
      %v2468 = vor.u32 %v2466, %v2467
      %v2469 = vrot.slane %v2468, 4
      %v2471 = vshll.u32 %v2454, 16
      %v2473 = vrot.slane %v2471, 5
      %v2474 = vsel %vm734, %v2469, %v2473
      %v2475 = vrot.slane %v2317, 4
      %v2476 = vrot.slane %v2320, 5
      %v2477 = vor.u32 %v2475, %v2476
      %v2478 = vrot.slane %v2477, 4
      %v2480 = vshll.u32 %v2455, 16
      %v2482 = vrot.slane %v2480, 5
      %v2483 = vsel %vm734, %v2478, %v2482
      %v2484 = vrot.slane %v2330, 4
      %v2485 = vrot.slane %v2333, 5
      %v2486 = vor.u32 %v2484, %v2485
      %v2487 = vrot.slane %v2486, 4
      %v2489 = vshll.u32 %v2456, 16
      %v2491 = vrot.slane %v2489, 5
      %v2492 = vsel %vm734, %v2487, %v2491
      %v2493 = vrot.slane %v2343, 4
      %v2494 = vrot.slane %v2346, 5
      %v2495 = vor.u32 %v2493, %v2494
      %v2496 = vrot.slane %v2495, 4
      %v2498 = vshll.u32 %v2457, 16
      %v2500 = vrot.slane %v2498, 5
      %v2501 = vsel %vm734, %v2496, %v2500
      %v2502 = vrot.slane %v2356, 4
      %v2503 = vrot.slane %v2359, 5
      %v2504 = vor.u32 %v2502, %v2503
      %v2505 = vrot.slane %v2504, 4
      %v2507 = vshll.u32 %v2458, 16
      %v2509 = vrot.slane %v2507, 5
      %v2510 = vsel %vm734, %v2505, %v2509
      %v2511 = vrot.slane %v2369, 4
      %v2512 = vrot.slane %v2372, 5
      %v2513 = vor.u32 %v2511, %v2512
      %v2514 = vrot.slane %v2513, 4
      %v2516 = vshll.u32 %v2459, 16
      %v2518 = vrot.slane %v2516, 5
      %v2519 = vsel %vm734, %v2514, %v2518
      %v2520 = vrot.slane %v2382, 4
      %v2521 = vrot.slane %v2385, 5
      %v2522 = vor.u32 %v2520, %v2521
      %v2523 = vrot.slane %v2522, 4
      %v2525 = vshll.u32 %v2460, 16
      %v2527 = vrot.slane %v2525, 5
      %v2528 = vsel %vm734, %v2523, %v2527
      %v2529 = vrot.slane %v2395, 4
      %v2530 = vrot.slane %v2398, 5
      %v2531 = vor.u32 %v2529, %v2530
      %v2532 = vrot.slane %v2531, 4
      %v2534 = vshll.u32 %v2461, 16
      %v2536 = vrot.slane %v2534, 5
      %v2537 = vsel %vm734, %v2532, %v2536
      %v2538 = vrot.slane %v2408, 4
      %v2539 = vrot.slane %v2411, 5
      %v2540 = vor.u32 %v2538, %v2539
      %v2541 = vrot.slane %v2540, 4
      %v2543 = vshll.u32 %v2462, 16
      %v2545 = vrot.slane %v2543, 5
      %v2546 = vsel %vm734, %v2541, %v2545
      %v2547 = vrot.slane %v2421, 4
      %v2548 = vrot.slane %v2424, 5
      %v2549 = vor.u32 %v2547, %v2548
      %v2550 = vrot.slane %v2549, 4
      %v2552 = vshll.u32 %v2463, 16
      %v2554 = vrot.slane %v2552, 5
      %v2555 = vsel %vm734, %v2550, %v2554
      %v2556 = vrot.slane %v2434, 4
      %v2557 = vrot.slane %v2437, 5
      %v2558 = vor.u32 %v2556, %v2557
      %v2559 = vrot.slane %v2558, 4
      %v2561 = vshll.u32 %v2464, 16
      %v2563 = vrot.slane %v2561, 5
      %v2564 = vsel %vm734, %v2559, %v2563
      %v2565 = vrot.slane %v2447, 4
      %v2566 = vrot.slane %v2450, 5
      %v2567 = vor.u32 %v2565, %v2566
      %v2568 = vrot.slane %v2567, 4
      %v2570 = vshll.u32 %v2465, 16
      %v2572 = vrot.slane %v2570, 5
      %v2573 = vsel %vm734, %v2568, %v2572
      %v2574 = vld [vmem:[%s1212 + $0x4] sm:$0x8]
      %v2575 = vld [vmem:[%s1212 + $0x8] sm:$0xf]
      %v2576 = vld [vmem:[%s1212 + $0x14] sm:$0x8]
      %v2577 = vld [vmem:[%s1212 + $0x18] sm:$0xf]
      %v2578 = vld [vmem:[%s1212 + $0x24] sm:$0x8]
      %v2579 = vld [vmem:[%s1212 + $0x28] sm:$0xf]
      %v2580 = vld [vmem:[%s1212 + $0x34] sm:$0x8]
      %v2581 = vld [vmem:[%s1212 + $0x38] sm:$0xf]
      %v2582 = vld [vmem:[%s1212 + $0x44] sm:$0x8]
      %v2583 = vld [vmem:[%s1212 + $0x48] sm:$0xf]
      %v2584 = vld [vmem:[%s1212 + $0x54] sm:$0x8]
      %v2585 = vld [vmem:[%s1212 + $0x58] sm:$0xf]
      %v2586 = vld [vmem:[%s1212 + $0x64] sm:$0x8]
      %v2587 = vld [vmem:[%s1212 + $0x68] sm:$0xf]
      %v2588 = vld [vmem:[%s1212 + $0x74] sm:$0x8]
      %v2589 = vld [vmem:[%s1212 + $0x78] sm:$0xf]
      %v2590 = vld [vmem:[%s1212 + $0x84] sm:$0x8]
      %v2591 = vld [vmem:[%s1212 + $0x88] sm:$0xf]
      %v2592 = vld [vmem:[%s1212 + $0x94] sm:$0x8]
      %v2593 = vld [vmem:[%s1212 + $0x98] sm:$0xf]
      %v2594 = vld [vmem:[%s1212 + $0xa4] sm:$0x8]
      %v2595 = vld [vmem:[%s1212 + $0xa8] sm:$0xf]
      %v2596 = vld [vmem:[%s1212 + $0xb4] sm:$0x8]
      %v2597 = vld [vmem:[%s1212 + $0xb8] sm:$0xf]
      %v2599 = vshrl.u32 %v2574, 16
      %v2601 = vrot.slane %v2599, 7
      %v2602 = vrot.slane %v2601, 4
      %v2604 = vshrl.u32 %v2575, 16
      %v2606 = vrot.slane %v2604, 7
      %v2607 = vshll.u32 %v2575, 16
      %v2609 = vor.u32 %v2606, %v2607
      %v2610 = vsel %vm535, %v2602, %v2609
      %v2612 = vshrl.u32 %v2576, 16
      %v2614 = vrot.slane %v2612, 7
      %v2615 = vrot.slane %v2614, 4
      %v2617 = vshrl.u32 %v2577, 16
      %v2619 = vrot.slane %v2617, 7
      %v2620 = vshll.u32 %v2577, 16
      %v2622 = vor.u32 %v2619, %v2620
      %v2623 = vsel %vm535, %v2615, %v2622
      %v2625 = vshrl.u32 %v2578, 16
      %v2627 = vrot.slane %v2625, 7
      %v2628 = vrot.slane %v2627, 4
      %v2630 = vshrl.u32 %v2579, 16
      %v2632 = vrot.slane %v2630, 7
      %v2633 = vshll.u32 %v2579, 16
      %v2635 = vor.u32 %v2632, %v2633
      %v2636 = vsel %vm535, %v2628, %v2635
      %v2638 = vshrl.u32 %v2580, 16
      %v2640 = vrot.slane %v2638, 7
      %v2641 = vrot.slane %v2640, 4
      %v2643 = vshrl.u32 %v2581, 16
      %v2645 = vrot.slane %v2643, 7
      %v2646 = vshll.u32 %v2581, 16
      %v2648 = vor.u32 %v2645, %v2646
      %v2649 = vsel %vm535, %v2641, %v2648
      %v2651 = vshrl.u32 %v2582, 16
      %v2653 = vrot.slane %v2651, 7
      %v2654 = vrot.slane %v2653, 4
      %v2656 = vshrl.u32 %v2583, 16
      %v2658 = vrot.slane %v2656, 7
      %v2659 = vshll.u32 %v2583, 16
      %v2661 = vor.u32 %v2658, %v2659
      %v2662 = vsel %vm535, %v2654, %v2661
      %v2664 = vshrl.u32 %v2584, 16
      %v2666 = vrot.slane %v2664, 7
      %v2667 = vrot.slane %v2666, 4
      %v2669 = vshrl.u32 %v2585, 16
      %v2671 = vrot.slane %v2669, 7
      %v2672 = vshll.u32 %v2585, 16
      %v2674 = vor.u32 %v2671, %v2672
      %v2675 = vsel %vm535, %v2667, %v2674
      %v2677 = vshrl.u32 %v2586, 16
      %v2679 = vrot.slane %v2677, 7
      %v2680 = vrot.slane %v2679, 4
      %v2682 = vshrl.u32 %v2587, 16
      %v2684 = vrot.slane %v2682, 7
      %v2685 = vshll.u32 %v2587, 16
      %v2687 = vor.u32 %v2684, %v2685
      %v2688 = vsel %vm535, %v2680, %v2687
      %v2690 = vshrl.u32 %v2588, 16
      %v2692 = vrot.slane %v2690, 7
      %v2693 = vrot.slane %v2692, 4
      %v2695 = vshrl.u32 %v2589, 16
      %v2697 = vrot.slane %v2695, 7
      %v2698 = vshll.u32 %v2589, 16
      %v2700 = vor.u32 %v2697, %v2698
      %v2701 = vsel %vm535, %v2693, %v2700
      %v2703 = vshrl.u32 %v2590, 16
      %v2705 = vrot.slane %v2703, 7
      %v2706 = vrot.slane %v2705, 4
      %v2708 = vshrl.u32 %v2591, 16
      %v2710 = vrot.slane %v2708, 7
      %v2711 = vshll.u32 %v2591, 16
      %v2713 = vor.u32 %v2710, %v2711
      %v2714 = vsel %vm535, %v2706, %v2713
      %v2716 = vshrl.u32 %v2592, 16
      %v2718 = vrot.slane %v2716, 7
      %v2719 = vrot.slane %v2718, 4
      %v2721 = vshrl.u32 %v2593, 16
      %v2723 = vrot.slane %v2721, 7
      %v2724 = vshll.u32 %v2593, 16
      %v2726 = vor.u32 %v2723, %v2724
      %v2727 = vsel %vm535, %v2719, %v2726
      %v2729 = vshrl.u32 %v2594, 16
      %v2731 = vrot.slane %v2729, 7
      %v2732 = vrot.slane %v2731, 4
      %v2734 = vshrl.u32 %v2595, 16
      %v2736 = vrot.slane %v2734, 7
      %v2737 = vshll.u32 %v2595, 16
      %v2739 = vor.u32 %v2736, %v2737
      %v2740 = vsel %vm535, %v2732, %v2739
      %v2742 = vshrl.u32 %v2596, 16
      %v2744 = vrot.slane %v2742, 7
      %v2745 = vrot.slane %v2744, 4
      %v2747 = vshrl.u32 %v2597, 16
      %v2749 = vrot.slane %v2747, 7
      %v2750 = vshll.u32 %v2597, 16
      %v2752 = vor.u32 %v2749, %v2750
      %v2753 = vsel %vm535, %v2745, %v2752
      %v2754 = vld [vmem:[%s1212 + $0xc] sm:$0x1]
      %v2755 = vld [vmem:[%s1212 + $0x1c] sm:$0x1]
      %v2756 = vld [vmem:[%s1212 + $0x2c] sm:$0x1]
      %v2757 = vld [vmem:[%s1212 + $0x3c] sm:$0x1]
      %v2758 = vld [vmem:[%s1212 + $0x4c] sm:$0x1]
      %v2759 = vld [vmem:[%s1212 + $0x5c] sm:$0x1]
      %v2760 = vld [vmem:[%s1212 + $0x6c] sm:$0x1]
      %v2761 = vld [vmem:[%s1212 + $0x7c] sm:$0x1]
      %v2762 = vld [vmem:[%s1212 + $0x8c] sm:$0x1]
      %v2763 = vld [vmem:[%s1212 + $0x9c] sm:$0x1]
      %v2764 = vld [vmem:[%s1212 + $0xac] sm:$0x1]
      %v2765 = vld [vmem:[%s1212 + $0xbc] sm:$0x1]
      %v2766 = vrot.slane %v2604, 4
      %v2767 = vrot.slane %v2607, 5
      %v2768 = vor.u32 %v2766, %v2767
      %v2769 = vrot.slane %v2768, 4
      %v2771 = vshll.u32 %v2754, 16
      %v2773 = vrot.slane %v2771, 5
      %v2774 = vsel %vm734, %v2769, %v2773
      %v2775 = vrot.slane %v2617, 4
      %v2776 = vrot.slane %v2620, 5
      %v2777 = vor.u32 %v2775, %v2776
      %v2778 = vrot.slane %v2777, 4
      %v2780 = vshll.u32 %v2755, 16
      %v2782 = vrot.slane %v2780, 5
      %v2783 = vsel %vm734, %v2778, %v2782
      %v2784 = vrot.slane %v2630, 4
      %v2785 = vrot.slane %v2633, 5
      %v2786 = vor.u32 %v2784, %v2785
      %v2787 = vrot.slane %v2786, 4
      %v2789 = vshll.u32 %v2756, 16
      %v2791 = vrot.slane %v2789, 5
      %v2792 = vsel %vm734, %v2787, %v2791
      %v2793 = vrot.slane %v2643, 4
      %v2794 = vrot.slane %v2646, 5
      %v2795 = vor.u32 %v2793, %v2794
      %v2796 = vrot.slane %v2795, 4
      %v2798 = vshll.u32 %v2757, 16
      %v2800 = vrot.slane %v2798, 5
      %v2801 = vsel %vm734, %v2796, %v2800
      %v2802 = vrot.slane %v2656, 4
      %v2803 = vrot.slane %v2659, 5
      %v2804 = vor.u32 %v2802, %v2803
      %v2805 = vrot.slane %v2804, 4
      %v2807 = vshll.u32 %v2758, 16
      %v2809 = vrot.slane %v2807, 5
      %v2810 = vsel %vm734, %v2805, %v2809
      %v2811 = vrot.slane %v2669, 4
      %v2812 = vrot.slane %v2672, 5
      %v2813 = vor.u32 %v2811, %v2812
      %v2814 = vrot.slane %v2813, 4
      %v2816 = vshll.u32 %v2759, 16
      %v2818 = vrot.slane %v2816, 5
      %v2819 = vsel %vm734, %v2814, %v2818
      %v2820 = vrot.slane %v2682, 4
      %v2821 = vrot.slane %v2685, 5
      %v2822 = vor.u32 %v2820, %v2821
      %v2823 = vrot.slane %v2822, 4
      %v2825 = vshll.u32 %v2760, 16
      %v2827 = vrot.slane %v2825, 5
      %v2828 = vsel %vm734, %v2823, %v2827
      %v2829 = vrot.slane %v2695, 4
      %v2830 = vrot.slane %v2698, 5
      %v2831 = vor.u32 %v2829, %v2830
      %v2832 = vrot.slane %v2831, 4
      %v2834 = vshll.u32 %v2761, 16
      %v2836 = vrot.slane %v2834, 5
      %v2837 = vsel %vm734, %v2832, %v2836
      %v2838 = vrot.slane %v2708, 4
      %v2839 = vrot.slane %v2711, 5
      %v2840 = vor.u32 %v2838, %v2839
      %v2841 = vrot.slane %v2840, 4
      %v2843 = vshll.u32 %v2762, 16
      %v2845 = vrot.slane %v2843, 5
      %v2846 = vsel %vm734, %v2841, %v2845
      %v2847 = vrot.slane %v2721, 4
      %v2848 = vrot.slane %v2724, 5
      %v2849 = vor.u32 %v2847, %v2848
      %v2850 = vrot.slane %v2849, 4
      %v2852 = vshll.u32 %v2763, 16
      %v2854 = vrot.slane %v2852, 5
      %v2855 = vsel %vm734, %v2850, %v2854
      %v2856 = vrot.slane %v2734, 4
      %v2857 = vrot.slane %v2737, 5
      %v2858 = vor.u32 %v2856, %v2857
      %v2859 = vrot.slane %v2858, 4
      %v2861 = vshll.u32 %v2764, 16
      %v2863 = vrot.slane %v2861, 5
      %v2864 = vsel %vm734, %v2859, %v2863
      %v2865 = vrot.slane %v2747, 4
      %v2866 = vrot.slane %v2750, 5
      %v2867 = vor.u32 %v2865, %v2866
      %v2868 = vrot.slane %v2867, 4
      %v2870 = vshll.u32 %v2765, 16
      %v2872 = vrot.slane %v2870, 5
      %v2873 = vsel %vm734, %v2868, %v2872
      %s2874 = scalar_lea.vmem [#allocation2], 48
      %v2875 = vld [vmem:[%s2874 + $0x4] sm:$0x8]
      %v2876 = vld [vmem:[%s2874 + $0x8] sm:$0xf]
      %v2877 = vld [vmem:[%s2874 + $0x14] sm:$0x8]
      %v2878 = vld [vmem:[%s2874 + $0x18] sm:$0xf]
      %v2879 = vld [vmem:[%s2874 + $0x24] sm:$0x8]
      %v2880 = vld [vmem:[%s2874 + $0x28] sm:$0xf]
      %v2881 = vld [vmem:[%s2874 + $0x34] sm:$0x8]
      %v2882 = vld [vmem:[%s2874 + $0x38] sm:$0xf]
      %v2883 = vld [vmem:[%s2874 + $0x44] sm:$0x8]
      %v2884 = vld [vmem:[%s2874 + $0x48] sm:$0xf]
      %v2885 = vld [vmem:[%s2874 + $0x54] sm:$0x8]
      %v2886 = vld [vmem:[%s2874 + $0x58] sm:$0xf]
      %v2887 = vld [vmem:[%s2874 + $0x64] sm:$0x8]
      %v2888 = vld [vmem:[%s2874 + $0x68] sm:$0xf]
      %v2889 = vld [vmem:[%s2874 + $0x74] sm:$0x8]
      %v2890 = vld [vmem:[%s2874 + $0x78] sm:$0xf]
      %v2891 = vld [vmem:[%s2874 + $0x84] sm:$0x8]
      %v2892 = vld [vmem:[%s2874 + $0x88] sm:$0xf]
      %v2893 = vld [vmem:[%s2874 + $0x94] sm:$0x8]
      %v2894 = vld [vmem:[%s2874 + $0x98] sm:$0xf]
      %v2895 = vld [vmem:[%s2874 + $0xa4] sm:$0x8]
      %v2896 = vld [vmem:[%s2874 + $0xa8] sm:$0xf]
      %v2897 = vld [vmem:[%s2874 + $0xb4] sm:$0x8]
      %v2898 = vld [vmem:[%s2874 + $0xb8] sm:$0xf]
      %v2900 = vshrl.u32 %v2875, 16
      %v2902 = vrot.slane %v2900, 7
      %v2903 = vrot.slane %v2902, 4
      %v2905 = vshrl.u32 %v2876, 16
      %v2907 = vrot.slane %v2905, 7
      %v2908 = vshll.u32 %v2876, 16
      %v2910 = vor.u32 %v2907, %v2908
      %v2911 = vsel %vm535, %v2903, %v2910
      %v2913 = vshrl.u32 %v2877, 16
      %v2915 = vrot.slane %v2913, 7
      %v2916 = vrot.slane %v2915, 4
      %v2918 = vshrl.u32 %v2878, 16
      %v2920 = vrot.slane %v2918, 7
      %v2921 = vshll.u32 %v2878, 16
      %v2923 = vor.u32 %v2920, %v2921
      %v2924 = vsel %vm535, %v2916, %v2923
      %v2926 = vshrl.u32 %v2879, 16
      %v2928 = vrot.slane %v2926, 7
      %v2929 = vrot.slane %v2928, 4
      %v2931 = vshrl.u32 %v2880, 16
      %v2933 = vrot.slane %v2931, 7
      %v2934 = vshll.u32 %v2880, 16
      %v2936 = vor.u32 %v2933, %v2934
      %v2937 = vsel %vm535, %v2929, %v2936
      %v2939 = vshrl.u32 %v2881, 16
      %v2941 = vrot.slane %v2939, 7
      %v2942 = vrot.slane %v2941, 4
      %v2944 = vshrl.u32 %v2882, 16
      %v2946 = vrot.slane %v2944, 7
      %v2947 = vshll.u32 %v2882, 16
      %v2949 = vor.u32 %v2946, %v2947
      %v2950 = vsel %vm535, %v2942, %v2949
      %v2952 = vshrl.u32 %v2883, 16
      %v2954 = vrot.slane %v2952, 7
      %v2955 = vrot.slane %v2954, 4
      %v2957 = vshrl.u32 %v2884, 16
      %v2959 = vrot.slane %v2957, 7
      %v2960 = vshll.u32 %v2884, 16
      %v2962 = vor.u32 %v2959, %v2960
      %v2963 = vsel %vm535, %v2955, %v2962
      %v2965 = vshrl.u32 %v2885, 16
      %v2967 = vrot.slane %v2965, 7
      %v2968 = vrot.slane %v2967, 4
      %v2970 = vshrl.u32 %v2886, 16
      %v2972 = vrot.slane %v2970, 7
      %v2973 = vshll.u32 %v2886, 16
      %v2975 = vor.u32 %v2972, %v2973
      %v2976 = vsel %vm535, %v2968, %v2975
      %v2978 = vshrl.u32 %v2887, 16
      %v2980 = vrot.slane %v2978, 7
      %v2981 = vrot.slane %v2980, 4
      %v2983 = vshrl.u32 %v2888, 16
      %v2985 = vrot.slane %v2983, 7
      %v2986 = vshll.u32 %v2888, 16
      %v2988 = vor.u32 %v2985, %v2986
      %v2989 = vsel %vm535, %v2981, %v2988
      %v2991 = vshrl.u32 %v2889, 16
      %v2993 = vrot.slane %v2991, 7
      %v2994 = vrot.slane %v2993, 4
      %v2996 = vshrl.u32 %v2890, 16
      %v2998 = vrot.slane %v2996, 7
      %v2999 = vshll.u32 %v2890, 16
      %v3001 = vor.u32 %v2998, %v2999
      %v3002 = vsel %vm535, %v2994, %v3001
      %v3004 = vshrl.u32 %v2891, 16
      %v3006 = vrot.slane %v3004, 7
      %v3007 = vrot.slane %v3006, 4
      %v3009 = vshrl.u32 %v2892, 16
      %v3011 = vrot.slane %v3009, 7
      %v3012 = vshll.u32 %v2892, 16
      %v3014 = vor.u32 %v3011, %v3012
      %v3015 = vsel %vm535, %v3007, %v3014
      %v3017 = vshrl.u32 %v2893, 16
      %v3019 = vrot.slane %v3017, 7
      %v3020 = vrot.slane %v3019, 4
      %v3022 = vshrl.u32 %v2894, 16
      %v3024 = vrot.slane %v3022, 7
      %v3025 = vshll.u32 %v2894, 16
      %v3027 = vor.u32 %v3024, %v3025
      %v3028 = vsel %vm535, %v3020, %v3027
      %v3030 = vshrl.u32 %v2895, 16
      %v3032 = vrot.slane %v3030, 7
      %v3033 = vrot.slane %v3032, 4
      %v3035 = vshrl.u32 %v2896, 16
      %v3037 = vrot.slane %v3035, 7
      %v3038 = vshll.u32 %v2896, 16
      %v3040 = vor.u32 %v3037, %v3038
      %v3041 = vsel %vm535, %v3033, %v3040
      %v3043 = vshrl.u32 %v2897, 16
      %v3045 = vrot.slane %v3043, 7
      %v3046 = vrot.slane %v3045, 4
      %v3048 = vshrl.u32 %v2898, 16
      %v3050 = vrot.slane %v3048, 7
      %v3051 = vshll.u32 %v2898, 16
      %v3053 = vor.u32 %v3050, %v3051
      %v3054 = vsel %vm535, %v3046, %v3053
      %v3055 = vld [vmem:[%s2874 + $0xc] sm:$0x1]
      %v3056 = vld [vmem:[%s2874 + $0x1c] sm:$0x1]
      %v3057 = vld [vmem:[%s2874 + $0x2c] sm:$0x1]
      %v3058 = vld [vmem:[%s2874 + $0x3c] sm:$0x1]
      %v3059 = vld [vmem:[%s2874 + $0x4c] sm:$0x1]
      %v3060 = vld [vmem:[%s2874 + $0x5c] sm:$0x1]
      %v3061 = vld [vmem:[%s2874 + $0x6c] sm:$0x1]
      %v3062 = vld [vmem:[%s2874 + $0x7c] sm:$0x1]
      %v3063 = vld [vmem:[%s2874 + $0x8c] sm:$0x1]
      %v3064 = vld [vmem:[%s2874 + $0x9c] sm:$0x1]
      %v3065 = vld [vmem:[%s2874 + $0xac] sm:$0x1]
      %v3066 = vld [vmem:[%s2874 + $0xbc] sm:$0x1]
      %v3067 = vrot.slane %v2905, 4
      %v3068 = vrot.slane %v2908, 5
      %v3069 = vor.u32 %v3067, %v3068
      %v3070 = vrot.slane %v3069, 4
      %v3072 = vshll.u32 %v3055, 16
      %v3074 = vrot.slane %v3072, 5
      %v3075 = vsel %vm734, %v3070, %v3074
      %v3076 = vrot.slane %v2918, 4
      %v3077 = vrot.slane %v2921, 5
      %v3078 = vor.u32 %v3076, %v3077
      %v3079 = vrot.slane %v3078, 4
      %v3081 = vshll.u32 %v3056, 16
      %v3083 = vrot.slane %v3081, 5
      %v3084 = vsel %vm734, %v3079, %v3083
      %v3085 = vrot.slane %v2931, 4
      %v3086 = vrot.slane %v2934, 5
      %v3087 = vor.u32 %v3085, %v3086
      %v3088 = vrot.slane %v3087, 4
      %v3090 = vshll.u32 %v3057, 16
      %v3092 = vrot.slane %v3090, 5
      %v3093 = vsel %vm734, %v3088, %v3092
      %v3094 = vrot.slane %v2944, 4
      %v3095 = vrot.slane %v2947, 5
      %v3096 = vor.u32 %v3094, %v3095
      %v3097 = vrot.slane %v3096, 4
      %v3099 = vshll.u32 %v3058, 16
      %v3101 = vrot.slane %v3099, 5
      %v3102 = vsel %vm734, %v3097, %v3101
      %v3103 = vrot.slane %v2957, 4
      %v3104 = vrot.slane %v2960, 5
      %v3105 = vor.u32 %v3103, %v3104
      %v3106 = vrot.slane %v3105, 4
      %v3108 = vshll.u32 %v3059, 16
      %v3110 = vrot.slane %v3108, 5
      %v3111 = vsel %vm734, %v3106, %v3110
      %v3112 = vrot.slane %v2970, 4
      %v3113 = vrot.slane %v2973, 5
      %v3114 = vor.u32 %v3112, %v3113
      %v3115 = vrot.slane %v3114, 4
      %v3117 = vshll.u32 %v3060, 16
      %v3119 = vrot.slane %v3117, 5
      %v3120 = vsel %vm734, %v3115, %v3119
      %v3121 = vrot.slane %v2983, 4
      %v3122 = vrot.slane %v2986, 5
      %v3123 = vor.u32 %v3121, %v3122
      %v3124 = vrot.slane %v3123, 4
      %v3126 = vshll.u32 %v3061, 16
      %v3128 = vrot.slane %v3126, 5
      %v3129 = vsel %vm734, %v3124, %v3128
      %v3130 = vrot.slane %v2996, 4
      %v3131 = vrot.slane %v2999, 5
      %v3132 = vor.u32 %v3130, %v3131
      %v3133 = vrot.slane %v3132, 4
      %v3135 = vshll.u32 %v3062, 16
      %v3137 = vrot.slane %v3135, 5
      %v3138 = vsel %vm734, %v3133, %v3137
      %v3139 = vrot.slane %v3009, 4
      %v3140 = vrot.slane %v3012, 5
      %v3141 = vor.u32 %v3139, %v3140
      %v3142 = vrot.slane %v3141, 4
      %v3144 = vshll.u32 %v3063, 16
      %v3146 = vrot.slane %v3144, 5
      %v3147 = vsel %vm734, %v3142, %v3146
      %v3148 = vrot.slane %v3022, 4
      %v3149 = vrot.slane %v3025, 5
      %v3150 = vor.u32 %v3148, %v3149
      %v3151 = vrot.slane %v3150, 4
      %v3153 = vshll.u32 %v3064, 16
      %v3155 = vrot.slane %v3153, 5
      %v3156 = vsel %vm734, %v3151, %v3155
      %v3157 = vrot.slane %v3035, 4
      %v3158 = vrot.slane %v3038, 5
      %v3159 = vor.u32 %v3157, %v3158
      %v3160 = vrot.slane %v3159, 4
      %v3162 = vshll.u32 %v3065, 16
      %v3164 = vrot.slane %v3162, 5
      %v3165 = vsel %vm734, %v3160, %v3164
      %v3166 = vrot.slane %v3048, 4
      %v3167 = vrot.slane %v3051, 5
      %v3168 = vor.u32 %v3166, %v3167
      %v3169 = vrot.slane %v3168, 4
      %v3171 = vshll.u32 %v3066, 16
      %v3173 = vrot.slane %v3171, 5
      %v3174 = vsel %vm734, %v3169, %v3173
      %v3175 = vunpack.c.l.b16 %v2310
      %v3176 = vunpack.c.l.b16 %v2323
      %v3177 = vunpack.c.l.b16 %v2336
      %v3178 = vunpack.c.l.b16 %v2349
      %v3179 = vunpack.c.l.b16 %v2362
      %v3180 = vunpack.c.l.b16 %v2375
      %v3181 = vunpack.c.l.b16 %v2388
      %v3182 = vunpack.c.l.b16 %v2401
      %v3183 = vunpack.c.l.b16 %v2414
      %v3184 = vunpack.c.l.b16 %v2427
      %v3185 = vunpack.c.l.b16 %v2440
      %v3186 = vunpack.c.l.b16 %v2453
      %v3187 = vpack.c.b16 %v3176, %v3175
      %v3188 = vpack.c.b16 %v3178, %v3177
      %v3189 = vpack.c.b16 %v3180, %v3179
      %v3190 = vpack.c.b16 %v3182, %v3181
      %v3191 = vpack.c.b16 %v3184, %v3183
      %v3192 = vpack.c.b16 %v3186, %v3185
      %v3205 = vunpack.c.l.b16 %v2275
      %v3206 = vunpack.c.l.b16 %v2277
      %v3207 = vunpack.c.l.b16 %v2279
      %v3208 = vunpack.c.l.b16 %v2281
      %v3209 = vunpack.c.l.b16 %v2283
      %v3210 = vunpack.c.l.b16 %v2285
      %v3211 = vunpack.c.l.b16 %v2287
      %v3212 = vunpack.c.l.b16 %v2289
      %v3213 = vunpack.c.l.b16 %v2291
      %v3214 = vunpack.c.l.b16 %v2293
      %v3215 = vunpack.c.l.b16 %v2295
      %v3216 = vunpack.c.l.b16 %v2297
      %v3217 = vpack.c.b16 %v3206, %v3205
      %v3218 = vpack.c.b16 %v3208, %v3207
      %v3219 = vpack.c.b16 %v3210, %v3209
      %v3220 = vpack.c.b16 %v3212, %v3211
      %v3221 = vpack.c.b16 %v3214, %v3213
      %v3222 = vpack.c.b16 %v3216, %v3215
      %3223 = vrot.lane.b32.xlu0 %v3217, 32
      %v3224 = vpop.permute.xlu0 %3223
      %3225 = vrot.lane.b32.xlu0 %v3218, 32
      %v3226 = vpop.permute.xlu0 %3225
      %3227 = vrot.lane.b32.xlu0 %v3219, 32
      %v3228 = vpop.permute.xlu0 %3227
      %3229 = vrot.lane.b32.xlu0 %v3220, 32
      %v3230 = vpop.permute.xlu0 %3229
      %3231 = vrot.lane.b32.xlu0 %v3221, 32
      %v3232 = vpop.permute.xlu0 %3231
      %3233 = vrot.lane.b32.xlu0 %v3222, 32
      %v3234 = vpop.permute.xlu0 %3233
      %v3235 = vunpack.c.l.b16 %v2474
      %v3236 = vunpack.c.l.b16 %v2483
      %v3237 = vunpack.c.l.b16 %v2492
      %v3238 = vunpack.c.l.b16 %v2501
      %v3239 = vunpack.c.l.b16 %v2510
      %v3240 = vunpack.c.l.b16 %v2519
      %v3241 = vunpack.c.l.b16 %v2528
      %v3242 = vunpack.c.l.b16 %v2537
      %v3243 = vunpack.c.l.b16 %v2546
      %v3244 = vunpack.c.l.b16 %v2555
      %v3245 = vunpack.c.l.b16 %v2564
      %v3246 = vunpack.c.l.b16 %v2573
      %v3247 = vpack.c.b16 %v3236, %v3235
      %v3248 = vpack.c.b16 %v3238, %v3237
      %v3249 = vpack.c.b16 %v3240, %v3239
      %v3250 = vpack.c.b16 %v3242, %v3241
      %v3251 = vpack.c.b16 %v3244, %v3243
      %v3252 = vpack.c.b16 %v3246, %v3245
      %3253 = vrot.lane.b32.xlu0 %v3247, 64
      %v3254 = vpop.permute.xlu0 %3253
      %3255 = vrot.lane.b32.xlu0 %v3248, 64
      %v3256 = vpop.permute.xlu0 %3255
      %3257 = vrot.lane.b32.xlu0 %v3249, 64
      %v3258 = vpop.permute.xlu0 %3257
      %3259 = vrot.lane.b32.xlu0 %v3250, 64
      %v3260 = vpop.permute.xlu0 %3259
      %3261 = vrot.lane.b32.xlu0 %v3251, 64
      %v3262 = vpop.permute.xlu0 %3261
      %3263 = vrot.lane.b32.xlu0 %v3252, 64
      %v3264 = vpop.permute.xlu0 %3263
      %v3265 = vunpack.c.l.b16 %v2610
      %v3266 = vunpack.c.l.b16 %v2623
      %v3267 = vunpack.c.l.b16 %v2636
      %v3268 = vunpack.c.l.b16 %v2649
      %v3269 = vunpack.c.l.b16 %v2662
      %v3270 = vunpack.c.l.b16 %v2675
      %v3271 = vunpack.c.l.b16 %v2688
      %v3272 = vunpack.c.l.b16 %v2701
      %v3273 = vunpack.c.l.b16 %v2714
      %v3274 = vunpack.c.l.b16 %v2727
      %v3275 = vunpack.c.l.b16 %v2740
      %v3276 = vunpack.c.l.b16 %v2753
      %v3277 = vpack.c.b16 %v3266, %v3265
      %v3278 = vpack.c.b16 %v3268, %v3267
      %v3279 = vpack.c.b16 %v3270, %v3269
      %v3280 = vpack.c.b16 %v3272, %v3271
      %v3281 = vpack.c.b16 %v3274, %v3273
      %v3282 = vpack.c.b16 %v3276, %v3275
      %3283 = vrot.lane.b32.xlu0 %v3277, 96
      %v3284 = vpop.permute.xlu0 %3283
      %3285 = vrot.lane.b32.xlu0 %v3278, 96
      %v3286 = vpop.permute.xlu0 %3285
      %3287 = vrot.lane.b32.xlu0 %v3279, 96
      %v3288 = vpop.permute.xlu0 %3287
      %3289 = vrot.lane.b32.xlu0 %v3280, 96
      %v3290 = vpop.permute.xlu0 %3289
      %3291 = vrot.lane.b32.xlu0 %v3281, 96
      %v3292 = vpop.permute.xlu0 %3291
      %3293 = vrot.lane.b32.xlu0 %v3282, 96
      %v3294 = vpop.permute.xlu0 %3293
      %v3307 = vunpack.c.l.b16 %v2575
      %v3308 = vunpack.c.l.b16 %v2577
      %v3309 = vunpack.c.l.b16 %v2579
      %v3310 = vunpack.c.l.b16 %v2581
      %v3311 = vunpack.c.l.b16 %v2583
      %v3312 = vunpack.c.l.b16 %v2585
      %v3313 = vunpack.c.l.b16 %v2587
      %v3314 = vunpack.c.l.b16 %v2589
      %v3315 = vunpack.c.l.b16 %v2591
      %v3316 = vunpack.c.l.b16 %v2593
      %v3317 = vunpack.c.l.b16 %v2595
      %v3318 = vunpack.c.l.b16 %v2597
      %v3319 = vpack.c.b16 %v3308, %v3307
      %v3320 = vpack.c.b16 %v3310, %v3309
      %v3321 = vpack.c.b16 %v3312, %v3311
      %v3322 = vpack.c.b16 %v3314, %v3313
      %v3323 = vpack.c.b16 %v3316, %v3315
      %v3324 = vpack.c.b16 %v3318, %v3317
      %v3325 = vunpack.c.l.b16 %v2774
      %v3326 = vunpack.c.l.b16 %v2783
      %v3327 = vunpack.c.l.b16 %v2792
      %v3328 = vunpack.c.l.b16 %v2801
      %v3329 = vunpack.c.l.b16 %v2810
      %v3330 = vunpack.c.l.b16 %v2819
      %v3331 = vunpack.c.l.b16 %v2828
      %v3332 = vunpack.c.l.b16 %v2837
      %v3333 = vunpack.c.l.b16 %v2846
      %v3334 = vunpack.c.l.b16 %v2855
      %v3335 = vunpack.c.l.b16 %v2864
      %v3336 = vunpack.c.l.b16 %v2873
      %v3337 = vpack.c.b16 %v3326, %v3325
      %v3338 = vpack.c.b16 %v3328, %v3327
      %v3339 = vpack.c.b16 %v3330, %v3329
      %v3340 = vpack.c.b16 %v3332, %v3331
      %v3341 = vpack.c.b16 %v3334, %v3333
      %v3342 = vpack.c.b16 %v3336, %v3335
      %3343 = vrot.lane.b32.xlu0 %v3337, 32
      %v3344 = vpop.permute.xlu0 %3343
      %3345 = vrot.lane.b32.xlu0 %v3338, 32
      %v3346 = vpop.permute.xlu0 %3345
      %3347 = vrot.lane.b32.xlu0 %v3339, 32
      %v3348 = vpop.permute.xlu0 %3347
      %3349 = vrot.lane.b32.xlu0 %v3340, 32
      %v3350 = vpop.permute.xlu0 %3349
      %3351 = vrot.lane.b32.xlu0 %v3341, 32
      %v3352 = vpop.permute.xlu0 %3351
      %3353 = vrot.lane.b32.xlu0 %v3342, 32
      %v3354 = vpop.permute.xlu0 %3353
      %v3355 = vunpack.c.l.b16 %v2911
      %v3356 = vunpack.c.l.b16 %v2924
      %v3357 = vunpack.c.l.b16 %v2937
      %v3358 = vunpack.c.l.b16 %v2950
      %v3359 = vunpack.c.l.b16 %v2963
      %v3360 = vunpack.c.l.b16 %v2976
      %v3361 = vunpack.c.l.b16 %v2989
      %v3362 = vunpack.c.l.b16 %v3002
      %v3363 = vunpack.c.l.b16 %v3015
      %v3364 = vunpack.c.l.b16 %v3028
      %v3365 = vunpack.c.l.b16 %v3041
      %v3366 = vunpack.c.l.b16 %v3054
      %v3367 = vpack.c.b16 %v3356, %v3355
      %v3368 = vpack.c.b16 %v3358, %v3357
      %v3369 = vpack.c.b16 %v3360, %v3359
      %v3370 = vpack.c.b16 %v3362, %v3361
      %v3371 = vpack.c.b16 %v3364, %v3363
      %v3372 = vpack.c.b16 %v3366, %v3365
      %3373 = vrot.lane.b32.xlu0 %v3367, 64
      %v3374 = vpop.permute.xlu0 %3373
      %3375 = vrot.lane.b32.xlu0 %v3368, 64
      %v3376 = vpop.permute.xlu0 %3375
      %3377 = vrot.lane.b32.xlu0 %v3369, 64
      %v3378 = vpop.permute.xlu0 %3377
      %3379 = vrot.lane.b32.xlu0 %v3370, 64
      %v3380 = vpop.permute.xlu0 %3379
      %3381 = vrot.lane.b32.xlu0 %v3371, 64
      %v3382 = vpop.permute.xlu0 %3381
      %3383 = vrot.lane.b32.xlu0 %v3372, 64
      %v3384 = vpop.permute.xlu0 %3383
      %v3397 = vunpack.c.l.b16 %v2876
      %v3398 = vunpack.c.l.b16 %v2878
      %v3399 = vunpack.c.l.b16 %v2880
      %v3400 = vunpack.c.l.b16 %v2882
      %v3401 = vunpack.c.l.b16 %v2884
      %v3402 = vunpack.c.l.b16 %v2886
      %v3403 = vunpack.c.l.b16 %v2888
      %v3404 = vunpack.c.l.b16 %v2890
      %v3405 = vunpack.c.l.b16 %v2892
      %v3406 = vunpack.c.l.b16 %v2894
      %v3407 = vunpack.c.l.b16 %v2896
      %v3408 = vunpack.c.l.b16 %v2898
      %v3409 = vpack.c.b16 %v3398, %v3397
      %v3410 = vpack.c.b16 %v3400, %v3399
      %v3411 = vpack.c.b16 %v3402, %v3401
      %v3412 = vpack.c.b16 %v3404, %v3403
      %v3413 = vpack.c.b16 %v3406, %v3405
      %v3414 = vpack.c.b16 %v3408, %v3407
      %3415 = vrot.lane.b32.xlu0 %v3409, 96
      %v3416 = vpop.permute.xlu0 %3415
      %3417 = vrot.lane.b32.xlu0 %v3410, 96
      %v3418 = vpop.permute.xlu0 %3417
      %3419 = vrot.lane.b32.xlu0 %v3411, 96
      %v3420 = vpop.permute.xlu0 %3419
      %3421 = vrot.lane.b32.xlu0 %v3412, 96
      %v3422 = vpop.permute.xlu0 %3421
      %3423 = vrot.lane.b32.xlu0 %v3413, 96
      %v3424 = vpop.permute.xlu0 %3423
      %3425 = vrot.lane.b32.xlu0 %v3414, 96
      %v3426 = vpop.permute.xlu0 %3425
      %v3427 = vunpack.c.l.b16 %v3075
      %v3428 = vunpack.c.l.b16 %v3084
      %v3429 = vunpack.c.l.b16 %v3093
      %v3430 = vunpack.c.l.b16 %v3102
      %v3431 = vunpack.c.l.b16 %v3111
      %v3432 = vunpack.c.l.b16 %v3120
      %v3433 = vunpack.c.l.b16 %v3129
      %v3434 = vunpack.c.l.b16 %v3138
      %v3435 = vunpack.c.l.b16 %v3147
      %v3436 = vunpack.c.l.b16 %v3156
      %v3437 = vunpack.c.l.b16 %v3165
      %v3438 = vunpack.c.l.b16 %v3174
      %v3439 = vpack.c.b16 %v3428, %v3427
      %v3440 = vpack.c.b16 %v3430, %v3429
      %v3441 = vpack.c.b16 %v3432, %v3431
      %v3442 = vpack.c.b16 %v3434, %v3433
      %v3443 = vpack.c.b16 %v3436, %v3435
      %v3444 = vpack.c.b16 %v3438, %v3437
      %vm3445 = vcmask 261120
      %v3448 = vsel %vm3445, %v3187, %v3224
      %v3451 = vsel %vm3445, %v3188, %v3226
      %v3454 = vsel %vm3445, %v3189, %v3228
      %v3457 = vsel %vm3445, %v3190, %v3230
      %v3460 = vsel %vm3445, %v3191, %v3232
      %v3463 = vsel %vm3445, %v3192, %v3234
      %vm3464 = vcmask 523264
      %v3466 = vsel %vm3464, %v3448, %v3254
      %v3468 = vsel %vm3464, %v3451, %v3256
      %v3470 = vsel %vm3464, %v3454, %v3258
      %v3472 = vsel %vm3464, %v3457, %v3260
      %v3474 = vsel %vm3464, %v3460, %v3262
      %v3476 = vsel %vm3464, %v3463, %v3264
      %v3478 = vsel %vm2018, %v3466, %v3284
      %v3481 = vsel %vm2018, %v3468, %v3286
      %v3484 = vsel %vm2018, %v3470, %v3288
      %v3487 = vsel %vm2018, %v3472, %v3290
      %v3490 = vsel %vm2018, %v3474, %v3292
      %v3493 = vsel %vm2018, %v3476, %v3294
      %v3497 = vsel %vm3445, %v3319, %v3344
      %v3500 = vsel %vm3445, %v3320, %v3346
      %v3503 = vsel %vm3445, %v3321, %v3348
      %v3506 = vsel %vm3445, %v3322, %v3350
      %v3509 = vsel %vm3445, %v3323, %v3352
      %v3512 = vsel %vm3445, %v3324, %v3354
      %v3514 = vsel %vm3464, %v3497, %v3374
      %v3516 = vsel %vm3464, %v3500, %v3376
      %v3518 = vsel %vm3464, %v3503, %v3378
      %v3520 = vsel %vm3464, %v3506, %v3380
      %v3522 = vsel %vm3464, %v3509, %v3382
      %v3524 = vsel %vm3464, %v3512, %v3384
      %v3526 = vsel %vm2018, %v3514, %v3416
      %v3529 = vsel %vm2018, %v3516, %v3418
      %v3532 = vsel %vm2018, %v3518, %v3420
      %v3535 = vsel %vm2018, %v3520, %v3422
      %v3538 = vsel %vm2018, %v3522, %v3424
      %v3541 = vsel %vm2018, %v3524, %v3426
      %v3543 = vld [vmem:[%s3] sm:$0xf]
      %v3544 = vld [vmem:[%s3 + $0x4] sm:$0xf]
      %v3545 = vld [vmem:[%s3 + $0x8] sm:$0xf]
      %v3546 = vld [vmem:[%s3 + $0xc] sm:$0xf]
      %v3547 = vld [vmem:[%s3 + $0x10] sm:$0xf]
      %v3548 = vld [vmem:[%s3 + $0x14] sm:$0xf]
      %v3549 = vld [vmem:[%s3 + $0x18] sm:$0xf]
      %v3550 = vld [vmem:[%s3 + $0x1c] sm:$0xf]
      %v3551 = vld [vmem:[%s3 + $0x20] sm:$0xf]
      %v3552 = vld [vmem:[%s3 + $0x24] sm:$0xf]
      %v3553 = vld [vmem:[%s3 + $0x28] sm:$0xf]
      %v3554 = vld [vmem:[%s3 + $0x2c] sm:$0xf]
      %v3555 = vld [vmem:[%s3 + $0x30] sm:$0xf]
      %v3556 = vld [vmem:[%s3 + $0x34] sm:$0xf]
      %v3557 = vld [vmem:[%s3 + $0x38] sm:$0xf]
      %v3558 = vld [vmem:[%s3 + $0x3c] sm:$0xf]
      %v3559 = vld [vmem:[%s3 + $0x40] sm:$0xf]
      %v3560 = vld [vmem:[%s3 + $0x44] sm:$0xf]
      %v3561 = vld [vmem:[%s3 + $0x48] sm:$0xf]
      %v3562 = vld [vmem:[%s3 + $0x4c] sm:$0xf]
      %v3563 = vld [vmem:[%s3 + $0x50] sm:$0xf]
      %v3564 = vld [vmem:[%s3 + $0x54] sm:$0xf]
      %v3565 = vld [vmem:[%s3 + $0x58] sm:$0xf]
      %v3566 = vld [vmem:[%s3 + $0x5c] sm:$0xf]
      %v3567 = vld [vmem:[%s3 + $0x60] sm:$0xf]
      %v3568 = vld [vmem:[%s3 + $0x64] sm:$0xf]
      %v3569 = vld [vmem:[%s3 + $0x68] sm:$0xf]
      %v3570 = vld [vmem:[%s3 + $0x6c] sm:$0xf]
      %v3571 = vld [vmem:[%s3 + $0x70] sm:$0xf]
      %v3572 = vld [vmem:[%s3 + $0x74] sm:$0xf]
      %v3573 = vld [vmem:[%s3 + $0x78] sm:$0xf]
      %v3574 = vld [vmem:[%s3 + $0x7c] sm:$0xf]
      %v3575 = vld [vmem:[%s3 + $0x80] sm:$0xf]
      %v3576 = vld [vmem:[%s3 + $0x84] sm:$0xf]
      %v3577 = vld [vmem:[%s3 + $0x88] sm:$0xf]
      %v3578 = vld [vmem:[%s3 + $0x8c] sm:$0xf]
      %v3579 = vld [vmem:[%s4] sm:$0x1]
      %v3581 = vlaneseq
      %v3582 = vshrl.u32 %v3581, 7
      %v3583 = vsub.s32 0, %v3582
      %v3584 = vrot.slane %v3579, %v3583
      %v3622 = vunpack.c.l.b16 %v3543
      %v3623 = vunpack.c.l.b16 %v3544
      %v3624 = vunpack.c.l.b16 %v3545
      %v3625 = vunpack.c.l.b16 %v3546
      %v3626 = vunpack.c.l.b16 %v3547
      %v3627 = vunpack.c.l.b16 %v3548
      %v3628 = vunpack.c.l.b16 %v3549
      %v3629 = vunpack.c.l.b16 %v3550
      %v3630 = vunpack.c.l.b16 %v3551
      %v3631 = vunpack.c.l.b16 %v3552
      %v3632 = vunpack.c.l.b16 %v3553
      %v3633 = vunpack.c.l.b16 %v3554
      %v3634 = vunpack.c.l.b16 %v3555
      %v3635 = vunpack.c.l.b16 %v3556
      %v3636 = vunpack.c.l.b16 %v3557
      %v3637 = vunpack.c.l.b16 %v3558
      %v3638 = vunpack.c.l.b16 %v3559
      %v3639 = vunpack.c.l.b16 %v3560
      %v3640 = vunpack.c.l.b16 %v3561
      %v3641 = vunpack.c.l.b16 %v3562
      %v3642 = vunpack.c.l.b16 %v3563
      %v3643 = vunpack.c.l.b16 %v3564
      %v3644 = vunpack.c.l.b16 %v3565
      %v3645 = vunpack.c.l.b16 %v3566
      %v3646 = vunpack.c.l.b16 %v3567
      %v3647 = vunpack.c.l.b16 %v3568
      %v3648 = vunpack.c.l.b16 %v3569
      %v3649 = vunpack.c.l.b16 %v3570
      %v3650 = vunpack.c.l.b16 %v3571
      %v3651 = vunpack.c.l.b16 %v3572
      %v3652 = vunpack.c.l.b16 %v3573
      %v3653 = vunpack.c.l.b16 %v3574
      %v3654 = vunpack.c.l.b16 %v3575
      %v3655 = vunpack.c.l.b16 %v3576
      %v3656 = vunpack.c.l.b16 %v3577
      %v3657 = vunpack.c.l.b16 %v3578
      %v3658 = vpack.c.b16 %v3623, %v3622
      %v3659 = vpack.c.b16 %v3625, %v3624
      %v3660 = vpack.c.b16 %v3627, %v3626
      %v3661 = vpack.c.b16 %v3629, %v3628
      %v3662 = vpack.c.b16 %v3631, %v3630
      %v3663 = vpack.c.b16 %v3633, %v3632
      %v3664 = vpack.c.b16 %v3635, %v3634
      %v3665 = vpack.c.b16 %v3637, %v3636
      %v3666 = vpack.c.b16 %v3639, %v3638
      %v3667 = vpack.c.b16 %v3641, %v3640
      %v3668 = vpack.c.b16 %v3643, %v3642
      %v3669 = vpack.c.b16 %v3645, %v3644
      %v3670 = vpack.c.b16 %v3647, %v3646
      %v3671 = vpack.c.b16 %v3649, %v3648
      %v3672 = vpack.c.b16 %v3651, %v3650
      %v3673 = vpack.c.b16 %v3653, %v3652
      %v3674 = vpack.c.b16 %v3655, %v3654
      %v3675 = vpack.c.b16 %v3657, %v3656
      %v3695 = vsel %vm3445, %v3439, 0
      %v3698 = vsel %vm3445, %v3440, 0
      %v3701 = vsel %vm3445, %v3441, 0
      %v3704 = vsel %vm3445, %v3442, 0
      %v3707 = vsel %vm3445, %v3443, 0
      %v3710 = vsel %vm3445, %v3444, 0
      %3712 = vmatprep.subr.bf16.mxu0 0
      %3713 = vmatpush1.bf16.msra.mxu0 %v3658
      %3714 = vmatprep.subr.bf16.mxu0 0
      %3715 = vmatpush1.bf16.msra.mxu0 %v3659
      %3716 = vmatprep.subr.bf16.mxu0 0
      %3717 = vmatpush1.bf16.msra.mxu0 %v3660
      %3718 = vmatprep.subr.bf16.mxu0 0
      %3719 = vmatpush1.bf16.msra.mxu0 %v3661
      %3720 = vmatprep.subr.bf16.mxu0 0
      %3721 = vmatpush1.bf16.msra.mxu0 %v3662
      %3722 = vmatprep.subr.bf16.mxu0 0
      %3723 = vmatpush1.bf16.msra.mxu0 %v3663
      %3724 = vmatprep.subr.bf16.mxu0 0
      %3725 = vmatpush1.bf16.msra.mxu0 %v3664
      %3726 = vmatprep.subr.bf16.mxu0 0
      %3727 = vmatpush1.bf16.msra.mxu0 %v3665
      %3728 = vmatprep.subr.bf16.mxu0 0
      %3729 = vmatpush1.bf16.msra.mxu0 %v3666
      %3730 = vmatprep.subr.bf16.mxu0 0
      %3731 = vmatpush1.bf16.msra.mxu0 %v3667
      %3732 = vmatprep.subr.bf16.mxu0 0
      %3733 = vmatpush1.bf16.msra.mxu0 %v3668
      %3734 = vmatprep.subr.bf16.mxu0 0
      %3735 = vmatpush1.bf16.msra.mxu0 %v3669
      %3736 = vmatprep.subr.bf16.mxu0 0
      %3737 = vmatpush1.bf16.msra.mxu0 %v3670
      %3738 = vmatprep.subr.bf16.mxu0 0
      %3739 = vmatpush1.bf16.msra.mxu0 %v3671
      %3740 = vmatprep.subr.bf16.mxu0 0
      %3741 = vmatpush1.bf16.msra.mxu0 %v3672
      %3742 = vmatprep.subr.bf16.mxu0 0
      %3743 = vmatpush1.bf16.msra.mxu0 %v3673
      %3744 = vmatprep.mubr.bf16.mxu0 %v3526
      %3745 = vmatmul.mubr.bf16.gmra.mrb[0].mxu0 %v3478
      %v3746 = vpop.f32.mrb[0].mxu0
      %v3747 = vadd.f32 %v3584, %v3746
      %v3748 = vpop.f32.mrb[0].mxu0
      %v3749 = vpop.f32.mrb[0].mxu0
      %v3750 = vadd.f32 %v3584, %v3749
      %v3751 = vpop.f32.mrb[0].mxu0
      %3752 = vmatprep.mubr.bf16.mxu0 %v3529
      %3753 = vmatmul.mubr.bf16.gmra.mrb[0].mxu0 %v3481
      %v3754 = vpop.f32.mrb[0].mxu0
      %v3755 = vadd.f32 %v3584, %v3754
      %v3756 = vpop.f32.mrb[0].mxu0
      %v3757 = vpop.f32.mrb[0].mxu0
      %v3758 = vadd.f32 %v3584, %v3757
      %v3759 = vpop.f32.mrb[0].mxu0
      %3760 = vmatprep.mubr.bf16.mxu0 %v3532
      %3761 = vmatmul.mubr.bf16.gmra.mrb[0].mxu0 %v3484
      %v3762 = vpop.f32.mrb[0].mxu0
      %v3763 = vadd.f32 %v3584, %v3762
      %v3764 = vpop.f32.mrb[0].mxu0
      %v3765 = vpop.f32.mrb[0].mxu0
      %v3766 = vadd.f32 %v3584, %v3765
      %v3767 = vpop.f32.mrb[0].mxu0
      %3768 = vmatprep.mubr.bf16.mxu0 %v3535
      %3769 = vmatmul.mubr.bf16.gmra.mrb[0].mxu0 %v3487
      %v3770 = vpop.f32.mrb[0].mxu0
      %v3771 = vadd.f32 %v3584, %v3770
      %v3772 = vpop.f32.mrb[0].mxu0
      %v3773 = vpop.f32.mrb[0].mxu0
      %v3774 = vadd.f32 %v3584, %v3773
      %v3775 = vpop.f32.mrb[0].mxu0
      %3776 = vmatprep.mubr.bf16.mxu0 %v3538
      %3777 = vmatmul.mubr.bf16.gmra.mrb[0].mxu0 %v3490
      %v3778 = vpop.f32.mrb[0].mxu0
      %v3779 = vadd.f32 %v3584, %v3778
      %v3780 = vpop.f32.mrb[0].mxu0
      %v3781 = vpop.f32.mrb[0].mxu0
      %v3782 = vadd.f32 %v3584, %v3781
      %v3783 = vpop.f32.mrb[0].mxu0
      %3784 = vmatprep.mubr.bf16.mxu0 %v3541
      %3785 = vmatmul.mubr.bf16.gmra.mrb[0].mxu0 %v3493
      %v3786 = vpop.f32.mrb[0].mxu0
      %v3787 = vadd.f32 %v3584, %v3786
      %v3788 = vpop.f32.mrb[0].mxu0
      %v3789 = vpop.f32.mrb[0].mxu0
      %v3790 = vadd.f32 %v3584, %v3789
      %v3791 = vpop.f32.mrb[0].mxu0
      %3792 = vdwg.mxu0
      %3793 = vmatprep.subr.bf16.mxu0 0
      %3794 = vmatpush1.bf16.msra.mxu0 %v3674
      %3795 = vmatprep.subr.bf16.mxu0 0
      %3796 = vmatpush1.bf16.msra.mxu0 %v3675
      %3797 = vmatprep.subr.bf16.mxu0 0
      %3798 = vmatpush1.bf16.msra.mxu0 0
      %3799 = vmatprep.subr.bf16.mxu0 0
      %3800 = vmatpush1.bf16.msra.mxu0 0
      %3801 = vmatprep.subr.bf16.mxu0 0
      %3802 = vmatpush1.bf16.msra.mxu0 0
      %3803 = vmatprep.subr.bf16.mxu0 0
      %3804 = vmatpush1.bf16.msra.mxu0 0
      %3805 = vmatprep.subr.bf16.mxu0 0
      %3806 = vmatpush1.bf16.msra.mxu0 0
      %3807 = vmatprep.subr.bf16.mxu0 0
      %3808 = vmatpush1.bf16.msra.mxu0 0
      %3809 = vmatprep.subr.bf16.mxu0 0
      %3810 = vmatpush1.bf16.msra.mxu0 0
      %3811 = vmatprep.subr.bf16.mxu0 0
      %3812 = vmatpush1.bf16.msra.mxu0 0
      %3813 = vmatprep.subr.bf16.mxu0 0
      %3814 = vmatpush1.bf16.msra.mxu0 0
      %3815 = vmatprep.subr.bf16.mxu0 0
      %3816 = vmatpush1.bf16.msra.mxu0 0
      %3817 = vmatprep.subr.bf16.mxu0 0
      %3818 = vmatpush1.bf16.msra.mxu0 0
      %3819 = vmatprep.subr.bf16.mxu0 0
      %3820 = vmatpush1.bf16.msra.mxu0 0
      %3821 = vmatprep.subr.bf16.mxu0 0
      %3822 = vmatpush1.bf16.msra.mxu0 0
      %3823 = vmatprep.subr.bf16.mxu0 0
      %3824 = vmatpush1.bf16.msra.mxu0 0
      %3825 = vmatprep.mubr.bf16.mxu0 0
      %3826 = vmatmul.mubr.bf16.gmra.mrb[0].mxu0 %v3695
      %v3827 = vpop.f32.mrb[0].mxu0
      %v3828 = vadd.f32 %v3747, %v3827
      %v3829 = vpop.f32.mrb[0].mxu0
      %v3830 = vpop.f32.mrb[0].mxu0
      %v3831 = vadd.f32 %v3750, %v3830
      %v3832 = vpop.f32.mrb[0].mxu0
      %3833 = vmatprep.mubr.bf16.mxu0 0
      %3834 = vmatmul.mubr.bf16.gmra.mrb[0].mxu0 %v3698
      %v3835 = vpop.f32.mrb[0].mxu0
      %v3836 = vadd.f32 %v3755, %v3835
      %v3837 = vpop.f32.mrb[0].mxu0
      %v3838 = vpop.f32.mrb[0].mxu0
      %v3839 = vadd.f32 %v3758, %v3838
      %v3840 = vpop.f32.mrb[0].mxu0
      %3841 = vmatprep.mubr.bf16.mxu0 0
      %3842 = vmatmul.mubr.bf16.gmra.mrb[0].mxu0 %v3701
      %v3843 = vpop.f32.mrb[0].mxu0
      %v3844 = vadd.f32 %v3763, %v3843
      %v3845 = vpop.f32.mrb[0].mxu0
      %v3846 = vpop.f32.mrb[0].mxu0
      %v3847 = vadd.f32 %v3766, %v3846
      %v3848 = vpop.f32.mrb[0].mxu0
      %3849 = vmatprep.mubr.bf16.mxu0 0
      %3850 = vmatmul.mubr.bf16.gmra.mrb[0].mxu0 %v3704
      %v3851 = vpop.f32.mrb[0].mxu0
      %v3852 = vadd.f32 %v3771, %v3851
      %v3853 = vpop.f32.mrb[0].mxu0
      %v3854 = vpop.f32.mrb[0].mxu0
      %v3855 = vadd.f32 %v3774, %v3854
      %v3856 = vpop.f32.mrb[0].mxu0
      %3857 = vmatprep.mubr.bf16.mxu0 0
      %3858 = vmatmul.mubr.bf16.gmra.mrb[0].mxu0 %v3707
      %v3859 = vpop.f32.mrb[0].mxu0
      %v3860 = vadd.f32 %v3779, %v3859
      %v3861 = vpop.f32.mrb[0].mxu0
      %v3862 = vpop.f32.mrb[0].mxu0
      %v3863 = vadd.f32 %v3782, %v3862
      %v3864 = vpop.f32.mrb[0].mxu0
      %3865 = vmatprep.mubr.bf16.mxu0 0
      %3866 = vmatmul.mubr.bf16.gmra.mrb[0].mxu0 %v3710
      %v3867 = vpop.f32.mrb[0].mxu0
      %v3868 = vadd.f32 %v3787, %v3867
      %v3869 = vpop.f32.mrb[0].mxu0
      %v3870 = vpop.f32.mrb[0].mxu0
      %v3871 = vadd.f32 %v3790, %v3870
      %v3872 = vpop.f32.mrb[0].mxu0
      %3873 = vdwg.mxu0
      %vm3874 = vcmp.ge.f32.partialorder %v3828, 0.0
      %vm3875 = vcmp.ge.f32.partialorder %v3831, 0.0
      %vm3876 = vcmp.ge.f32.partialorder %v3836, 0.0
      %vm3877 = vcmp.ge.f32.partialorder %v3839, 0.0
      %vm3878 = vcmp.ge.f32.partialorder %v3844, 0.0
      %vm3879 = vcmp.ge.f32.partialorder %v3847, 0.0
      %vm3880 = vcmp.ge.f32.partialorder %v3852, 0.0
      %vm3881 = vcmp.ge.f32.partialorder %v3855, 0.0
      %vm3882 = vcmp.ge.f32.partialorder %v3860, 0.0
      %vm3883 = vcmp.ge.f32.partialorder %v3863, 0.0
      %vm3884 = vcmp.ge.f32.partialorder %v3868, 0.0
      %vm3885 = vcmp.ge.f32.partialorder %v3871, 0.0
      %v3886 = vmul.f32 %v3828, 0.1
      %v3887 = vmul.f32 %v3831, 0.1
      %v3888 = vmul.f32 %v3836, 0.1
      %v3889 = vmul.f32 %v3839, 0.1
      %v3890 = vmul.f32 %v3844, 0.1
      %v3891 = vmul.f32 %v3847, 0.1
      %v3892 = vmul.f32 %v3852, 0.1
      %v3893 = vmul.f32 %v3855, 0.1
      %v3894 = vmul.f32 %v3860, 0.1
      %v3895 = vmul.f32 %v3863, 0.1
      %v3896 = vmul.f32 %v3868, 0.1
      %v3897 = vmul.f32 %v3871, 0.1
      %v3898 = vsel %vm3874, %v3828, %v3886
      %v3899 = vsel %vm3875, %v3831, %v3887
      %v3900 = vsel %vm3876, %v3836, %v3888
      %v3901 = vsel %vm3877, %v3839, %v3889
      %v3902 = vsel %vm3878, %v3844, %v3890
      %v3903 = vsel %vm3879, %v3847, %v3891
      %v3904 = vsel %vm3880, %v3852, %v3892
      %v3905 = vsel %vm3881, %v3855, %v3893
      %v3906 = vsel %vm3882, %v3860, %v3894
      %v3907 = vsel %vm3883, %v3863, %v3895
      %v3908 = vsel %vm3884, %v3868, %v3896
      %v3909 = vsel %vm3885, %v3871, %v3897
      %v3910 = vpack.c.bf16 %v3898, %v3898
      %v3911 = vpack.c.bf16 %v3899, %v3899
      %v3912 = vpack.c.bf16 %v3900, %v3900
      %v3913 = vpack.c.bf16 %v3901, %v3901
      %v3914 = vpack.c.bf16 %v3902, %v3902
      %v3915 = vpack.c.bf16 %v3903, %v3903
      %v3916 = vpack.c.bf16 %v3904, %v3904
      %v3917 = vpack.c.bf16 %v3905, %v3905
      %v3918 = vpack.c.bf16 %v3906, %v3906
      %v3919 = vpack.c.bf16 %v3907, %v3907
      %v3920 = vpack.c.bf16 %v3908, %v3908
      %v3921 = vpack.c.bf16 %v3909, %v3909
      %3922 = vst.msk [vmem:[%s1212 + $0x8] sm:$0xf] %vm2259, %v3910
      %3923 = vst.msk [vmem:[%s1212 + $0x18] sm:$0xf] %vm2259, %v3911
      %3924 = vst.msk [vmem:[%s1212 + $0x28] sm:$0xf] %vm2259, %v3912
      %3925 = vst.msk [vmem:[%s1212 + $0x38] sm:$0xf] %vm2259, %v3913
      %3926 = vst.msk [vmem:[%s1212 + $0x48] sm:$0xf] %vm2259, %v3914
      %3927 = vst.msk [vmem:[%s1212 + $0x58] sm:$0xf] %vm2259, %v3915
      %3928 = vst.msk [vmem:[%s1212 + $0x68] sm:$0xf] %vm2259, %v3916
      %3929 = vst.msk [vmem:[%s1212 + $0x78] sm:$0xf] %vm2259, %v3917
      %3930 = vst.msk [vmem:[%s1212 + $0x88] sm:$0xf] %vm2259, %v3918
      %3931 = vst.msk [vmem:[%s1212 + $0x98] sm:$0xf] %vm2259, %v3919
      %3932 = vst.msk [vmem:[%s1212 + $0xa8] sm:$0xf] %vm2259, %v3920
      %3933 = vst.msk [vmem:[%s1212 + $0xb8] sm:$0xf] %vm2259, %v3921
      %v3934 = vld [vmem:[%s1212 + $0x4] sm:$0x8]
      %v3935 = vld [vmem:[%s1212 + $0x8] sm:$0xf]
      %v3936 = vld [vmem:[%s1212 + $0x14] sm:$0x8]
      %v3937 = vld [vmem:[%s1212 + $0x18] sm:$0xf]
      %v3938 = vld [vmem:[%s1212 + $0x24] sm:$0x8]
      %v3939 = vld [vmem:[%s1212 + $0x28] sm:$0xf]
      %v3940 = vld [vmem:[%s1212 + $0x34] sm:$0x8]
      %v3941 = vld [vmem:[%s1212 + $0x38] sm:$0xf]
      %v3942 = vld [vmem:[%s1212 + $0x44] sm:$0x8]
      %v3943 = vld [vmem:[%s1212 + $0x48] sm:$0xf]
      %v3944 = vld [vmem:[%s1212 + $0x54] sm:$0x8]
      %v3945 = vld [vmem:[%s1212 + $0x58] sm:$0xf]
      %v3946 = vld [vmem:[%s1212 + $0x64] sm:$0x8]
      %v3947 = vld [vmem:[%s1212 + $0x68] sm:$0xf]
      %v3948 = vld [vmem:[%s1212 + $0x74] sm:$0x8]
      %v3949 = vld [vmem:[%s1212 + $0x78] sm:$0xf]
      %v3950 = vld [vmem:[%s1212 + $0x84] sm:$0x8]
      %v3951 = vld [vmem:[%s1212 + $0x88] sm:$0xf]
      %v3952 = vld [vmem:[%s1212 + $0x94] sm:$0x8]
      %v3953 = vld [vmem:[%s1212 + $0x98] sm:$0xf]
      %v3955 = vshrl.u32 %v3934, 16
      %v3957 = vrot.slane %v3955, 7
      %v3958 = vrot.slane %v3957, 4
      %v3960 = vshrl.u32 %v3935, 16
      %v3962 = vrot.slane %v3960, 7
      %v3963 = vshll.u32 %v3935, 16
      %v3965 = vor.u32 %v3962, %v3963
      %v3966 = vsel %vm535, %v3958, %v3965
      %v3968 = vshrl.u32 %v3936, 16
      %v3970 = vrot.slane %v3968, 7
      %v3971 = vrot.slane %v3970, 4
      %v3973 = vshrl.u32 %v3937, 16
      %v3975 = vrot.slane %v3973, 7
      %v3976 = vshll.u32 %v3937, 16
      %v3978 = vor.u32 %v3975, %v3976
      %v3979 = vsel %vm535, %v3971, %v3978
      %v3981 = vshrl.u32 %v3938, 16
      %v3983 = vrot.slane %v3981, 7
      %v3984 = vrot.slane %v3983, 4
      %v3986 = vshrl.u32 %v3939, 16
      %v3988 = vrot.slane %v3986, 7
      %v3989 = vshll.u32 %v3939, 16
      %v3991 = vor.u32 %v3988, %v3989
      %v3992 = vsel %vm535, %v3984, %v3991
      %v3994 = vshrl.u32 %v3940, 16
      %v3996 = vrot.slane %v3994, 7
      %v3997 = vrot.slane %v3996, 4
      %v3999 = vshrl.u32 %v3941, 16
      %v4001 = vrot.slane %v3999, 7
      %v4002 = vshll.u32 %v3941, 16
      %v4004 = vor.u32 %v4001, %v4002
      %v4005 = vsel %vm535, %v3997, %v4004
      %v4007 = vshrl.u32 %v3942, 16
      %v4009 = vrot.slane %v4007, 7
      %v4010 = vrot.slane %v4009, 4
      %v4012 = vshrl.u32 %v3943, 16
      %v4014 = vrot.slane %v4012, 7
      %v4015 = vshll.u32 %v3943, 16
      %v4017 = vor.u32 %v4014, %v4015
      %v4018 = vsel %vm535, %v4010, %v4017
      %v4020 = vshrl.u32 %v3944, 16
      %v4022 = vrot.slane %v4020, 7
      %v4023 = vrot.slane %v4022, 4
      %v4025 = vshrl.u32 %v3945, 16
      %v4027 = vrot.slane %v4025, 7
      %v4028 = vshll.u32 %v3945, 16
      %v4030 = vor.u32 %v4027, %v4028
      %v4031 = vsel %vm535, %v4023, %v4030
      %v4033 = vshrl.u32 %v3946, 16
      %v4035 = vrot.slane %v4033, 7
      %v4036 = vrot.slane %v4035, 4
      %v4038 = vshrl.u32 %v3947, 16
      %v4040 = vrot.slane %v4038, 7
      %v4041 = vshll.u32 %v3947, 16
      %v4043 = vor.u32 %v4040, %v4041
      %v4044 = vsel %vm535, %v4036, %v4043
      %v4046 = vshrl.u32 %v3948, 16
      %v4048 = vrot.slane %v4046, 7
      %v4049 = vrot.slane %v4048, 4
      %v4051 = vshrl.u32 %v3949, 16
      %v4053 = vrot.slane %v4051, 7
      %v4054 = vshll.u32 %v3949, 16
      %v4056 = vor.u32 %v4053, %v4054
      %v4057 = vsel %vm535, %v4049, %v4056
      %v4059 = vshrl.u32 %v3950, 16
      %v4061 = vrot.slane %v4059, 7
      %v4062 = vrot.slane %v4061, 4
      %v4064 = vshrl.u32 %v3951, 16
      %v4066 = vrot.slane %v4064, 7
      %v4067 = vshll.u32 %v3951, 16
      %v4069 = vor.u32 %v4066, %v4067
      %v4070 = vsel %vm535, %v4062, %v4069
      %v4072 = vshrl.u32 %v3952, 16
      %v4074 = vrot.slane %v4072, 7
      %v4075 = vrot.slane %v4074, 4
      %v4077 = vshrl.u32 %v3953, 16
      %v4079 = vrot.slane %v4077, 7
      %v4080 = vshll.u32 %v3953, 16
      %v4082 = vor.u32 %v4079, %v4080
      %v4083 = vsel %vm535, %v4075, %v4082
      %v4084 = vld [vmem:[%s1212 + $0xc] sm:$0x1]
      %v4085 = vld [vmem:[%s1212 + $0x1c] sm:$0x1]
      %v4086 = vld [vmem:[%s1212 + $0x2c] sm:$0x1]
      %v4087 = vld [vmem:[%s1212 + $0x3c] sm:$0x1]
      %v4088 = vld [vmem:[%s1212 + $0x4c] sm:$0x1]
      %v4089 = vld [vmem:[%s1212 + $0x5c] sm:$0x1]
      %v4090 = vld [vmem:[%s1212 + $0x6c] sm:$0x1]
      %v4091 = vld [vmem:[%s1212 + $0x7c] sm:$0x1]
      %v4092 = vld [vmem:[%s1212 + $0x8c] sm:$0x1]
      %v4093 = vld [vmem:[%s1212 + $0x9c] sm:$0x1]
      %v4094 = vrot.slane %v3960, 4
      %v4095 = vrot.slane %v3963, 5
      %v4096 = vor.u32 %v4094, %v4095
      %v4097 = vrot.slane %v4096, 4
      %v4099 = vshll.u32 %v4084, 16
      %v4101 = vrot.slane %v4099, 5
      %v4102 = vsel %vm734, %v4097, %v4101
      %v4103 = vrot.slane %v3973, 4
      %v4104 = vrot.slane %v3976, 5
      %v4105 = vor.u32 %v4103, %v4104
      %v4106 = vrot.slane %v4105, 4
      %v4108 = vshll.u32 %v4085, 16
      %v4110 = vrot.slane %v4108, 5
      %v4111 = vsel %vm734, %v4106, %v4110
      %v4112 = vrot.slane %v3986, 4
      %v4113 = vrot.slane %v3989, 5
      %v4114 = vor.u32 %v4112, %v4113
      %v4115 = vrot.slane %v4114, 4
      %v4117 = vshll.u32 %v4086, 16
      %v4119 = vrot.slane %v4117, 5
      %v4120 = vsel %vm734, %v4115, %v4119
      %v4121 = vrot.slane %v3999, 4
      %v4122 = vrot.slane %v4002, 5
      %v4123 = vor.u32 %v4121, %v4122
      %v4124 = vrot.slane %v4123, 4
      %v4126 = vshll.u32 %v4087, 16
      %v4128 = vrot.slane %v4126, 5
      %v4129 = vsel %vm734, %v4124, %v4128
      %v4130 = vrot.slane %v4012, 4
      %v4131 = vrot.slane %v4015, 5
      %v4132 = vor.u32 %v4130, %v4131
      %v4133 = vrot.slane %v4132, 4
      %v4135 = vshll.u32 %v4088, 16
      %v4137 = vrot.slane %v4135, 5
      %v4138 = vsel %vm734, %v4133, %v4137
      %v4139 = vrot.slane %v4025, 4
      %v4140 = vrot.slane %v4028, 5
      %v4141 = vor.u32 %v4139, %v4140
      %v4142 = vrot.slane %v4141, 4
      %v4144 = vshll.u32 %v4089, 16
      %v4146 = vrot.slane %v4144, 5
      %v4147 = vsel %vm734, %v4142, %v4146
      %v4148 = vrot.slane %v4038, 4
      %v4149 = vrot.slane %v4041, 5
      %v4150 = vor.u32 %v4148, %v4149
      %v4151 = vrot.slane %v4150, 4
      %v4153 = vshll.u32 %v4090, 16
      %v4155 = vrot.slane %v4153, 5
      %v4156 = vsel %vm734, %v4151, %v4155
      %v4157 = vrot.slane %v4051, 4
      %v4158 = vrot.slane %v4054, 5
      %v4159 = vor.u32 %v4157, %v4158
      %v4160 = vrot.slane %v4159, 4
      %v4162 = vshll.u32 %v4091, 16
      %v4164 = vrot.slane %v4162, 5
      %v4165 = vsel %vm734, %v4160, %v4164
      %v4166 = vrot.slane %v4064, 4
      %v4167 = vrot.slane %v4067, 5
      %v4168 = vor.u32 %v4166, %v4167
      %v4169 = vrot.slane %v4168, 4
      %v4171 = vshll.u32 %v4092, 16
      %v4173 = vrot.slane %v4171, 5
      %v4174 = vsel %vm734, %v4169, %v4173
      %v4175 = vrot.slane %v4077, 4
      %v4176 = vrot.slane %v4080, 5
      %v4177 = vor.u32 %v4175, %v4176
      %v4178 = vrot.slane %v4177, 4
      %v4180 = vshll.u32 %v4093, 16
      %v4182 = vrot.slane %v4180, 5
      %v4183 = vsel %vm734, %v4178, %v4182
      %v4184 = vld [vmem:[%s2874 + $0x4] sm:$0x8]
      %v4185 = vld [vmem:[%s2874 + $0x8] sm:$0xf]
      %v4186 = vld [vmem:[%s2874 + $0x14] sm:$0x8]
      %v4187 = vld [vmem:[%s2874 + $0x18] sm:$0xf]
      %v4188 = vld [vmem:[%s2874 + $0x24] sm:$0x8]
      %v4189 = vld [vmem:[%s2874 + $0x28] sm:$0xf]
      %v4190 = vld [vmem:[%s2874 + $0x34] sm:$0x8]
      %v4191 = vld [vmem:[%s2874 + $0x38] sm:$0xf]
      %v4192 = vld [vmem:[%s2874 + $0x44] sm:$0x8]
      %v4193 = vld [vmem:[%s2874 + $0x48] sm:$0xf]
      %v4194 = vld [vmem:[%s2874 + $0x54] sm:$0x8]
      %v4195 = vld [vmem:[%s2874 + $0x58] sm:$0xf]
      %v4196 = vld [vmem:[%s2874 + $0x64] sm:$0x8]
      %v4197 = vld [vmem:[%s2874 + $0x68] sm:$0xf]
      %v4198 = vld [vmem:[%s2874 + $0x74] sm:$0x8]
      %v4199 = vld [vmem:[%s2874 + $0x78] sm:$0xf]
      %v4200 = vld [vmem:[%s2874 + $0x84] sm:$0x8]
      %v4201 = vld [vmem:[%s2874 + $0x88] sm:$0xf]
      %v4202 = vld [vmem:[%s2874 + $0x94] sm:$0x8]
      %v4203 = vld [vmem:[%s2874 + $0x98] sm:$0xf]
      %v4205 = vshrl.u32 %v4184, 16
      %v4207 = vrot.slane %v4205, 7
      %v4208 = vrot.slane %v4207, 4
      %v4210 = vshrl.u32 %v4185, 16
      %v4212 = vrot.slane %v4210, 7
      %v4213 = vshll.u32 %v4185, 16
      %v4215 = vor.u32 %v4212, %v4213
      %v4216 = vsel %vm535, %v4208, %v4215
      %v4218 = vshrl.u32 %v4186, 16
      %v4220 = vrot.slane %v4218, 7
      %v4221 = vrot.slane %v4220, 4
      %v4223 = vshrl.u32 %v4187, 16
      %v4225 = vrot.slane %v4223, 7
      %v4226 = vshll.u32 %v4187, 16
      %v4228 = vor.u32 %v4225, %v4226
      %v4229 = vsel %vm535, %v4221, %v4228
      %v4231 = vshrl.u32 %v4188, 16
      %v4233 = vrot.slane %v4231, 7
      %v4234 = vrot.slane %v4233, 4
      %v4236 = vshrl.u32 %v4189, 16
      %v4238 = vrot.slane %v4236, 7
      %v4239 = vshll.u32 %v4189, 16
      %v4241 = vor.u32 %v4238, %v4239
      %v4242 = vsel %vm535, %v4234, %v4241
      %v4244 = vshrl.u32 %v4190, 16
      %v4246 = vrot.slane %v4244, 7
      %v4247 = vrot.slane %v4246, 4
      %v4249 = vshrl.u32 %v4191, 16
      %v4251 = vrot.slane %v4249, 7
      %v4252 = vshll.u32 %v4191, 16
      %v4254 = vor.u32 %v4251, %v4252
      %v4255 = vsel %vm535, %v4247, %v4254
      %v4257 = vshrl.u32 %v4192, 16
      %v4259 = vrot.slane %v4257, 7
      %v4260 = vrot.slane %v4259, 4
      %v4262 = vshrl.u32 %v4193, 16
      %v4264 = vrot.slane %v4262, 7
      %v4265 = vshll.u32 %v4193, 16
      %v4267 = vor.u32 %v4264, %v4265
      %v4268 = vsel %vm535, %v4260, %v4267
      %v4270 = vshrl.u32 %v4194, 16
      %v4272 = vrot.slane %v4270, 7
      %v4273 = vrot.slane %v4272, 4
      %v4275 = vshrl.u32 %v4195, 16
      %v4277 = vrot.slane %v4275, 7
      %v4278 = vshll.u32 %v4195, 16
      %v4280 = vor.u32 %v4277, %v4278
      %v4281 = vsel %vm535, %v4273, %v4280
      %v4283 = vshrl.u32 %v4196, 16
      %v4285 = vrot.slane %v4283, 7
      %v4286 = vrot.slane %v4285, 4
      %v4288 = vshrl.u32 %v4197, 16
      %v4290 = vrot.slane %v4288, 7
      %v4291 = vshll.u32 %v4197, 16
      %v4293 = vor.u32 %v4290, %v4291
      %v4294 = vsel %vm535, %v4286, %v4293
      %v4296 = vshrl.u32 %v4198, 16
      %v4298 = vrot.slane %v4296, 7
      %v4299 = vrot.slane %v4298, 4
      %v4301 = vshrl.u32 %v4199, 16
      %v4303 = vrot.slane %v4301, 7
      %v4304 = vshll.u32 %v4199, 16
      %v4306 = vor.u32 %v4303, %v4304
      %v4307 = vsel %vm535, %v4299, %v4306
      %v4309 = vshrl.u32 %v4200, 16
      %v4311 = vrot.slane %v4309, 7
      %v4312 = vrot.slane %v4311, 4
      %v4314 = vshrl.u32 %v4201, 16
      %v4316 = vrot.slane %v4314, 7
      %v4317 = vshll.u32 %v4201, 16
      %v4319 = vor.u32 %v4316, %v4317
      %v4320 = vsel %vm535, %v4312, %v4319
      %v4322 = vshrl.u32 %v4202, 16
      %v4324 = vrot.slane %v4322, 7
      %v4325 = vrot.slane %v4324, 4
      %v4327 = vshrl.u32 %v4203, 16
      %v4329 = vrot.slane %v4327, 7
      %v4330 = vshll.u32 %v4203, 16
      %v4332 = vor.u32 %v4329, %v4330
      %v4333 = vsel %vm535, %v4325, %v4332
      %v4334 = vld [vmem:[%s2874 + $0xc] sm:$0x1]
      %v4335 = vld [vmem:[%s2874 + $0x1c] sm:$0x1]
      %v4336 = vld [vmem:[%s2874 + $0x2c] sm:$0x1]
      %v4337 = vld [vmem:[%s2874 + $0x3c] sm:$0x1]
      %v4338 = vld [vmem:[%s2874 + $0x4c] sm:$0x1]
      %v4339 = vld [vmem:[%s2874 + $0x5c] sm:$0x1]
      %v4340 = vld [vmem:[%s2874 + $0x6c] sm:$0x1]
      %v4341 = vld [vmem:[%s2874 + $0x7c] sm:$0x1]
      %v4342 = vld [vmem:[%s2874 + $0x8c] sm:$0x1]
      %v4343 = vld [vmem:[%s2874 + $0x9c] sm:$0x1]
      %v4344 = vrot.slane %v4210, 4
      %v4345 = vrot.slane %v4213, 5
      %v4346 = vor.u32 %v4344, %v4345
      %v4347 = vrot.slane %v4346, 4
      %v4349 = vshll.u32 %v4334, 16
      %v4351 = vrot.slane %v4349, 5
      %v4352 = vsel %vm734, %v4347, %v4351
      %v4353 = vrot.slane %v4223, 4
      %v4354 = vrot.slane %v4226, 5
      %v4355 = vor.u32 %v4353, %v4354
      %v4356 = vrot.slane %v4355, 4
      %v4358 = vshll.u32 %v4335, 16
      %v4360 = vrot.slane %v4358, 5
      %v4361 = vsel %vm734, %v4356, %v4360
      %v4362 = vrot.slane %v4236, 4
      %v4363 = vrot.slane %v4239, 5
      %v4364 = vor.u32 %v4362, %v4363
      %v4365 = vrot.slane %v4364, 4
      %v4367 = vshll.u32 %v4336, 16
      %v4369 = vrot.slane %v4367, 5
      %v4370 = vsel %vm734, %v4365, %v4369
      %v4371 = vrot.slane %v4249, 4
      %v4372 = vrot.slane %v4252, 5
      %v4373 = vor.u32 %v4371, %v4372
      %v4374 = vrot.slane %v4373, 4
      %v4376 = vshll.u32 %v4337, 16
      %v4378 = vrot.slane %v4376, 5
      %v4379 = vsel %vm734, %v4374, %v4378
      %v4380 = vrot.slane %v4262, 4
      %v4381 = vrot.slane %v4265, 5
      %v4382 = vor.u32 %v4380, %v4381
      %v4383 = vrot.slane %v4382, 4
      %v4385 = vshll.u32 %v4338, 16
      %v4387 = vrot.slane %v4385, 5
      %v4388 = vsel %vm734, %v4383, %v4387
      %v4389 = vrot.slane %v4275, 4
      %v4390 = vrot.slane %v4278, 5
      %v4391 = vor.u32 %v4389, %v4390
      %v4392 = vrot.slane %v4391, 4
      %v4394 = vshll.u32 %v4339, 16
      %v4396 = vrot.slane %v4394, 5
      %v4397 = vsel %vm734, %v4392, %v4396
      %v4398 = vrot.slane %v4288, 4
      %v4399 = vrot.slane %v4291, 5
      %v4400 = vor.u32 %v4398, %v4399
      %v4401 = vrot.slane %v4400, 4
      %v4403 = vshll.u32 %v4340, 16
      %v4405 = vrot.slane %v4403, 5
      %v4406 = vsel %vm734, %v4401, %v4405
      %v4407 = vrot.slane %v4301, 4
      %v4408 = vrot.slane %v4304, 5
      %v4409 = vor.u32 %v4407, %v4408
      %v4410 = vrot.slane %v4409, 4
      %v4412 = vshll.u32 %v4341, 16
      %v4414 = vrot.slane %v4412, 5
      %v4415 = vsel %vm734, %v4410, %v4414
      %v4416 = vrot.slane %v4314, 4
      %v4417 = vrot.slane %v4317, 5
      %v4418 = vor.u32 %v4416, %v4417
      %v4419 = vrot.slane %v4418, 4
      %v4421 = vshll.u32 %v4342, 16
      %v4423 = vrot.slane %v4421, 5
      %v4424 = vsel %vm734, %v4419, %v4423
      %v4425 = vrot.slane %v4327, 4
      %v4426 = vrot.slane %v4330, 5
      %v4427 = vor.u32 %v4425, %v4426
      %v4428 = vrot.slane %v4427, 4
      %v4430 = vshll.u32 %v4343, 16
      %v4432 = vrot.slane %v4430, 5
      %v4433 = vsel %vm734, %v4428, %v4432
      %s4434 = scalar_lea.vmem [#allocation2], 64
      %v4435 = vld [vmem:[%s4434 + $0x4] sm:$0x8]
      %v4436 = vld [vmem:[%s4434 + $0x8] sm:$0xf]
      %v4437 = vld [vmem:[%s4434 + $0x14] sm:$0x8]
      %v4438 = vld [vmem:[%s4434 + $0x18] sm:$0xf]
      %v4439 = vld [vmem:[%s4434 + $0x24] sm:$0x8]
      %v4440 = vld [vmem:[%s4434 + $0x28] sm:$0xf]
      %v4441 = vld [vmem:[%s4434 + $0x34] sm:$0x8]
      %v4442 = vld [vmem:[%s4434 + $0x38] sm:$0xf]
      %v4443 = vld [vmem:[%s4434 + $0x44] sm:$0x8]
      %v4444 = vld [vmem:[%s4434 + $0x48] sm:$0xf]
      %v4445 = vld [vmem:[%s4434 + $0x54] sm:$0x8]
      %v4446 = vld [vmem:[%s4434 + $0x58] sm:$0xf]
      %v4447 = vld [vmem:[%s4434 + $0x64] sm:$0x8]
      %v4448 = vld [vmem:[%s4434 + $0x68] sm:$0xf]
      %v4449 = vld [vmem:[%s4434 + $0x74] sm:$0x8]
      %v4450 = vld [vmem:[%s4434 + $0x78] sm:$0xf]
      %v4451 = vld [vmem:[%s4434 + $0x84] sm:$0x8]
      %v4452 = vld [vmem:[%s4434 + $0x88] sm:$0xf]
      %v4453 = vld [vmem:[%s4434 + $0x94] sm:$0x8]
      %v4454 = vld [vmem:[%s4434 + $0x98] sm:$0xf]
      %v4456 = vshrl.u32 %v4435, 16
      %v4458 = vrot.slane %v4456, 7
      %v4459 = vrot.slane %v4458, 4
      %v4461 = vshrl.u32 %v4436, 16
      %v4463 = vrot.slane %v4461, 7
      %v4464 = vshll.u32 %v4436, 16
      %v4466 = vor.u32 %v4463, %v4464
      %v4467 = vsel %vm535, %v4459, %v4466
      %v4469 = vshrl.u32 %v4437, 16
      %v4471 = vrot.slane %v4469, 7
      %v4472 = vrot.slane %v4471, 4
      %v4474 = vshrl.u32 %v4438, 16
      %v4476 = vrot.slane %v4474, 7
      %v4477 = vshll.u32 %v4438, 16
      %v4479 = vor.u32 %v4476, %v4477
      %v4480 = vsel %vm535, %v4472, %v4479
      %v4482 = vshrl.u32 %v4439, 16
      %v4484 = vrot.slane %v4482, 7
      %v4485 = vrot.slane %v4484, 4
      %v4487 = vshrl.u32 %v4440, 16
      %v4489 = vrot.slane %v4487, 7
      %v4490 = vshll.u32 %v4440, 16
      %v4492 = vor.u32 %v4489, %v4490
      %v4493 = vsel %vm535, %v4485, %v4492
      %v4495 = vshrl.u32 %v4441, 16
      %v4497 = vrot.slane %v4495, 7
      %v4498 = vrot.slane %v4497, 4
      %v4500 = vshrl.u32 %v4442, 16
      %v4502 = vrot.slane %v4500, 7
      %v4503 = vshll.u32 %v4442, 16
      %v4505 = vor.u32 %v4502, %v4503
      %v4506 = vsel %vm535, %v4498, %v4505
      %v4508 = vshrl.u32 %v4443, 16
      %v4510 = vrot.slane %v4508, 7
      %v4511 = vrot.slane %v4510, 4
      %v4513 = vshrl.u32 %v4444, 16
      %v4515 = vrot.slane %v4513, 7
      %v4516 = vshll.u32 %v4444, 16
      %v4518 = vor.u32 %v4515, %v4516
      %v4519 = vsel %vm535, %v4511, %v4518
      %v4521 = vshrl.u32 %v4445, 16
      %v4523 = vrot.slane %v4521, 7
      %v4524 = vrot.slane %v4523, 4
      %v4526 = vshrl.u32 %v4446, 16
      %v4528 = vrot.slane %v4526, 7
      %v4529 = vshll.u32 %v4446, 16
      %v4531 = vor.u32 %v4528, %v4529
      %v4532 = vsel %vm535, %v4524, %v4531
      %v4534 = vshrl.u32 %v4447, 16
      %v4536 = vrot.slane %v4534, 7
      %v4537 = vrot.slane %v4536, 4
      %v4539 = vshrl.u32 %v4448, 16
      %v4541 = vrot.slane %v4539, 7
      %v4542 = vshll.u32 %v4448, 16
      %v4544 = vor.u32 %v4541, %v4542
      %v4545 = vsel %vm535, %v4537, %v4544
      %v4547 = vshrl.u32 %v4449, 16
      %v4549 = vrot.slane %v4547, 7
      %v4550 = vrot.slane %v4549, 4
      %v4552 = vshrl.u32 %v4450, 16
      %v4554 = vrot.slane %v4552, 7
      %v4555 = vshll.u32 %v4450, 16
      %v4557 = vor.u32 %v4554, %v4555
      %v4558 = vsel %vm535, %v4550, %v4557
      %v4560 = vshrl.u32 %v4451, 16
      %v4562 = vrot.slane %v4560, 7
      %v4563 = vrot.slane %v4562, 4
      %v4565 = vshrl.u32 %v4452, 16
      %v4567 = vrot.slane %v4565, 7
      %v4568 = vshll.u32 %v4452, 16
      %v4570 = vor.u32 %v4567, %v4568
      %v4571 = vsel %vm535, %v4563, %v4570
      %v4573 = vshrl.u32 %v4453, 16
      %v4575 = vrot.slane %v4573, 7
      %v4576 = vrot.slane %v4575, 4
      %v4578 = vshrl.u32 %v4454, 16
      %v4580 = vrot.slane %v4578, 7
      %v4581 = vshll.u32 %v4454, 16
      %v4583 = vor.u32 %v4580, %v4581
      %v4584 = vsel %vm535, %v4576, %v4583
      %v4585 = vld [vmem:[%s4434 + $0xc] sm:$0x1]
      %v4586 = vld [vmem:[%s4434 + $0x1c] sm:$0x1]
      %v4587 = vld [vmem:[%s4434 + $0x2c] sm:$0x1]
      %v4588 = vld [vmem:[%s4434 + $0x3c] sm:$0x1]
      %v4589 = vld [vmem:[%s4434 + $0x4c] sm:$0x1]
      %v4590 = vld [vmem:[%s4434 + $0x5c] sm:$0x1]
      %v4591 = vld [vmem:[%s4434 + $0x6c] sm:$0x1]
      %v4592 = vld [vmem:[%s4434 + $0x7c] sm:$0x1]
      %v4593 = vld [vmem:[%s4434 + $0x8c] sm:$0x1]
      %v4594 = vld [vmem:[%s4434 + $0x9c] sm:$0x1]
      %v4595 = vrot.slane %v4461, 4
      %v4596 = vrot.slane %v4464, 5
      %v4597 = vor.u32 %v4595, %v4596
      %v4598 = vrot.slane %v4597, 4
      %v4600 = vshll.u32 %v4585, 16
      %v4602 = vrot.slane %v4600, 5
      %v4603 = vsel %vm734, %v4598, %v4602
      %v4604 = vrot.slane %v4474, 4
      %v4605 = vrot.slane %v4477, 5
      %v4606 = vor.u32 %v4604, %v4605
      %v4607 = vrot.slane %v4606, 4
      %v4609 = vshll.u32 %v4586, 16
      %v4611 = vrot.slane %v4609, 5
      %v4612 = vsel %vm734, %v4607, %v4611
      %v4613 = vrot.slane %v4487, 4
      %v4614 = vrot.slane %v4490, 5
      %v4615 = vor.u32 %v4613, %v4614
      %v4616 = vrot.slane %v4615, 4
      %v4618 = vshll.u32 %v4587, 16
      %v4620 = vrot.slane %v4618, 5
      %v4621 = vsel %vm734, %v4616, %v4620
      %v4622 = vrot.slane %v4500, 4
      %v4623 = vrot.slane %v4503, 5
      %v4624 = vor.u32 %v4622, %v4623
      %v4625 = vrot.slane %v4624, 4
      %v4627 = vshll.u32 %v4588, 16
      %v4629 = vrot.slane %v4627, 5
      %v4630 = vsel %vm734, %v4625, %v4629
      %v4631 = vrot.slane %v4513, 4
      %v4632 = vrot.slane %v4516, 5
      %v4633 = vor.u32 %v4631, %v4632
      %v4634 = vrot.slane %v4633, 4
      %v4636 = vshll.u32 %v4589, 16
      %v4638 = vrot.slane %v4636, 5
      %v4639 = vsel %vm734, %v4634, %v4638
      %v4640 = vrot.slane %v4526, 4
      %v4641 = vrot.slane %v4529, 5
      %v4642 = vor.u32 %v4640, %v4641
      %v4643 = vrot.slane %v4642, 4
      %v4645 = vshll.u32 %v4590, 16
      %v4647 = vrot.slane %v4645, 5
      %v4648 = vsel %vm734, %v4643, %v4647
      %v4649 = vrot.slane %v4539, 4
      %v4650 = vrot.slane %v4542, 5
      %v4651 = vor.u32 %v4649, %v4650
      %v4652 = vrot.slane %v4651, 4
      %v4654 = vshll.u32 %v4591, 16
      %v4656 = vrot.slane %v4654, 5
      %v4657 = vsel %vm734, %v4652, %v4656
      %v4658 = vrot.slane %v4552, 4
      %v4659 = vrot.slane %v4555, 5
      %v4660 = vor.u32 %v4658, %v4659
      %v4661 = vrot.slane %v4660, 4
      %v4663 = vshll.u32 %v4592, 16
      %v4665 = vrot.slane %v4663, 5
      %v4666 = vsel %vm734, %v4661, %v4665
      %v4667 = vrot.slane %v4565, 4
      %v4668 = vrot.slane %v4568, 5
      %v4669 = vor.u32 %v4667, %v4668
      %v4670 = vrot.slane %v4669, 4
      %v4672 = vshll.u32 %v4593, 16
      %v4674 = vrot.slane %v4672, 5
      %v4675 = vsel %vm734, %v4670, %v4674
      %v4676 = vrot.slane %v4578, 4
      %v4677 = vrot.slane %v4581, 5
      %v4678 = vor.u32 %v4676, %v4677
      %v4679 = vrot.slane %v4678, 4
      %v4681 = vshll.u32 %v4594, 16
      %v4683 = vrot.slane %v4681, 5
      %v4684 = vsel %vm734, %v4679, %v4683
      %v4685 = vunpack.c.l.b16 %v3966
      %v4686 = vunpack.c.l.b16 %v3979
      %v4687 = vunpack.c.l.b16 %v3992
      %v4688 = vunpack.c.l.b16 %v4005
      %v4689 = vunpack.c.l.b16 %v4018
      %v4690 = vunpack.c.l.b16 %v4031
      %v4691 = vunpack.c.l.b16 %v4044
      %v4692 = vunpack.c.l.b16 %v4057
      %v4693 = vunpack.c.l.b16 %v4070
      %v4694 = vunpack.c.l.b16 %v4083
      %v4695 = vpack.c.b16 %v4686, %v4685
      %v4696 = vpack.c.b16 %v4688, %v4687
      %v4697 = vpack.c.b16 %v4690, %v4689
      %v4698 = vpack.c.b16 %v4692, %v4691
      %v4699 = vpack.c.b16 %v4694, %v4693
      %v4710 = vunpack.c.l.b16 %v3935
      %v4711 = vunpack.c.l.b16 %v3937
      %v4712 = vunpack.c.l.b16 %v3939
      %v4713 = vunpack.c.l.b16 %v3941
      %v4714 = vunpack.c.l.b16 %v3943
      %v4715 = vunpack.c.l.b16 %v3945
      %v4716 = vunpack.c.l.b16 %v3947
      %v4717 = vunpack.c.l.b16 %v3949
      %v4718 = vunpack.c.l.b16 %v3951
      %v4719 = vunpack.c.l.b16 %v3953
      %v4720 = vpack.c.b16 %v4711, %v4710
      %v4721 = vpack.c.b16 %v4713, %v4712
      %v4722 = vpack.c.b16 %v4715, %v4714
      %v4723 = vpack.c.b16 %v4717, %v4716
      %v4724 = vpack.c.b16 %v4719, %v4718
      %4725 = vrot.lane.b32.xlu0 %v4720, 32
      %v4726 = vpop.permute.xlu0 %4725
      %4727 = vrot.lane.b32.xlu0 %v4721, 32
      %v4728 = vpop.permute.xlu0 %4727
      %4729 = vrot.lane.b32.xlu0 %v4722, 32
      %v4730 = vpop.permute.xlu0 %4729
      %4731 = vrot.lane.b32.xlu0 %v4723, 32
      %v4732 = vpop.permute.xlu0 %4731
      %4733 = vrot.lane.b32.xlu0 %v4724, 32
      %v4734 = vpop.permute.xlu0 %4733
      %v4735 = vunpack.c.l.b16 %v4102
      %v4736 = vunpack.c.l.b16 %v4111
      %v4737 = vunpack.c.l.b16 %v4120
      %v4738 = vunpack.c.l.b16 %v4129
      %v4739 = vunpack.c.l.b16 %v4138
      %v4740 = vunpack.c.l.b16 %v4147
      %v4741 = vunpack.c.l.b16 %v4156
      %v4742 = vunpack.c.l.b16 %v4165
      %v4743 = vunpack.c.l.b16 %v4174
      %v4744 = vunpack.c.l.b16 %v4183
      %v4745 = vpack.c.b16 %v4736, %v4735
      %v4746 = vpack.c.b16 %v4738, %v4737
      %v4747 = vpack.c.b16 %v4740, %v4739
      %v4748 = vpack.c.b16 %v4742, %v4741
      %v4749 = vpack.c.b16 %v4744, %v4743
      %4750 = vrot.lane.b32.xlu0 %v4745, 64
      %v4751 = vpop.permute.xlu0 %4750
      %4752 = vrot.lane.b32.xlu0 %v4746, 64
      %v4753 = vpop.permute.xlu0 %4752
      %4754 = vrot.lane.b32.xlu0 %v4747, 64
      %v4755 = vpop.permute.xlu0 %4754
      %4756 = vrot.lane.b32.xlu0 %v4748, 64
      %v4757 = vpop.permute.xlu0 %4756
      %4758 = vrot.lane.b32.xlu0 %v4749, 64
      %v4759 = vpop.permute.xlu0 %4758
      %v4760 = vunpack.c.l.b16 %v4216
      %v4761 = vunpack.c.l.b16 %v4229
      %v4762 = vunpack.c.l.b16 %v4242
      %v4763 = vunpack.c.l.b16 %v4255
      %v4764 = vunpack.c.l.b16 %v4268
      %v4765 = vunpack.c.l.b16 %v4281
      %v4766 = vunpack.c.l.b16 %v4294
      %v4767 = vunpack.c.l.b16 %v4307
      %v4768 = vunpack.c.l.b16 %v4320
      %v4769 = vunpack.c.l.b16 %v4333
      %v4770 = vpack.c.b16 %v4761, %v4760
      %v4771 = vpack.c.b16 %v4763, %v4762
      %v4772 = vpack.c.b16 %v4765, %v4764
      %v4773 = vpack.c.b16 %v4767, %v4766
      %v4774 = vpack.c.b16 %v4769, %v4768
      %4775 = vrot.lane.b32.xlu0 %v4770, 96
      %v4776 = vpop.permute.xlu0 %4775
      %4777 = vrot.lane.b32.xlu0 %v4771, 96
      %v4778 = vpop.permute.xlu0 %4777
      %4779 = vrot.lane.b32.xlu0 %v4772, 96
      %v4780 = vpop.permute.xlu0 %4779
      %4781 = vrot.lane.b32.xlu0 %v4773, 96
      %v4782 = vpop.permute.xlu0 %4781
      %4783 = vrot.lane.b32.xlu0 %v4774, 96
      %v4784 = vpop.permute.xlu0 %4783
      %v4795 = vunpack.c.l.b16 %v4185
      %v4796 = vunpack.c.l.b16 %v4187
      %v4797 = vunpack.c.l.b16 %v4189
      %v4798 = vunpack.c.l.b16 %v4191
      %v4799 = vunpack.c.l.b16 %v4193
      %v4800 = vunpack.c.l.b16 %v4195
      %v4801 = vunpack.c.l.b16 %v4197
      %v4802 = vunpack.c.l.b16 %v4199
      %v4803 = vunpack.c.l.b16 %v4201
      %v4804 = vunpack.c.l.b16 %v4203
      %v4805 = vpack.c.b16 %v4796, %v4795
      %v4806 = vpack.c.b16 %v4798, %v4797
      %v4807 = vpack.c.b16 %v4800, %v4799
      %v4808 = vpack.c.b16 %v4802, %v4801
      %v4809 = vpack.c.b16 %v4804, %v4803
      %v4810 = vunpack.c.l.b16 %v4352
      %v4811 = vunpack.c.l.b16 %v4361
      %v4812 = vunpack.c.l.b16 %v4370
      %v4813 = vunpack.c.l.b16 %v4379
      %v4814 = vunpack.c.l.b16 %v4388
      %v4815 = vunpack.c.l.b16 %v4397
      %v4816 = vunpack.c.l.b16 %v4406
      %v4817 = vunpack.c.l.b16 %v4415
      %v4818 = vunpack.c.l.b16 %v4424
      %v4819 = vunpack.c.l.b16 %v4433
      %v4820 = vpack.c.b16 %v4811, %v4810
      %v4821 = vpack.c.b16 %v4813, %v4812
      %v4822 = vpack.c.b16 %v4815, %v4814
      %v4823 = vpack.c.b16 %v4817, %v4816
      %v4824 = vpack.c.b16 %v4819, %v4818
      %4825 = vrot.lane.b32.xlu0 %v4820, 32
      %v4826 = vpop.permute.xlu0 %4825
      %4827 = vrot.lane.b32.xlu0 %v4821, 32
      %v4828 = vpop.permute.xlu0 %4827
      %4829 = vrot.lane.b32.xlu0 %v4822, 32
      %v4830 = vpop.permute.xlu0 %4829
      %4831 = vrot.lane.b32.xlu0 %v4823, 32
      %v4832 = vpop.permute.xlu0 %4831
      %4833 = vrot.lane.b32.xlu0 %v4824, 32
      %v4834 = vpop.permute.xlu0 %4833
      %v4835 = vunpack.c.l.b16 %v4467
      %v4836 = vunpack.c.l.b16 %v4480
      %v4837 = vunpack.c.l.b16 %v4493
      %v4838 = vunpack.c.l.b16 %v4506
      %v4839 = vunpack.c.l.b16 %v4519
      %v4840 = vunpack.c.l.b16 %v4532
      %v4841 = vunpack.c.l.b16 %v4545
      %v4842 = vunpack.c.l.b16 %v4558
      %v4843 = vunpack.c.l.b16 %v4571
      %v4844 = vunpack.c.l.b16 %v4584
      %v4845 = vpack.c.b16 %v4836, %v4835
      %v4846 = vpack.c.b16 %v4838, %v4837
      %v4847 = vpack.c.b16 %v4840, %v4839
      %v4848 = vpack.c.b16 %v4842, %v4841
      %v4849 = vpack.c.b16 %v4844, %v4843
      %4850 = vrot.lane.b32.xlu0 %v4845, 64
      %v4851 = vpop.permute.xlu0 %4850
      %4852 = vrot.lane.b32.xlu0 %v4846, 64
      %v4853 = vpop.permute.xlu0 %4852
      %4854 = vrot.lane.b32.xlu0 %v4847, 64
      %v4855 = vpop.permute.xlu0 %4854
      %4856 = vrot.lane.b32.xlu0 %v4848, 64
      %v4857 = vpop.permute.xlu0 %4856
      %4858 = vrot.lane.b32.xlu0 %v4849, 64
      %v4859 = vpop.permute.xlu0 %4858
      %v4870 = vunpack.c.l.b16 %v4436
      %v4871 = vunpack.c.l.b16 %v4438
      %v4872 = vunpack.c.l.b16 %v4440
      %v4873 = vunpack.c.l.b16 %v4442
      %v4874 = vunpack.c.l.b16 %v4444
      %v4875 = vunpack.c.l.b16 %v4446
      %v4876 = vunpack.c.l.b16 %v4448
      %v4877 = vunpack.c.l.b16 %v4450
      %v4878 = vunpack.c.l.b16 %v4452
      %v4879 = vunpack.c.l.b16 %v4454
      %v4880 = vpack.c.b16 %v4871, %v4870
      %v4881 = vpack.c.b16 %v4873, %v4872
      %v4882 = vpack.c.b16 %v4875, %v4874
      %v4883 = vpack.c.b16 %v4877, %v4876
      %v4884 = vpack.c.b16 %v4879, %v4878
      %4885 = vrot.lane.b32.xlu0 %v4880, 96
      %v4886 = vpop.permute.xlu0 %4885
      %4887 = vrot.lane.b32.xlu0 %v4881, 96
      %v4888 = vpop.permute.xlu0 %4887
      %4889 = vrot.lane.b32.xlu0 %v4882, 96
      %v4890 = vpop.permute.xlu0 %4889
      %4891 = vrot.lane.b32.xlu0 %v4883, 96
      %v4892 = vpop.permute.xlu0 %4891
      %4893 = vrot.lane.b32.xlu0 %v4884, 96
      %v4894 = vpop.permute.xlu0 %4893
      %v4895 = vunpack.c.l.b16 %v4603
      %v4896 = vunpack.c.l.b16 %v4612
      %v4897 = vunpack.c.l.b16 %v4621
      %v4898 = vunpack.c.l.b16 %v4630
      %v4899 = vunpack.c.l.b16 %v4639
      %v4900 = vunpack.c.l.b16 %v4648
      %v4901 = vunpack.c.l.b16 %v4657
      %v4902 = vunpack.c.l.b16 %v4666
      %v4903 = vunpack.c.l.b16 %v4675
      %v4904 = vunpack.c.l.b16 %v4684
      %v4905 = vpack.c.b16 %v4896, %v4895
      %v4906 = vpack.c.b16 %v4898, %v4897
      %v4907 = vpack.c.b16 %v4900, %v4899
      %v4908 = vpack.c.b16 %v4902, %v4901
      %v4909 = vpack.c.b16 %v4904, %v4903
      %v4912 = vsel %vm3445, %v4695, %v4726
      %v4915 = vsel %vm3445, %v4696, %v4728
      %v4918 = vsel %vm3445, %v4697, %v4730
      %v4921 = vsel %vm3445, %v4698, %v4732
      %v4924 = vsel %vm3445, %v4699, %v4734
      %v4926 = vsel %vm3464, %v4912, %v4751
      %v4928 = vsel %vm3464, %v4915, %v4753
      %v4930 = vsel %vm3464, %v4918, %v4755
      %v4932 = vsel %vm3464, %v4921, %v4757
      %v4934 = vsel %vm3464, %v4924, %v4759
      %v4936 = vsel %vm2018, %v4926, %v4776
      %v4939 = vsel %vm2018, %v4928, %v4778
      %v4942 = vsel %vm2018, %v4930, %v4780
      %v4945 = vsel %vm2018, %v4932, %v4782
      %v4948 = vsel %vm2018, %v4934, %v4784
      %v4952 = vsel %vm3445, %v4805, %v4826
      %v4955 = vsel %vm3445, %v4806, %v4828
      %v4958 = vsel %vm3445, %v4807, %v4830
      %v4961 = vsel %vm3445, %v4808, %v4832
      %v4964 = vsel %vm3445, %v4809, %v4834
      %v4966 = vsel %vm3464, %v4952, %v4851
      %v4968 = vsel %vm3464, %v4955, %v4853
      %v4970 = vsel %vm3464, %v4958, %v4855
      %v4972 = vsel %vm3464, %v4961, %v4857
      %v4974 = vsel %vm3464, %v4964, %v4859
      %v4976 = vsel %vm2018, %v4966, %v4886
      %v4979 = vsel %vm2018, %v4968, %v4888
      %v4982 = vsel %vm2018, %v4970, %v4890
      %v4985 = vsel %vm2018, %v4972, %v4892
      %v4988 = vsel %vm2018, %v4974, %v4894
      %v4990 = vld [vmem:[%s5] sm:$0xf]
      %v4991 = vld [vmem:[%s5 + $0x4] sm:$0xf]
      %v4992 = vld [vmem:[%s5 + $0x8] sm:$0xf]
      %v4993 = vld [vmem:[%s5 + $0xc] sm:$0xf]
      %v4994 = vld [vmem:[%s5 + $0x10] sm:$0xf]
      %v4995 = vld [vmem:[%s5 + $0x14] sm:$0xf]
      %v4996 = vld [vmem:[%s5 + $0x18] sm:$0xf]
      %v4997 = vld [vmem:[%s5 + $0x1c] sm:$0xf]
      %v4998 = vld [vmem:[%s5 + $0x20] sm:$0xf]
      %v4999 = vld [vmem:[%s5 + $0x24] sm:$0xf]
      %v5000 = vld [vmem:[%s5 + $0x28] sm:$0xf]
      %v5001 = vld [vmem:[%s5 + $0x2c] sm:$0xf]
      %v5002 = vld [vmem:[%s5 + $0x30] sm:$0xf]
      %v5003 = vld [vmem:[%s5 + $0x34] sm:$0xf]
      %v5004 = vld [vmem:[%s5 + $0x38] sm:$0xf]
      %v5005 = vld [vmem:[%s5 + $0x3c] sm:$0xf]
      %v5006 = vld [vmem:[%s5 + $0x40] sm:$0xf]
      %v5007 = vld [vmem:[%s5 + $0x44] sm:$0xf]
      %v5008 = vld [vmem:[%s5 + $0x48] sm:$0xf]
      %v5009 = vld [vmem:[%s5 + $0x4c] sm:$0xf]
      %v5010 = vld [vmem:[%s5 + $0x50] sm:$0xf]
      %v5011 = vld [vmem:[%s5 + $0x54] sm:$0xf]
      %v5012 = vld [vmem:[%s5 + $0x58] sm:$0xf]
      %v5013 = vld [vmem:[%s5 + $0x5c] sm:$0xf]
      %v5014 = vld [vmem:[%s5 + $0x60] sm:$0xf]
      %v5015 = vld [vmem:[%s5 + $0x64] sm:$0xf]
      %v5016 = vld [vmem:[%s5 + $0x68] sm:$0xf]
      %v5017 = vld [vmem:[%s5 + $0x6c] sm:$0xf]
      %v5018 = vld [vmem:[%s5 + $0x70] sm:$0xf]
      %v5019 = vld [vmem:[%s5 + $0x74] sm:$0xf]
      %v5020 = vld [vmem:[%s5 + $0x78] sm:$0xf]
      %v5021 = vld [vmem:[%s5 + $0x7c] sm:$0xf]
      %v5022 = vld [vmem:[%s5 + $0x80] sm:$0xf]
      %v5023 = vld [vmem:[%s5 + $0x84] sm:$0xf]
      %v5024 = vld [vmem:[%s5 + $0x88] sm:$0xf]
      %v5025 = vld [vmem:[%s5 + $0x8c] sm:$0xf]
      %v5026 = vld [vmem:[%s6] sm:$0x1]
      %v5028 = vlaneseq
      %v5029 = vshrl.u32 %v5028, 7
      %v5030 = vsub.s32 0, %v5029
      %v5031 = vrot.slane %v5026, %v5030
      %v5069 = vunpack.c.l.b16 %v4990
      %v5070 = vunpack.c.l.b16 %v4991
      %v5071 = vunpack.c.l.b16 %v4992
      %v5072 = vunpack.c.l.b16 %v4993
      %v5073 = vunpack.c.l.b16 %v4994
      %v5074 = vunpack.c.l.b16 %v4995
      %v5075 = vunpack.c.l.b16 %v4996
      %v5076 = vunpack.c.l.b16 %v4997
      %v5077 = vunpack.c.l.b16 %v4998
      %v5078 = vunpack.c.l.b16 %v4999
      %v5079 = vunpack.c.l.b16 %v5000
      %v5080 = vunpack.c.l.b16 %v5001
      %v5081 = vunpack.c.l.b16 %v5002
      %v5082 = vunpack.c.l.b16 %v5003
      %v5083 = vunpack.c.l.b16 %v5004
      %v5084 = vunpack.c.l.b16 %v5005
      %v5085 = vunpack.c.l.b16 %v5006
      %v5086 = vunpack.c.l.b16 %v5007
      %v5087 = vunpack.c.l.b16 %v5008
      %v5088 = vunpack.c.l.b16 %v5009
      %v5089 = vunpack.c.l.b16 %v5010
      %v5090 = vunpack.c.l.b16 %v5011
      %v5091 = vunpack.c.l.b16 %v5012
      %v5092 = vunpack.c.l.b16 %v5013
      %v5093 = vunpack.c.l.b16 %v5014
      %v5094 = vunpack.c.l.b16 %v5015
      %v5095 = vunpack.c.l.b16 %v5016
      %v5096 = vunpack.c.l.b16 %v5017
      %v5097 = vunpack.c.l.b16 %v5018
      %v5098 = vunpack.c.l.b16 %v5019
      %v5099 = vunpack.c.l.b16 %v5020
      %v5100 = vunpack.c.l.b16 %v5021
      %v5101 = vunpack.c.l.b16 %v5022
      %v5102 = vunpack.c.l.b16 %v5023
      %v5103 = vunpack.c.l.b16 %v5024
      %v5104 = vunpack.c.l.b16 %v5025
      %v5105 = vpack.c.b16 %v5070, %v5069
      %v5106 = vpack.c.b16 %v5072, %v5071
      %v5107 = vpack.c.b16 %v5074, %v5073
      %v5108 = vpack.c.b16 %v5076, %v5075
      %v5109 = vpack.c.b16 %v5078, %v5077
      %v5110 = vpack.c.b16 %v5080, %v5079
      %v5111 = vpack.c.b16 %v5082, %v5081
      %v5112 = vpack.c.b16 %v5084, %v5083
      %v5113 = vpack.c.b16 %v5086, %v5085
      %v5114 = vpack.c.b16 %v5088, %v5087
      %v5115 = vpack.c.b16 %v5090, %v5089
      %v5116 = vpack.c.b16 %v5092, %v5091
      %v5117 = vpack.c.b16 %v5094, %v5093
      %v5118 = vpack.c.b16 %v5096, %v5095
      %v5119 = vpack.c.b16 %v5098, %v5097
      %v5120 = vpack.c.b16 %v5100, %v5099
      %v5121 = vpack.c.b16 %v5102, %v5101
      %v5122 = vpack.c.b16 %v5104, %v5103
      %v5142 = vsel %vm3445, %v4905, 0
      %v5145 = vsel %vm3445, %v4906, 0
      %v5148 = vsel %vm3445, %v4907, 0
      %v5151 = vsel %vm3445, %v4908, 0
      %v5154 = vsel %vm3445, %v4909, 0
      %5156 = vmatprep.subr.bf16.mxu0 0
      %5157 = vmatpush1.bf16.msra.mxu0 %v5105
      %5158 = vmatprep.subr.bf16.mxu0 0
      %5159 = vmatpush1.bf16.msra.mxu0 %v5106
      %5160 = vmatprep.subr.bf16.mxu0 0
      %5161 = vmatpush1.bf16.msra.mxu0 %v5107
      %5162 = vmatprep.subr.bf16.mxu0 0
      %5163 = vmatpush1.bf16.msra.mxu0 %v5108
      %5164 = vmatprep.subr.bf16.mxu0 0
      %5165 = vmatpush1.bf16.msra.mxu0 %v5109
      %5166 = vmatprep.subr.bf16.mxu0 0
      %5167 = vmatpush1.bf16.msra.mxu0 %v5110
      %5168 = vmatprep.subr.bf16.mxu0 0
      %5169 = vmatpush1.bf16.msra.mxu0 %v5111
      %5170 = vmatprep.subr.bf16.mxu0 0
      %5171 = vmatpush1.bf16.msra.mxu0 %v5112
      %5172 = vmatprep.subr.bf16.mxu0 0
      %5173 = vmatpush1.bf16.msra.mxu0 %v5113
      %5174 = vmatprep.subr.bf16.mxu0 0
      %5175 = vmatpush1.bf16.msra.mxu0 %v5114
      %5176 = vmatprep.subr.bf16.mxu0 0
      %5177 = vmatpush1.bf16.msra.mxu0 %v5115
      %5178 = vmatprep.subr.bf16.mxu0 0
      %5179 = vmatpush1.bf16.msra.mxu0 %v5116
      %5180 = vmatprep.subr.bf16.mxu0 0
      %5181 = vmatpush1.bf16.msra.mxu0 %v5117
      %5182 = vmatprep.subr.bf16.mxu0 0
      %5183 = vmatpush1.bf16.msra.mxu0 %v5118
      %5184 = vmatprep.subr.bf16.mxu0 0
      %5185 = vmatpush1.bf16.msra.mxu0 %v5119
      %5186 = vmatprep.subr.bf16.mxu0 0
      %5187 = vmatpush1.bf16.msra.mxu0 %v5120
      %5188 = vmatprep.mubr.bf16.mxu0 %v4976
      %5189 = vmatmul.mubr.bf16.gmra.mrb[0].mxu0 %v4936
      %v5190 = vpop.f32.mrb[0].mxu0
      %v5191 = vadd.f32 %v5031, %v5190
      %v5192 = vpop.f32.mrb[0].mxu0
      %v5193 = vpop.f32.mrb[0].mxu0
      %v5194 = vadd.f32 %v5031, %v5193
      %v5195 = vpop.f32.mrb[0].mxu0
      %5196 = vmatprep.mubr.bf16.mxu0 %v4979
      %5197 = vmatmul.mubr.bf16.gmra.mrb[0].mxu0 %v4939
      %v5198 = vpop.f32.mrb[0].mxu0
      %v5199 = vadd.f32 %v5031, %v5198
      %v5200 = vpop.f32.mrb[0].mxu0
      %v5201 = vpop.f32.mrb[0].mxu0
      %v5202 = vadd.f32 %v5031, %v5201
      %v5203 = vpop.f32.mrb[0].mxu0
      %5204 = vmatprep.mubr.bf16.mxu0 %v4982
      %5205 = vmatmul.mubr.bf16.gmra.mrb[0].mxu0 %v4942
      %v5206 = vpop.f32.mrb[0].mxu0
      %v5207 = vadd.f32 %v5031, %v5206
      %v5208 = vpop.f32.mrb[0].mxu0
      %v5209 = vpop.f32.mrb[0].mxu0
      %v5210 = vadd.f32 %v5031, %v5209
      %v5211 = vpop.f32.mrb[0].mxu0
      %5212 = vmatprep.mubr.bf16.mxu0 %v4985
      %5213 = vmatmul.mubr.bf16.gmra.mrb[0].mxu0 %v4945
      %v5214 = vpop.f32.mrb[0].mxu0
      %v5215 = vadd.f32 %v5031, %v5214
      %v5216 = vpop.f32.mrb[0].mxu0
      %v5217 = vpop.f32.mrb[0].mxu0
      %v5218 = vadd.f32 %v5031, %v5217
      %v5219 = vpop.f32.mrb[0].mxu0
      %5220 = vmatprep.mubr.bf16.mxu0 %v4988
      %5221 = vmatmul.mubr.bf16.gmra.mrb[0].mxu0 %v4948
      %v5222 = vpop.f32.mrb[0].mxu0
      %v5223 = vadd.f32 %v5031, %v5222
      %v5224 = vpop.f32.mrb[0].mxu0
      %v5225 = vpop.f32.mrb[0].mxu0
      %v5226 = vadd.f32 %v5031, %v5225
      %v5227 = vpop.f32.mrb[0].mxu0
      %5228 = vdwg.mxu0
      %5229 = vmatprep.subr.bf16.mxu0 0
      %5230 = vmatpush1.bf16.msra.mxu0 %v5121
      %5231 = vmatprep.subr.bf16.mxu0 0
      %5232 = vmatpush1.bf16.msra.mxu0 %v5122
      %5233 = vmatprep.subr.bf16.mxu0 0
      %5234 = vmatpush1.bf16.msra.mxu0 0
      %5235 = vmatprep.subr.bf16.mxu0 0
      %5236 = vmatpush1.bf16.msra.mxu0 0
      %5237 = vmatprep.subr.bf16.mxu0 0
      %5238 = vmatpush1.bf16.msra.mxu0 0
      %5239 = vmatprep.subr.bf16.mxu0 0
      %5240 = vmatpush1.bf16.msra.mxu0 0
      %5241 = vmatprep.subr.bf16.mxu0 0
      %5242 = vmatpush1.bf16.msra.mxu0 0
      %5243 = vmatprep.subr.bf16.mxu0 0
      %5244 = vmatpush1.bf16.msra.mxu0 0
      %5245 = vmatprep.subr.bf16.mxu0 0
      %5246 = vmatpush1.bf16.msra.mxu0 0
      %5247 = vmatprep.subr.bf16.mxu0 0
      %5248 = vmatpush1.bf16.msra.mxu0 0
      %5249 = vmatprep.subr.bf16.mxu0 0
      %5250 = vmatpush1.bf16.msra.mxu0 0
      %5251 = vmatprep.subr.bf16.mxu0 0
      %5252 = vmatpush1.bf16.msra.mxu0 0
      %5253 = vmatprep.subr.bf16.mxu0 0
      %5254 = vmatpush1.bf16.msra.mxu0 0
      %5255 = vmatprep.subr.bf16.mxu0 0
      %5256 = vmatpush1.bf16.msra.mxu0 0
      %5257 = vmatprep.subr.bf16.mxu0 0
      %5258 = vmatpush1.bf16.msra.mxu0 0
      %5259 = vmatprep.subr.bf16.mxu0 0
      %5260 = vmatpush1.bf16.msra.mxu0 0
      %5261 = vmatprep.mubr.bf16.mxu0 0
      %5262 = vmatmul.mubr.bf16.gmra.mrb[0].mxu0 %v5142
      %v5263 = vpop.f32.mrb[0].mxu0
      %v5264 = vadd.f32 %v5191, %v5263
      %v5265 = vpop.f32.mrb[0].mxu0
      %v5266 = vpop.f32.mrb[0].mxu0
      %v5267 = vadd.f32 %v5194, %v5266
      %v5268 = vpop.f32.mrb[0].mxu0
      %5269 = vmatprep.mubr.bf16.mxu0 0
      %5270 = vmatmul.mubr.bf16.gmra.mrb[0].mxu0 %v5145
      %v5271 = vpop.f32.mrb[0].mxu0
      %v5272 = vadd.f32 %v5199, %v5271
      %v5273 = vpop.f32.mrb[0].mxu0
      %v5274 = vpop.f32.mrb[0].mxu0
      %v5275 = vadd.f32 %v5202, %v5274
      %v5276 = vpop.f32.mrb[0].mxu0
      %5277 = vmatprep.mubr.bf16.mxu0 0
      %5278 = vmatmul.mubr.bf16.gmra.mrb[0].mxu0 %v5148
      %v5279 = vpop.f32.mrb[0].mxu0
      %v5280 = vadd.f32 %v5207, %v5279
      %v5281 = vpop.f32.mrb[0].mxu0
      %v5282 = vpop.f32.mrb[0].mxu0
      %v5283 = vadd.f32 %v5210, %v5282
      %v5284 = vpop.f32.mrb[0].mxu0
      %5285 = vmatprep.mubr.bf16.mxu0 0
      %5286 = vmatmul.mubr.bf16.gmra.mrb[0].mxu0 %v5151
      %v5287 = vpop.f32.mrb[0].mxu0
      %v5288 = vadd.f32 %v5215, %v5287
      %v5289 = vpop.f32.mrb[0].mxu0
      %v5290 = vpop.f32.mrb[0].mxu0
      %v5291 = vadd.f32 %v5218, %v5290
      %v5292 = vpop.f32.mrb[0].mxu0
      %5293 = vmatprep.mubr.bf16.mxu0 0
      %5294 = vmatmul.mubr.bf16.gmra.mrb[0].mxu0 %v5154
      %v5295 = vpop.f32.mrb[0].mxu0
      %v5296 = vadd.f32 %v5223, %v5295
      %v5297 = vpop.f32.mrb[0].mxu0
      %v5298 = vpop.f32.mrb[0].mxu0
      %v5299 = vadd.f32 %v5226, %v5298
      %v5300 = vpop.f32.mrb[0].mxu0
      %5301 = vdwg.mxu0
      %vm5302 = vcmp.ge.f32.partialorder %v5264, 0.0
      %vm5303 = vcmp.ge.f32.partialorder %v5267, 0.0
      %vm5304 = vcmp.ge.f32.partialorder %v5272, 0.0
      %vm5305 = vcmp.ge.f32.partialorder %v5275, 0.0
      %vm5306 = vcmp.ge.f32.partialorder %v5280, 0.0
      %vm5307 = vcmp.ge.f32.partialorder %v5283, 0.0
      %vm5308 = vcmp.ge.f32.partialorder %v5288, 0.0
      %vm5309 = vcmp.ge.f32.partialorder %v5291, 0.0
      %vm5310 = vcmp.ge.f32.partialorder %v5296, 0.0
      %vm5311 = vcmp.ge.f32.partialorder %v5299, 0.0
      %v5312 = vmul.f32 %v5264, 0.1
      %v5313 = vmul.f32 %v5267, 0.1
      %v5314 = vmul.f32 %v5272, 0.1
      %v5315 = vmul.f32 %v5275, 0.1
      %v5316 = vmul.f32 %v5280, 0.1
      %v5317 = vmul.f32 %v5283, 0.1
      %v5318 = vmul.f32 %v5288, 0.1
      %v5319 = vmul.f32 %v5291, 0.1
      %v5320 = vmul.f32 %v5296, 0.1
      %v5321 = vmul.f32 %v5299, 0.1
      %v5322 = vsel %vm5302, %v5264, %v5312
      %v5323 = vsel %vm5303, %v5267, %v5313
      %v5324 = vsel %vm5304, %v5272, %v5314
      %v5325 = vsel %vm5305, %v5275, %v5315
      %v5326 = vsel %vm5306, %v5280, %v5316
      %v5327 = vsel %vm5307, %v5283, %v5317
      %v5328 = vsel %vm5308, %v5288, %v5318
      %v5329 = vsel %vm5309, %v5291, %v5319
      %v5330 = vsel %vm5310, %v5296, %v5320
      %v5331 = vsel %vm5311, %v5299, %v5321
      %v5332 = vpack.c.bf16 %v5322, %v5322
      %v5333 = vpack.c.bf16 %v5323, %v5323
      %v5334 = vpack.c.bf16 %v5324, %v5324
      %v5335 = vpack.c.bf16 %v5325, %v5325
      %v5336 = vpack.c.bf16 %v5326, %v5326
      %v5337 = vpack.c.bf16 %v5327, %v5327
      %v5338 = vpack.c.bf16 %v5328, %v5328
      %v5339 = vpack.c.bf16 %v5329, %v5329
      %v5340 = vpack.c.bf16 %v5330, %v5330
      %v5341 = vpack.c.bf16 %v5331, %v5331
      %5342 = vst.msk [vmem:[%s2874 + $0x8] sm:$0xf] %vm2259, %v5332
      %5343 = vst.msk [vmem:[%s2874 + $0x18] sm:$0xf] %vm2259, %v5333
      %5344 = vst.msk [vmem:[%s2874 + $0x28] sm:$0xf] %vm2259, %v5334
      %5345 = vst.msk [vmem:[%s2874 + $0x38] sm:$0xf] %vm2259, %v5335
      %5346 = vst.msk [vmem:[%s2874 + $0x48] sm:$0xf] %vm2259, %v5336
      %5347 = vst.msk [vmem:[%s2874 + $0x58] sm:$0xf] %vm2259, %v5337
      %5348 = vst.msk [vmem:[%s2874 + $0x68] sm:$0xf] %vm2259, %v5338
      %5349 = vst.msk [vmem:[%s2874 + $0x78] sm:$0xf] %vm2259, %v5339
      %5350 = vst.msk [vmem:[%s2874 + $0x88] sm:$0xf] %vm2259, %v5340
      %5351 = vst.msk [vmem:[%s2874 + $0x98] sm:$0xf] %vm2259, %v5341
      %v5352 = vld [vmem:[%s2874 + $0x4] sm:$0x8]
      %v5353 = vld [vmem:[%s2874 + $0x8] sm:$0xf]
      %v5354 = vld [vmem:[%s2874 + $0x14] sm:$0x8]
      %v5355 = vld [vmem:[%s2874 + $0x18] sm:$0xf]
      %v5356 = vld [vmem:[%s2874 + $0x24] sm:$0x8]
      %v5357 = vld [vmem:[%s2874 + $0x28] sm:$0xf]
      %v5358 = vld [vmem:[%s2874 + $0x34] sm:$0x8]
      %v5359 = vld [vmem:[%s2874 + $0x38] sm:$0xf]
      %v5360 = vld [vmem:[%s2874 + $0x44] sm:$0x8]
      %v5361 = vld [vmem:[%s2874 + $0x48] sm:$0xf]
      %v5362 = vld [vmem:[%s2874 + $0x54] sm:$0x8]
      %v5363 = vld [vmem:[%s2874 + $0x58] sm:$0xf]
      %v5364 = vld [vmem:[%s2874 + $0x64] sm:$0x8]
      %v5365 = vld [vmem:[%s2874 + $0x68] sm:$0xf]
      %v5366 = vld [vmem:[%s2874 + $0x74] sm:$0x8]
      %v5367 = vld [vmem:[%s2874 + $0x78] sm:$0xf]
      %v5369 = vshrl.u32 %v5352, 16
      %v5371 = vrot.slane %v5369, 7
      %v5372 = vrot.slane %v5371, 4
      %v5374 = vshrl.u32 %v5353, 16
      %v5376 = vrot.slane %v5374, 7
      %v5377 = vshll.u32 %v5353, 16
      %v5379 = vor.u32 %v5376, %v5377
      %v5380 = vsel %vm535, %v5372, %v5379
      %v5382 = vshrl.u32 %v5354, 16
      %v5384 = vrot.slane %v5382, 7
      %v5385 = vrot.slane %v5384, 4
      %v5387 = vshrl.u32 %v5355, 16
      %v5389 = vrot.slane %v5387, 7
      %v5390 = vshll.u32 %v5355, 16
      %v5392 = vor.u32 %v5389, %v5390
      %v5393 = vsel %vm535, %v5385, %v5392
      %v5395 = vshrl.u32 %v5356, 16
      %v5397 = vrot.slane %v5395, 7
      %v5398 = vrot.slane %v5397, 4
      %v5400 = vshrl.u32 %v5357, 16
      %v5402 = vrot.slane %v5400, 7
      %v5403 = vshll.u32 %v5357, 16
      %v5405 = vor.u32 %v5402, %v5403
      %v5406 = vsel %vm535, %v5398, %v5405
      %v5408 = vshrl.u32 %v5358, 16
      %v5410 = vrot.slane %v5408, 7
      %v5411 = vrot.slane %v5410, 4
      %v5413 = vshrl.u32 %v5359, 16
      %v5415 = vrot.slane %v5413, 7
      %v5416 = vshll.u32 %v5359, 16
      %v5418 = vor.u32 %v5415, %v5416
      %v5419 = vsel %vm535, %v5411, %v5418
      %v5421 = vshrl.u32 %v5360, 16
      %v5423 = vrot.slane %v5421, 7
      %v5424 = vrot.slane %v5423, 4
      %v5426 = vshrl.u32 %v5361, 16
      %v5428 = vrot.slane %v5426, 7
      %v5429 = vshll.u32 %v5361, 16
      %v5431 = vor.u32 %v5428, %v5429
      %v5432 = vsel %vm535, %v5424, %v5431
      %v5434 = vshrl.u32 %v5362, 16
      %v5436 = vrot.slane %v5434, 7
      %v5437 = vrot.slane %v5436, 4
      %v5439 = vshrl.u32 %v5363, 16
      %v5441 = vrot.slane %v5439, 7
      %v5442 = vshll.u32 %v5363, 16
      %v5444 = vor.u32 %v5441, %v5442
      %v5445 = vsel %vm535, %v5437, %v5444
      %v5447 = vshrl.u32 %v5364, 16
      %v5449 = vrot.slane %v5447, 7
      %v5450 = vrot.slane %v5449, 4
      %v5452 = vshrl.u32 %v5365, 16
      %v5454 = vrot.slane %v5452, 7
      %v5455 = vshll.u32 %v5365, 16
      %v5457 = vor.u32 %v5454, %v5455
      %v5458 = vsel %vm535, %v5450, %v5457
      %v5460 = vshrl.u32 %v5366, 16
      %v5462 = vrot.slane %v5460, 7
      %v5463 = vrot.slane %v5462, 4
      %v5465 = vshrl.u32 %v5367, 16
      %v5467 = vrot.slane %v5465, 7
      %v5468 = vshll.u32 %v5367, 16
      %v5470 = vor.u32 %v5467, %v5468
      %v5471 = vsel %vm535, %v5463, %v5470
      %v5472 = vld [vmem:[%s2874 + $0xc] sm:$0x1]
      %v5473 = vld [vmem:[%s2874 + $0x1c] sm:$0x1]
      %v5474 = vld [vmem:[%s2874 + $0x2c] sm:$0x1]
      %v5475 = vld [vmem:[%s2874 + $0x3c] sm:$0x1]
      %v5476 = vld [vmem:[%s2874 + $0x4c] sm:$0x1]
      %v5477 = vld [vmem:[%s2874 + $0x5c] sm:$0x1]
      %v5478 = vld [vmem:[%s2874 + $0x6c] sm:$0x1]
      %v5479 = vld [vmem:[%s2874 + $0x7c] sm:$0x1]
      %v5480 = vrot.slane %v5374, 4
      %v5481 = vrot.slane %v5377, 5
      %v5482 = vor.u32 %v5480, %v5481
      %v5483 = vrot.slane %v5482, 4
      %v5485 = vshll.u32 %v5472, 16
      %v5487 = vrot.slane %v5485, 5
      %v5488 = vsel %vm734, %v5483, %v5487
      %v5489 = vrot.slane %v5387, 4
      %v5490 = vrot.slane %v5390, 5
      %v5491 = vor.u32 %v5489, %v5490
      %v5492 = vrot.slane %v5491, 4
      %v5494 = vshll.u32 %v5473, 16
      %v5496 = vrot.slane %v5494, 5
      %v5497 = vsel %vm734, %v5492, %v5496
      %v5498 = vrot.slane %v5400, 4
      %v5499 = vrot.slane %v5403, 5
      %v5500 = vor.u32 %v5498, %v5499
      %v5501 = vrot.slane %v5500, 4
      %v5503 = vshll.u32 %v5474, 16
      %v5505 = vrot.slane %v5503, 5
      %v5506 = vsel %vm734, %v5501, %v5505
      %v5507 = vrot.slane %v5413, 4
      %v5508 = vrot.slane %v5416, 5
      %v5509 = vor.u32 %v5507, %v5508
      %v5510 = vrot.slane %v5509, 4
      %v5512 = vshll.u32 %v5475, 16
      %v5514 = vrot.slane %v5512, 5
      %v5515 = vsel %vm734, %v5510, %v5514
      %v5516 = vrot.slane %v5426, 4
      %v5517 = vrot.slane %v5429, 5
      %v5518 = vor.u32 %v5516, %v5517
      %v5519 = vrot.slane %v5518, 4
      %v5521 = vshll.u32 %v5476, 16
      %v5523 = vrot.slane %v5521, 5
      %v5524 = vsel %vm734, %v5519, %v5523
      %v5525 = vrot.slane %v5439, 4
      %v5526 = vrot.slane %v5442, 5
      %v5527 = vor.u32 %v5525, %v5526
      %v5528 = vrot.slane %v5527, 4
      %v5530 = vshll.u32 %v5477, 16
      %v5532 = vrot.slane %v5530, 5
      %v5533 = vsel %vm734, %v5528, %v5532
      %v5534 = vrot.slane %v5452, 4
      %v5535 = vrot.slane %v5455, 5
      %v5536 = vor.u32 %v5534, %v5535
      %v5537 = vrot.slane %v5536, 4
      %v5539 = vshll.u32 %v5478, 16
      %v5541 = vrot.slane %v5539, 5
      %v5542 = vsel %vm734, %v5537, %v5541
      %v5543 = vrot.slane %v5465, 4
      %v5544 = vrot.slane %v5468, 5
      %v5545 = vor.u32 %v5543, %v5544
      %v5546 = vrot.slane %v5545, 4
      %v5548 = vshll.u32 %v5479, 16
      %v5550 = vrot.slane %v5548, 5
      %v5551 = vsel %vm734, %v5546, %v5550
      %v5552 = vld [vmem:[%s4434 + $0x4] sm:$0x8]
      %v5553 = vld [vmem:[%s4434 + $0x8] sm:$0xf]
      %v5554 = vld [vmem:[%s4434 + $0x14] sm:$0x8]
      %v5555 = vld [vmem:[%s4434 + $0x18] sm:$0xf]
      %v5556 = vld [vmem:[%s4434 + $0x24] sm:$0x8]
      %v5557 = vld [vmem:[%s4434 + $0x28] sm:$0xf]
      %v5558 = vld [vmem:[%s4434 + $0x34] sm:$0x8]
      %v5559 = vld [vmem:[%s4434 + $0x38] sm:$0xf]
      %v5560 = vld [vmem:[%s4434 + $0x44] sm:$0x8]
      %v5561 = vld [vmem:[%s4434 + $0x48] sm:$0xf]
      %v5562 = vld [vmem:[%s4434 + $0x54] sm:$0x8]
      %v5563 = vld [vmem:[%s4434 + $0x58] sm:$0xf]
      %v5564 = vld [vmem:[%s4434 + $0x64] sm:$0x8]
      %v5565 = vld [vmem:[%s4434 + $0x68] sm:$0xf]
      %v5566 = vld [vmem:[%s4434 + $0x74] sm:$0x8]
      %v5567 = vld [vmem:[%s4434 + $0x78] sm:$0xf]
      %v5569 = vshrl.u32 %v5552, 16
      %v5571 = vrot.slane %v5569, 7
      %v5572 = vrot.slane %v5571, 4
      %v5574 = vshrl.u32 %v5553, 16
      %v5576 = vrot.slane %v5574, 7
      %v5577 = vshll.u32 %v5553, 16
      %v5579 = vor.u32 %v5576, %v5577
      %v5580 = vsel %vm535, %v5572, %v5579
      %v5582 = vshrl.u32 %v5554, 16
      %v5584 = vrot.slane %v5582, 7
      %v5585 = vrot.slane %v5584, 4
      %v5587 = vshrl.u32 %v5555, 16
      %v5589 = vrot.slane %v5587, 7
      %v5590 = vshll.u32 %v5555, 16
      %v5592 = vor.u32 %v5589, %v5590
      %v5593 = vsel %vm535, %v5585, %v5592
      %v5595 = vshrl.u32 %v5556, 16
      %v5597 = vrot.slane %v5595, 7
      %v5598 = vrot.slane %v5597, 4
      %v5600 = vshrl.u32 %v5557, 16
      %v5602 = vrot.slane %v5600, 7
      %v5603 = vshll.u32 %v5557, 16
      %v5605 = vor.u32 %v5602, %v5603
      %v5606 = vsel %vm535, %v5598, %v5605
      %v5608 = vshrl.u32 %v5558, 16
      %v5610 = vrot.slane %v5608, 7
      %v5611 = vrot.slane %v5610, 4
      %v5613 = vshrl.u32 %v5559, 16
      %v5615 = vrot.slane %v5613, 7
      %v5616 = vshll.u32 %v5559, 16
      %v5618 = vor.u32 %v5615, %v5616
      %v5619 = vsel %vm535, %v5611, %v5618
      %v5621 = vshrl.u32 %v5560, 16
      %v5623 = vrot.slane %v5621, 7
      %v5624 = vrot.slane %v5623, 4
      %v5626 = vshrl.u32 %v5561, 16
      %v5628 = vrot.slane %v5626, 7
      %v5629 = vshll.u32 %v5561, 16
      %v5631 = vor.u32 %v5628, %v5629
      %v5632 = vsel %vm535, %v5624, %v5631
      %v5634 = vshrl.u32 %v5562, 16
      %v5636 = vrot.slane %v5634, 7
      %v5637 = vrot.slane %v5636, 4
      %v5639 = vshrl.u32 %v5563, 16
      %v5641 = vrot.slane %v5639, 7
      %v5642 = vshll.u32 %v5563, 16
      %v5644 = vor.u32 %v5641, %v5642
      %v5645 = vsel %vm535, %v5637, %v5644
      %v5647 = vshrl.u32 %v5564, 16
      %v5649 = vrot.slane %v5647, 7
      %v5650 = vrot.slane %v5649, 4
      %v5652 = vshrl.u32 %v5565, 16
      %v5654 = vrot.slane %v5652, 7
      %v5655 = vshll.u32 %v5565, 16
      %v5657 = vor.u32 %v5654, %v5655
      %v5658 = vsel %vm535, %v5650, %v5657
      %v5660 = vshrl.u32 %v5566, 16
      %v5662 = vrot.slane %v5660, 7
      %v5663 = vrot.slane %v5662, 4
      %v5665 = vshrl.u32 %v5567, 16
      %v5667 = vrot.slane %v5665, 7
      %v5668 = vshll.u32 %v5567, 16
      %v5670 = vor.u32 %v5667, %v5668
      %v5671 = vsel %vm535, %v5663, %v5670
      %v5672 = vld [vmem:[%s4434 + $0xc] sm:$0x1]
      %v5673 = vld [vmem:[%s4434 + $0x1c] sm:$0x1]
      %v5674 = vld [vmem:[%s4434 + $0x2c] sm:$0x1]
      %v5675 = vld [vmem:[%s4434 + $0x3c] sm:$0x1]
      %v5676 = vld [vmem:[%s4434 + $0x4c] sm:$0x1]
      %v5677 = vld [vmem:[%s4434 + $0x5c] sm:$0x1]
      %v5678 = vld [vmem:[%s4434 + $0x6c] sm:$0x1]
      %v5679 = vld [vmem:[%s4434 + $0x7c] sm:$0x1]
      %v5680 = vrot.slane %v5574, 4
      %v5681 = vrot.slane %v5577, 5
      %v5682 = vor.u32 %v5680, %v5681
      %v5683 = vrot.slane %v5682, 4
      %v5685 = vshll.u32 %v5672, 16
      %v5687 = vrot.slane %v5685, 5
      %v5688 = vsel %vm734, %v5683, %v5687
      %v5689 = vrot.slane %v5587, 4
      %v5690 = vrot.slane %v5590, 5
      %v5691 = vor.u32 %v5689, %v5690
      %v5692 = vrot.slane %v5691, 4
      %v5694 = vshll.u32 %v5673, 16
      %v5696 = vrot.slane %v5694, 5
      %v5697 = vsel %vm734, %v5692, %v5696
      %v5698 = vrot.slane %v5600, 4
      %v5699 = vrot.slane %v5603, 5
      %v5700 = vor.u32 %v5698, %v5699
      %v5701 = vrot.slane %v5700, 4
      %v5703 = vshll.u32 %v5674, 16
      %v5705 = vrot.slane %v5703, 5
      %v5706 = vsel %vm734, %v5701, %v5705
      %v5707 = vrot.slane %v5613, 4
      %v5708 = vrot.slane %v5616, 5
      %v5709 = vor.u32 %v5707, %v5708
      %v5710 = vrot.slane %v5709, 4
      %v5712 = vshll.u32 %v5675, 16
      %v5714 = vrot.slane %v5712, 5
      %v5715 = vsel %vm734, %v5710, %v5714
      %v5716 = vrot.slane %v5626, 4
      %v5717 = vrot.slane %v5629, 5
      %v5718 = vor.u32 %v5716, %v5717
      %v5719 = vrot.slane %v5718, 4
      %v5721 = vshll.u32 %v5676, 16
      %v5723 = vrot.slane %v5721, 5
      %v5724 = vsel %vm734, %v5719, %v5723
      %v5725 = vrot.slane %v5639, 4
      %v5726 = vrot.slane %v5642, 5
      %v5727 = vor.u32 %v5725, %v5726
      %v5728 = vrot.slane %v5727, 4
      %v5730 = vshll.u32 %v5677, 16
      %v5732 = vrot.slane %v5730, 5
      %v5733 = vsel %vm734, %v5728, %v5732
      %v5734 = vrot.slane %v5652, 4
      %v5735 = vrot.slane %v5655, 5
      %v5736 = vor.u32 %v5734, %v5735
      %v5737 = vrot.slane %v5736, 4
      %v5739 = vshll.u32 %v5678, 16
      %v5741 = vrot.slane %v5739, 5
      %v5742 = vsel %vm734, %v5737, %v5741
      %v5743 = vrot.slane %v5665, 4
      %v5744 = vrot.slane %v5668, 5
      %v5745 = vor.u32 %v5743, %v5744
      %v5746 = vrot.slane %v5745, 4
      %v5748 = vshll.u32 %v5679, 16
      %v5750 = vrot.slane %v5748, 5
      %v5751 = vsel %vm734, %v5746, %v5750
      %s5752 = scalar_lea.vmem [#allocation2], 80
      %v5753 = vld [vmem:[%s5752 + $0x4] sm:$0x8]
      %v5754 = vld [vmem:[%s5752 + $0x8] sm:$0xf]
      %v5755 = vld [vmem:[%s5752 + $0x14] sm:$0x8]
      %v5756 = vld [vmem:[%s5752 + $0x18] sm:$0xf]
      %v5757 = vld [vmem:[%s5752 + $0x24] sm:$0x8]
      %v5758 = vld [vmem:[%s5752 + $0x28] sm:$0xf]
      %v5759 = vld [vmem:[%s5752 + $0x34] sm:$0x8]
      %v5760 = vld [vmem:[%s5752 + $0x38] sm:$0xf]
      %v5761 = vld [vmem:[%s5752 + $0x44] sm:$0x8]
      %v5762 = vld [vmem:[%s5752 + $0x48] sm:$0xf]
      %v5763 = vld [vmem:[%s5752 + $0x54] sm:$0x8]
      %v5764 = vld [vmem:[%s5752 + $0x58] sm:$0xf]
      %v5765 = vld [vmem:[%s5752 + $0x64] sm:$0x8]
      %v5766 = vld [vmem:[%s5752 + $0x68] sm:$0xf]
      %v5767 = vld [vmem:[%s5752 + $0x74] sm:$0x8]
      %v5768 = vld [vmem:[%s5752 + $0x78] sm:$0xf]
      %v5770 = vshrl.u32 %v5753, 16
      %v5772 = vrot.slane %v5770, 7
      %v5773 = vrot.slane %v5772, 4
      %v5775 = vshrl.u32 %v5754, 16
      %v5777 = vrot.slane %v5775, 7
      %v5778 = vshll.u32 %v5754, 16
      %v5780 = vor.u32 %v5777, %v5778
      %v5781 = vsel %vm535, %v5773, %v5780
      %v5783 = vshrl.u32 %v5755, 16
      %v5785 = vrot.slane %v5783, 7
      %v5786 = vrot.slane %v5785, 4
      %v5788 = vshrl.u32 %v5756, 16
      %v5790 = vrot.slane %v5788, 7
      %v5791 = vshll.u32 %v5756, 16
      %v5793 = vor.u32 %v5790, %v5791
      %v5794 = vsel %vm535, %v5786, %v5793
      %v5796 = vshrl.u32 %v5757, 16
      %v5798 = vrot.slane %v5796, 7
      %v5799 = vrot.slane %v5798, 4
      %v5801 = vshrl.u32 %v5758, 16
      %v5803 = vrot.slane %v5801, 7
      %v5804 = vshll.u32 %v5758, 16
      %v5806 = vor.u32 %v5803, %v5804
      %v5807 = vsel %vm535, %v5799, %v5806
      %v5809 = vshrl.u32 %v5759, 16
      %v5811 = vrot.slane %v5809, 7
      %v5812 = vrot.slane %v5811, 4
      %v5814 = vshrl.u32 %v5760, 16
      %v5816 = vrot.slane %v5814, 7
      %v5817 = vshll.u32 %v5760, 16
      %v5819 = vor.u32 %v5816, %v5817
      %v5820 = vsel %vm535, %v5812, %v5819
      %v5822 = vshrl.u32 %v5761, 16
      %v5824 = vrot.slane %v5822, 7
      %v5825 = vrot.slane %v5824, 4
      %v5827 = vshrl.u32 %v5762, 16
      %v5829 = vrot.slane %v5827, 7
      %v5830 = vshll.u32 %v5762, 16
      %v5832 = vor.u32 %v5829, %v5830
      %v5833 = vsel %vm535, %v5825, %v5832
      %v5835 = vshrl.u32 %v5763, 16
      %v5837 = vrot.slane %v5835, 7
      %v5838 = vrot.slane %v5837, 4
      %v5840 = vshrl.u32 %v5764, 16
      %v5842 = vrot.slane %v5840, 7
      %v5843 = vshll.u32 %v5764, 16
      %v5845 = vor.u32 %v5842, %v5843
      %v5846 = vsel %vm535, %v5838, %v5845
      %v5848 = vshrl.u32 %v5765, 16
      %v5850 = vrot.slane %v5848, 7
      %v5851 = vrot.slane %v5850, 4
      %v5853 = vshrl.u32 %v5766, 16
      %v5855 = vrot.slane %v5853, 7
      %v5856 = vshll.u32 %v5766, 16
      %v5858 = vor.u32 %v5855, %v5856
      %v5859 = vsel %vm535, %v5851, %v5858
      %v5861 = vshrl.u32 %v5767, 16
      %v5863 = vrot.slane %v5861, 7
      %v5864 = vrot.slane %v5863, 4
      %v5866 = vshrl.u32 %v5768, 16
      %v5868 = vrot.slane %v5866, 7
      %v5869 = vshll.u32 %v5768, 16
      %v5871 = vor.u32 %v5868, %v5869
      %v5872 = vsel %vm535, %v5864, %v5871
      %v5873 = vld [vmem:[%s5752 + $0xc] sm:$0x1]
      %v5874 = vld [vmem:[%s5752 + $0x1c] sm:$0x1]
      %v5875 = vld [vmem:[%s5752 + $0x2c] sm:$0x1]
      %v5876 = vld [vmem:[%s5752 + $0x3c] sm:$0x1]
      %v5877 = vld [vmem:[%s5752 + $0x4c] sm:$0x1]
      %v5878 = vld [vmem:[%s5752 + $0x5c] sm:$0x1]
      %v5879 = vld [vmem:[%s5752 + $0x6c] sm:$0x1]
      %v5880 = vld [vmem:[%s5752 + $0x7c] sm:$0x1]
      %v5881 = vrot.slane %v5775, 4
      %v5882 = vrot.slane %v5778, 5
      %v5883 = vor.u32 %v5881, %v5882
      %v5884 = vrot.slane %v5883, 4
      %v5886 = vshll.u32 %v5873, 16
      %v5888 = vrot.slane %v5886, 5
      %v5889 = vsel %vm734, %v5884, %v5888
      %v5890 = vrot.slane %v5788, 4
      %v5891 = vrot.slane %v5791, 5
      %v5892 = vor.u32 %v5890, %v5891
      %v5893 = vrot.slane %v5892, 4
      %v5895 = vshll.u32 %v5874, 16
      %v5897 = vrot.slane %v5895, 5
      %v5898 = vsel %vm734, %v5893, %v5897
      %v5899 = vrot.slane %v5801, 4
      %v5900 = vrot.slane %v5804, 5
      %v5901 = vor.u32 %v5899, %v5900
      %v5902 = vrot.slane %v5901, 4
      %v5904 = vshll.u32 %v5875, 16
      %v5906 = vrot.slane %v5904, 5
      %v5907 = vsel %vm734, %v5902, %v5906
      %v5908 = vrot.slane %v5814, 4
      %v5909 = vrot.slane %v5817, 5
      %v5910 = vor.u32 %v5908, %v5909
      %v5911 = vrot.slane %v5910, 4
      %v5913 = vshll.u32 %v5876, 16
      %v5915 = vrot.slane %v5913, 5
      %v5916 = vsel %vm734, %v5911, %v5915
      %v5917 = vrot.slane %v5827, 4
      %v5918 = vrot.slane %v5830, 5
      %v5919 = vor.u32 %v5917, %v5918
      %v5920 = vrot.slane %v5919, 4
      %v5922 = vshll.u32 %v5877, 16
      %v5924 = vrot.slane %v5922, 5
      %v5925 = vsel %vm734, %v5920, %v5924
      %v5926 = vrot.slane %v5840, 4
      %v5927 = vrot.slane %v5843, 5
      %v5928 = vor.u32 %v5926, %v5927
      %v5929 = vrot.slane %v5928, 4
      %v5931 = vshll.u32 %v5878, 16
      %v5933 = vrot.slane %v5931, 5
      %v5934 = vsel %vm734, %v5929, %v5933
      %v5935 = vrot.slane %v5853, 4
      %v5936 = vrot.slane %v5856, 5
      %v5937 = vor.u32 %v5935, %v5936
      %v5938 = vrot.slane %v5937, 4
      %v5940 = vshll.u32 %v5879, 16
      %v5942 = vrot.slane %v5940, 5
      %v5943 = vsel %vm734, %v5938, %v5942
      %v5944 = vrot.slane %v5866, 4
      %v5945 = vrot.slane %v5869, 5
      %v5946 = vor.u32 %v5944, %v5945
      %v5947 = vrot.slane %v5946, 4
      %v5949 = vshll.u32 %v5880, 16
      %v5951 = vrot.slane %v5949, 5
      %v5952 = vsel %vm734, %v5947, %v5951
      %v5953 = vunpack.c.l.b16 %v5380
      %v5954 = vunpack.c.l.b16 %v5393
      %v5955 = vunpack.c.l.b16 %v5406
      %v5956 = vunpack.c.l.b16 %v5419
      %v5957 = vunpack.c.l.b16 %v5432
      %v5958 = vunpack.c.l.b16 %v5445
      %v5959 = vunpack.c.l.b16 %v5458
      %v5960 = vunpack.c.l.b16 %v5471
      %v5961 = vpack.c.b16 %v5954, %v5953
      %v5962 = vpack.c.b16 %v5956, %v5955
      %v5963 = vpack.c.b16 %v5958, %v5957
      %v5964 = vpack.c.b16 %v5960, %v5959
      %v5973 = vunpack.c.l.b16 %v5353
      %v5974 = vunpack.c.l.b16 %v5355
      %v5975 = vunpack.c.l.b16 %v5357
      %v5976 = vunpack.c.l.b16 %v5359
      %v5977 = vunpack.c.l.b16 %v5361
      %v5978 = vunpack.c.l.b16 %v5363
      %v5979 = vunpack.c.l.b16 %v5365
      %v5980 = vunpack.c.l.b16 %v5367
      %v5981 = vpack.c.b16 %v5974, %v5973
      %v5982 = vpack.c.b16 %v5976, %v5975
      %v5983 = vpack.c.b16 %v5978, %v5977
      %v5984 = vpack.c.b16 %v5980, %v5979
      %5985 = vrot.lane.b32.xlu0 %v5981, 32
      %v5986 = vpop.permute.xlu0 %5985
      %5987 = vrot.lane.b32.xlu0 %v5982, 32
      %v5988 = vpop.permute.xlu0 %5987
      %5989 = vrot.lane.b32.xlu0 %v5983, 32
      %v5990 = vpop.permute.xlu0 %5989
      %5991 = vrot.lane.b32.xlu0 %v5984, 32
      %v5992 = vpop.permute.xlu0 %5991
      %v5993 = vunpack.c.l.b16 %v5488
      %v5994 = vunpack.c.l.b16 %v5497
      %v5995 = vunpack.c.l.b16 %v5506
      %v5996 = vunpack.c.l.b16 %v5515
      %v5997 = vunpack.c.l.b16 %v5524
      %v5998 = vunpack.c.l.b16 %v5533
      %v5999 = vunpack.c.l.b16 %v5542
      %v6000 = vunpack.c.l.b16 %v5551
      %v6001 = vpack.c.b16 %v5994, %v5993
      %v6002 = vpack.c.b16 %v5996, %v5995
      %v6003 = vpack.c.b16 %v5998, %v5997
      %v6004 = vpack.c.b16 %v6000, %v5999
      %6005 = vrot.lane.b32.xlu0 %v6001, 64
      %v6006 = vpop.permute.xlu0 %6005
      %6007 = vrot.lane.b32.xlu0 %v6002, 64
      %v6008 = vpop.permute.xlu0 %6007
      %6009 = vrot.lane.b32.xlu0 %v6003, 64
      %v6010 = vpop.permute.xlu0 %6009
      %6011 = vrot.lane.b32.xlu0 %v6004, 64
      %v6012 = vpop.permute.xlu0 %6011
      %v6013 = vunpack.c.l.b16 %v5580
      %v6014 = vunpack.c.l.b16 %v5593
      %v6015 = vunpack.c.l.b16 %v5606
      %v6016 = vunpack.c.l.b16 %v5619
      %v6017 = vunpack.c.l.b16 %v5632
      %v6018 = vunpack.c.l.b16 %v5645
      %v6019 = vunpack.c.l.b16 %v5658
      %v6020 = vunpack.c.l.b16 %v5671
      %v6021 = vpack.c.b16 %v6014, %v6013
      %v6022 = vpack.c.b16 %v6016, %v6015
      %v6023 = vpack.c.b16 %v6018, %v6017
      %v6024 = vpack.c.b16 %v6020, %v6019
      %6025 = vrot.lane.b32.xlu0 %v6021, 96
      %v6026 = vpop.permute.xlu0 %6025
      %6027 = vrot.lane.b32.xlu0 %v6022, 96
      %v6028 = vpop.permute.xlu0 %6027
      %6029 = vrot.lane.b32.xlu0 %v6023, 96
      %v6030 = vpop.permute.xlu0 %6029
      %6031 = vrot.lane.b32.xlu0 %v6024, 96
      %v6032 = vpop.permute.xlu0 %6031
      %v6041 = vunpack.c.l.b16 %v5553
      %v6042 = vunpack.c.l.b16 %v5555
      %v6043 = vunpack.c.l.b16 %v5557
      %v6044 = vunpack.c.l.b16 %v5559
      %v6045 = vunpack.c.l.b16 %v5561
      %v6046 = vunpack.c.l.b16 %v5563
      %v6047 = vunpack.c.l.b16 %v5565
      %v6048 = vunpack.c.l.b16 %v5567
      %v6049 = vpack.c.b16 %v6042, %v6041
      %v6050 = vpack.c.b16 %v6044, %v6043
      %v6051 = vpack.c.b16 %v6046, %v6045
      %v6052 = vpack.c.b16 %v6048, %v6047
      %v6053 = vunpack.c.l.b16 %v5688
      %v6054 = vunpack.c.l.b16 %v5697
      %v6055 = vunpack.c.l.b16 %v5706
      %v6056 = vunpack.c.l.b16 %v5715
      %v6057 = vunpack.c.l.b16 %v5724
      %v6058 = vunpack.c.l.b16 %v5733
      %v6059 = vunpack.c.l.b16 %v5742
      %v6060 = vunpack.c.l.b16 %v5751
      %v6061 = vpack.c.b16 %v6054, %v6053
      %v6062 = vpack.c.b16 %v6056, %v6055
      %v6063 = vpack.c.b16 %v6058, %v6057
      %v6064 = vpack.c.b16 %v6060, %v6059
      %6065 = vrot.lane.b32.xlu0 %v6061, 32
      %v6066 = vpop.permute.xlu0 %6065
      %6067 = vrot.lane.b32.xlu0 %v6062, 32
      %v6068 = vpop.permute.xlu0 %6067
      %6069 = vrot.lane.b32.xlu0 %v6063, 32
      %v6070 = vpop.permute.xlu0 %6069
      %6071 = vrot.lane.b32.xlu0 %v6064, 32
      %v6072 = vpop.permute.xlu0 %6071
      %v6073 = vunpack.c.l.b16 %v5781
      %v6074 = vunpack.c.l.b16 %v5794
      %v6075 = vunpack.c.l.b16 %v5807
      %v6076 = vunpack.c.l.b16 %v5820
      %v6077 = vunpack.c.l.b16 %v5833
      %v6078 = vunpack.c.l.b16 %v5846
      %v6079 = vunpack.c.l.b16 %v5859
      %v6080 = vunpack.c.l.b16 %v5872
      %v6081 = vpack.c.b16 %v6074, %v6073
      %v6082 = vpack.c.b16 %v6076, %v6075
      %v6083 = vpack.c.b16 %v6078, %v6077
      %v6084 = vpack.c.b16 %v6080, %v6079
      %6085 = vrot.lane.b32.xlu0 %v6081, 64
      %v6086 = vpop.permute.xlu0 %6085
      %6087 = vrot.lane.b32.xlu0 %v6082, 64
      %v6088 = vpop.permute.xlu0 %6087
      %6089 = vrot.lane.b32.xlu0 %v6083, 64
      %v6090 = vpop.permute.xlu0 %6089
      %6091 = vrot.lane.b32.xlu0 %v6084, 64
      %v6092 = vpop.permute.xlu0 %6091
      %v6101 = vunpack.c.l.b16 %v5754
      %v6102 = vunpack.c.l.b16 %v5756
      %v6103 = vunpack.c.l.b16 %v5758
      %v6104 = vunpack.c.l.b16 %v5760
      %v6105 = vunpack.c.l.b16 %v5762
      %v6106 = vunpack.c.l.b16 %v5764
      %v6107 = vunpack.c.l.b16 %v5766
      %v6108 = vunpack.c.l.b16 %v5768
      %v6109 = vpack.c.b16 %v6102, %v6101
      %v6110 = vpack.c.b16 %v6104, %v6103
      %v6111 = vpack.c.b16 %v6106, %v6105
      %v6112 = vpack.c.b16 %v6108, %v6107
      %6113 = vrot.lane.b32.xlu0 %v6109, 96
      %v6114 = vpop.permute.xlu0 %6113
      %6115 = vrot.lane.b32.xlu0 %v6110, 96
      %v6116 = vpop.permute.xlu0 %6115
      %6117 = vrot.lane.b32.xlu0 %v6111, 96
      %v6118 = vpop.permute.xlu0 %6117
      %6119 = vrot.lane.b32.xlu0 %v6112, 96
      %v6120 = vpop.permute.xlu0 %6119
      %v6121 = vunpack.c.l.b16 %v5889
      %v6122 = vunpack.c.l.b16 %v5898
      %v6123 = vunpack.c.l.b16 %v5907
      %v6124 = vunpack.c.l.b16 %v5916
      %v6125 = vunpack.c.l.b16 %v5925
      %v6126 = vunpack.c.l.b16 %v5934
      %v6127 = vunpack.c.l.b16 %v5943
      %v6128 = vunpack.c.l.b16 %v5952
      %v6129 = vpack.c.b16 %v6122, %v6121
      %v6130 = vpack.c.b16 %v6124, %v6123
      %v6131 = vpack.c.b16 %v6126, %v6125
      %v6132 = vpack.c.b16 %v6128, %v6127
      %v6135 = vsel %vm3445, %v5961, %v5986
      %v6138 = vsel %vm3445, %v5962, %v5988
      %v6141 = vsel %vm3445, %v5963, %v5990
      %v6144 = vsel %vm3445, %v5964, %v5992
      %v6146 = vsel %vm3464, %v6135, %v6006
      %v6148 = vsel %vm3464, %v6138, %v6008
      %v6150 = vsel %vm3464, %v6141, %v6010
      %v6152 = vsel %vm3464, %v6144, %v6012
      %v6154 = vsel %vm2018, %v6146, %v6026
      %v6157 = vsel %vm2018, %v6148, %v6028
      %v6160 = vsel %vm2018, %v6150, %v6030
      %v6163 = vsel %vm2018, %v6152, %v6032
      %v6167 = vsel %vm3445, %v6049, %v6066
      %v6170 = vsel %vm3445, %v6050, %v6068
      %v6173 = vsel %vm3445, %v6051, %v6070
      %v6176 = vsel %vm3445, %v6052, %v6072
      %v6178 = vsel %vm3464, %v6167, %v6086
      %v6180 = vsel %vm3464, %v6170, %v6088
      %v6182 = vsel %vm3464, %v6173, %v6090
      %v6184 = vsel %vm3464, %v6176, %v6092
      %v6186 = vsel %vm2018, %v6178, %v6114
      %v6189 = vsel %vm2018, %v6180, %v6116
      %v6192 = vsel %vm2018, %v6182, %v6118
      %v6195 = vsel %vm2018, %v6184, %v6120
      %v6197 = vld [vmem:[%s7] sm:$0xf]
      %v6198 = vld [vmem:[%s7 + $0x4] sm:$0xf]
      %v6199 = vld [vmem:[%s7 + $0x8] sm:$0xf]
      %v6200 = vld [vmem:[%s7 + $0xc] sm:$0xf]
      %v6201 = vld [vmem:[%s7 + $0x10] sm:$0xf]
      %v6202 = vld [vmem:[%s7 + $0x14] sm:$0xf]
      %v6203 = vld [vmem:[%s7 + $0x18] sm:$0xf]
      %v6204 = vld [vmem:[%s7 + $0x1c] sm:$0xf]
      %v6205 = vld [vmem:[%s7 + $0x20] sm:$0xf]
      %v6206 = vld [vmem:[%s7 + $0x24] sm:$0xf]
      %v6207 = vld [vmem:[%s7 + $0x28] sm:$0xf]
      %v6208 = vld [vmem:[%s7 + $0x2c] sm:$0xf]
      %v6209 = vld [vmem:[%s7 + $0x30] sm:$0xf]
      %v6210 = vld [vmem:[%s7 + $0x34] sm:$0xf]
      %v6211 = vld [vmem:[%s7 + $0x38] sm:$0xf]
      %v6212 = vld [vmem:[%s7 + $0x3c] sm:$0xf]
      %v6213 = vld [vmem:[%s7 + $0x40] sm:$0xf]
      %v6214 = vld [vmem:[%s7 + $0x44] sm:$0xf]
      %v6215 = vld [vmem:[%s7 + $0x48] sm:$0xf]
      %v6216 = vld [vmem:[%s7 + $0x4c] sm:$0xf]
      %v6217 = vld [vmem:[%s7 + $0x50] sm:$0xf]
      %v6218 = vld [vmem:[%s7 + $0x54] sm:$0xf]
      %v6219 = vld [vmem:[%s7 + $0x58] sm:$0xf]
      %v6220 = vld [vmem:[%s7 + $0x5c] sm:$0xf]
      %v6221 = vld [vmem:[%s7 + $0x60] sm:$0xf]
      %v6222 = vld [vmem:[%s7 + $0x64] sm:$0xf]
      %v6223 = vld [vmem:[%s7 + $0x68] sm:$0xf]
      %v6224 = vld [vmem:[%s7 + $0x6c] sm:$0xf]
      %v6225 = vld [vmem:[%s7 + $0x70] sm:$0xf]
      %v6226 = vld [vmem:[%s7 + $0x74] sm:$0xf]
      %v6227 = vld [vmem:[%s7 + $0x78] sm:$0xf]
      %v6228 = vld [vmem:[%s7 + $0x7c] sm:$0xf]
      %v6229 = vld [vmem:[%s7 + $0x80] sm:$0xf]
      %v6230 = vld [vmem:[%s7 + $0x84] sm:$0xf]
      %v6231 = vld [vmem:[%s7 + $0x88] sm:$0xf]
      %v6232 = vld [vmem:[%s7 + $0x8c] sm:$0xf]
      %v6233 = vld [vmem:[%s8] sm:$0x1]
      %v6235 = vlaneseq
      %v6236 = vshrl.u32 %v6235, 7
      %v6237 = vsub.s32 0, %v6236
      %v6238 = vrot.slane %v6233, %v6237
      %v6276 = vunpack.c.l.b16 %v6197
      %v6277 = vunpack.c.l.b16 %v6198
      %v6278 = vunpack.c.l.b16 %v6199
      %v6279 = vunpack.c.l.b16 %v6200
      %v6280 = vunpack.c.l.b16 %v6201
      %v6281 = vunpack.c.l.b16 %v6202
      %v6282 = vunpack.c.l.b16 %v6203
      %v6283 = vunpack.c.l.b16 %v6204
      %v6284 = vunpack.c.l.b16 %v6205
      %v6285 = vunpack.c.l.b16 %v6206
      %v6286 = vunpack.c.l.b16 %v6207
      %v6287 = vunpack.c.l.b16 %v6208
      %v6288 = vunpack.c.l.b16 %v6209
      %v6289 = vunpack.c.l.b16 %v6210
      %v6290 = vunpack.c.l.b16 %v6211
      %v6291 = vunpack.c.l.b16 %v6212
      %v6292 = vunpack.c.l.b16 %v6213
      %v6293 = vunpack.c.l.b16 %v6214
      %v6294 = vunpack.c.l.b16 %v6215
      %v6295 = vunpack.c.l.b16 %v6216
      %v6296 = vunpack.c.l.b16 %v6217
      %v6297 = vunpack.c.l.b16 %v6218
      %v6298 = vunpack.c.l.b16 %v6219
      %v6299 = vunpack.c.l.b16 %v6220
      %v6300 = vunpack.c.l.b16 %v6221
      %v6301 = vunpack.c.l.b16 %v6222
      %v6302 = vunpack.c.l.b16 %v6223
      %v6303 = vunpack.c.l.b16 %v6224
      %v6304 = vunpack.c.l.b16 %v6225
      %v6305 = vunpack.c.l.b16 %v6226
      %v6306 = vunpack.c.l.b16 %v6227
      %v6307 = vunpack.c.l.b16 %v6228
      %v6308 = vunpack.c.l.b16 %v6229
      %v6309 = vunpack.c.l.b16 %v6230
      %v6310 = vunpack.c.l.b16 %v6231
      %v6311 = vunpack.c.l.b16 %v6232
      %v6312 = vpack.c.b16 %v6277, %v6276
      %v6313 = vpack.c.b16 %v6279, %v6278
      %v6314 = vpack.c.b16 %v6281, %v6280
      %v6315 = vpack.c.b16 %v6283, %v6282
      %v6316 = vpack.c.b16 %v6285, %v6284
      %v6317 = vpack.c.b16 %v6287, %v6286
      %v6318 = vpack.c.b16 %v6289, %v6288
      %v6319 = vpack.c.b16 %v6291, %v6290
      %v6320 = vpack.c.b16 %v6293, %v6292
      %v6321 = vpack.c.b16 %v6295, %v6294
      %v6322 = vpack.c.b16 %v6297, %v6296
      %v6323 = vpack.c.b16 %v6299, %v6298
      %v6324 = vpack.c.b16 %v6301, %v6300
      %v6325 = vpack.c.b16 %v6303, %v6302
      %v6326 = vpack.c.b16 %v6305, %v6304
      %v6327 = vpack.c.b16 %v6307, %v6306
      %v6328 = vpack.c.b16 %v6309, %v6308
      %v6329 = vpack.c.b16 %v6311, %v6310
      %v6349 = vsel %vm3445, %v6129, 0
      %v6352 = vsel %vm3445, %v6130, 0
      %v6355 = vsel %vm3445, %v6131, 0
      %v6358 = vsel %vm3445, %v6132, 0
      %6360 = vmatprep.subr.bf16.mxu0 0
      %6361 = vmatpush1.bf16.msra.mxu0 %v6312
      %6362 = vmatprep.subr.bf16.mxu0 0
      %6363 = vmatpush1.bf16.msra.mxu0 %v6313
      %6364 = vmatprep.subr.bf16.mxu0 0
      %6365 = vmatpush1.bf16.msra.mxu0 %v6314
      %6366 = vmatprep.subr.bf16.mxu0 0
      %6367 = vmatpush1.bf16.msra.mxu0 %v6315
      %6368 = vmatprep.subr.bf16.mxu0 0
      %6369 = vmatpush1.bf16.msra.mxu0 %v6316
      %6370 = vmatprep.subr.bf16.mxu0 0
      %6371 = vmatpush1.bf16.msra.mxu0 %v6317
      %6372 = vmatprep.subr.bf16.mxu0 0
      %6373 = vmatpush1.bf16.msra.mxu0 %v6318
      %6374 = vmatprep.subr.bf16.mxu0 0
      %6375 = vmatpush1.bf16.msra.mxu0 %v6319
      %6376 = vmatprep.subr.bf16.mxu0 0
      %6377 = vmatpush1.bf16.msra.mxu0 %v6320
      %6378 = vmatprep.subr.bf16.mxu0 0
      %6379 = vmatpush1.bf16.msra.mxu0 %v6321
      %6380 = vmatprep.subr.bf16.mxu0 0
      %6381 = vmatpush1.bf16.msra.mxu0 %v6322
      %6382 = vmatprep.subr.bf16.mxu0 0
      %6383 = vmatpush1.bf16.msra.mxu0 %v6323
      %6384 = vmatprep.subr.bf16.mxu0 0
      %6385 = vmatpush1.bf16.msra.mxu0 %v6324
      %6386 = vmatprep.subr.bf16.mxu0 0
      %6387 = vmatpush1.bf16.msra.mxu0 %v6325
      %6388 = vmatprep.subr.bf16.mxu0 0
      %6389 = vmatpush1.bf16.msra.mxu0 %v6326
      %6390 = vmatprep.subr.bf16.mxu0 0
      %6391 = vmatpush1.bf16.msra.mxu0 %v6327
      %6392 = vmatprep.mubr.bf16.mxu0 %v6186
      %6393 = vmatmul.mubr.bf16.gmra.mrb[0].mxu0 %v6154
      %v6394 = vpop.f32.mrb[0].mxu0
      %v6395 = vadd.f32 %v6238, %v6394
      %v6396 = vpop.f32.mrb[0].mxu0
      %v6397 = vpop.f32.mrb[0].mxu0
      %v6398 = vadd.f32 %v6238, %v6397
      %v6399 = vpop.f32.mrb[0].mxu0
      %6400 = vmatprep.mubr.bf16.mxu0 %v6189
      %6401 = vmatmul.mubr.bf16.gmra.mrb[0].mxu0 %v6157
      %v6402 = vpop.f32.mrb[0].mxu0
      %v6403 = vadd.f32 %v6238, %v6402
      %v6404 = vpop.f32.mrb[0].mxu0
      %v6405 = vpop.f32.mrb[0].mxu0
      %v6406 = vadd.f32 %v6238, %v6405
      %v6407 = vpop.f32.mrb[0].mxu0
      %6408 = vmatprep.mubr.bf16.mxu0 %v6192
      %6409 = vmatmul.mubr.bf16.gmra.mrb[0].mxu0 %v6160
      %v6410 = vpop.f32.mrb[0].mxu0
      %v6411 = vadd.f32 %v6238, %v6410
      %v6412 = vpop.f32.mrb[0].mxu0
      %v6413 = vpop.f32.mrb[0].mxu0
      %v6414 = vadd.f32 %v6238, %v6413
      %v6415 = vpop.f32.mrb[0].mxu0
      %6416 = vmatprep.mubr.bf16.mxu0 %v6195
      %6417 = vmatmul.mubr.bf16.gmra.mrb[0].mxu0 %v6163
      %v6418 = vpop.f32.mrb[0].mxu0
      %v6419 = vadd.f32 %v6238, %v6418
      %v6420 = vpop.f32.mrb[0].mxu0
      %v6421 = vpop.f32.mrb[0].mxu0
      %v6422 = vadd.f32 %v6238, %v6421
      %v6423 = vpop.f32.mrb[0].mxu0
      %6424 = vdwg.mxu0
      %6425 = vmatprep.subr.bf16.mxu0 0
      %6426 = vmatpush1.bf16.msra.mxu0 %v6328
      %6427 = vmatprep.subr.bf16.mxu0 0
      %6428 = vmatpush1.bf16.msra.mxu0 %v6329
      %6429 = vmatprep.subr.bf16.mxu0 0
      %6430 = vmatpush1.bf16.msra.mxu0 0
      %6431 = vmatprep.subr.bf16.mxu0 0
      %6432 = vmatpush1.bf16.msra.mxu0 0
      %6433 = vmatprep.subr.bf16.mxu0 0
      %6434 = vmatpush1.bf16.msra.mxu0 0
      %6435 = vmatprep.subr.bf16.mxu0 0
      %6436 = vmatpush1.bf16.msra.mxu0 0
      %6437 = vmatprep.subr.bf16.mxu0 0
      %6438 = vmatpush1.bf16.msra.mxu0 0
      %6439 = vmatprep.subr.bf16.mxu0 0
      %6440 = vmatpush1.bf16.msra.mxu0 0
      %6441 = vmatprep.subr.bf16.mxu0 0
      %6442 = vmatpush1.bf16.msra.mxu0 0
      %6443 = vmatprep.subr.bf16.mxu0 0
      %6444 = vmatpush1.bf16.msra.mxu0 0
      %6445 = vmatprep.subr.bf16.mxu0 0
      %6446 = vmatpush1.bf16.msra.mxu0 0
      %6447 = vmatprep.subr.bf16.mxu0 0
      %6448 = vmatpush1.bf16.msra.mxu0 0
      %6449 = vmatprep.subr.bf16.mxu0 0
      %6450 = vmatpush1.bf16.msra.mxu0 0
      %6451 = vmatprep.subr.bf16.mxu0 0
      %6452 = vmatpush1.bf16.msra.mxu0 0
      %6453 = vmatprep.subr.bf16.mxu0 0
      %6454 = vmatpush1.bf16.msra.mxu0 0
      %6455 = vmatprep.subr.bf16.mxu0 0
      %6456 = vmatpush1.bf16.msra.mxu0 0
      %6457 = vmatprep.mubr.bf16.mxu0 0
      %6458 = vmatmul.mubr.bf16.gmra.mrb[0].mxu0 %v6349
      %v6459 = vpop.f32.mrb[0].mxu0
      %v6460 = vadd.f32 %v6395, %v6459
      %v6461 = vpop.f32.mrb[0].mxu0
      %v6462 = vpop.f32.mrb[0].mxu0
      %v6463 = vadd.f32 %v6398, %v6462
      %v6464 = vpop.f32.mrb[0].mxu0
      %6465 = vmatprep.mubr.bf16.mxu0 0
      %6466 = vmatmul.mubr.bf16.gmra.mrb[0].mxu0 %v6352
      %v6467 = vpop.f32.mrb[0].mxu0
      %v6468 = vadd.f32 %v6403, %v6467
      %v6469 = vpop.f32.mrb[0].mxu0
      %v6470 = vpop.f32.mrb[0].mxu0
      %v6471 = vadd.f32 %v6406, %v6470
      %v6472 = vpop.f32.mrb[0].mxu0
      %6473 = vmatprep.mubr.bf16.mxu0 0
      %6474 = vmatmul.mubr.bf16.gmra.mrb[0].mxu0 %v6355
      %v6475 = vpop.f32.mrb[0].mxu0
      %v6476 = vadd.f32 %v6411, %v6475
      %v6477 = vpop.f32.mrb[0].mxu0
      %v6478 = vpop.f32.mrb[0].mxu0
      %v6479 = vadd.f32 %v6414, %v6478
      %v6480 = vpop.f32.mrb[0].mxu0
      %6481 = vmatprep.mubr.bf16.mxu0 0
      %6482 = vmatmul.mubr.bf16.gmra.mrb[0].mxu0 %v6358
      %v6483 = vpop.f32.mrb[0].mxu0
      %v6484 = vadd.f32 %v6419, %v6483
      %v6485 = vpop.f32.mrb[0].mxu0
      %v6486 = vpop.f32.mrb[0].mxu0
      %v6487 = vadd.f32 %v6422, %v6486
      %v6488 = vpop.f32.mrb[0].mxu0
      %6489 = vdwg.mxu0
      %v6490 = vpack.c.bf16 %v6460, %v6460
      %v6491 = vpack.c.bf16 %v6463, %v6463
      %v6492 = vpack.c.bf16 %v6468, %v6468
      %v6493 = vpack.c.bf16 %v6471, %v6471
      %v6494 = vpack.c.bf16 %v6476, %v6476
      %v6495 = vpack.c.bf16 %v6479, %v6479
      %v6496 = vpack.c.bf16 %v6484, %v6484
      %v6497 = vpack.c.bf16 %v6487, %v6487
      %6498 = vst [vmem:[%s368] sm:$0xf] %v6490
      %6499 = vst [vmem:[%s368 + $0x4] sm:$0xf] %v6491
      %6500 = vst [vmem:[%s368 + $0x8] sm:$0xf] %v6492
      %6501 = vst [vmem:[%s368 + $0xc] sm:$0xf] %v6493
      %6502 = vst [vmem:[%s368 + $0x10] sm:$0xf] %v6494
      %6503 = vst [vmem:[%s368 + $0x14] sm:$0xf] %v6495
      %6504 = vst [vmem:[%s368 + $0x18] sm:$0xf] %v6496
      %6505 = vst [vmem:[%s368 + $0x1c] sm:$0xf] %v6497
      %s6506 = smul.u32 8, %s25
      %p6507 = scmp.lt.s32.totalorder %s24, 1
      %s6508 = scalar_select %p6507, %s24, 1
      %p6509 = scmp.lt.s32.totalorder %s6506, 7
      %s6510 = scalar_select %p6509, %s6506, 7
      %s6511 = smul.addr %s6508, 8
      %s6512 = sadd.s32 %s6510, %s6511
      %s6513 = smul.addr %s6512, 4
      %s6514 = scalar_lea.vmem %s9, %s6513
      // Predicated region
      $region57: #{repnet_forward.2} parent=55 // pred_check
        %p6515 = pneg %p248
      $region58: #{repnet_forward.2} parent=55 // pred_check_branch
        %6517 = sbr.rel (%p6515) target = $region60
      $region59: #{repnet_forward.2} parent=55 // pred_region
        %s6518 = smul.u32 8, %s25
      $region60: #{repnet_forward.2} parent=55 // pred_fallthru
        _
    $region56: #{repnet_forward.2} parent=5 // pred_fallthru
      _
    %p6519 = scmp.le.s32.totalorder 2, %s15
    // Predicated region
    $region61: #{repnet_forward.2} parent=5 // pred_check
      %p6520 = pneg %p6519
    $region62: #{repnet_forward.2} parent=5 // pred_check_branch
      %6522 = sbr.rel (%p6520) target = $region64
    $region63: #{repnet_forward.2} parent=5 // pred_region
      %s6523 = ssub.s32 %s15, 2
      // Predicated region
      $region65: #{repnet_forward.2} parent=63 // pred_check
        %p6524 = pneg %p254
      $region66: #{repnet_forward.2} parent=63 // pred_check_branch
        %6526 = sbr.rel (%p6524) target = $region68
      $region67: #{repnet_forward.2} parent=63 // pred_region
        %s6527 = smul.u32 8, %s27
        %p6528 = scmp.lt.s32.totalorder %s26, 1
        %s6529 = scalar_select %p6528, %s26, 1
        %p6530 = scmp.lt.s32.totalorder %s6527, 7
        %s6531 = scalar_select %p6530, %s6527, 7
        %s6532 = smul.addr %s6529, 8
        %s6533 = sadd.s32 %s6531, %s6532
        %s6534 = smul.addr %s6533, 4
        %s6535 = scalar_lea.vmem %s9, %s6534
      $region68: #{repnet_forward.2} parent=63 // pred_fallthru
        _
    $region64: #{repnet_forward.2} parent=5 // pred_fallthru
      _
  $region6: #{repnet_forward.2} parent=0 // loop_footer
    %s19 = sadd.s32 1, %s15
  $region7: #{repnet_forward.2} parent=0 // loop_footer_branch
    %14 = sbr.rel target = $region3
  $region8: #{repnet_forward.2} parent=0 // loop_exit
    _

</llo_original>
